<compile_context>
chip_gen: v5e
topology: v5e:2x2
jax: 0.10.0
libtpu: 0.0.40
codegen_flags: <defaults>
</compile_context>

<pallas_src>
import jax
import jax.numpy as jnp
from jax.experimental import pallas as pl
from jax.experimental.pallas import tpu as pltpu

INPUT_SIZE = 784
HIDDEN_DIM = 256
OUTPUT_SIZE = 1

_LANE = 128
_SUBLANE = 8
W3_NPAD = _LANE  # layer-3 weight padded to one full lane tile (128)


def _round_up(n, m):
    return ((n + m - 1) // m) * m


def _disc_kernel(x_ref, w1_ref, b1_ref, w2_ref, b2_ref, w3_ref, b3_ref, o_ref):
    w_dtype = w1_ref.dtype                     # f32 or bf16 (MXU operand dtype)
    prec = (jax.lax.Precision.HIGHEST if w_dtype == jnp.float32
            else jax.lax.Precision.DEFAULT)

    x = x_ref[...]                             # (TB, 784), same dtype as weights

    # Layer 1: Linear + LeakyReLU(0.2)
    h1 = jnp.dot(x, w1_ref[...], preferred_element_type=jnp.float32, precision=prec)
    h1 = h1 + b1_ref[...]                      # (TB, 256) + (1, 256)
    h1 = jnp.where(h1 > 0, h1, 0.2 * h1)

    # Layer 2: Linear + LeakyReLU(0.2)
    h2 = jnp.dot(h1.astype(w_dtype), w2_ref[...],
                 preferred_element_type=jnp.float32, precision=prec)
    h2 = h2 + b2_ref[...]
    h2 = jnp.where(h2 > 0, h2, 0.2 * h2)

    # Layer 3: N padded to 128 for a clean MXU tile; only lane 0 is real.
    h3 = jnp.dot(h2.astype(w_dtype), w3_ref[...],
                 preferred_element_type=jnp.float32, precision=prec)
    logit = h3[:, 0:1] + b3_ref[...]           # (TB, 1) + (1, 1) -> (TB, 1)
    o_ref[...] = jax.nn.sigmoid(logit)         # sigmoid on the real column only


def discriminator_forward(x, params, *, block_b=1024, use_bf16=False):
    """x: (B, 784). params: w1,b1,w2,b2,w3,b3 with (in_features, out_features) weights."""
    B = x.shape[0]
    w1, b1 = params["w1"], params["b1"]
    w2, b2 = params["w2"], params["b2"]
    w3, b3 = params["w3"], params["b3"]

    # Only the tiny layer-3 weight is padded (256x1 -> 256x128); x is NOT padded.
    w3_p = jnp.pad(w3, ((0, 0), (0, W3_NPAD - OUTPUT_SIZE)))

    if use_bf16:
        # Halve the dominant x HBM stream and the weight traffic; accumulation
        # and the bias/LeakyReLU/sigmoid epilogues stay f32 (looser tolerance).
        x = x.astype(jnp.bfloat16)
        w1 = w1.astype(jnp.bfloat16)
        w2 = w2.astype(jnp.bfloat16)
        w3_p = w3_p.astype(jnp.bfloat16)

    # Batch tile: multiple of 8 sublanes, <= block_b; keep >= ~4 grid steps for
    # large batches so both v7x TensorCores get pipelined work.
    tb = min(block_b, _round_up(B, _SUBLANE))
    if B > 4 * _SUBLANE:
        tb = min(tb, _round_up(pl.cdiv(B, 4), _SUBLANE))
    tb = max(tb, _SUBLANE)
    grid = (pl.cdiv(B, tb),)  # ragged edge block handled by Pallas; no batch pad

    flops = 2 * B * (INPUT_SIZE * HIDDEN_DIM + HIDDEN_DIM * HIDDEN_DIM
                     + HIDDEN_DIM * W3_NPAD)
    bytes_accessed = (
        x.size * x.dtype.itemsize
        + w1.size * w1.dtype.itemsize
        + w2.size * w2.dtype.itemsize
        + w3_p.size * w3_p.dtype.itemsize
        + (b1.size + b2.size + b3.size) * 4
        + B * OUTPUT_SIZE * 4
    )

    out = pl.pallas_call(
        _disc_kernel,
        out_shape=jax.ShapeDtypeStruct((B, OUTPUT_SIZE), jnp.float32),
        grid=grid,
        in_specs=[
            # x: tiled along the batch grid axis; last dim equals the full array
            # dim (784) -> legal block, Mosaic pads lanes internally in VMEM.
            pl.BlockSpec((tb, INPUT_SIZE), lambda i: (i, 0)),
            # weights/biases: constant index_map -> VMEM-resident, DMA'd once.
            pl.BlockSpec((INPUT_SIZE, HIDDEN_DIM), lambda i: (0, 0)),
            pl.BlockSpec((1, HIDDEN_DIM), lambda i: (0, 0)),
            pl.BlockSpec((HIDDEN_DIM, HIDDEN_DIM), lambda i: (0, 0)),
            pl.BlockSpec((1, HIDDEN_DIM), lambda i: (0, 0)),
            pl.BlockSpec((HIDDEN_DIM, W3_NPAD), lambda i: (0, 0)),
            pl.BlockSpec((1, OUTPUT_SIZE), lambda i: (0, 0)),
        ],
        # Un-padded output: last block dim equals the array dim (1), so writeback
        # is exactly B*4 bytes (no 128-wide padded slab, no wrapper slice copy).
        out_specs=pl.BlockSpec((tb, OUTPUT_SIZE), lambda i: (i, 0)),
        compiler_params=pltpu.CompilerParams(
            dimension_semantics=("parallel",),  # batch axis -> both v7x TCs
        ),
        cost_estimate=pl.CostEstimate(
            flops=flops,
            transcendentals=B,
            bytes_accessed=bytes_accessed,
        ),
    )(x, w1, b1, w2, b2, w3_p, b3)

    return out


def init_params(key):
    """Deterministic synthetic init (PyTorch-Linear-like uniform bounds).

    Weights stored as (in_features, out_features) so y = x @ W + b, equivalent
    to PyTorch's y = x @ W_pt.T + b.
    """
    ks = jax.random.split(key, 6)

    def linear(kw, kb, fan_in, fan_out):
        bound = 1.0 / (fan_in ** 0.5)
        w = jax.random.uniform(kw, (fan_in, fan_out), jnp.float32, -bound, bound)
        b = jax.random.uniform(kb, (1, fan_out), jnp.float32, -bound, bound)
        return w, b

    w1, b1 = linear(ks[0], ks[1], INPUT_SIZE, HIDDEN_DIM)
    w2, b2 = linear(ks[2], ks[3], HIDDEN_DIM, HIDDEN_DIM)
    w3, b3 = linear(ks[4], ks[5], HIDDEN_DIM, OUTPUT_SIZE)
    return {"w1": w1, "b1": b1, "w2": w2, "b2": b2, "w3": w3, "b3": b3}


def _reference_forward(x, p):
    prec = jax.lax.Precision.HIGHEST
    h1 = jnp.dot(x, p["w1"], precision=prec) + p["b1"]
    h1 = jnp.where(h1 > 0, h1, 0.2 * h1)
    h2 = jnp.dot(h1, p["w2"], precision=prec) + p["b2"]
    h2 = jnp.where(h2 > 0, h2, 0.2 * h2)
    h3 = jnp.dot(h2, p["w3"], precision=prec) + p["b3"]
    return jax.nn.sigmoid(h3)


if __name__ == "__main__":
    key = jax.random.PRNGKey(0)
    k_params, k_x = jax.random.split(key)
    params = init_params(k_params)

    # 1) Small batch, f32 exact path (single tile).
    x_small = jax.random.normal(k_x, (8, INPUT_SIZE), dtype=jnp.float32)
    out_small = jax.block_until_ready(discriminator_forward(x_small, params))
    ref_small = _reference_forward(x_small, params)
    assert out_small.shape == (8, OUTPUT_SIZE)
    assert jnp.allclose(out_small, ref_small, atol=1e-5, rtol=1e-5)

    # 2) Ragged batch (not a tile multiple) exercising edge blocks, f32 path.
    x_mid = jax.random.normal(jax.random.fold_in(k_x, 1), (200, INPUT_SIZE),
                              dtype=jnp.float32)
    out_mid = jax.block_until_ready(discriminator_forward(x_mid, params))
    ref_mid = _reference_forward(x_mid, params)
    assert out_mid.shape == (200, OUTPUT_SIZE)
    assert jnp.allclose(out_mid, ref_mid, atol=1e-5, rtol=1e-5)

    # 3) Larger ragged batch on the bf16 operand path (bf16 x + weights,
    #    f32 accumulation/epilogue) — the HBM-bandwidth lever on v5e/v6e/v7x.
    x_big = jax.random.normal(jax.random.fold_in(k_x, 2), (500, INPUT_SIZE),
                              dtype=jnp.float32)
    out_big = jax.block_until_ready(
        discriminator_forward(x_big, params, use_bf16=True))
    ref_big = _reference_forward(x_big, params)
    assert out_big.shape == (500, OUTPUT_SIZE)
    assert bool(jnp.all(jnp.isfinite(out_big)))
    assert float(jnp.max(jnp.abs(out_big - ref_big))) < 5e-2

    print("KERNEL_OK")
</pallas_src>

<mosaic_0001>
module attributes {stable_mosaic.version = 11 : i64} {
  func.func @_disc_kernel(%arg0: i32, %arg1: memref<8x784xf32, #tpu.memory_space<vmem>>, %arg2: memref<784x256xf32, #tpu.memory_space<vmem>>, %arg3: memref<1x256xf32, #tpu.memory_space<vmem>>, %arg4: memref<256x256xf32, #tpu.memory_space<vmem>>, %arg5: memref<1x256xf32, #tpu.memory_space<vmem>>, %arg6: memref<256x128xf32, #tpu.memory_space<vmem>>, %arg7: memref<1x1xf32, #tpu.memory_space<vmem>>, %arg8: memref<8x1xf32, #tpu.memory_space<vmem>>) attributes {dimension_semantics = [#tpu.dimension_semantics<parallel>], iteration_bounds = array<i64: 1>, scalar_prefetch = 0 : i64, scratch_operands = 0 : i64, tpu.core_type = #tpu.core_type<tc>, window_params = [{transform_indices = @transform_0, window_bounds = array<i64: 8, 784>}, {pipeline_mode = #tpu.pipeline_mode<synchronous>, transform_indices = @transform_1, window_bounds = array<i64: 784, 256>}, {pipeline_mode = #tpu.pipeline_mode<synchronous>, transform_indices = @transform_2, window_bounds = array<i64: 1, 256>}, {pipeline_mode = #tpu.pipeline_mode<synchronous>, transform_indices = @transform_3, window_bounds = array<i64: 256, 256>}, {pipeline_mode = #tpu.pipeline_mode<synchronous>, transform_indices = @transform_4, window_bounds = array<i64: 1, 256>}, {pipeline_mode = #tpu.pipeline_mode<synchronous>, transform_indices = @transform_5, window_bounds = array<i64: 256, 128>}, {pipeline_mode = #tpu.pipeline_mode<synchronous>, transform_indices = @transform_6, window_bounds = array<i64: 1, 1>}, {transform_indices = @transform_7, window_bounds = array<i64: 8, 1>}]} {
    %c0 = arith.constant 0 : index
    %c0_0 = arith.constant 0 : index
    %0 = vector.load %arg1[%c0, %c0_0] : memref<8x784xf32, #tpu.memory_space<vmem>>, vector<8x784xf32>
    %c0_1 = arith.constant 0 : index
    %c0_2 = arith.constant 0 : index
    %1 = vector.load %arg2[%c0_1, %c0_2] : memref<784x256xf32, #tpu.memory_space<vmem>>, vector<784x256xf32>
    %cst = arith.constant dense<0.000000e+00> : vector<8x256xf32>
    %2 = tpu.matmul %0, %1, %cst {dimension_numbers = #tpu.dot_dimension_numbers<[1], [0], [0], [1], [0, 0, 1, 1], [], []>, precision = #tpu.contract_precision<fp32>} : vector<8x784xf32>, vector<784x256xf32>, vector<8x256xf32> -> vector<8x256xf32>
    %c0_3 = arith.constant 0 : index
    %c0_4 = arith.constant 0 : index
    %3 = vector.load %arg3[%c0_3, %c0_4] : memref<1x256xf32, #tpu.memory_space<vmem>>, vector<1x256xf32>
    %4 = vector.broadcast %3 : vector<1x256xf32> to vector<8x256xf32>
    %5 = arith.addf %2, %4 : vector<8x256xf32>
    %cst_5 = arith.constant 0.000000e+00 : f32
    %6 = vector.broadcast %cst_5 : f32 to vector<8x256xf32>
    %7 = arith.cmpf ogt, %5, %6 : vector<8x256xf32>
    %cst_6 = arith.constant 2.000000e-01 : f32
    %8 = vector.broadcast %cst_6 : f32 to vector<8x256xf32>
    %9 = arith.mulf %8, %5 : vector<8x256xf32>
    %10 = arith.select %7, %5, %9 : vector<8x256xi1>, vector<8x256xf32>
    %c0_7 = arith.constant 0 : index
    %c0_8 = arith.constant 0 : index
    %11 = vector.load %arg4[%c0_7, %c0_8] : memref<256x256xf32, #tpu.memory_space<vmem>>, vector<256x256xf32>
    %cst_9 = arith.constant dense<0.000000e+00> : vector<8x256xf32>
    %12 = tpu.matmul %10, %11, %cst_9 {dimension_numbers = #tpu.dot_dimension_numbers<[1], [0], [0], [1], [0, 0, 1, 1], [], []>, precision = #tpu.contract_precision<fp32>} : vector<8x256xf32>, vector<256x256xf32>, vector<8x256xf32> -> vector<8x256xf32>
    %c0_10 = arith.constant 0 : index
    %c0_11 = arith.constant 0 : index
    %13 = vector.load %arg5[%c0_10, %c0_11] : memref<1x256xf32, #tpu.memory_space<vmem>>, vector<1x256xf32>
    %14 = vector.broadcast %13 : vector<1x256xf32> to vector<8x256xf32>
    %15 = arith.addf %12, %14 : vector<8x256xf32>
    %cst_12 = arith.constant 0.000000e+00 : f32
    %16 = vector.broadcast %cst_12 : f32 to vector<8x256xf32>
    %17 = arith.cmpf ogt, %15, %16 : vector<8x256xf32>
    %cst_13 = arith.constant 2.000000e-01 : f32
    %18 = vector.broadcast %cst_13 : f32 to vector<8x256xf32>
    %19 = arith.mulf %18, %15 : vector<8x256xf32>
    %20 = arith.select %17, %15, %19 : vector<8x256xi1>, vector<8x256xf32>
    %c0_14 = arith.constant 0 : index
    %c0_15 = arith.constant 0 : index
    %21 = vector.load %arg6[%c0_14, %c0_15] : memref<256x128xf32, #tpu.memory_space<vmem>>, vector<256x128xf32>
    %cst_16 = arith.constant dense<0.000000e+00> : vector<8x128xf32>
    %22 = tpu.matmul %20, %21, %cst_16 {dimension_numbers = #tpu.dot_dimension_numbers<[1], [0], [0], [1], [0, 0, 1, 1], [], []>, precision = #tpu.contract_precision<fp32>} : vector<8x256xf32>, vector<256x128xf32>, vector<8x128xf32> -> vector<8x128xf32>
    %23 = vector.extract_strided_slice %22 {offsets = [0, 0], sizes = [8, 1], strides = [1, 1]} : vector<8x128xf32> to vector<8x1xf32>
    %c0_17 = arith.constant 0 : index
    %c0_18 = arith.constant 0 : index
    %24 = vector.load %arg7[%c0_17, %c0_18] : memref<1x1xf32, #tpu.memory_space<vmem>>, vector<1x1xf32>
    %25 = vector.broadcast %24 : vector<1x1xf32> to vector<8x1xf32>
    %26 = arith.addf %23, %25 : vector<8x1xf32>
    %27 = arith.negf %26 : vector<8x1xf32>
    %28 = math.exp %27 : vector<8x1xf32>
    %cst_19 = arith.constant 1.000000e+00 : f32
    %29 = vector.broadcast %cst_19 : f32 to vector<8x1xf32>
    %30 = arith.addf %29, %28 : vector<8x1xf32>
    %31 = arith.divf %29, %30 : vector<8x1xf32>
    %c0_20 = arith.constant 0 : index
    %c0_21 = arith.constant 0 : index
    %32 = vector.load %arg8[%c0_20, %c0_21] : memref<8x1xf32, #tpu.memory_space<vmem>>, vector<8x1xf32>
    tpu.vector_store %arg8[%c0_20, %c0_21], %31 {strides = array<i32>} : memref<8x1xf32, #tpu.memory_space<vmem>>, vector<8x1xf32>,
    return
  }
  func.func @transform_0(%arg0: i32) -> (i32, i32) {
    %c0_i32 = arith.constant 0 : i32
    %c0_i32_0 = arith.constant 0 : i32
    return %arg0, %c0_i32 : i32, i32
  }
  func.func @transform_1(%arg0: i32) -> (i32, i32) {
    %c0_i32 = arith.constant 0 : i32
    %c0_i32_0 = arith.constant 0 : i32
    %c0_i32_1 = arith.constant 0 : i32
    return %c0_i32, %c0_i32_0 : i32, i32
  }
  func.func @transform_2(%arg0: i32) -> (i32, i32) {
    %c0_i32 = arith.constant 0 : i32
    %c0_i32_0 = arith.constant 0 : i32
    %c0_i32_1 = arith.constant 0 : i32
    return %c0_i32, %c0_i32_0 : i32, i32
  }
  func.func @transform_3(%arg0: i32) -> (i32, i32) {
    %c0_i32 = arith.constant 0 : i32
    %c0_i32_0 = arith.constant 0 : i32
    %c0_i32_1 = arith.constant 0 : i32
    return %c0_i32, %c0_i32_0 : i32, i32
  }
  func.func @transform_4(%arg0: i32) -> (i32, i32) {
    %c0_i32 = arith.constant 0 : i32
    %c0_i32_0 = arith.constant 0 : i32
    %c0_i32_1 = arith.constant 0 : i32
    return %c0_i32, %c0_i32_0 : i32, i32
  }
  func.func @transform_5(%arg0: i32) -> (i32, i32) {
    %c0_i32 = arith.constant 0 : i32
    %c0_i32_0 = arith.constant 0 : i32
    %c0_i32_1 = arith.constant 0 : i32
    return %c0_i32, %c0_i32_0 : i32, i32
  }
  func.func @transform_6(%arg0: i32) -> (i32, i32) {
    %c0_i32 = arith.constant 0 : i32
    %c0_i32_0 = arith.constant 0 : i32
    %c0_i32_1 = arith.constant 0 : i32
    return %c0_i32, %c0_i32_0 : i32, i32
  }
  func.func @transform_7(%arg0: i32) -> (i32, i32) {
    %c0_i32 = arith.constant 0 : i32
    %c0_i32_0 = arith.constant 0 : i32
    return %arg0, %c0_i32 : i32, i32
  }
}

</mosaic_0001>

<llo_original>
// kernel: tpu_custom_call.1
$region0: #{tpu_custom_call.1}
  #allocation0 [shape = 'u32[]', space=smem, size = 0x4, offset = 0x4, fixed_abs, tag = 'smem constant byte address 0x4 - core index']
  #allocation1 [shape = 'u32[72,128]{1,0:T(1,128)}', space=vmem, size = 0x9000, scoped, tag = 'internal scratch']
  #allocation2 [shape = 'f32[1,1]{1,0:T(1,128)S(1)}', space=vmem, size = 0x200, scoped, tag = 'scoped memory for tpu_custom_call.1']
  %s0 = inlined_call_operand.hbm [shape: f32[8,784], index: 0, kind: input, shape index: {}]
  %s1 = inlined_call_operand.hbm [shape: f32[784,256], index: 1, kind: input, shape index: {}]
  %s2 = inlined_call_operand.vmem [shape: f32[1,256], index: 2, kind: input, shape index: {}]
  %s3 = inlined_call_operand.hbm [shape: f32[256,256], index: 3, kind: input, shape index: {}]
  %s4 = inlined_call_operand.vmem [shape: f32[1,256], index: 4, kind: input, shape index: {}]
  %s5 = inlined_call_operand.hbm [shape: f32[256,128], index: 5, kind: input, shape index: {}]
  %s6 = inlined_call_operand.<no memory space> [shape: f32[1,1], index: 6, kind: input, shape index: {}]
  %s7 = inlined_call_operand.vmem [shape: f32[8,1], index: 7, kind: output, shape index: {}]
  %s8 = sld [smem:[#allocation0]]
  $region54: #{tpu_custom_call.1} parent=0
    _
  %s10 = ssub.s32 1, %s8
  %s11 = scalar_select 0, %s10, %s8
  %v12 = vstv %s6
  %13 = vst [vmem:[#allocation2] sm:$0x1] %v12
  $region1: #{tpu_custom_call.1} parent=0
    #allocation3 [shape = 'u8[28672]{0}', space=vmem, size = 0x7000, scoped, tag = 'input window, operand 0, single buffered']
    #allocation4 [shape = 's32[1]{0}', space=sflag, size = 0x4, scoped, tag = 'scoped memory for tpu_custom_call.1']
    #allocation5 [shape = 'u8[802816]{0}', space=vmem, size = 0xc4000, scoped, tag = 'input window, operand 1, single buffered']
    #allocation6 [shape = 's32[1]{0}', space=sflag, size = 0x4, scoped, tag = 'scoped memory for tpu_custom_call.1']
    #allocation7 [shape = 'u8[262144]{0}', space=vmem, size = 0x40000, scoped, tag = 'input window, operand 3, single buffered']
    #allocation8 [shape = 'u8[131072]{0}', space=vmem, size = 0x20000, scoped, tag = 'input window, operand 5, single buffered']
    #allocation9 [shape = 's32[1]{0}', space=sflag, size = 0x4, scoped, tag = 'scoped memory for tpu_custom_call.1']
    %14 = vsyncpa [#allocation4], 0
    %15 = vsyncpa [#allocation6], 0
    %16 = vsyncpa [#allocation9], 0
    // Predicated region
    $region2: #{tpu_custom_call.1} parent=1 // pred_check
      _
    $region3: #{tpu_custom_call.1} parent=1 // pred_check_branch
      %18 = sbr.rel (0) target = $region5
    $region4: #{tpu_custom_call.1} parent=1 // pred_region
      %20 = vsyncadd [#allocation4], 0
      %s22 = sshll.u32 %s0, 4
      %s23 = int_to_ptr.hbm [resolvable:$true] %s22
      %s24 = sshll.u32 [#allocation3], 4
      %s25 = int_to_ptr.vmem [resolvable:$true] %s24
      %27 = dma.hbm_to_vmem [thread:$0]  %s23, 896, %s25, [#allocation4]
    $region5: #{tpu_custom_call.1} parent=1 // pred_fallthru
      _
    // Predicated region
    $region6: #{tpu_custom_call.1} parent=1 // pred_check
      _
    $region7: #{tpu_custom_call.1} parent=1 // pred_check_branch
      %29 = sbr.rel (0) target = $region9
    $region8: #{tpu_custom_call.1} parent=1 // pred_region
      %31 = vsyncadd [#allocation6], 0
      %s32 = sshll.u32 %s1, 4
      %s33 = int_to_ptr.hbm [resolvable:$true] %s32
      %s34 = sshll.u32 [#allocation5], 4
      %s35 = int_to_ptr.vmem [resolvable:$true] %s34
      %40 = dma.hbm_to_vmem [thread:$0]  %s33, 25088, %s35, [#allocation6], 256, 256, 16
    $region9: #{tpu_custom_call.1} parent=1 // pred_fallthru
      _
    // Predicated region
    $region10: #{tpu_custom_call.1} parent=1 // pred_check
      _
    $region11: #{tpu_custom_call.1} parent=1 // pred_check_branch
      %42 = sbr.rel (0) target = $region13
    $region12: #{tpu_custom_call.1} parent=1 // pred_region
      _
    $region13: #{tpu_custom_call.1} parent=1 // pred_fallthru
      _
    // Predicated region
    $region14: #{tpu_custom_call.1} parent=1 // pred_check
      _
    $region15: #{tpu_custom_call.1} parent=1 // pred_check_branch
      %44 = sbr.rel (0) target = $region17
    $region16: #{tpu_custom_call.1} parent=1 // pred_region
      %46 = vsyncadd [#allocation6], 0
      %s47 = sshll.u32 %s3, 4
      %s48 = int_to_ptr.hbm [resolvable:$true] %s47
      %s49 = sshll.u32 [#allocation7], 4
      %s50 = int_to_ptr.vmem [resolvable:$true] %s49
      %55 = dma.hbm_to_vmem [thread:$0]  %s48, 8192, %s50, [#allocation6], 256, 256, 16
    $region17: #{tpu_custom_call.1} parent=1 // pred_fallthru
      _
    // Predicated region
    $region18: #{tpu_custom_call.1} parent=1 // pred_check
      _
    $region19: #{tpu_custom_call.1} parent=1 // pred_check_branch
      %57 = sbr.rel (0) target = $region21
    $region20: #{tpu_custom_call.1} parent=1 // pred_region
      _
    $region21: #{tpu_custom_call.1} parent=1 // pred_fallthru
      _
    // Predicated region
    $region22: #{tpu_custom_call.1} parent=1 // pred_check
      _
    $region23: #{tpu_custom_call.1} parent=1 // pred_check_branch
      %59 = sbr.rel (0) target = $region25
    $region24: #{tpu_custom_call.1} parent=1 // pred_region
      %61 = vsyncadd [#allocation9], 0
      %s62 = sshll.u32 %s5, 4
      %s63 = int_to_ptr.hbm [resolvable:$true] %s62
      %s64 = sshll.u32 [#allocation8], 4
      %s65 = int_to_ptr.vmem [resolvable:$true] %s64
      %70 = dma.hbm_to_vmem [thread:$0]  %s63, 4096, %s65, [#allocation9], 128, 128, 8
    $region25: #{tpu_custom_call.1} parent=1 // pred_fallthru
      _
    // Predicated region
    $region26: #{tpu_custom_call.1} parent=1 // pred_check
      _
    $region27: #{tpu_custom_call.1} parent=1 // pred_check_branch
      %72 = sbr.rel (0) target = $region29
    $region28: #{tpu_custom_call.1} parent=1 // pred_region
      _
    $region29: #{tpu_custom_call.1} parent=1 // pred_fallthru
      _
    // Predicated region
    $region30: #{tpu_custom_call.1} parent=1 // pred_check
      _
    $region31: #{tpu_custom_call.1} parent=1 // pred_check_branch
      %74 = sbr.rel (0) target = $region33
    $region32: #{tpu_custom_call.1} parent=1 // pred_region
      %76 = dma.done [#allocation4], 896
    $region33: #{tpu_custom_call.1} parent=1 // pred_fallthru
      _
    // Predicated region
    $region34: #{tpu_custom_call.1} parent=1 // pred_check
      _
    $region35: #{tpu_custom_call.1} parent=1 // pred_check_branch
      %78 = sbr.rel (0) target = $region37
    $region36: #{tpu_custom_call.1} parent=1 // pred_region
      %80 = dma.done [#allocation6], 25088
    $region37: #{tpu_custom_call.1} parent=1 // pred_fallthru
      _
    // Predicated region
    $region38: #{tpu_custom_call.1} parent=1 // pred_check
      _
    $region39: #{tpu_custom_call.1} parent=1 // pred_check_branch
      %82 = sbr.rel (0) target = $region41
    $region40: #{tpu_custom_call.1} parent=1 // pred_region
      %84 = dma.done [#allocation6], 8192
    $region41: #{tpu_custom_call.1} parent=1 // pred_fallthru
      _
    // Predicated region
    $region42: #{tpu_custom_call.1} parent=1 // pred_check
      _
    $region43: #{tpu_custom_call.1} parent=1 // pred_check_branch
      %86 = sbr.rel (0) target = $region45
    $region44: #{tpu_custom_call.1} parent=1 // pred_region
      %88 = dma.done [#allocation9], 4096
    $region45: #{tpu_custom_call.1} parent=1 // pred_fallthru
      _
    %v89 = vld [vmem:[#allocation3] sm:$0xff]
    %v90 = vld [vmem:[#allocation3 + $0x8] sm:$0xff]
    %v91 = vld [vmem:[#allocation3 + $0x10] sm:$0xff]
    %v92 = vld [vmem:[#allocation3 + $0x18] sm:$0xff]
    %v93 = vld [vmem:[#allocation3 + $0x20] sm:$0xff]
    %v94 = vld [vmem:[#allocation3 + $0x28] sm:$0xff]
    %v95 = vld [vmem:[#allocation3 + $0x30] sm:$0xff]
    %v96 = vld [vmem:[#allocation5] sm:$0xff]
    %v97 = vld [vmem:[#allocation5 + $0x8] sm:$0xff]
    %v98 = vld [vmem:[#allocation5 + $0x10] sm:$0xff]
    %v99 = vld [vmem:[#allocation5 + $0x18] sm:$0xff]
    %v100 = vld [vmem:[#allocation5 + $0x20] sm:$0xff]
    %v101 = vld [vmem:[#allocation5 + $0x28] sm:$0xff]
    %v102 = vld [vmem:[#allocation5 + $0x30] sm:$0xff]
    %v103 = vld [vmem:[#allocation5 + $0x38] sm:$0xff]
    %v104 = vld [vmem:[#allocation5 + $0x40] sm:$0xff]
    %v105 = vld [vmem:[#allocation5 + $0x48] sm:$0xff]
    %v106 = vld [vmem:[#allocation5 + $0x50] sm:$0xff]
    %v107 = vld [vmem:[#allocation5 + $0x58] sm:$0xff]
    %v108 = vld [vmem:[#allocation5 + $0x60] sm:$0xff]
    %v109 = vld [vmem:[#allocation5 + $0x68] sm:$0xff]
    %v110 = vld [vmem:[#allocation5 + $0x70] sm:$0xff]
    %v111 = vld [vmem:[#allocation5 + $0x78] sm:$0xff]
    %v112 = vld [vmem:[#allocation5 + $0x80] sm:$0xff]
    %v113 = vld [vmem:[#allocation5 + $0x88] sm:$0xff]
    %v114 = vld [vmem:[#allocation5 + $0x90] sm:$0xff]
    %v115 = vld [vmem:[#allocation5 + $0x98] sm:$0xff]
    %v116 = vld [vmem:[#allocation5 + $0xa0] sm:$0xff]
    %v117 = vld [vmem:[#allocation5 + $0xa8] sm:$0xff]
    %v118 = vld [vmem:[#allocation5 + $0xb0] sm:$0xff]
    %v119 = vld [vmem:[#allocation5 + $0xb8] sm:$0xff]
    %v120 = vld [vmem:[#allocation5 + $0xc0] sm:$0xff]
    %v121 = vld [vmem:[#allocation5 + $0xc8] sm:$0xff]
    %v122 = vld [vmem:[#allocation5 + $0xd0] sm:$0xff]
    %v123 = vld [vmem:[#allocation5 + $0xd8] sm:$0xff]
    %v124 = vld [vmem:[#allocation5 + $0xe0] sm:$0xff]
    %v125 = vld [vmem:[#allocation5 + $0xe8] sm:$0xff]
    %v126 = vld [vmem:[#allocation5 + $0xf0] sm:$0xff]
    %v127 = vld [vmem:[#allocation5 + $0xf8] sm:$0xff]
    %v128 = vld [vmem:[#allocation5 + $0x100] sm:$0xff]
    %v129 = vld [vmem:[#allocation5 + $0x108] sm:$0xff]
    %v130 = vld [vmem:[#allocation5 + $0x110] sm:$0xff]
    %v131 = vld [vmem:[#allocation5 + $0x118] sm:$0xff]
    %v132 = vld [vmem:[#allocation5 + $0x120] sm:$0xff]
    %v133 = vld [vmem:[#allocation5 + $0x128] sm:$0xff]
    %v134 = vld [vmem:[#allocation5 + $0x130] sm:$0xff]
    %v135 = vld [vmem:[#allocation5 + $0x138] sm:$0xff]
    %v136 = vld [vmem:[#allocation5 + $0x140] sm:$0xff]
    %v137 = vld [vmem:[#allocation5 + $0x148] sm:$0xff]
    %v138 = vld [vmem:[#allocation5 + $0x150] sm:$0xff]
    %v139 = vld [vmem:[#allocation5 + $0x158] sm:$0xff]
    %v140 = vld [vmem:[#allocation5 + $0x160] sm:$0xff]
    %v141 = vld [vmem:[#allocation5 + $0x168] sm:$0xff]
    %v142 = vld [vmem:[#allocation5 + $0x170] sm:$0xff]
    %v143 = vld [vmem:[#allocation5 + $0x178] sm:$0xff]
    %v144 = vld [vmem:[#allocation5 + $0x180] sm:$0xff]
    %v145 = vld [vmem:[#allocation5 + $0x188] sm:$0xff]
    %v146 = vld [vmem:[#allocation5 + $0x190] sm:$0xff]
    %v147 = vld [vmem:[#allocation5 + $0x198] sm:$0xff]
    %v148 = vld [vmem:[#allocation5 + $0x1a0] sm:$0xff]
    %v149 = vld [vmem:[#allocation5 + $0x1a8] sm:$0xff]
    %v150 = vld [vmem:[#allocation5 + $0x1b0] sm:$0xff]
    %v151 = vld [vmem:[#allocation5 + $0x1b8] sm:$0xff]
    %v152 = vld [vmem:[#allocation5 + $0x1c0] sm:$0xff]
    %v153 = vld [vmem:[#allocation5 + $0x1c8] sm:$0xff]
    %v154 = vld [vmem:[#allocation5 + $0x1d0] sm:$0xff]
    %v155 = vld [vmem:[#allocation5 + $0x1d8] sm:$0xff]
    %v156 = vld [vmem:[#allocation5 + $0x1e0] sm:$0xff]
    %v157 = vld [vmem:[#allocation5 + $0x1e8] sm:$0xff]
    %v158 = vld [vmem:[#allocation5 + $0x1f0] sm:$0xff]
    %v159 = vld [vmem:[#allocation5 + $0x1f8] sm:$0xff]
    %v160 = vld [vmem:[#allocation5 + $0x200] sm:$0xff]
    %v161 = vld [vmem:[#allocation5 + $0x208] sm:$0xff]
    %v162 = vld [vmem:[#allocation5 + $0x210] sm:$0xff]
    %v163 = vld [vmem:[#allocation5 + $0x218] sm:$0xff]
    %v164 = vld [vmem:[#allocation5 + $0x220] sm:$0xff]
    %v165 = vld [vmem:[#allocation5 + $0x228] sm:$0xff]
    %v166 = vld [vmem:[#allocation5 + $0x230] sm:$0xff]
    %v167 = vld [vmem:[#allocation5 + $0x238] sm:$0xff]
    %v168 = vld [vmem:[#allocation5 + $0x240] sm:$0xff]
    %v169 = vld [vmem:[#allocation5 + $0x248] sm:$0xff]
    %v170 = vld [vmem:[#allocation5 + $0x250] sm:$0xff]
    %v171 = vld [vmem:[#allocation5 + $0x258] sm:$0xff]
    %v172 = vld [vmem:[#allocation5 + $0x260] sm:$0xff]
    %v173 = vld [vmem:[#allocation5 + $0x268] sm:$0xff]
    %v174 = vld [vmem:[#allocation5 + $0x270] sm:$0xff]
    %v175 = vld [vmem:[#allocation5 + $0x278] sm:$0xff]
    %v176 = vld [vmem:[#allocation5 + $0x280] sm:$0xff]
    %v177 = vld [vmem:[#allocation5 + $0x288] sm:$0xff]
    %v178 = vld [vmem:[#allocation5 + $0x290] sm:$0xff]
    %v179 = vld [vmem:[#allocation5 + $0x298] sm:$0xff]
    %v180 = vld [vmem:[#allocation5 + $0x2a0] sm:$0xff]
    %v181 = vld [vmem:[#allocation5 + $0x2a8] sm:$0xff]
    %v182 = vld [vmem:[#allocation5 + $0x2b0] sm:$0xff]
    %v183 = vld [vmem:[#allocation5 + $0x2b8] sm:$0xff]
    %v184 = vld [vmem:[#allocation5 + $0x2c0] sm:$0xff]
    %v185 = vld [vmem:[#allocation5 + $0x2c8] sm:$0xff]
    %v186 = vld [vmem:[#allocation5 + $0x2d0] sm:$0xff]
    %v187 = vld [vmem:[#allocation5 + $0x2d8] sm:$0xff]
    %v188 = vld [vmem:[#allocation5 + $0x2e0] sm:$0xff]
    %v189 = vld [vmem:[#allocation5 + $0x2e8] sm:$0xff]
    %v190 = vld [vmem:[#allocation5 + $0x2f0] sm:$0xff]
    %v191 = vld [vmem:[#allocation5 + $0x2f8] sm:$0xff]
    %v192 = vld [vmem:[#allocation5 + $0x300] sm:$0xff]
    %v193 = vld [vmem:[#allocation5 + $0x308] sm:$0xff]
    %v194 = vld [vmem:[#allocation5 + $0x310] sm:$0xff]
    %v195 = vld [vmem:[#allocation5 + $0x318] sm:$0xff]
    %v196 = vld [vmem:[#allocation5 + $0x320] sm:$0xff]
    %v197 = vld [vmem:[#allocation5 + $0x328] sm:$0xff]
    %v198 = vld [vmem:[#allocation5 + $0x330] sm:$0xff]
    %v199 = vld [vmem:[#allocation5 + $0x338] sm:$0xff]
    %v200 = vld [vmem:[#allocation5 + $0x340] sm:$0xff]
    %v201 = vld [vmem:[#allocation5 + $0x348] sm:$0xff]
    %v202 = vld [vmem:[#allocation5 + $0x350] sm:$0xff]
    %v203 = vld [vmem:[#allocation5 + $0x358] sm:$0xff]
    %v204 = vld [vmem:[#allocation5 + $0x360] sm:$0xff]
    %v205 = vld [vmem:[#allocation5 + $0x368] sm:$0xff]
    %v206 = vld [vmem:[#allocation5 + $0x370] sm:$0xff]
    %v207 = vld [vmem:[#allocation5 + $0x378] sm:$0xff]
    %v208 = vld [vmem:[#allocation5 + $0x380] sm:$0xff]
    %v209 = vld [vmem:[#allocation5 + $0x388] sm:$0xff]
    %v210 = vld [vmem:[#allocation5 + $0x390] sm:$0xff]
    %v211 = vld [vmem:[#allocation5 + $0x398] sm:$0xff]
    %v212 = vld [vmem:[#allocation5 + $0x3a0] sm:$0xff]
    %v213 = vld [vmem:[#allocation5 + $0x3a8] sm:$0xff]
    %v214 = vld [vmem:[#allocation5 + $0x3b0] sm:$0xff]
    %v215 = vld [vmem:[#allocation5 + $0x3b8] sm:$0xff]
    %v216 = vld [vmem:[#allocation5 + $0x3c0] sm:$0xff]
    %v217 = vld [vmem:[#allocation5 + $0x3c8] sm:$0xff]
    %v218 = vld [vmem:[#allocation5 + $0x3d0] sm:$0xff]
    %v219 = vld [vmem:[#allocation5 + $0x3d8] sm:$0xff]
    %v220 = vld [vmem:[#allocation5 + $0x3e0] sm:$0xff]
    %v221 = vld [vmem:[#allocation5 + $0x3e8] sm:$0xff]
    %v222 = vld [vmem:[#allocation5 + $0x3f0] sm:$0xff]
    %v223 = vld [vmem:[#allocation5 + $0x3f8] sm:$0xff]
    %v224 = vld [vmem:[#allocation5 + $0x400] sm:$0xff]
    %v225 = vld [vmem:[#allocation5 + $0x408] sm:$0xff]
    %v226 = vld [vmem:[#allocation5 + $0x410] sm:$0xff]
    %v227 = vld [vmem:[#allocation5 + $0x418] sm:$0xff]
    %v228 = vld [vmem:[#allocation5 + $0x420] sm:$0xff]
    %v229 = vld [vmem:[#allocation5 + $0x428] sm:$0xff]
    %v230 = vld [vmem:[#allocation5 + $0x430] sm:$0xff]
    %v231 = vld [vmem:[#allocation5 + $0x438] sm:$0xff]
    %v232 = vld [vmem:[#allocation5 + $0x440] sm:$0xff]
    %v233 = vld [vmem:[#allocation5 + $0x448] sm:$0xff]
    %v234 = vld [vmem:[#allocation5 + $0x450] sm:$0xff]
    %v235 = vld [vmem:[#allocation5 + $0x458] sm:$0xff]
    %v236 = vld [vmem:[#allocation5 + $0x460] sm:$0xff]
    %v237 = vld [vmem:[#allocation5 + $0x468] sm:$0xff]
    %v238 = vld [vmem:[#allocation5 + $0x470] sm:$0xff]
    %v239 = vld [vmem:[#allocation5 + $0x478] sm:$0xff]
    %v240 = vld [vmem:[#allocation5 + $0x480] sm:$0xff]
    %v241 = vld [vmem:[#allocation5 + $0x488] sm:$0xff]
    %v242 = vld [vmem:[#allocation5 + $0x490] sm:$0xff]
    %v243 = vld [vmem:[#allocation5 + $0x498] sm:$0xff]
    %v244 = vld [vmem:[#allocation5 + $0x4a0] sm:$0xff]
    %v245 = vld [vmem:[#allocation5 + $0x4a8] sm:$0xff]
    %v246 = vld [vmem:[#allocation5 + $0x4b0] sm:$0xff]
    %v247 = vld [vmem:[#allocation5 + $0x4b8] sm:$0xff]
    %v248 = vld [vmem:[#allocation5 + $0x4c0] sm:$0xff]
    %v249 = vld [vmem:[#allocation5 + $0x4c8] sm:$0xff]
    %v250 = vld [vmem:[#allocation5 + $0x4d0] sm:$0xff]
    %v251 = vld [vmem:[#allocation5 + $0x4d8] sm:$0xff]
    %v252 = vld [vmem:[#allocation5 + $0x4e0] sm:$0xff]
    %v253 = vld [vmem:[#allocation5 + $0x4e8] sm:$0xff]
    %v254 = vld [vmem:[#allocation5 + $0x4f0] sm:$0xff]
    %v255 = vld [vmem:[#allocation5 + $0x4f8] sm:$0xff]
    %v256 = vld [vmem:[#allocation5 + $0x500] sm:$0xff]
    %v257 = vld [vmem:[#allocation5 + $0x508] sm:$0xff]
    %v258 = vld [vmem:[#allocation5 + $0x510] sm:$0xff]
    %v259 = vld [vmem:[#allocation5 + $0x518] sm:$0xff]
    %v260 = vld [vmem:[#allocation5 + $0x520] sm:$0xff]
    %v261 = vld [vmem:[#allocation5 + $0x528] sm:$0xff]
    %v262 = vld [vmem:[#allocation5 + $0x530] sm:$0xff]
    %v263 = vld [vmem:[#allocation5 + $0x538] sm:$0xff]
    %v264 = vld [vmem:[#allocation5 + $0x540] sm:$0xff]
    %v265 = vld [vmem:[#allocation5 + $0x548] sm:$0xff]
    %v266 = vld [vmem:[#allocation5 + $0x550] sm:$0xff]
    %v267 = vld [vmem:[#allocation5 + $0x558] sm:$0xff]
    %v268 = vld [vmem:[#allocation5 + $0x560] sm:$0xff]
    %v269 = vld [vmem:[#allocation5 + $0x568] sm:$0xff]
    %v270 = vld [vmem:[#allocation5 + $0x570] sm:$0xff]
    %v271 = vld [vmem:[#allocation5 + $0x578] sm:$0xff]
    %v272 = vld [vmem:[#allocation5 + $0x580] sm:$0xff]
    %v273 = vld [vmem:[#allocation5 + $0x588] sm:$0xff]
    %v274 = vld [vmem:[#allocation5 + $0x590] sm:$0xff]
    %v275 = vld [vmem:[#allocation5 + $0x598] sm:$0xff]
    %v276 = vld [vmem:[#allocation5 + $0x5a0] sm:$0xff]
    %v277 = vld [vmem:[#allocation5 + $0x5a8] sm:$0xff]
    %v278 = vld [vmem:[#allocation5 + $0x5b0] sm:$0xff]
    %v279 = vld [vmem:[#allocation5 + $0x5b8] sm:$0xff]
    %v280 = vld [vmem:[#allocation5 + $0x5c0] sm:$0xff]
    %v281 = vld [vmem:[#allocation5 + $0x5c8] sm:$0xff]
    %v282 = vld [vmem:[#allocation5 + $0x5d0] sm:$0xff]
    %v283 = vld [vmem:[#allocation5 + $0x5d8] sm:$0xff]
    %v284 = vld [vmem:[#allocation5 + $0x5e0] sm:$0xff]
    %v285 = vld [vmem:[#allocation5 + $0x5e8] sm:$0xff]
    %v286 = vld [vmem:[#allocation5 + $0x5f0] sm:$0xff]
    %v287 = vld [vmem:[#allocation5 + $0x5f8] sm:$0xff]
    %v288 = vld [vmem:[#allocation5 + $0x600] sm:$0xff]
    %v289 = vld [vmem:[#allocation5 + $0x608] sm:$0xff]
    %v290 = vld [vmem:[#allocation5 + $0x610] sm:$0xff]
    %v291 = vld [vmem:[#allocation5 + $0x618] sm:$0xff]
    %v292 = vld [vmem:[%s2] sm:$0x3]
    %v294 = vperm.slane %v292, 0
    %v295 = vperm.slane %v292, 1
    %vm298 = vcmask 130048
    %v300 = vsel %vm298, %v95, 0
    %v302 = vand.u32 %v126, 4294901760
    %303 = vmatpush.msra.mxu0 %v302
    %v304 = vand.u32 %v124, 4294901760
    %305 = vmatpush.msra.mxu0 %v304
    %v306 = vand.u32 %v122, 4294901760
    %307 = vmatpush.msra.mxu0 %v306
    %v308 = vand.u32 %v120, 4294901760
    %309 = vmatpush.msra.mxu0 %v308
    %v310 = vand.u32 %v118, 4294901760
    %311 = vmatpush.msra.mxu0 %v310
    %v312 = vand.u32 %v116, 4294901760
    %313 = vmatpush.msra.mxu0 %v312
    %v314 = vand.u32 %v114, 4294901760
    %315 = vmatpush.msra.mxu0 %v314
    %v316 = vand.u32 %v112, 4294901760
    %317 = vmatpush.msra.mxu0 %v316
    %v318 = vand.u32 %v110, 4294901760
    %319 = vmatpush.msra.mxu0 %v318
    %v320 = vand.u32 %v108, 4294901760
    %321 = vmatpush.msra.mxu0 %v320
    %v322 = vand.u32 %v106, 4294901760
    %323 = vmatpush.msra.mxu0 %v322
    %v324 = vand.u32 %v104, 4294901760
    %325 = vmatpush.msra.mxu0 %v324
    %v326 = vand.u32 %v102, 4294901760
    %327 = vmatpush.msra.mxu0 %v326
    %v328 = vand.u32 %v100, 4294901760
    %329 = vmatpush.msra.mxu0 %v328
    %v330 = vand.u32 %v98, 4294901760
    %331 = vmatpush.msra.mxu0 %v330
    %v332 = vand.u32 %v96, 4294901760
    %333 = vmatpush.msra.mxu0 %v332
    %v334 = vand.u32 %v89, 4294901760
    %v335 = vsub.f32 %v89, %v334
    %v336 = vand.u32 %v335, 4294901760
    %v337 = vsub.f32 %v335, %v336
    %v338 = vand.u32 %v337, 4294901760
    %339 = vmatmul.f32.gmra.mxu0 %v338
    %v340 = vpop.f32.mrf.mxu0
    %v341 = vadd.f32 %v294, %v340
    %342 = vdwg.mxu0
    %v343 = vand.u32 %v126, 4294901760
    %v344 = vsub.f32 %v126, %v343
    %v345 = vand.u32 %v344, 4294901760
    %v346 = vsub.f32 %v344, %v345
    %v347 = vand.u32 %v346, 4294901760
    %348 = vmatpush.msra.mxu0 %v347
    %v349 = vand.u32 %v124, 4294901760
    %v350 = vsub.f32 %v124, %v349
    %v351 = vand.u32 %v350, 4294901760
    %v352 = vsub.f32 %v350, %v351
    %v353 = vand.u32 %v352, 4294901760
    %354 = vmatpush.msra.mxu0 %v353
    %v355 = vand.u32 %v122, 4294901760
    %v356 = vsub.f32 %v122, %v355
    %v357 = vand.u32 %v356, 4294901760
    %v358 = vsub.f32 %v356, %v357
    %v359 = vand.u32 %v358, 4294901760
    %360 = vmatpush.msra.mxu0 %v359
    %v361 = vand.u32 %v120, 4294901760
    %v362 = vsub.f32 %v120, %v361
    %v363 = vand.u32 %v362, 4294901760
    %v364 = vsub.f32 %v362, %v363
    %v365 = vand.u32 %v364, 4294901760
    %366 = vmatpush.msra.mxu0 %v365
    %v367 = vand.u32 %v118, 4294901760
    %v368 = vsub.f32 %v118, %v367
    %v369 = vand.u32 %v368, 4294901760
    %v370 = vsub.f32 %v368, %v369
    %v371 = vand.u32 %v370, 4294901760
    %372 = vmatpush.msra.mxu0 %v371
    %v373 = vand.u32 %v116, 4294901760
    %v374 = vsub.f32 %v116, %v373
    %v375 = vand.u32 %v374, 4294901760
    %v376 = vsub.f32 %v374, %v375
    %v377 = vand.u32 %v376, 4294901760
    %378 = vmatpush.msra.mxu0 %v377
    %v379 = vand.u32 %v114, 4294901760
    %v380 = vsub.f32 %v114, %v379
    %v381 = vand.u32 %v380, 4294901760
    %v382 = vsub.f32 %v380, %v381
    %v383 = vand.u32 %v382, 4294901760
    %384 = vmatpush.msra.mxu0 %v383
    %v385 = vand.u32 %v112, 4294901760
    %v386 = vsub.f32 %v112, %v385
    %v387 = vand.u32 %v386, 4294901760
    %v388 = vsub.f32 %v386, %v387
    %v389 = vand.u32 %v388, 4294901760
    %390 = vmatpush.msra.mxu0 %v389
    %v391 = vand.u32 %v110, 4294901760
    %v392 = vsub.f32 %v110, %v391
    %v393 = vand.u32 %v392, 4294901760
    %v394 = vsub.f32 %v392, %v393
    %v395 = vand.u32 %v394, 4294901760
    %396 = vmatpush.msra.mxu0 %v395
    %v397 = vand.u32 %v108, 4294901760
    %v398 = vsub.f32 %v108, %v397
    %v399 = vand.u32 %v398, 4294901760
    %v400 = vsub.f32 %v398, %v399
    %v401 = vand.u32 %v400, 4294901760
    %402 = vmatpush.msra.mxu0 %v401
    %v403 = vand.u32 %v106, 4294901760
    %v404 = vsub.f32 %v106, %v403
    %v405 = vand.u32 %v404, 4294901760
    %v406 = vsub.f32 %v404, %v405
    %v407 = vand.u32 %v406, 4294901760
    %408 = vmatpush.msra.mxu0 %v407
    %v409 = vand.u32 %v104, 4294901760
    %v410 = vsub.f32 %v104, %v409
    %v411 = vand.u32 %v410, 4294901760
    %v412 = vsub.f32 %v410, %v411
    %v413 = vand.u32 %v412, 4294901760
    %414 = vmatpush.msra.mxu0 %v413
    %v415 = vand.u32 %v102, 4294901760
    %v416 = vsub.f32 %v102, %v415
    %v417 = vand.u32 %v416, 4294901760
    %v418 = vsub.f32 %v416, %v417
    %v419 = vand.u32 %v418, 4294901760
    %420 = vmatpush.msra.mxu0 %v419
    %v421 = vand.u32 %v100, 4294901760
    %v422 = vsub.f32 %v100, %v421
    %v423 = vand.u32 %v422, 4294901760
    %v424 = vsub.f32 %v422, %v423
    %v425 = vand.u32 %v424, 4294901760
    %426 = vmatpush.msra.mxu0 %v425
    %v427 = vand.u32 %v98, 4294901760
    %v428 = vsub.f32 %v98, %v427
    %v429 = vand.u32 %v428, 4294901760
    %v430 = vsub.f32 %v428, %v429
    %v431 = vand.u32 %v430, 4294901760
    %432 = vmatpush.msra.mxu0 %v431
    %v433 = vand.u32 %v96, 4294901760
    %v434 = vsub.f32 %v96, %v433
    %v435 = vand.u32 %v434, 4294901760
    %v436 = vsub.f32 %v434, %v435
    %v437 = vand.u32 %v436, 4294901760
    %438 = vmatpush.msra.mxu0 %v437
    %v439 = vand.u32 %v89, 4294901760
    %440 = vmatmul.f32.gmra.mxu0 %v439
    %v441 = vpop.f32.mrf.mxu0
    %v442 = vadd.f32 %v341, %v441
    %443 = vdwg.mxu0
    %v444 = vand.u32 %v126, 4294901760
    %v445 = vsub.f32 %v126, %v444
    %446 = vmatpush.msra.mxu0 %v445
    %v447 = vand.u32 %v124, 4294901760
    %v448 = vsub.f32 %v124, %v447
    %449 = vmatpush.msra.mxu0 %v448
    %v450 = vand.u32 %v122, 4294901760
    %v451 = vsub.f32 %v122, %v450
    %452 = vmatpush.msra.mxu0 %v451
    %v453 = vand.u32 %v120, 4294901760
    %v454 = vsub.f32 %v120, %v453
    %455 = vmatpush.msra.mxu0 %v454
    %v456 = vand.u32 %v118, 4294901760
    %v457 = vsub.f32 %v118, %v456
    %458 = vmatpush.msra.mxu0 %v457
    %v459 = vand.u32 %v116, 4294901760
    %v460 = vsub.f32 %v116, %v459
    %461 = vmatpush.msra.mxu0 %v460
    %v462 = vand.u32 %v114, 4294901760
    %v463 = vsub.f32 %v114, %v462
    %464 = vmatpush.msra.mxu0 %v463
    %v465 = vand.u32 %v112, 4294901760
    %v466 = vsub.f32 %v112, %v465
    %467 = vmatpush.msra.mxu0 %v466
    %v468 = vand.u32 %v110, 4294901760
    %v469 = vsub.f32 %v110, %v468
    %470 = vmatpush.msra.mxu0 %v469
    %v471 = vand.u32 %v108, 4294901760
    %v472 = vsub.f32 %v108, %v471
    %473 = vmatpush.msra.mxu0 %v472
    %v474 = vand.u32 %v106, 4294901760
    %v475 = vsub.f32 %v106, %v474
    %476 = vmatpush.msra.mxu0 %v475
    %v477 = vand.u32 %v104, 4294901760
    %v478 = vsub.f32 %v104, %v477
    %479 = vmatpush.msra.mxu0 %v478
    %v480 = vand.u32 %v102, 4294901760
    %v481 = vsub.f32 %v102, %v480
    %482 = vmatpush.msra.mxu0 %v481
    %v483 = vand.u32 %v100, 4294901760
    %v484 = vsub.f32 %v100, %v483
    %485 = vmatpush.msra.mxu0 %v484
    %v486 = vand.u32 %v98, 4294901760
    %v487 = vsub.f32 %v98, %v486
    %488 = vmatpush.msra.mxu0 %v487
    %v489 = vand.u32 %v96, 4294901760
    %v490 = vsub.f32 %v96, %v489
    %491 = vmatpush.msra.mxu0 %v490
    %v492 = vand.u32 %v89, 4294901760
    %v493 = vsub.f32 %v89, %v492
    %494 = vmatmul.f32.gmra.mxu0 %v493
    %v495 = vpop.f32.mrf.mxu0
    %v496 = vadd.f32 %v442, %v495
    %497 = vdwg.mxu0
    %v498 = vand.u32 %v126, 4294901760
    %499 = vmatpush.msra.mxu0 %v498
    %v500 = vand.u32 %v124, 4294901760
    %501 = vmatpush.msra.mxu0 %v500
    %v502 = vand.u32 %v122, 4294901760
    %503 = vmatpush.msra.mxu0 %v502
    %v504 = vand.u32 %v120, 4294901760
    %505 = vmatpush.msra.mxu0 %v504
    %v506 = vand.u32 %v118, 4294901760
    %507 = vmatpush.msra.mxu0 %v506
    %v508 = vand.u32 %v116, 4294901760
    %509 = vmatpush.msra.mxu0 %v508
    %v510 = vand.u32 %v114, 4294901760
    %511 = vmatpush.msra.mxu0 %v510
    %v512 = vand.u32 %v112, 4294901760
    %513 = vmatpush.msra.mxu0 %v512
    %v514 = vand.u32 %v110, 4294901760
    %515 = vmatpush.msra.mxu0 %v514
    %v516 = vand.u32 %v108, 4294901760
    %517 = vmatpush.msra.mxu0 %v516
    %v518 = vand.u32 %v106, 4294901760
    %519 = vmatpush.msra.mxu0 %v518
    %v520 = vand.u32 %v104, 4294901760
    %521 = vmatpush.msra.mxu0 %v520
    %v522 = vand.u32 %v102, 4294901760
    %523 = vmatpush.msra.mxu0 %v522
    %v524 = vand.u32 %v100, 4294901760
    %525 = vmatpush.msra.mxu0 %v524
    %v526 = vand.u32 %v98, 4294901760
    %527 = vmatpush.msra.mxu0 %v526
    %v528 = vand.u32 %v96, 4294901760
    %529 = vmatpush.msra.mxu0 %v528
    %v530 = vand.u32 %v89, 4294901760
    %v531 = vsub.f32 %v89, %v530
    %v532 = vand.u32 %v531, 4294901760
    %533 = vmatmul.f32.gmra.mxu0 %v532
    %v534 = vpop.f32.mrf.mxu0
    %v535 = vadd.f32 %v496, %v534
    %536 = vdwg.mxu0
    %v537 = vand.u32 %v126, 4294901760
    %v538 = vsub.f32 %v126, %v537
    %v539 = vand.u32 %v538, 4294901760
    %540 = vmatpush.msra.mxu0 %v539
    %v541 = vand.u32 %v124, 4294901760
    %v542 = vsub.f32 %v124, %v541
    %v543 = vand.u32 %v542, 4294901760
    %544 = vmatpush.msra.mxu0 %v543
    %v545 = vand.u32 %v122, 4294901760
    %v546 = vsub.f32 %v122, %v545
    %v547 = vand.u32 %v546, 4294901760
    %548 = vmatpush.msra.mxu0 %v547
    %v549 = vand.u32 %v120, 4294901760
    %v550 = vsub.f32 %v120, %v549
    %v551 = vand.u32 %v550, 4294901760
    %552 = vmatpush.msra.mxu0 %v551
    %v553 = vand.u32 %v118, 4294901760
    %v554 = vsub.f32 %v118, %v553
    %v555 = vand.u32 %v554, 4294901760
    %556 = vmatpush.msra.mxu0 %v555
    %v557 = vand.u32 %v116, 4294901760
    %v558 = vsub.f32 %v116, %v557
    %v559 = vand.u32 %v558, 4294901760
    %560 = vmatpush.msra.mxu0 %v559
    %v561 = vand.u32 %v114, 4294901760
    %v562 = vsub.f32 %v114, %v561
    %v563 = vand.u32 %v562, 4294901760
    %564 = vmatpush.msra.mxu0 %v563
    %v565 = vand.u32 %v112, 4294901760
    %v566 = vsub.f32 %v112, %v565
    %v567 = vand.u32 %v566, 4294901760
    %568 = vmatpush.msra.mxu0 %v567
    %v569 = vand.u32 %v110, 4294901760
    %v570 = vsub.f32 %v110, %v569
    %v571 = vand.u32 %v570, 4294901760
    %572 = vmatpush.msra.mxu0 %v571
    %v573 = vand.u32 %v108, 4294901760
    %v574 = vsub.f32 %v108, %v573
    %v575 = vand.u32 %v574, 4294901760
    %576 = vmatpush.msra.mxu0 %v575
    %v577 = vand.u32 %v106, 4294901760
    %v578 = vsub.f32 %v106, %v577
    %v579 = vand.u32 %v578, 4294901760
    %580 = vmatpush.msra.mxu0 %v579
    %v581 = vand.u32 %v104, 4294901760
    %v582 = vsub.f32 %v104, %v581
    %v583 = vand.u32 %v582, 4294901760
    %584 = vmatpush.msra.mxu0 %v583
    %v585 = vand.u32 %v102, 4294901760
    %v586 = vsub.f32 %v102, %v585
    %v587 = vand.u32 %v586, 4294901760
    %588 = vmatpush.msra.mxu0 %v587
    %v589 = vand.u32 %v100, 4294901760
    %v590 = vsub.f32 %v100, %v589
    %v591 = vand.u32 %v590, 4294901760
    %592 = vmatpush.msra.mxu0 %v591
    %v593 = vand.u32 %v98, 4294901760
    %v594 = vsub.f32 %v98, %v593
    %v595 = vand.u32 %v594, 4294901760
    %596 = vmatpush.msra.mxu0 %v595
    %v597 = vand.u32 %v96, 4294901760
    %v598 = vsub.f32 %v96, %v597
    %v599 = vand.u32 %v598, 4294901760
    %600 = vmatpush.msra.mxu0 %v599
    %v601 = vand.u32 %v89, 4294901760
    %602 = vmatmul.f32.gmra.mxu0 %v601
    %v603 = vpop.f32.mrf.mxu0
    %v604 = vadd.f32 %v535, %v603
    %605 = vdwg.mxu0
    %v606 = vand.u32 %v126, 4294901760
    %607 = vmatpush.msra.mxu0 %v606
    %v608 = vand.u32 %v124, 4294901760
    %609 = vmatpush.msra.mxu0 %v608
    %v610 = vand.u32 %v122, 4294901760
    %611 = vmatpush.msra.mxu0 %v610
    %v612 = vand.u32 %v120, 4294901760
    %613 = vmatpush.msra.mxu0 %v612
    %v614 = vand.u32 %v118, 4294901760
    %615 = vmatpush.msra.mxu0 %v614
    %v616 = vand.u32 %v116, 4294901760
    %617 = vmatpush.msra.mxu0 %v616
    %v618 = vand.u32 %v114, 4294901760
    %619 = vmatpush.msra.mxu0 %v618
    %v620 = vand.u32 %v112, 4294901760
    %621 = vmatpush.msra.mxu0 %v620
    %v622 = vand.u32 %v110, 4294901760
    %623 = vmatpush.msra.mxu0 %v622
    %v624 = vand.u32 %v108, 4294901760
    %625 = vmatpush.msra.mxu0 %v624
    %v626 = vand.u32 %v106, 4294901760
    %627 = vmatpush.msra.mxu0 %v626
    %v628 = vand.u32 %v104, 4294901760
    %629 = vmatpush.msra.mxu0 %v628
    %v630 = vand.u32 %v102, 4294901760
    %631 = vmatpush.msra.mxu0 %v630
    %v632 = vand.u32 %v100, 4294901760
    %633 = vmatpush.msra.mxu0 %v632
    %v634 = vand.u32 %v98, 4294901760
    %635 = vmatpush.msra.mxu0 %v634
    %v636 = vand.u32 %v96, 4294901760
    %637 = vmatpush.msra.mxu0 %v636
    %v638 = vand.u32 %v89, 4294901760
    %639 = vmatmul.f32.gmra.mxu0 %v638
    %v640 = vpop.f32.mrf.mxu0
    %v641 = vadd.f32 %v604, %v640
    %642 = vdwg.mxu0
    %v643 = vand.u32 %v158, 4294901760
    %644 = vmatpush.msra.mxu0 %v643
    %v645 = vand.u32 %v156, 4294901760
    %646 = vmatpush.msra.mxu0 %v645
    %v647 = vand.u32 %v154, 4294901760
    %648 = vmatpush.msra.mxu0 %v647
    %v649 = vand.u32 %v152, 4294901760
    %650 = vmatpush.msra.mxu0 %v649
    %v651 = vand.u32 %v150, 4294901760
    %652 = vmatpush.msra.mxu0 %v651
    %v653 = vand.u32 %v148, 4294901760
    %654 = vmatpush.msra.mxu0 %v653
    %v655 = vand.u32 %v146, 4294901760
    %656 = vmatpush.msra.mxu0 %v655
    %v657 = vand.u32 %v144, 4294901760
    %658 = vmatpush.msra.mxu0 %v657
    %v659 = vand.u32 %v142, 4294901760
    %660 = vmatpush.msra.mxu0 %v659
    %v661 = vand.u32 %v140, 4294901760
    %662 = vmatpush.msra.mxu0 %v661
    %v663 = vand.u32 %v138, 4294901760
    %664 = vmatpush.msra.mxu0 %v663
    %v665 = vand.u32 %v136, 4294901760
    %666 = vmatpush.msra.mxu0 %v665
    %v667 = vand.u32 %v134, 4294901760
    %668 = vmatpush.msra.mxu0 %v667
    %v669 = vand.u32 %v132, 4294901760
    %670 = vmatpush.msra.mxu0 %v669
    %v671 = vand.u32 %v130, 4294901760
    %672 = vmatpush.msra.mxu0 %v671
    %v673 = vand.u32 %v128, 4294901760
    %674 = vmatpush.msra.mxu0 %v673
    %v675 = vand.u32 %v90, 4294901760
    %v676 = vsub.f32 %v90, %v675
    %v677 = vand.u32 %v676, 4294901760
    %v678 = vsub.f32 %v676, %v677
    %v679 = vand.u32 %v678, 4294901760
    %680 = vmatmul.f32.gmra.mxu0 %v679
    %v681 = vpop.f32.mrf.mxu0
    %v682 = vadd.f32 %v641, %v681
    %683 = vdwg.mxu0
    %v684 = vand.u32 %v158, 4294901760
    %v685 = vsub.f32 %v158, %v684
    %v686 = vand.u32 %v685, 4294901760
    %v687 = vsub.f32 %v685, %v686
    %v688 = vand.u32 %v687, 4294901760
    %689 = vmatpush.msra.mxu0 %v688
    %v690 = vand.u32 %v156, 4294901760
    %v691 = vsub.f32 %v156, %v690
    %v692 = vand.u32 %v691, 4294901760
    %v693 = vsub.f32 %v691, %v692
    %v694 = vand.u32 %v693, 4294901760
    %695 = vmatpush.msra.mxu0 %v694
    %v696 = vand.u32 %v154, 4294901760
    %v697 = vsub.f32 %v154, %v696
    %v698 = vand.u32 %v697, 4294901760
    %v699 = vsub.f32 %v697, %v698
    %v700 = vand.u32 %v699, 4294901760
    %701 = vmatpush.msra.mxu0 %v700
    %v702 = vand.u32 %v152, 4294901760
    %v703 = vsub.f32 %v152, %v702
    %v704 = vand.u32 %v703, 4294901760
    %v705 = vsub.f32 %v703, %v704
    %v706 = vand.u32 %v705, 4294901760
    %707 = vmatpush.msra.mxu0 %v706
    %v708 = vand.u32 %v150, 4294901760
    %v709 = vsub.f32 %v150, %v708
    %v710 = vand.u32 %v709, 4294901760
    %v711 = vsub.f32 %v709, %v710
    %v712 = vand.u32 %v711, 4294901760
    %713 = vmatpush.msra.mxu0 %v712
    %v714 = vand.u32 %v148, 4294901760
    %v715 = vsub.f32 %v148, %v714
    %v716 = vand.u32 %v715, 4294901760
    %v717 = vsub.f32 %v715, %v716
    %v718 = vand.u32 %v717, 4294901760
    %719 = vmatpush.msra.mxu0 %v718
    %v720 = vand.u32 %v146, 4294901760
    %v721 = vsub.f32 %v146, %v720
    %v722 = vand.u32 %v721, 4294901760
    %v723 = vsub.f32 %v721, %v722
    %v724 = vand.u32 %v723, 4294901760
    %725 = vmatpush.msra.mxu0 %v724
    %v726 = vand.u32 %v144, 4294901760
    %v727 = vsub.f32 %v144, %v726
    %v728 = vand.u32 %v727, 4294901760
    %v729 = vsub.f32 %v727, %v728
    %v730 = vand.u32 %v729, 4294901760
    %731 = vmatpush.msra.mxu0 %v730
    %v732 = vand.u32 %v142, 4294901760
    %v733 = vsub.f32 %v142, %v732
    %v734 = vand.u32 %v733, 4294901760
    %v735 = vsub.f32 %v733, %v734
    %v736 = vand.u32 %v735, 4294901760
    %737 = vmatpush.msra.mxu0 %v736
    %v738 = vand.u32 %v140, 4294901760
    %v739 = vsub.f32 %v140, %v738
    %v740 = vand.u32 %v739, 4294901760
    %v741 = vsub.f32 %v739, %v740
    %v742 = vand.u32 %v741, 4294901760
    %743 = vmatpush.msra.mxu0 %v742
    %v744 = vand.u32 %v138, 4294901760
    %v745 = vsub.f32 %v138, %v744
    %v746 = vand.u32 %v745, 4294901760
    %v747 = vsub.f32 %v745, %v746
    %v748 = vand.u32 %v747, 4294901760
    %749 = vmatpush.msra.mxu0 %v748
    %v750 = vand.u32 %v136, 4294901760
    %v751 = vsub.f32 %v136, %v750
    %v752 = vand.u32 %v751, 4294901760
    %v753 = vsub.f32 %v751, %v752
    %v754 = vand.u32 %v753, 4294901760
    %755 = vmatpush.msra.mxu0 %v754
    %v756 = vand.u32 %v134, 4294901760
    %v757 = vsub.f32 %v134, %v756
    %v758 = vand.u32 %v757, 4294901760
    %v759 = vsub.f32 %v757, %v758
    %v760 = vand.u32 %v759, 4294901760
    %761 = vmatpush.msra.mxu0 %v760
    %v762 = vand.u32 %v132, 4294901760
    %v763 = vsub.f32 %v132, %v762
    %v764 = vand.u32 %v763, 4294901760
    %v765 = vsub.f32 %v763, %v764
    %v766 = vand.u32 %v765, 4294901760
    %767 = vmatpush.msra.mxu0 %v766
    %v768 = vand.u32 %v130, 4294901760
    %v769 = vsub.f32 %v130, %v768
    %v770 = vand.u32 %v769, 4294901760
    %v771 = vsub.f32 %v769, %v770
    %v772 = vand.u32 %v771, 4294901760
    %773 = vmatpush.msra.mxu0 %v772
    %v774 = vand.u32 %v128, 4294901760
    %v775 = vsub.f32 %v128, %v774
    %v776 = vand.u32 %v775, 4294901760
    %v777 = vsub.f32 %v775, %v776
    %v778 = vand.u32 %v777, 4294901760
    %779 = vmatpush.msra.mxu0 %v778
    %v780 = vand.u32 %v90, 4294901760
    %781 = vmatmul.f32.gmra.mxu0 %v780
    %v782 = vpop.f32.mrf.mxu0
    %v783 = vadd.f32 %v682, %v782
    %784 = vdwg.mxu0
    %v785 = vand.u32 %v158, 4294901760
    %v786 = vsub.f32 %v158, %v785
    %787 = vmatpush.msra.mxu0 %v786
    %v788 = vand.u32 %v156, 4294901760
    %v789 = vsub.f32 %v156, %v788
    %790 = vmatpush.msra.mxu0 %v789
    %v791 = vand.u32 %v154, 4294901760
    %v792 = vsub.f32 %v154, %v791
    %793 = vmatpush.msra.mxu0 %v792
    %v794 = vand.u32 %v152, 4294901760
    %v795 = vsub.f32 %v152, %v794
    %796 = vmatpush.msra.mxu0 %v795
    %v797 = vand.u32 %v150, 4294901760
    %v798 = vsub.f32 %v150, %v797
    %799 = vmatpush.msra.mxu0 %v798
    %v800 = vand.u32 %v148, 4294901760
    %v801 = vsub.f32 %v148, %v800
    %802 = vmatpush.msra.mxu0 %v801
    %v803 = vand.u32 %v146, 4294901760
    %v804 = vsub.f32 %v146, %v803
    %805 = vmatpush.msra.mxu0 %v804
    %v806 = vand.u32 %v144, 4294901760
    %v807 = vsub.f32 %v144, %v806
    %808 = vmatpush.msra.mxu0 %v807
    %v809 = vand.u32 %v142, 4294901760
    %v810 = vsub.f32 %v142, %v809
    %811 = vmatpush.msra.mxu0 %v810
    %v812 = vand.u32 %v140, 4294901760
    %v813 = vsub.f32 %v140, %v812
    %814 = vmatpush.msra.mxu0 %v813
    %v815 = vand.u32 %v138, 4294901760
    %v816 = vsub.f32 %v138, %v815
    %817 = vmatpush.msra.mxu0 %v816
    %v818 = vand.u32 %v136, 4294901760
    %v819 = vsub.f32 %v136, %v818
    %820 = vmatpush.msra.mxu0 %v819
    %v821 = vand.u32 %v134, 4294901760
    %v822 = vsub.f32 %v134, %v821
    %823 = vmatpush.msra.mxu0 %v822
    %v824 = vand.u32 %v132, 4294901760
    %v825 = vsub.f32 %v132, %v824
    %826 = vmatpush.msra.mxu0 %v825
    %v827 = vand.u32 %v130, 4294901760
    %v828 = vsub.f32 %v130, %v827
    %829 = vmatpush.msra.mxu0 %v828
    %v830 = vand.u32 %v128, 4294901760
    %v831 = vsub.f32 %v128, %v830
    %832 = vmatpush.msra.mxu0 %v831
    %v833 = vand.u32 %v90, 4294901760
    %v834 = vsub.f32 %v90, %v833
    %835 = vmatmul.f32.gmra.mxu0 %v834
    %v836 = vpop.f32.mrf.mxu0
    %v837 = vadd.f32 %v783, %v836
    %838 = vdwg.mxu0
    %v839 = vand.u32 %v158, 4294901760
    %840 = vmatpush.msra.mxu0 %v839
    %v841 = vand.u32 %v156, 4294901760
    %842 = vmatpush.msra.mxu0 %v841
    %v843 = vand.u32 %v154, 4294901760
    %844 = vmatpush.msra.mxu0 %v843
    %v845 = vand.u32 %v152, 4294901760
    %846 = vmatpush.msra.mxu0 %v845
    %v847 = vand.u32 %v150, 4294901760
    %848 = vmatpush.msra.mxu0 %v847
    %v849 = vand.u32 %v148, 4294901760
    %850 = vmatpush.msra.mxu0 %v849
    %v851 = vand.u32 %v146, 4294901760
    %852 = vmatpush.msra.mxu0 %v851
    %v853 = vand.u32 %v144, 4294901760
    %854 = vmatpush.msra.mxu0 %v853
    %v855 = vand.u32 %v142, 4294901760
    %856 = vmatpush.msra.mxu0 %v855
    %v857 = vand.u32 %v140, 4294901760
    %858 = vmatpush.msra.mxu0 %v857
    %v859 = vand.u32 %v138, 4294901760
    %860 = vmatpush.msra.mxu0 %v859
    %v861 = vand.u32 %v136, 4294901760
    %862 = vmatpush.msra.mxu0 %v861
    %v863 = vand.u32 %v134, 4294901760
    %864 = vmatpush.msra.mxu0 %v863
    %v865 = vand.u32 %v132, 4294901760
    %866 = vmatpush.msra.mxu0 %v865
    %v867 = vand.u32 %v130, 4294901760
    %868 = vmatpush.msra.mxu0 %v867
    %v869 = vand.u32 %v128, 4294901760
    %870 = vmatpush.msra.mxu0 %v869
    %v871 = vand.u32 %v90, 4294901760
    %v872 = vsub.f32 %v90, %v871
    %v873 = vand.u32 %v872, 4294901760
    %874 = vmatmul.f32.gmra.mxu0 %v873
    %v875 = vpop.f32.mrf.mxu0
    %v876 = vadd.f32 %v837, %v875
    %877 = vdwg.mxu0
    %v878 = vand.u32 %v158, 4294901760
    %v879 = vsub.f32 %v158, %v878
    %v880 = vand.u32 %v879, 4294901760
    %881 = vmatpush.msra.mxu0 %v880
    %v882 = vand.u32 %v156, 4294901760
    %v883 = vsub.f32 %v156, %v882
    %v884 = vand.u32 %v883, 4294901760
    %885 = vmatpush.msra.mxu0 %v884
    %v886 = vand.u32 %v154, 4294901760
    %v887 = vsub.f32 %v154, %v886
    %v888 = vand.u32 %v887, 4294901760
    %889 = vmatpush.msra.mxu0 %v888
    %v890 = vand.u32 %v152, 4294901760
    %v891 = vsub.f32 %v152, %v890
    %v892 = vand.u32 %v891, 4294901760
    %893 = vmatpush.msra.mxu0 %v892
    %v894 = vand.u32 %v150, 4294901760
    %v895 = vsub.f32 %v150, %v894
    %v896 = vand.u32 %v895, 4294901760
    %897 = vmatpush.msra.mxu0 %v896
    %v898 = vand.u32 %v148, 4294901760
    %v899 = vsub.f32 %v148, %v898
    %v900 = vand.u32 %v899, 4294901760
    %901 = vmatpush.msra.mxu0 %v900
    %v902 = vand.u32 %v146, 4294901760
    %v903 = vsub.f32 %v146, %v902
    %v904 = vand.u32 %v903, 4294901760
    %905 = vmatpush.msra.mxu0 %v904
    %v906 = vand.u32 %v144, 4294901760
    %v907 = vsub.f32 %v144, %v906
    %v908 = vand.u32 %v907, 4294901760
    %909 = vmatpush.msra.mxu0 %v908
    %v910 = vand.u32 %v142, 4294901760
    %v911 = vsub.f32 %v142, %v910
    %v912 = vand.u32 %v911, 4294901760
    %913 = vmatpush.msra.mxu0 %v912
    %v914 = vand.u32 %v140, 4294901760
    %v915 = vsub.f32 %v140, %v914
    %v916 = vand.u32 %v915, 4294901760
    %917 = vmatpush.msra.mxu0 %v916
    %v918 = vand.u32 %v138, 4294901760
    %v919 = vsub.f32 %v138, %v918
    %v920 = vand.u32 %v919, 4294901760
    %921 = vmatpush.msra.mxu0 %v920
    %v922 = vand.u32 %v136, 4294901760
    %v923 = vsub.f32 %v136, %v922
    %v924 = vand.u32 %v923, 4294901760
    %925 = vmatpush.msra.mxu0 %v924
    %v926 = vand.u32 %v134, 4294901760
    %v927 = vsub.f32 %v134, %v926
    %v928 = vand.u32 %v927, 4294901760
    %929 = vmatpush.msra.mxu0 %v928
    %v930 = vand.u32 %v132, 4294901760
    %v931 = vsub.f32 %v132, %v930
    %v932 = vand.u32 %v931, 4294901760
    %933 = vmatpush.msra.mxu0 %v932
    %v934 = vand.u32 %v130, 4294901760
    %v935 = vsub.f32 %v130, %v934
    %v936 = vand.u32 %v935, 4294901760
    %937 = vmatpush.msra.mxu0 %v936
    %v938 = vand.u32 %v128, 4294901760
    %v939 = vsub.f32 %v128, %v938
    %v940 = vand.u32 %v939, 4294901760
    %941 = vmatpush.msra.mxu0 %v940
    %v942 = vand.u32 %v90, 4294901760
    %943 = vmatmul.f32.gmra.mxu0 %v942
    %v944 = vpop.f32.mrf.mxu0
    %v945 = vadd.f32 %v876, %v944
    %946 = vdwg.mxu0
    %v947 = vand.u32 %v158, 4294901760
    %948 = vmatpush.msra.mxu0 %v947
    %v949 = vand.u32 %v156, 4294901760
    %950 = vmatpush.msra.mxu0 %v949
    %v951 = vand.u32 %v154, 4294901760
    %952 = vmatpush.msra.mxu0 %v951
    %v953 = vand.u32 %v152, 4294901760
    %954 = vmatpush.msra.mxu0 %v953
    %v955 = vand.u32 %v150, 4294901760
    %956 = vmatpush.msra.mxu0 %v955
    %v957 = vand.u32 %v148, 4294901760
    %958 = vmatpush.msra.mxu0 %v957
    %v959 = vand.u32 %v146, 4294901760
    %960 = vmatpush.msra.mxu0 %v959
    %v961 = vand.u32 %v144, 4294901760
    %962 = vmatpush.msra.mxu0 %v961
    %v963 = vand.u32 %v142, 4294901760
    %964 = vmatpush.msra.mxu0 %v963
    %v965 = vand.u32 %v140, 4294901760
    %966 = vmatpush.msra.mxu0 %v965
    %v967 = vand.u32 %v138, 4294901760
    %968 = vmatpush.msra.mxu0 %v967
    %v969 = vand.u32 %v136, 4294901760
    %970 = vmatpush.msra.mxu0 %v969
    %v971 = vand.u32 %v134, 4294901760
    %972 = vmatpush.msra.mxu0 %v971
    %v973 = vand.u32 %v132, 4294901760
    %974 = vmatpush.msra.mxu0 %v973
    %v975 = vand.u32 %v130, 4294901760
    %976 = vmatpush.msra.mxu0 %v975
    %v977 = vand.u32 %v128, 4294901760
    %978 = vmatpush.msra.mxu0 %v977
    %v979 = vand.u32 %v90, 4294901760
    %980 = vmatmul.f32.gmra.mxu0 %v979
    %v981 = vpop.f32.mrf.mxu0
    %v982 = vadd.f32 %v945, %v981
    %983 = vdwg.mxu0
    %v984 = vand.u32 %v190, 4294901760
    %985 = vmatpush.msra.mxu0 %v984
    %v986 = vand.u32 %v188, 4294901760
    %987 = vmatpush.msra.mxu0 %v986
    %v988 = vand.u32 %v186, 4294901760
    %989 = vmatpush.msra.mxu0 %v988
    %v990 = vand.u32 %v184, 4294901760
    %991 = vmatpush.msra.mxu0 %v990
    %v992 = vand.u32 %v182, 4294901760
    %993 = vmatpush.msra.mxu0 %v992
    %v994 = vand.u32 %v180, 4294901760
    %995 = vmatpush.msra.mxu0 %v994
    %v996 = vand.u32 %v178, 4294901760
    %997 = vmatpush.msra.mxu0 %v996
    %v998 = vand.u32 %v176, 4294901760
    %999 = vmatpush.msra.mxu0 %v998
    %v1000 = vand.u32 %v174, 4294901760
    %1001 = vmatpush.msra.mxu0 %v1000
    %v1002 = vand.u32 %v172, 4294901760
    %1003 = vmatpush.msra.mxu0 %v1002
    %v1004 = vand.u32 %v170, 4294901760
    %1005 = vmatpush.msra.mxu0 %v1004
    %v1006 = vand.u32 %v168, 4294901760
    %1007 = vmatpush.msra.mxu0 %v1006
    %v1008 = vand.u32 %v166, 4294901760
    %1009 = vmatpush.msra.mxu0 %v1008
    %v1010 = vand.u32 %v164, 4294901760
    %1011 = vmatpush.msra.mxu0 %v1010
    %v1012 = vand.u32 %v162, 4294901760
    %1013 = vmatpush.msra.mxu0 %v1012
    %v1014 = vand.u32 %v160, 4294901760
    %1015 = vmatpush.msra.mxu0 %v1014
    %v1016 = vand.u32 %v91, 4294901760
    %v1017 = vsub.f32 %v91, %v1016
    %v1018 = vand.u32 %v1017, 4294901760
    %v1019 = vsub.f32 %v1017, %v1018
    %v1020 = vand.u32 %v1019, 4294901760
    %1021 = vmatmul.f32.gmra.mxu0 %v1020
    %v1022 = vpop.f32.mrf.mxu0
    %v1023 = vadd.f32 %v982, %v1022
    %1024 = vdwg.mxu0
    %v1025 = vand.u32 %v190, 4294901760
    %v1026 = vsub.f32 %v190, %v1025
    %v1027 = vand.u32 %v1026, 4294901760
    %v1028 = vsub.f32 %v1026, %v1027
    %v1029 = vand.u32 %v1028, 4294901760
    %1030 = vmatpush.msra.mxu0 %v1029
    %v1031 = vand.u32 %v188, 4294901760
    %v1032 = vsub.f32 %v188, %v1031
    %v1033 = vand.u32 %v1032, 4294901760
    %v1034 = vsub.f32 %v1032, %v1033
    %v1035 = vand.u32 %v1034, 4294901760
    %1036 = vmatpush.msra.mxu0 %v1035
    %v1037 = vand.u32 %v186, 4294901760
    %v1038 = vsub.f32 %v186, %v1037
    %v1039 = vand.u32 %v1038, 4294901760
    %v1040 = vsub.f32 %v1038, %v1039
    %v1041 = vand.u32 %v1040, 4294901760
    %1042 = vmatpush.msra.mxu0 %v1041
    %v1043 = vand.u32 %v184, 4294901760
    %v1044 = vsub.f32 %v184, %v1043
    %v1045 = vand.u32 %v1044, 4294901760
    %v1046 = vsub.f32 %v1044, %v1045
    %v1047 = vand.u32 %v1046, 4294901760
    %1048 = vmatpush.msra.mxu0 %v1047
    %v1049 = vand.u32 %v182, 4294901760
    %v1050 = vsub.f32 %v182, %v1049
    %v1051 = vand.u32 %v1050, 4294901760
    %v1052 = vsub.f32 %v1050, %v1051
    %v1053 = vand.u32 %v1052, 4294901760
    %1054 = vmatpush.msra.mxu0 %v1053
    %v1055 = vand.u32 %v180, 4294901760
    %v1056 = vsub.f32 %v180, %v1055
    %v1057 = vand.u32 %v1056, 4294901760
    %v1058 = vsub.f32 %v1056, %v1057
    %v1059 = vand.u32 %v1058, 4294901760
    %1060 = vmatpush.msra.mxu0 %v1059
    %v1061 = vand.u32 %v178, 4294901760
    %v1062 = vsub.f32 %v178, %v1061
    %v1063 = vand.u32 %v1062, 4294901760
    %v1064 = vsub.f32 %v1062, %v1063
    %v1065 = vand.u32 %v1064, 4294901760
    %1066 = vmatpush.msra.mxu0 %v1065
    %v1067 = vand.u32 %v176, 4294901760
    %v1068 = vsub.f32 %v176, %v1067
    %v1069 = vand.u32 %v1068, 4294901760
    %v1070 = vsub.f32 %v1068, %v1069
    %v1071 = vand.u32 %v1070, 4294901760
    %1072 = vmatpush.msra.mxu0 %v1071
    %v1073 = vand.u32 %v174, 4294901760
    %v1074 = vsub.f32 %v174, %v1073
    %v1075 = vand.u32 %v1074, 4294901760
    %v1076 = vsub.f32 %v1074, %v1075
    %v1077 = vand.u32 %v1076, 4294901760
    %1078 = vmatpush.msra.mxu0 %v1077
    %v1079 = vand.u32 %v172, 4294901760
    %v1080 = vsub.f32 %v172, %v1079
    %v1081 = vand.u32 %v1080, 4294901760
    %v1082 = vsub.f32 %v1080, %v1081
    %v1083 = vand.u32 %v1082, 4294901760
    %1084 = vmatpush.msra.mxu0 %v1083
    %v1085 = vand.u32 %v170, 4294901760
    %v1086 = vsub.f32 %v170, %v1085
    %v1087 = vand.u32 %v1086, 4294901760
    %v1088 = vsub.f32 %v1086, %v1087
    %v1089 = vand.u32 %v1088, 4294901760
    %1090 = vmatpush.msra.mxu0 %v1089
    %v1091 = vand.u32 %v168, 4294901760
    %v1092 = vsub.f32 %v168, %v1091
    %v1093 = vand.u32 %v1092, 4294901760
    %v1094 = vsub.f32 %v1092, %v1093
    %v1095 = vand.u32 %v1094, 4294901760
    %1096 = vmatpush.msra.mxu0 %v1095
    %v1097 = vand.u32 %v166, 4294901760
    %v1098 = vsub.f32 %v166, %v1097
    %v1099 = vand.u32 %v1098, 4294901760
    %v1100 = vsub.f32 %v1098, %v1099
    %v1101 = vand.u32 %v1100, 4294901760
    %1102 = vmatpush.msra.mxu0 %v1101
    %v1103 = vand.u32 %v164, 4294901760
    %v1104 = vsub.f32 %v164, %v1103
    %v1105 = vand.u32 %v1104, 4294901760
    %v1106 = vsub.f32 %v1104, %v1105
    %v1107 = vand.u32 %v1106, 4294901760
    %1108 = vmatpush.msra.mxu0 %v1107
    %v1109 = vand.u32 %v162, 4294901760
    %v1110 = vsub.f32 %v162, %v1109
    %v1111 = vand.u32 %v1110, 4294901760
    %v1112 = vsub.f32 %v1110, %v1111
    %v1113 = vand.u32 %v1112, 4294901760
    %1114 = vmatpush.msra.mxu0 %v1113
    %v1115 = vand.u32 %v160, 4294901760
    %v1116 = vsub.f32 %v160, %v1115
    %v1117 = vand.u32 %v1116, 4294901760
    %v1118 = vsub.f32 %v1116, %v1117
    %v1119 = vand.u32 %v1118, 4294901760
    %1120 = vmatpush.msra.mxu0 %v1119
    %v1121 = vand.u32 %v91, 4294901760
    %1122 = vmatmul.f32.gmra.mxu0 %v1121
    %v1123 = vpop.f32.mrf.mxu0
    %v1124 = vadd.f32 %v1023, %v1123
    %1125 = vdwg.mxu0
    %v1126 = vand.u32 %v190, 4294901760
    %v1127 = vsub.f32 %v190, %v1126
    %1128 = vmatpush.msra.mxu0 %v1127
    %v1129 = vand.u32 %v188, 4294901760
    %v1130 = vsub.f32 %v188, %v1129
    %1131 = vmatpush.msra.mxu0 %v1130
    %v1132 = vand.u32 %v186, 4294901760
    %v1133 = vsub.f32 %v186, %v1132
    %1134 = vmatpush.msra.mxu0 %v1133
    %v1135 = vand.u32 %v184, 4294901760
    %v1136 = vsub.f32 %v184, %v1135
    %1137 = vmatpush.msra.mxu0 %v1136
    %v1138 = vand.u32 %v182, 4294901760
    %v1139 = vsub.f32 %v182, %v1138
    %1140 = vmatpush.msra.mxu0 %v1139
    %v1141 = vand.u32 %v180, 4294901760
    %v1142 = vsub.f32 %v180, %v1141
    %1143 = vmatpush.msra.mxu0 %v1142
    %v1144 = vand.u32 %v178, 4294901760
    %v1145 = vsub.f32 %v178, %v1144
    %1146 = vmatpush.msra.mxu0 %v1145
    %v1147 = vand.u32 %v176, 4294901760
    %v1148 = vsub.f32 %v176, %v1147
    %1149 = vmatpush.msra.mxu0 %v1148
    %v1150 = vand.u32 %v174, 4294901760
    %v1151 = vsub.f32 %v174, %v1150
    %1152 = vmatpush.msra.mxu0 %v1151
    %v1153 = vand.u32 %v172, 4294901760
    %v1154 = vsub.f32 %v172, %v1153
    %1155 = vmatpush.msra.mxu0 %v1154
    %v1156 = vand.u32 %v170, 4294901760
    %v1157 = vsub.f32 %v170, %v1156
    %1158 = vmatpush.msra.mxu0 %v1157
    %v1159 = vand.u32 %v168, 4294901760
    %v1160 = vsub.f32 %v168, %v1159
    %1161 = vmatpush.msra.mxu0 %v1160
    %v1162 = vand.u32 %v166, 4294901760
    %v1163 = vsub.f32 %v166, %v1162
    %1164 = vmatpush.msra.mxu0 %v1163
    %v1165 = vand.u32 %v164, 4294901760
    %v1166 = vsub.f32 %v164, %v1165
    %1167 = vmatpush.msra.mxu0 %v1166
    %v1168 = vand.u32 %v162, 4294901760
    %v1169 = vsub.f32 %v162, %v1168
    %1170 = vmatpush.msra.mxu0 %v1169
    %v1171 = vand.u32 %v160, 4294901760
    %v1172 = vsub.f32 %v160, %v1171
    %1173 = vmatpush.msra.mxu0 %v1172
    %v1174 = vand.u32 %v91, 4294901760
    %v1175 = vsub.f32 %v91, %v1174
    %1176 = vmatmul.f32.gmra.mxu0 %v1175
    %v1177 = vpop.f32.mrf.mxu0
    %v1178 = vadd.f32 %v1124, %v1177
    %1179 = vdwg.mxu0
    %v1180 = vand.u32 %v190, 4294901760
    %1181 = vmatpush.msra.mxu0 %v1180
    %v1182 = vand.u32 %v188, 4294901760
    %1183 = vmatpush.msra.mxu0 %v1182
    %v1184 = vand.u32 %v186, 4294901760
    %1185 = vmatpush.msra.mxu0 %v1184
    %v1186 = vand.u32 %v184, 4294901760
    %1187 = vmatpush.msra.mxu0 %v1186
    %v1188 = vand.u32 %v182, 4294901760
    %1189 = vmatpush.msra.mxu0 %v1188
    %v1190 = vand.u32 %v180, 4294901760
    %1191 = vmatpush.msra.mxu0 %v1190
    %v1192 = vand.u32 %v178, 4294901760
    %1193 = vmatpush.msra.mxu0 %v1192
    %v1194 = vand.u32 %v176, 4294901760
    %1195 = vmatpush.msra.mxu0 %v1194
    %v1196 = vand.u32 %v174, 4294901760
    %1197 = vmatpush.msra.mxu0 %v1196
    %v1198 = vand.u32 %v172, 4294901760
    %1199 = vmatpush.msra.mxu0 %v1198
    %v1200 = vand.u32 %v170, 4294901760
    %1201 = vmatpush.msra.mxu0 %v1200
    %v1202 = vand.u32 %v168, 4294901760
    %1203 = vmatpush.msra.mxu0 %v1202
    %v1204 = vand.u32 %v166, 4294901760
    %1205 = vmatpush.msra.mxu0 %v1204
    %v1206 = vand.u32 %v164, 4294901760
    %1207 = vmatpush.msra.mxu0 %v1206
    %v1208 = vand.u32 %v162, 4294901760
    %1209 = vmatpush.msra.mxu0 %v1208
    %v1210 = vand.u32 %v160, 4294901760
    %1211 = vmatpush.msra.mxu0 %v1210
    %v1212 = vand.u32 %v91, 4294901760
    %v1213 = vsub.f32 %v91, %v1212
    %v1214 = vand.u32 %v1213, 4294901760
    %1215 = vmatmul.f32.gmra.mxu0 %v1214
    %v1216 = vpop.f32.mrf.mxu0
    %v1217 = vadd.f32 %v1178, %v1216
    %1218 = vdwg.mxu0
    %v1219 = vand.u32 %v190, 4294901760
    %v1220 = vsub.f32 %v190, %v1219
    %v1221 = vand.u32 %v1220, 4294901760
    %1222 = vmatpush.msra.mxu0 %v1221
    %v1223 = vand.u32 %v188, 4294901760
    %v1224 = vsub.f32 %v188, %v1223
    %v1225 = vand.u32 %v1224, 4294901760
    %1226 = vmatpush.msra.mxu0 %v1225
    %v1227 = vand.u32 %v186, 4294901760
    %v1228 = vsub.f32 %v186, %v1227
    %v1229 = vand.u32 %v1228, 4294901760
    %1230 = vmatpush.msra.mxu0 %v1229
    %v1231 = vand.u32 %v184, 4294901760
    %v1232 = vsub.f32 %v184, %v1231
    %v1233 = vand.u32 %v1232, 4294901760
    %1234 = vmatpush.msra.mxu0 %v1233
    %v1235 = vand.u32 %v182, 4294901760
    %v1236 = vsub.f32 %v182, %v1235
    %v1237 = vand.u32 %v1236, 4294901760
    %1238 = vmatpush.msra.mxu0 %v1237
    %v1239 = vand.u32 %v180, 4294901760
    %v1240 = vsub.f32 %v180, %v1239
    %v1241 = vand.u32 %v1240, 4294901760
    %1242 = vmatpush.msra.mxu0 %v1241
    %v1243 = vand.u32 %v178, 4294901760
    %v1244 = vsub.f32 %v178, %v1243
    %v1245 = vand.u32 %v1244, 4294901760
    %1246 = vmatpush.msra.mxu0 %v1245
    %v1247 = vand.u32 %v176, 4294901760
    %v1248 = vsub.f32 %v176, %v1247
    %v1249 = vand.u32 %v1248, 4294901760
    %1250 = vmatpush.msra.mxu0 %v1249
    %v1251 = vand.u32 %v174, 4294901760
    %v1252 = vsub.f32 %v174, %v1251
    %v1253 = vand.u32 %v1252, 4294901760
    %1254 = vmatpush.msra.mxu0 %v1253
    %v1255 = vand.u32 %v172, 4294901760
    %v1256 = vsub.f32 %v172, %v1255
    %v1257 = vand.u32 %v1256, 4294901760
    %1258 = vmatpush.msra.mxu0 %v1257
    %v1259 = vand.u32 %v170, 4294901760
    %v1260 = vsub.f32 %v170, %v1259
    %v1261 = vand.u32 %v1260, 4294901760
    %1262 = vmatpush.msra.mxu0 %v1261
    %v1263 = vand.u32 %v168, 4294901760
    %v1264 = vsub.f32 %v168, %v1263
    %v1265 = vand.u32 %v1264, 4294901760
    %1266 = vmatpush.msra.mxu0 %v1265
    %v1267 = vand.u32 %v166, 4294901760
    %v1268 = vsub.f32 %v166, %v1267
    %v1269 = vand.u32 %v1268, 4294901760
    %1270 = vmatpush.msra.mxu0 %v1269
    %v1271 = vand.u32 %v164, 4294901760
    %v1272 = vsub.f32 %v164, %v1271
    %v1273 = vand.u32 %v1272, 4294901760
    %1274 = vmatpush.msra.mxu0 %v1273
    %v1275 = vand.u32 %v162, 4294901760
    %v1276 = vsub.f32 %v162, %v1275
    %v1277 = vand.u32 %v1276, 4294901760
    %1278 = vmatpush.msra.mxu0 %v1277
    %v1279 = vand.u32 %v160, 4294901760
    %v1280 = vsub.f32 %v160, %v1279
    %v1281 = vand.u32 %v1280, 4294901760
    %1282 = vmatpush.msra.mxu0 %v1281
    %v1283 = vand.u32 %v91, 4294901760
    %1284 = vmatmul.f32.gmra.mxu0 %v1283
    %v1285 = vpop.f32.mrf.mxu0
    %v1286 = vadd.f32 %v1217, %v1285
    %1287 = vdwg.mxu0
    %v1288 = vand.u32 %v190, 4294901760
    %1289 = vmatpush.msra.mxu0 %v1288
    %v1290 = vand.u32 %v188, 4294901760
    %1291 = vmatpush.msra.mxu0 %v1290
    %v1292 = vand.u32 %v186, 4294901760
    %1293 = vmatpush.msra.mxu0 %v1292
    %v1294 = vand.u32 %v184, 4294901760
    %1295 = vmatpush.msra.mxu0 %v1294
    %v1296 = vand.u32 %v182, 4294901760
    %1297 = vmatpush.msra.mxu0 %v1296
    %v1298 = vand.u32 %v180, 4294901760
    %1299 = vmatpush.msra.mxu0 %v1298
    %v1300 = vand.u32 %v178, 4294901760
    %1301 = vmatpush.msra.mxu0 %v1300
    %v1302 = vand.u32 %v176, 4294901760
    %1303 = vmatpush.msra.mxu0 %v1302
    %v1304 = vand.u32 %v174, 4294901760
    %1305 = vmatpush.msra.mxu0 %v1304
    %v1306 = vand.u32 %v172, 4294901760
    %1307 = vmatpush.msra.mxu0 %v1306
    %v1308 = vand.u32 %v170, 4294901760
    %1309 = vmatpush.msra.mxu0 %v1308
    %v1310 = vand.u32 %v168, 4294901760
    %1311 = vmatpush.msra.mxu0 %v1310
    %v1312 = vand.u32 %v166, 4294901760
    %1313 = vmatpush.msra.mxu0 %v1312
    %v1314 = vand.u32 %v164, 4294901760
    %1315 = vmatpush.msra.mxu0 %v1314
    %v1316 = vand.u32 %v162, 4294901760
    %1317 = vmatpush.msra.mxu0 %v1316
    %v1318 = vand.u32 %v160, 4294901760
    %1319 = vmatpush.msra.mxu0 %v1318
    %v1320 = vand.u32 %v91, 4294901760
    %1321 = vmatmul.f32.gmra.mxu0 %v1320
    %v1322 = vpop.f32.mrf.mxu0
    %v1323 = vadd.f32 %v1286, %v1322
    %1324 = vdwg.mxu0
    %v1325 = vand.u32 %v222, 4294901760
    %1326 = vmatpush.msra.mxu0 %v1325
    %v1327 = vand.u32 %v220, 4294901760
    %1328 = vmatpush.msra.mxu0 %v1327
    %v1329 = vand.u32 %v218, 4294901760
    %1330 = vmatpush.msra.mxu0 %v1329
    %v1331 = vand.u32 %v216, 4294901760
    %1332 = vmatpush.msra.mxu0 %v1331
    %v1333 = vand.u32 %v214, 4294901760
    %1334 = vmatpush.msra.mxu0 %v1333
    %v1335 = vand.u32 %v212, 4294901760
    %1336 = vmatpush.msra.mxu0 %v1335
    %v1337 = vand.u32 %v210, 4294901760
    %1338 = vmatpush.msra.mxu0 %v1337
    %v1339 = vand.u32 %v208, 4294901760
    %1340 = vmatpush.msra.mxu0 %v1339
    %v1341 = vand.u32 %v206, 4294901760
    %1342 = vmatpush.msra.mxu0 %v1341
    %v1343 = vand.u32 %v204, 4294901760
    %1344 = vmatpush.msra.mxu0 %v1343
    %v1345 = vand.u32 %v202, 4294901760
    %1346 = vmatpush.msra.mxu0 %v1345
    %v1347 = vand.u32 %v200, 4294901760
    %1348 = vmatpush.msra.mxu0 %v1347
    %v1349 = vand.u32 %v198, 4294901760
    %1350 = vmatpush.msra.mxu0 %v1349
    %v1351 = vand.u32 %v196, 4294901760
    %1352 = vmatpush.msra.mxu0 %v1351
    %v1353 = vand.u32 %v194, 4294901760
    %1354 = vmatpush.msra.mxu0 %v1353
    %v1355 = vand.u32 %v192, 4294901760
    %1356 = vmatpush.msra.mxu0 %v1355
    %v1357 = vand.u32 %v92, 4294901760
    %v1358 = vsub.f32 %v92, %v1357
    %v1359 = vand.u32 %v1358, 4294901760
    %v1360 = vsub.f32 %v1358, %v1359
    %v1361 = vand.u32 %v1360, 4294901760
    %1362 = vmatmul.f32.gmra.mxu0 %v1361
    %v1363 = vpop.f32.mrf.mxu0
    %v1364 = vadd.f32 %v1323, %v1363
    %1365 = vdwg.mxu0
    %v1366 = vand.u32 %v222, 4294901760
    %v1367 = vsub.f32 %v222, %v1366
    %v1368 = vand.u32 %v1367, 4294901760
    %v1369 = vsub.f32 %v1367, %v1368
    %v1370 = vand.u32 %v1369, 4294901760
    %1371 = vmatpush.msra.mxu0 %v1370
    %v1372 = vand.u32 %v220, 4294901760
    %v1373 = vsub.f32 %v220, %v1372
    %v1374 = vand.u32 %v1373, 4294901760
    %v1375 = vsub.f32 %v1373, %v1374
    %v1376 = vand.u32 %v1375, 4294901760
    %1377 = vmatpush.msra.mxu0 %v1376
    %v1378 = vand.u32 %v218, 4294901760
    %v1379 = vsub.f32 %v218, %v1378
    %v1380 = vand.u32 %v1379, 4294901760
    %v1381 = vsub.f32 %v1379, %v1380
    %v1382 = vand.u32 %v1381, 4294901760
    %1383 = vmatpush.msra.mxu0 %v1382
    %v1384 = vand.u32 %v216, 4294901760
    %v1385 = vsub.f32 %v216, %v1384
    %v1386 = vand.u32 %v1385, 4294901760
    %v1387 = vsub.f32 %v1385, %v1386
    %v1388 = vand.u32 %v1387, 4294901760
    %1389 = vmatpush.msra.mxu0 %v1388
    %v1390 = vand.u32 %v214, 4294901760
    %v1391 = vsub.f32 %v214, %v1390
    %v1392 = vand.u32 %v1391, 4294901760
    %v1393 = vsub.f32 %v1391, %v1392
    %v1394 = vand.u32 %v1393, 4294901760
    %1395 = vmatpush.msra.mxu0 %v1394
    %v1396 = vand.u32 %v212, 4294901760
    %v1397 = vsub.f32 %v212, %v1396
    %v1398 = vand.u32 %v1397, 4294901760
    %v1399 = vsub.f32 %v1397, %v1398
    %v1400 = vand.u32 %v1399, 4294901760
    %1401 = vmatpush.msra.mxu0 %v1400
    %v1402 = vand.u32 %v210, 4294901760
    %v1403 = vsub.f32 %v210, %v1402
    %v1404 = vand.u32 %v1403, 4294901760
    %v1405 = vsub.f32 %v1403, %v1404
    %v1406 = vand.u32 %v1405, 4294901760
    %1407 = vmatpush.msra.mxu0 %v1406
    %v1408 = vand.u32 %v208, 4294901760
    %v1409 = vsub.f32 %v208, %v1408
    %v1410 = vand.u32 %v1409, 4294901760
    %v1411 = vsub.f32 %v1409, %v1410
    %v1412 = vand.u32 %v1411, 4294901760
    %1413 = vmatpush.msra.mxu0 %v1412
    %v1414 = vand.u32 %v206, 4294901760
    %v1415 = vsub.f32 %v206, %v1414
    %v1416 = vand.u32 %v1415, 4294901760
    %v1417 = vsub.f32 %v1415, %v1416
    %v1418 = vand.u32 %v1417, 4294901760
    %1419 = vmatpush.msra.mxu0 %v1418
    %v1420 = vand.u32 %v204, 4294901760
    %v1421 = vsub.f32 %v204, %v1420
    %v1422 = vand.u32 %v1421, 4294901760
    %v1423 = vsub.f32 %v1421, %v1422
    %v1424 = vand.u32 %v1423, 4294901760
    %1425 = vmatpush.msra.mxu0 %v1424
    %v1426 = vand.u32 %v202, 4294901760
    %v1427 = vsub.f32 %v202, %v1426
    %v1428 = vand.u32 %v1427, 4294901760
    %v1429 = vsub.f32 %v1427, %v1428
    %v1430 = vand.u32 %v1429, 4294901760
    %1431 = vmatpush.msra.mxu0 %v1430
    %v1432 = vand.u32 %v200, 4294901760
    %v1433 = vsub.f32 %v200, %v1432
    %v1434 = vand.u32 %v1433, 4294901760
    %v1435 = vsub.f32 %v1433, %v1434
    %v1436 = vand.u32 %v1435, 4294901760
    %1437 = vmatpush.msra.mxu0 %v1436
    %v1438 = vand.u32 %v198, 4294901760
    %v1439 = vsub.f32 %v198, %v1438
    %v1440 = vand.u32 %v1439, 4294901760
    %v1441 = vsub.f32 %v1439, %v1440
    %v1442 = vand.u32 %v1441, 4294901760
    %1443 = vmatpush.msra.mxu0 %v1442
    %v1444 = vand.u32 %v196, 4294901760
    %v1445 = vsub.f32 %v196, %v1444
    %v1446 = vand.u32 %v1445, 4294901760
    %v1447 = vsub.f32 %v1445, %v1446
    %v1448 = vand.u32 %v1447, 4294901760
    %1449 = vmatpush.msra.mxu0 %v1448
    %v1450 = vand.u32 %v194, 4294901760
    %v1451 = vsub.f32 %v194, %v1450
    %v1452 = vand.u32 %v1451, 4294901760
    %v1453 = vsub.f32 %v1451, %v1452
    %v1454 = vand.u32 %v1453, 4294901760
    %1455 = vmatpush.msra.mxu0 %v1454
    %v1456 = vand.u32 %v192, 4294901760
    %v1457 = vsub.f32 %v192, %v1456
    %v1458 = vand.u32 %v1457, 4294901760
    %v1459 = vsub.f32 %v1457, %v1458
    %v1460 = vand.u32 %v1459, 4294901760
    %1461 = vmatpush.msra.mxu0 %v1460
    %v1462 = vand.u32 %v92, 4294901760
    %1463 = vmatmul.f32.gmra.mxu0 %v1462
    %v1464 = vpop.f32.mrf.mxu0
    %v1465 = vadd.f32 %v1364, %v1464
    %1466 = vdwg.mxu0
    %v1467 = vand.u32 %v222, 4294901760
    %v1468 = vsub.f32 %v222, %v1467
    %1469 = vmatpush.msra.mxu0 %v1468
    %v1470 = vand.u32 %v220, 4294901760
    %v1471 = vsub.f32 %v220, %v1470
    %1472 = vmatpush.msra.mxu0 %v1471
    %v1473 = vand.u32 %v218, 4294901760
    %v1474 = vsub.f32 %v218, %v1473
    %1475 = vmatpush.msra.mxu0 %v1474
    %v1476 = vand.u32 %v216, 4294901760
    %v1477 = vsub.f32 %v216, %v1476
    %1478 = vmatpush.msra.mxu0 %v1477
    %v1479 = vand.u32 %v214, 4294901760
    %v1480 = vsub.f32 %v214, %v1479
    %1481 = vmatpush.msra.mxu0 %v1480
    %v1482 = vand.u32 %v212, 4294901760
    %v1483 = vsub.f32 %v212, %v1482
    %1484 = vmatpush.msra.mxu0 %v1483
    %v1485 = vand.u32 %v210, 4294901760
    %v1486 = vsub.f32 %v210, %v1485
    %1487 = vmatpush.msra.mxu0 %v1486
    %v1488 = vand.u32 %v208, 4294901760
    %v1489 = vsub.f32 %v208, %v1488
    %1490 = vmatpush.msra.mxu0 %v1489
    %v1491 = vand.u32 %v206, 4294901760
    %v1492 = vsub.f32 %v206, %v1491
    %1493 = vmatpush.msra.mxu0 %v1492
    %v1494 = vand.u32 %v204, 4294901760
    %v1495 = vsub.f32 %v204, %v1494
    %1496 = vmatpush.msra.mxu0 %v1495
    %v1497 = vand.u32 %v202, 4294901760
    %v1498 = vsub.f32 %v202, %v1497
    %1499 = vmatpush.msra.mxu0 %v1498
    %v1500 = vand.u32 %v200, 4294901760
    %v1501 = vsub.f32 %v200, %v1500
    %1502 = vmatpush.msra.mxu0 %v1501
    %v1503 = vand.u32 %v198, 4294901760
    %v1504 = vsub.f32 %v198, %v1503
    %1505 = vmatpush.msra.mxu0 %v1504
    %v1506 = vand.u32 %v196, 4294901760
    %v1507 = vsub.f32 %v196, %v1506
    %1508 = vmatpush.msra.mxu0 %v1507
    %v1509 = vand.u32 %v194, 4294901760
    %v1510 = vsub.f32 %v194, %v1509
    %1511 = vmatpush.msra.mxu0 %v1510
    %v1512 = vand.u32 %v192, 4294901760
    %v1513 = vsub.f32 %v192, %v1512
    %1514 = vmatpush.msra.mxu0 %v1513
    %v1515 = vand.u32 %v92, 4294901760
    %v1516 = vsub.f32 %v92, %v1515
    %1517 = vmatmul.f32.gmra.mxu0 %v1516
    %v1518 = vpop.f32.mrf.mxu0
    %v1519 = vadd.f32 %v1465, %v1518
    %1520 = vdwg.mxu0
    %v1521 = vand.u32 %v222, 4294901760
    %1522 = vmatpush.msra.mxu0 %v1521
    %v1523 = vand.u32 %v220, 4294901760
    %1524 = vmatpush.msra.mxu0 %v1523
    %v1525 = vand.u32 %v218, 4294901760
    %1526 = vmatpush.msra.mxu0 %v1525
    %v1527 = vand.u32 %v216, 4294901760
    %1528 = vmatpush.msra.mxu0 %v1527
    %v1529 = vand.u32 %v214, 4294901760
    %1530 = vmatpush.msra.mxu0 %v1529
    %v1531 = vand.u32 %v212, 4294901760
    %1532 = vmatpush.msra.mxu0 %v1531
    %v1533 = vand.u32 %v210, 4294901760
    %1534 = vmatpush.msra.mxu0 %v1533
    %v1535 = vand.u32 %v208, 4294901760
    %1536 = vmatpush.msra.mxu0 %v1535
    %v1537 = vand.u32 %v206, 4294901760
    %1538 = vmatpush.msra.mxu0 %v1537
    %v1539 = vand.u32 %v204, 4294901760
    %1540 = vmatpush.msra.mxu0 %v1539
    %v1541 = vand.u32 %v202, 4294901760
    %1542 = vmatpush.msra.mxu0 %v1541
    %v1543 = vand.u32 %v200, 4294901760
    %1544 = vmatpush.msra.mxu0 %v1543
    %v1545 = vand.u32 %v198, 4294901760
    %1546 = vmatpush.msra.mxu0 %v1545
    %v1547 = vand.u32 %v196, 4294901760
    %1548 = vmatpush.msra.mxu0 %v1547
    %v1549 = vand.u32 %v194, 4294901760
    %1550 = vmatpush.msra.mxu0 %v1549
    %v1551 = vand.u32 %v192, 4294901760
    %1552 = vmatpush.msra.mxu0 %v1551
    %v1553 = vand.u32 %v92, 4294901760
    %v1554 = vsub.f32 %v92, %v1553
    %v1555 = vand.u32 %v1554, 4294901760
    %1556 = vmatmul.f32.gmra.mxu0 %v1555
    %v1557 = vpop.f32.mrf.mxu0
    %v1558 = vadd.f32 %v1519, %v1557
    %1559 = vdwg.mxu0
    %v1560 = vand.u32 %v222, 4294901760
    %v1561 = vsub.f32 %v222, %v1560
    %v1562 = vand.u32 %v1561, 4294901760
    %1563 = vmatpush.msra.mxu0 %v1562
    %v1564 = vand.u32 %v220, 4294901760
    %v1565 = vsub.f32 %v220, %v1564
    %v1566 = vand.u32 %v1565, 4294901760
    %1567 = vmatpush.msra.mxu0 %v1566
    %v1568 = vand.u32 %v218, 4294901760
    %v1569 = vsub.f32 %v218, %v1568
    %v1570 = vand.u32 %v1569, 4294901760
    %1571 = vmatpush.msra.mxu0 %v1570
    %v1572 = vand.u32 %v216, 4294901760
    %v1573 = vsub.f32 %v216, %v1572
    %v1574 = vand.u32 %v1573, 4294901760
    %1575 = vmatpush.msra.mxu0 %v1574
    %v1576 = vand.u32 %v214, 4294901760
    %v1577 = vsub.f32 %v214, %v1576
    %v1578 = vand.u32 %v1577, 4294901760
    %1579 = vmatpush.msra.mxu0 %v1578
    %v1580 = vand.u32 %v212, 4294901760
    %v1581 = vsub.f32 %v212, %v1580
    %v1582 = vand.u32 %v1581, 4294901760
    %1583 = vmatpush.msra.mxu0 %v1582
    %v1584 = vand.u32 %v210, 4294901760
    %v1585 = vsub.f32 %v210, %v1584
    %v1586 = vand.u32 %v1585, 4294901760
    %1587 = vmatpush.msra.mxu0 %v1586
    %v1588 = vand.u32 %v208, 4294901760
    %v1589 = vsub.f32 %v208, %v1588
    %v1590 = vand.u32 %v1589, 4294901760
    %1591 = vmatpush.msra.mxu0 %v1590
    %v1592 = vand.u32 %v206, 4294901760
    %v1593 = vsub.f32 %v206, %v1592
    %v1594 = vand.u32 %v1593, 4294901760
    %1595 = vmatpush.msra.mxu0 %v1594
    %v1596 = vand.u32 %v204, 4294901760
    %v1597 = vsub.f32 %v204, %v1596
    %v1598 = vand.u32 %v1597, 4294901760
    %1599 = vmatpush.msra.mxu0 %v1598
    %v1600 = vand.u32 %v202, 4294901760
    %v1601 = vsub.f32 %v202, %v1600
    %v1602 = vand.u32 %v1601, 4294901760
    %1603 = vmatpush.msra.mxu0 %v1602
    %v1604 = vand.u32 %v200, 4294901760
    %v1605 = vsub.f32 %v200, %v1604
    %v1606 = vand.u32 %v1605, 4294901760
    %1607 = vmatpush.msra.mxu0 %v1606
    %v1608 = vand.u32 %v198, 4294901760
    %v1609 = vsub.f32 %v198, %v1608
    %v1610 = vand.u32 %v1609, 4294901760
    %1611 = vmatpush.msra.mxu0 %v1610
    %v1612 = vand.u32 %v196, 4294901760
    %v1613 = vsub.f32 %v196, %v1612
    %v1614 = vand.u32 %v1613, 4294901760
    %1615 = vmatpush.msra.mxu0 %v1614
    %v1616 = vand.u32 %v194, 4294901760
    %v1617 = vsub.f32 %v194, %v1616
    %v1618 = vand.u32 %v1617, 4294901760
    %1619 = vmatpush.msra.mxu0 %v1618
    %v1620 = vand.u32 %v192, 4294901760
    %v1621 = vsub.f32 %v192, %v1620
    %v1622 = vand.u32 %v1621, 4294901760
    %1623 = vmatpush.msra.mxu0 %v1622
    %v1624 = vand.u32 %v92, 4294901760
    %1625 = vmatmul.f32.gmra.mxu0 %v1624
    %v1626 = vpop.f32.mrf.mxu0
    %v1627 = vadd.f32 %v1558, %v1626
    %1628 = vdwg.mxu0
    %v1629 = vand.u32 %v222, 4294901760
    %1630 = vmatpush.msra.mxu0 %v1629
    %v1631 = vand.u32 %v220, 4294901760
    %1632 = vmatpush.msra.mxu0 %v1631
    %v1633 = vand.u32 %v218, 4294901760
    %1634 = vmatpush.msra.mxu0 %v1633
    %v1635 = vand.u32 %v216, 4294901760
    %1636 = vmatpush.msra.mxu0 %v1635
    %v1637 = vand.u32 %v214, 4294901760
    %1638 = vmatpush.msra.mxu0 %v1637
    %v1639 = vand.u32 %v212, 4294901760
    %1640 = vmatpush.msra.mxu0 %v1639
    %v1641 = vand.u32 %v210, 4294901760
    %1642 = vmatpush.msra.mxu0 %v1641
    %v1643 = vand.u32 %v208, 4294901760
    %1644 = vmatpush.msra.mxu0 %v1643
    %v1645 = vand.u32 %v206, 4294901760
    %1646 = vmatpush.msra.mxu0 %v1645
    %v1647 = vand.u32 %v204, 4294901760
    %1648 = vmatpush.msra.mxu0 %v1647
    %v1649 = vand.u32 %v202, 4294901760
    %1650 = vmatpush.msra.mxu0 %v1649
    %v1651 = vand.u32 %v200, 4294901760
    %1652 = vmatpush.msra.mxu0 %v1651
    %v1653 = vand.u32 %v198, 4294901760
    %1654 = vmatpush.msra.mxu0 %v1653
    %v1655 = vand.u32 %v196, 4294901760
    %1656 = vmatpush.msra.mxu0 %v1655
    %v1657 = vand.u32 %v194, 4294901760
    %1658 = vmatpush.msra.mxu0 %v1657
    %v1659 = vand.u32 %v192, 4294901760
    %1660 = vmatpush.msra.mxu0 %v1659
    %v1661 = vand.u32 %v92, 4294901760
    %1662 = vmatmul.f32.gmra.mxu0 %v1661
    %v1663 = vpop.f32.mrf.mxu0
    %v1664 = vadd.f32 %v1627, %v1663
    %1665 = vdwg.mxu0
    %v1666 = vand.u32 %v254, 4294901760
    %1667 = vmatpush.msra.mxu0 %v1666
    %v1668 = vand.u32 %v252, 4294901760
    %1669 = vmatpush.msra.mxu0 %v1668
    %v1670 = vand.u32 %v250, 4294901760
    %1671 = vmatpush.msra.mxu0 %v1670
    %v1672 = vand.u32 %v248, 4294901760
    %1673 = vmatpush.msra.mxu0 %v1672
    %v1674 = vand.u32 %v246, 4294901760
    %1675 = vmatpush.msra.mxu0 %v1674
    %v1676 = vand.u32 %v244, 4294901760
    %1677 = vmatpush.msra.mxu0 %v1676
    %v1678 = vand.u32 %v242, 4294901760
    %1679 = vmatpush.msra.mxu0 %v1678
    %v1680 = vand.u32 %v240, 4294901760
    %1681 = vmatpush.msra.mxu0 %v1680
    %v1682 = vand.u32 %v238, 4294901760
    %1683 = vmatpush.msra.mxu0 %v1682
    %v1684 = vand.u32 %v236, 4294901760
    %1685 = vmatpush.msra.mxu0 %v1684
    %v1686 = vand.u32 %v234, 4294901760
    %1687 = vmatpush.msra.mxu0 %v1686
    %v1688 = vand.u32 %v232, 4294901760
    %1689 = vmatpush.msra.mxu0 %v1688
    %v1690 = vand.u32 %v230, 4294901760
    %1691 = vmatpush.msra.mxu0 %v1690
    %v1692 = vand.u32 %v228, 4294901760
    %1693 = vmatpush.msra.mxu0 %v1692
    %v1694 = vand.u32 %v226, 4294901760
    %1695 = vmatpush.msra.mxu0 %v1694
    %v1696 = vand.u32 %v224, 4294901760
    %1697 = vmatpush.msra.mxu0 %v1696
    %v1698 = vand.u32 %v93, 4294901760
    %v1699 = vsub.f32 %v93, %v1698
    %v1700 = vand.u32 %v1699, 4294901760
    %v1701 = vsub.f32 %v1699, %v1700
    %v1702 = vand.u32 %v1701, 4294901760
    %1703 = vmatmul.f32.gmra.mxu0 %v1702
    %v1704 = vpop.f32.mrf.mxu0
    %v1705 = vadd.f32 %v1664, %v1704
    %1706 = vdwg.mxu0
    %v1707 = vand.u32 %v254, 4294901760
    %v1708 = vsub.f32 %v254, %v1707
    %v1709 = vand.u32 %v1708, 4294901760
    %v1710 = vsub.f32 %v1708, %v1709
    %v1711 = vand.u32 %v1710, 4294901760
    %1712 = vmatpush.msra.mxu0 %v1711
    %v1713 = vand.u32 %v252, 4294901760
    %v1714 = vsub.f32 %v252, %v1713
    %v1715 = vand.u32 %v1714, 4294901760
    %v1716 = vsub.f32 %v1714, %v1715
    %v1717 = vand.u32 %v1716, 4294901760
    %1718 = vmatpush.msra.mxu0 %v1717
    %v1719 = vand.u32 %v250, 4294901760
    %v1720 = vsub.f32 %v250, %v1719
    %v1721 = vand.u32 %v1720, 4294901760
    %v1722 = vsub.f32 %v1720, %v1721
    %v1723 = vand.u32 %v1722, 4294901760
    %1724 = vmatpush.msra.mxu0 %v1723
    %v1725 = vand.u32 %v248, 4294901760
    %v1726 = vsub.f32 %v248, %v1725
    %v1727 = vand.u32 %v1726, 4294901760
    %v1728 = vsub.f32 %v1726, %v1727
    %v1729 = vand.u32 %v1728, 4294901760
    %1730 = vmatpush.msra.mxu0 %v1729
    %v1731 = vand.u32 %v246, 4294901760
    %v1732 = vsub.f32 %v246, %v1731
    %v1733 = vand.u32 %v1732, 4294901760
    %v1734 = vsub.f32 %v1732, %v1733
    %v1735 = vand.u32 %v1734, 4294901760
    %1736 = vmatpush.msra.mxu0 %v1735
    %v1737 = vand.u32 %v244, 4294901760
    %v1738 = vsub.f32 %v244, %v1737
    %v1739 = vand.u32 %v1738, 4294901760
    %v1740 = vsub.f32 %v1738, %v1739
    %v1741 = vand.u32 %v1740, 4294901760
    %1742 = vmatpush.msra.mxu0 %v1741
    %v1743 = vand.u32 %v242, 4294901760
    %v1744 = vsub.f32 %v242, %v1743
    %v1745 = vand.u32 %v1744, 4294901760
    %v1746 = vsub.f32 %v1744, %v1745
    %v1747 = vand.u32 %v1746, 4294901760
    %1748 = vmatpush.msra.mxu0 %v1747
    %v1749 = vand.u32 %v240, 4294901760
    %v1750 = vsub.f32 %v240, %v1749
    %v1751 = vand.u32 %v1750, 4294901760
    %v1752 = vsub.f32 %v1750, %v1751
    %v1753 = vand.u32 %v1752, 4294901760
    %1754 = vmatpush.msra.mxu0 %v1753
    %v1755 = vand.u32 %v238, 4294901760
    %v1756 = vsub.f32 %v238, %v1755
    %v1757 = vand.u32 %v1756, 4294901760
    %v1758 = vsub.f32 %v1756, %v1757
    %v1759 = vand.u32 %v1758, 4294901760
    %1760 = vmatpush.msra.mxu0 %v1759
    %v1761 = vand.u32 %v236, 4294901760
    %v1762 = vsub.f32 %v236, %v1761
    %v1763 = vand.u32 %v1762, 4294901760
    %v1764 = vsub.f32 %v1762, %v1763
    %v1765 = vand.u32 %v1764, 4294901760
    %1766 = vmatpush.msra.mxu0 %v1765
    %v1767 = vand.u32 %v234, 4294901760
    %v1768 = vsub.f32 %v234, %v1767
    %v1769 = vand.u32 %v1768, 4294901760
    %v1770 = vsub.f32 %v1768, %v1769
    %v1771 = vand.u32 %v1770, 4294901760
    %1772 = vmatpush.msra.mxu0 %v1771
    %v1773 = vand.u32 %v232, 4294901760
    %v1774 = vsub.f32 %v232, %v1773
    %v1775 = vand.u32 %v1774, 4294901760
    %v1776 = vsub.f32 %v1774, %v1775
    %v1777 = vand.u32 %v1776, 4294901760
    %1778 = vmatpush.msra.mxu0 %v1777
    %v1779 = vand.u32 %v230, 4294901760
    %v1780 = vsub.f32 %v230, %v1779
    %v1781 = vand.u32 %v1780, 4294901760
    %v1782 = vsub.f32 %v1780, %v1781
    %v1783 = vand.u32 %v1782, 4294901760
    %1784 = vmatpush.msra.mxu0 %v1783
    %v1785 = vand.u32 %v228, 4294901760
    %v1786 = vsub.f32 %v228, %v1785
    %v1787 = vand.u32 %v1786, 4294901760
    %v1788 = vsub.f32 %v1786, %v1787
    %v1789 = vand.u32 %v1788, 4294901760
    %1790 = vmatpush.msra.mxu0 %v1789
    %v1791 = vand.u32 %v226, 4294901760
    %v1792 = vsub.f32 %v226, %v1791
    %v1793 = vand.u32 %v1792, 4294901760
    %v1794 = vsub.f32 %v1792, %v1793
    %v1795 = vand.u32 %v1794, 4294901760
    %1796 = vmatpush.msra.mxu0 %v1795
    %v1797 = vand.u32 %v224, 4294901760
    %v1798 = vsub.f32 %v224, %v1797
    %v1799 = vand.u32 %v1798, 4294901760
    %v1800 = vsub.f32 %v1798, %v1799
    %v1801 = vand.u32 %v1800, 4294901760
    %1802 = vmatpush.msra.mxu0 %v1801
    %v1803 = vand.u32 %v93, 4294901760
    %1804 = vmatmul.f32.gmra.mxu0 %v1803
    %v1805 = vpop.f32.mrf.mxu0
    %v1806 = vadd.f32 %v1705, %v1805
    %1807 = vdwg.mxu0
    %v1808 = vand.u32 %v254, 4294901760
    %v1809 = vsub.f32 %v254, %v1808
    %1810 = vmatpush.msra.mxu0 %v1809
    %v1811 = vand.u32 %v252, 4294901760
    %v1812 = vsub.f32 %v252, %v1811
    %1813 = vmatpush.msra.mxu0 %v1812
    %v1814 = vand.u32 %v250, 4294901760
    %v1815 = vsub.f32 %v250, %v1814
    %1816 = vmatpush.msra.mxu0 %v1815
    %v1817 = vand.u32 %v248, 4294901760
    %v1818 = vsub.f32 %v248, %v1817
    %1819 = vmatpush.msra.mxu0 %v1818
    %v1820 = vand.u32 %v246, 4294901760
    %v1821 = vsub.f32 %v246, %v1820
    %1822 = vmatpush.msra.mxu0 %v1821
    %v1823 = vand.u32 %v244, 4294901760
    %v1824 = vsub.f32 %v244, %v1823
    %1825 = vmatpush.msra.mxu0 %v1824
    %v1826 = vand.u32 %v242, 4294901760
    %v1827 = vsub.f32 %v242, %v1826
    %1828 = vmatpush.msra.mxu0 %v1827
    %v1829 = vand.u32 %v240, 4294901760
    %v1830 = vsub.f32 %v240, %v1829
    %1831 = vmatpush.msra.mxu0 %v1830
    %v1832 = vand.u32 %v238, 4294901760
    %v1833 = vsub.f32 %v238, %v1832
    %1834 = vmatpush.msra.mxu0 %v1833
    %v1835 = vand.u32 %v236, 4294901760
    %v1836 = vsub.f32 %v236, %v1835
    %1837 = vmatpush.msra.mxu0 %v1836
    %v1838 = vand.u32 %v234, 4294901760
    %v1839 = vsub.f32 %v234, %v1838
    %1840 = vmatpush.msra.mxu0 %v1839
    %v1841 = vand.u32 %v232, 4294901760
    %v1842 = vsub.f32 %v232, %v1841
    %1843 = vmatpush.msra.mxu0 %v1842
    %v1844 = vand.u32 %v230, 4294901760
    %v1845 = vsub.f32 %v230, %v1844
    %1846 = vmatpush.msra.mxu0 %v1845
    %v1847 = vand.u32 %v228, 4294901760
    %v1848 = vsub.f32 %v228, %v1847
    %1849 = vmatpush.msra.mxu0 %v1848
    %v1850 = vand.u32 %v226, 4294901760
    %v1851 = vsub.f32 %v226, %v1850
    %1852 = vmatpush.msra.mxu0 %v1851
    %v1853 = vand.u32 %v224, 4294901760
    %v1854 = vsub.f32 %v224, %v1853
    %1855 = vmatpush.msra.mxu0 %v1854
    %v1856 = vand.u32 %v93, 4294901760
    %v1857 = vsub.f32 %v93, %v1856
    %1858 = vmatmul.f32.gmra.mxu0 %v1857
    %v1859 = vpop.f32.mrf.mxu0
    %v1860 = vadd.f32 %v1806, %v1859
    %1861 = vdwg.mxu0
    %v1862 = vand.u32 %v254, 4294901760
    %1863 = vmatpush.msra.mxu0 %v1862
    %v1864 = vand.u32 %v252, 4294901760
    %1865 = vmatpush.msra.mxu0 %v1864
    %v1866 = vand.u32 %v250, 4294901760
    %1867 = vmatpush.msra.mxu0 %v1866
    %v1868 = vand.u32 %v248, 4294901760
    %1869 = vmatpush.msra.mxu0 %v1868
    %v1870 = vand.u32 %v246, 4294901760
    %1871 = vmatpush.msra.mxu0 %v1870
    %v1872 = vand.u32 %v244, 4294901760
    %1873 = vmatpush.msra.mxu0 %v1872
    %v1874 = vand.u32 %v242, 4294901760
    %1875 = vmatpush.msra.mxu0 %v1874
    %v1876 = vand.u32 %v240, 4294901760
    %1877 = vmatpush.msra.mxu0 %v1876
    %v1878 = vand.u32 %v238, 4294901760
    %1879 = vmatpush.msra.mxu0 %v1878
    %v1880 = vand.u32 %v236, 4294901760
    %1881 = vmatpush.msra.mxu0 %v1880
    %v1882 = vand.u32 %v234, 4294901760
    %1883 = vmatpush.msra.mxu0 %v1882
    %v1884 = vand.u32 %v232, 4294901760
    %1885 = vmatpush.msra.mxu0 %v1884
    %v1886 = vand.u32 %v230, 4294901760
    %1887 = vmatpush.msra.mxu0 %v1886
    %v1888 = vand.u32 %v228, 4294901760
    %1889 = vmatpush.msra.mxu0 %v1888
    %v1890 = vand.u32 %v226, 4294901760
    %1891 = vmatpush.msra.mxu0 %v1890
    %v1892 = vand.u32 %v224, 4294901760
    %1893 = vmatpush.msra.mxu0 %v1892
    %v1894 = vand.u32 %v93, 4294901760
    %v1895 = vsub.f32 %v93, %v1894
    %v1896 = vand.u32 %v1895, 4294901760
    %1897 = vmatmul.f32.gmra.mxu0 %v1896
    %v1898 = vpop.f32.mrf.mxu0
    %v1899 = vadd.f32 %v1860, %v1898
    %1900 = vdwg.mxu0
    %v1901 = vand.u32 %v254, 4294901760
    %v1902 = vsub.f32 %v254, %v1901
    %v1903 = vand.u32 %v1902, 4294901760
    %1904 = vmatpush.msra.mxu0 %v1903
    %v1905 = vand.u32 %v252, 4294901760
    %v1906 = vsub.f32 %v252, %v1905
    %v1907 = vand.u32 %v1906, 4294901760
    %1908 = vmatpush.msra.mxu0 %v1907
    %v1909 = vand.u32 %v250, 4294901760
    %v1910 = vsub.f32 %v250, %v1909
    %v1911 = vand.u32 %v1910, 4294901760
    %1912 = vmatpush.msra.mxu0 %v1911
    %v1913 = vand.u32 %v248, 4294901760
    %v1914 = vsub.f32 %v248, %v1913
    %v1915 = vand.u32 %v1914, 4294901760
    %1916 = vmatpush.msra.mxu0 %v1915
    %v1917 = vand.u32 %v246, 4294901760
    %v1918 = vsub.f32 %v246, %v1917
    %v1919 = vand.u32 %v1918, 4294901760
    %1920 = vmatpush.msra.mxu0 %v1919
    %v1921 = vand.u32 %v244, 4294901760
    %v1922 = vsub.f32 %v244, %v1921
    %v1923 = vand.u32 %v1922, 4294901760
    %1924 = vmatpush.msra.mxu0 %v1923
    %v1925 = vand.u32 %v242, 4294901760
    %v1926 = vsub.f32 %v242, %v1925
    %v1927 = vand.u32 %v1926, 4294901760
    %1928 = vmatpush.msra.mxu0 %v1927
    %v1929 = vand.u32 %v240, 4294901760
    %v1930 = vsub.f32 %v240, %v1929
    %v1931 = vand.u32 %v1930, 4294901760
    %1932 = vmatpush.msra.mxu0 %v1931
    %v1933 = vand.u32 %v238, 4294901760
    %v1934 = vsub.f32 %v238, %v1933
    %v1935 = vand.u32 %v1934, 4294901760
    %1936 = vmatpush.msra.mxu0 %v1935
    %v1937 = vand.u32 %v236, 4294901760
    %v1938 = vsub.f32 %v236, %v1937
    %v1939 = vand.u32 %v1938, 4294901760
    %1940 = vmatpush.msra.mxu0 %v1939
    %v1941 = vand.u32 %v234, 4294901760
    %v1942 = vsub.f32 %v234, %v1941
    %v1943 = vand.u32 %v1942, 4294901760
    %1944 = vmatpush.msra.mxu0 %v1943
    %v1945 = vand.u32 %v232, 4294901760
    %v1946 = vsub.f32 %v232, %v1945
    %v1947 = vand.u32 %v1946, 4294901760
    %1948 = vmatpush.msra.mxu0 %v1947
    %v1949 = vand.u32 %v230, 4294901760
    %v1950 = vsub.f32 %v230, %v1949
    %v1951 = vand.u32 %v1950, 4294901760
    %1952 = vmatpush.msra.mxu0 %v1951
    %v1953 = vand.u32 %v228, 4294901760
    %v1954 = vsub.f32 %v228, %v1953
    %v1955 = vand.u32 %v1954, 4294901760
    %1956 = vmatpush.msra.mxu0 %v1955
    %v1957 = vand.u32 %v226, 4294901760
    %v1958 = vsub.f32 %v226, %v1957
    %v1959 = vand.u32 %v1958, 4294901760
    %1960 = vmatpush.msra.mxu0 %v1959
    %v1961 = vand.u32 %v224, 4294901760
    %v1962 = vsub.f32 %v224, %v1961
    %v1963 = vand.u32 %v1962, 4294901760
    %1964 = vmatpush.msra.mxu0 %v1963
    %v1965 = vand.u32 %v93, 4294901760
    %1966 = vmatmul.f32.gmra.mxu0 %v1965
    %v1967 = vpop.f32.mrf.mxu0
    %v1968 = vadd.f32 %v1899, %v1967
    %1969 = vdwg.mxu0
    %v1970 = vand.u32 %v254, 4294901760
    %1971 = vmatpush.msra.mxu0 %v1970
    %v1972 = vand.u32 %v252, 4294901760
    %1973 = vmatpush.msra.mxu0 %v1972
    %v1974 = vand.u32 %v250, 4294901760
    %1975 = vmatpush.msra.mxu0 %v1974
    %v1976 = vand.u32 %v248, 4294901760
    %1977 = vmatpush.msra.mxu0 %v1976
    %v1978 = vand.u32 %v246, 4294901760
    %1979 = vmatpush.msra.mxu0 %v1978
    %v1980 = vand.u32 %v244, 4294901760
    %1981 = vmatpush.msra.mxu0 %v1980
    %v1982 = vand.u32 %v242, 4294901760
    %1983 = vmatpush.msra.mxu0 %v1982
    %v1984 = vand.u32 %v240, 4294901760
    %1985 = vmatpush.msra.mxu0 %v1984
    %v1986 = vand.u32 %v238, 4294901760
    %1987 = vmatpush.msra.mxu0 %v1986
    %v1988 = vand.u32 %v236, 4294901760
    %1989 = vmatpush.msra.mxu0 %v1988
    %v1990 = vand.u32 %v234, 4294901760
    %1991 = vmatpush.msra.mxu0 %v1990
    %v1992 = vand.u32 %v232, 4294901760
    %1993 = vmatpush.msra.mxu0 %v1992
    %v1994 = vand.u32 %v230, 4294901760
    %1995 = vmatpush.msra.mxu0 %v1994
    %v1996 = vand.u32 %v228, 4294901760
    %1997 = vmatpush.msra.mxu0 %v1996
    %v1998 = vand.u32 %v226, 4294901760
    %1999 = vmatpush.msra.mxu0 %v1998
    %v2000 = vand.u32 %v224, 4294901760
    %2001 = vmatpush.msra.mxu0 %v2000
    %v2002 = vand.u32 %v93, 4294901760
    %2003 = vmatmul.f32.gmra.mxu0 %v2002
    %v2004 = vpop.f32.mrf.mxu0
    %v2005 = vadd.f32 %v1968, %v2004
    %2006 = vdwg.mxu0
    %v2007 = vand.u32 %v286, 4294901760
    %2008 = vmatpush.msra.mxu0 %v2007
    %v2009 = vand.u32 %v284, 4294901760
    %2010 = vmatpush.msra.mxu0 %v2009
    %v2011 = vand.u32 %v282, 4294901760
    %2012 = vmatpush.msra.mxu0 %v2011
    %v2013 = vand.u32 %v280, 4294901760
    %2014 = vmatpush.msra.mxu0 %v2013
    %v2015 = vand.u32 %v278, 4294901760
    %2016 = vmatpush.msra.mxu0 %v2015
    %v2017 = vand.u32 %v276, 4294901760
    %2018 = vmatpush.msra.mxu0 %v2017
    %v2019 = vand.u32 %v274, 4294901760
    %2020 = vmatpush.msra.mxu0 %v2019
    %v2021 = vand.u32 %v272, 4294901760
    %2022 = vmatpush.msra.mxu0 %v2021
    %v2023 = vand.u32 %v270, 4294901760
    %2024 = vmatpush.msra.mxu0 %v2023
    %v2025 = vand.u32 %v268, 4294901760
    %2026 = vmatpush.msra.mxu0 %v2025
    %v2027 = vand.u32 %v266, 4294901760
    %2028 = vmatpush.msra.mxu0 %v2027
    %v2029 = vand.u32 %v264, 4294901760
    %2030 = vmatpush.msra.mxu0 %v2029
    %v2031 = vand.u32 %v262, 4294901760
    %2032 = vmatpush.msra.mxu0 %v2031
    %v2033 = vand.u32 %v260, 4294901760
    %2034 = vmatpush.msra.mxu0 %v2033
    %v2035 = vand.u32 %v258, 4294901760
    %2036 = vmatpush.msra.mxu0 %v2035
    %v2037 = vand.u32 %v256, 4294901760
    %2038 = vmatpush.msra.mxu0 %v2037
    %v2039 = vand.u32 %v94, 4294901760
    %v2040 = vsub.f32 %v94, %v2039
    %v2041 = vand.u32 %v2040, 4294901760
    %v2042 = vsub.f32 %v2040, %v2041
    %v2043 = vand.u32 %v2042, 4294901760
    %2044 = vmatmul.f32.gmra.mxu0 %v2043
    %v2045 = vpop.f32.mrf.mxu0
    %v2046 = vadd.f32 %v2005, %v2045
    %2047 = vdwg.mxu0
    %v2048 = vand.u32 %v286, 4294901760
    %v2049 = vsub.f32 %v286, %v2048
    %v2050 = vand.u32 %v2049, 4294901760
    %v2051 = vsub.f32 %v2049, %v2050
    %v2052 = vand.u32 %v2051, 4294901760
    %2053 = vmatpush.msra.mxu0 %v2052
    %v2054 = vand.u32 %v284, 4294901760
    %v2055 = vsub.f32 %v284, %v2054
    %v2056 = vand.u32 %v2055, 4294901760
    %v2057 = vsub.f32 %v2055, %v2056
    %v2058 = vand.u32 %v2057, 4294901760
    %2059 = vmatpush.msra.mxu0 %v2058
    %v2060 = vand.u32 %v282, 4294901760
    %v2061 = vsub.f32 %v282, %v2060
    %v2062 = vand.u32 %v2061, 4294901760
    %v2063 = vsub.f32 %v2061, %v2062
    %v2064 = vand.u32 %v2063, 4294901760
    %2065 = vmatpush.msra.mxu0 %v2064
    %v2066 = vand.u32 %v280, 4294901760
    %v2067 = vsub.f32 %v280, %v2066
    %v2068 = vand.u32 %v2067, 4294901760
    %v2069 = vsub.f32 %v2067, %v2068
    %v2070 = vand.u32 %v2069, 4294901760
    %2071 = vmatpush.msra.mxu0 %v2070
    %v2072 = vand.u32 %v278, 4294901760
    %v2073 = vsub.f32 %v278, %v2072
    %v2074 = vand.u32 %v2073, 4294901760
    %v2075 = vsub.f32 %v2073, %v2074
    %v2076 = vand.u32 %v2075, 4294901760
    %2077 = vmatpush.msra.mxu0 %v2076
    %v2078 = vand.u32 %v276, 4294901760
    %v2079 = vsub.f32 %v276, %v2078
    %v2080 = vand.u32 %v2079, 4294901760
    %v2081 = vsub.f32 %v2079, %v2080
    %v2082 = vand.u32 %v2081, 4294901760
    %2083 = vmatpush.msra.mxu0 %v2082
    %v2084 = vand.u32 %v274, 4294901760
    %v2085 = vsub.f32 %v274, %v2084
    %v2086 = vand.u32 %v2085, 4294901760
    %v2087 = vsub.f32 %v2085, %v2086
    %v2088 = vand.u32 %v2087, 4294901760
    %2089 = vmatpush.msra.mxu0 %v2088
    %v2090 = vand.u32 %v272, 4294901760
    %v2091 = vsub.f32 %v272, %v2090
    %v2092 = vand.u32 %v2091, 4294901760
    %v2093 = vsub.f32 %v2091, %v2092
    %v2094 = vand.u32 %v2093, 4294901760
    %2095 = vmatpush.msra.mxu0 %v2094
    %v2096 = vand.u32 %v270, 4294901760
    %v2097 = vsub.f32 %v270, %v2096
    %v2098 = vand.u32 %v2097, 4294901760
    %v2099 = vsub.f32 %v2097, %v2098
    %v2100 = vand.u32 %v2099, 4294901760
    %2101 = vmatpush.msra.mxu0 %v2100
    %v2102 = vand.u32 %v268, 4294901760
    %v2103 = vsub.f32 %v268, %v2102
    %v2104 = vand.u32 %v2103, 4294901760
    %v2105 = vsub.f32 %v2103, %v2104
    %v2106 = vand.u32 %v2105, 4294901760
    %2107 = vmatpush.msra.mxu0 %v2106
    %v2108 = vand.u32 %v266, 4294901760
    %v2109 = vsub.f32 %v266, %v2108
    %v2110 = vand.u32 %v2109, 4294901760
    %v2111 = vsub.f32 %v2109, %v2110
    %v2112 = vand.u32 %v2111, 4294901760
    %2113 = vmatpush.msra.mxu0 %v2112
    %v2114 = vand.u32 %v264, 4294901760
    %v2115 = vsub.f32 %v264, %v2114
    %v2116 = vand.u32 %v2115, 4294901760
    %v2117 = vsub.f32 %v2115, %v2116
    %v2118 = vand.u32 %v2117, 4294901760
    %2119 = vmatpush.msra.mxu0 %v2118
    %v2120 = vand.u32 %v262, 4294901760
    %v2121 = vsub.f32 %v262, %v2120
    %v2122 = vand.u32 %v2121, 4294901760
    %v2123 = vsub.f32 %v2121, %v2122
    %v2124 = vand.u32 %v2123, 4294901760
    %2125 = vmatpush.msra.mxu0 %v2124
    %v2126 = vand.u32 %v260, 4294901760
    %v2127 = vsub.f32 %v260, %v2126
    %v2128 = vand.u32 %v2127, 4294901760
    %v2129 = vsub.f32 %v2127, %v2128
    %v2130 = vand.u32 %v2129, 4294901760
    %2131 = vmatpush.msra.mxu0 %v2130
    %v2132 = vand.u32 %v258, 4294901760
    %v2133 = vsub.f32 %v258, %v2132
    %v2134 = vand.u32 %v2133, 4294901760
    %v2135 = vsub.f32 %v2133, %v2134
    %v2136 = vand.u32 %v2135, 4294901760
    %2137 = vmatpush.msra.mxu0 %v2136
    %v2138 = vand.u32 %v256, 4294901760
    %v2139 = vsub.f32 %v256, %v2138
    %v2140 = vand.u32 %v2139, 4294901760
    %v2141 = vsub.f32 %v2139, %v2140
    %v2142 = vand.u32 %v2141, 4294901760
    %2143 = vmatpush.msra.mxu0 %v2142
    %v2144 = vand.u32 %v94, 4294901760
    %2145 = vmatmul.f32.gmra.mxu0 %v2144
    %v2146 = vpop.f32.mrf.mxu0
    %v2147 = vadd.f32 %v2046, %v2146
    %2148 = vdwg.mxu0
    %v2149 = vand.u32 %v286, 4294901760
    %v2150 = vsub.f32 %v286, %v2149
    %2151 = vmatpush.msra.mxu0 %v2150
    %v2152 = vand.u32 %v284, 4294901760
    %v2153 = vsub.f32 %v284, %v2152
    %2154 = vmatpush.msra.mxu0 %v2153
    %v2155 = vand.u32 %v282, 4294901760
    %v2156 = vsub.f32 %v282, %v2155
    %2157 = vmatpush.msra.mxu0 %v2156
    %v2158 = vand.u32 %v280, 4294901760
    %v2159 = vsub.f32 %v280, %v2158
    %2160 = vmatpush.msra.mxu0 %v2159
    %v2161 = vand.u32 %v278, 4294901760
    %v2162 = vsub.f32 %v278, %v2161
    %2163 = vmatpush.msra.mxu0 %v2162
    %v2164 = vand.u32 %v276, 4294901760
    %v2165 = vsub.f32 %v276, %v2164
    %2166 = vmatpush.msra.mxu0 %v2165
    %v2167 = vand.u32 %v274, 4294901760
    %v2168 = vsub.f32 %v274, %v2167
    %2169 = vmatpush.msra.mxu0 %v2168
    %v2170 = vand.u32 %v272, 4294901760
    %v2171 = vsub.f32 %v272, %v2170
    %2172 = vmatpush.msra.mxu0 %v2171
    %v2173 = vand.u32 %v270, 4294901760
    %v2174 = vsub.f32 %v270, %v2173
    %2175 = vmatpush.msra.mxu0 %v2174
    %v2176 = vand.u32 %v268, 4294901760
    %v2177 = vsub.f32 %v268, %v2176
    %2178 = vmatpush.msra.mxu0 %v2177
    %v2179 = vand.u32 %v266, 4294901760
    %v2180 = vsub.f32 %v266, %v2179
    %2181 = vmatpush.msra.mxu0 %v2180
    %v2182 = vand.u32 %v264, 4294901760
    %v2183 = vsub.f32 %v264, %v2182
    %2184 = vmatpush.msra.mxu0 %v2183
    %v2185 = vand.u32 %v262, 4294901760
    %v2186 = vsub.f32 %v262, %v2185
    %2187 = vmatpush.msra.mxu0 %v2186
    %v2188 = vand.u32 %v260, 4294901760
    %v2189 = vsub.f32 %v260, %v2188
    %2190 = vmatpush.msra.mxu0 %v2189
    %v2191 = vand.u32 %v258, 4294901760
    %v2192 = vsub.f32 %v258, %v2191
    %2193 = vmatpush.msra.mxu0 %v2192
    %v2194 = vand.u32 %v256, 4294901760
    %v2195 = vsub.f32 %v256, %v2194
    %2196 = vmatpush.msra.mxu0 %v2195
    %v2197 = vand.u32 %v94, 4294901760
    %v2198 = vsub.f32 %v94, %v2197
    %2199 = vmatmul.f32.gmra.mxu0 %v2198
    %v2200 = vpop.f32.mrf.mxu0
    %v2201 = vadd.f32 %v2147, %v2200
    %2202 = vdwg.mxu0
    %v2203 = vand.u32 %v286, 4294901760
    %2204 = vmatpush.msra.mxu0 %v2203
    %v2205 = vand.u32 %v284, 4294901760
    %2206 = vmatpush.msra.mxu0 %v2205
    %v2207 = vand.u32 %v282, 4294901760
    %2208 = vmatpush.msra.mxu0 %v2207
    %v2209 = vand.u32 %v280, 4294901760
    %2210 = vmatpush.msra.mxu0 %v2209
    %v2211 = vand.u32 %v278, 4294901760
    %2212 = vmatpush.msra.mxu0 %v2211
    %v2213 = vand.u32 %v276, 4294901760
    %2214 = vmatpush.msra.mxu0 %v2213
    %v2215 = vand.u32 %v274, 4294901760
    %2216 = vmatpush.msra.mxu0 %v2215
    %v2217 = vand.u32 %v272, 4294901760
    %2218 = vmatpush.msra.mxu0 %v2217
    %v2219 = vand.u32 %v270, 4294901760
    %2220 = vmatpush.msra.mxu0 %v2219
    %v2221 = vand.u32 %v268, 4294901760
    %2222 = vmatpush.msra.mxu0 %v2221
    %v2223 = vand.u32 %v266, 4294901760
    %2224 = vmatpush.msra.mxu0 %v2223
    %v2225 = vand.u32 %v264, 4294901760
    %2226 = vmatpush.msra.mxu0 %v2225
    %v2227 = vand.u32 %v262, 4294901760
    %2228 = vmatpush.msra.mxu0 %v2227
    %v2229 = vand.u32 %v260, 4294901760
    %2230 = vmatpush.msra.mxu0 %v2229
    %v2231 = vand.u32 %v258, 4294901760
    %2232 = vmatpush.msra.mxu0 %v2231
    %v2233 = vand.u32 %v256, 4294901760
    %2234 = vmatpush.msra.mxu0 %v2233
    %v2235 = vand.u32 %v94, 4294901760
    %v2236 = vsub.f32 %v94, %v2235
    %v2237 = vand.u32 %v2236, 4294901760
    %2238 = vmatmul.f32.gmra.mxu0 %v2237
    %v2239 = vpop.f32.mrf.mxu0
    %v2240 = vadd.f32 %v2201, %v2239
    %2241 = vdwg.mxu0
    %v2242 = vand.u32 %v286, 4294901760
    %v2243 = vsub.f32 %v286, %v2242
    %v2244 = vand.u32 %v2243, 4294901760
    %2245 = vmatpush.msra.mxu0 %v2244
    %v2246 = vand.u32 %v284, 4294901760
    %v2247 = vsub.f32 %v284, %v2246
    %v2248 = vand.u32 %v2247, 4294901760
    %2249 = vmatpush.msra.mxu0 %v2248
    %v2250 = vand.u32 %v282, 4294901760
    %v2251 = vsub.f32 %v282, %v2250
    %v2252 = vand.u32 %v2251, 4294901760
    %2253 = vmatpush.msra.mxu0 %v2252
    %v2254 = vand.u32 %v280, 4294901760
    %v2255 = vsub.f32 %v280, %v2254
    %v2256 = vand.u32 %v2255, 4294901760
    %2257 = vmatpush.msra.mxu0 %v2256
    %v2258 = vand.u32 %v278, 4294901760
    %v2259 = vsub.f32 %v278, %v2258
    %v2260 = vand.u32 %v2259, 4294901760
    %2261 = vmatpush.msra.mxu0 %v2260
    %v2262 = vand.u32 %v276, 4294901760
    %v2263 = vsub.f32 %v276, %v2262
    %v2264 = vand.u32 %v2263, 4294901760
    %2265 = vmatpush.msra.mxu0 %v2264
    %v2266 = vand.u32 %v274, 4294901760
    %v2267 = vsub.f32 %v274, %v2266
    %v2268 = vand.u32 %v2267, 4294901760
    %2269 = vmatpush.msra.mxu0 %v2268
    %v2270 = vand.u32 %v272, 4294901760
    %v2271 = vsub.f32 %v272, %v2270
    %v2272 = vand.u32 %v2271, 4294901760
    %2273 = vmatpush.msra.mxu0 %v2272
    %v2274 = vand.u32 %v270, 4294901760
    %v2275 = vsub.f32 %v270, %v2274
    %v2276 = vand.u32 %v2275, 4294901760
    %2277 = vmatpush.msra.mxu0 %v2276
    %v2278 = vand.u32 %v268, 4294901760
    %v2279 = vsub.f32 %v268, %v2278
    %v2280 = vand.u32 %v2279, 4294901760
    %2281 = vmatpush.msra.mxu0 %v2280
    %v2282 = vand.u32 %v266, 4294901760
    %v2283 = vsub.f32 %v266, %v2282
    %v2284 = vand.u32 %v2283, 4294901760
    %2285 = vmatpush.msra.mxu0 %v2284
    %v2286 = vand.u32 %v264, 4294901760
    %v2287 = vsub.f32 %v264, %v2286
    %v2288 = vand.u32 %v2287, 4294901760
    %2289 = vmatpush.msra.mxu0 %v2288
    %v2290 = vand.u32 %v262, 4294901760
    %v2291 = vsub.f32 %v262, %v2290
    %v2292 = vand.u32 %v2291, 4294901760
    %2293 = vmatpush.msra.mxu0 %v2292
    %v2294 = vand.u32 %v260, 4294901760
    %v2295 = vsub.f32 %v260, %v2294
    %v2296 = vand.u32 %v2295, 4294901760
    %2297 = vmatpush.msra.mxu0 %v2296
    %v2298 = vand.u32 %v258, 4294901760
    %v2299 = vsub.f32 %v258, %v2298
    %v2300 = vand.u32 %v2299, 4294901760
    %2301 = vmatpush.msra.mxu0 %v2300
    %v2302 = vand.u32 %v256, 4294901760
    %v2303 = vsub.f32 %v256, %v2302
    %v2304 = vand.u32 %v2303, 4294901760
    %2305 = vmatpush.msra.mxu0 %v2304
    %v2306 = vand.u32 %v94, 4294901760
    %2307 = vmatmul.f32.gmra.mxu0 %v2306
    %v2308 = vpop.f32.mrf.mxu0
    %v2309 = vadd.f32 %v2240, %v2308
    %2310 = vdwg.mxu0
    %v2311 = vand.u32 %v286, 4294901760
    %2312 = vmatpush.msra.mxu0 %v2311
    %v2313 = vand.u32 %v284, 4294901760
    %2314 = vmatpush.msra.mxu0 %v2313
    %v2315 = vand.u32 %v282, 4294901760
    %2316 = vmatpush.msra.mxu0 %v2315
    %v2317 = vand.u32 %v280, 4294901760
    %2318 = vmatpush.msra.mxu0 %v2317
    %v2319 = vand.u32 %v278, 4294901760
    %2320 = vmatpush.msra.mxu0 %v2319
    %v2321 = vand.u32 %v276, 4294901760
    %2322 = vmatpush.msra.mxu0 %v2321
    %v2323 = vand.u32 %v274, 4294901760
    %2324 = vmatpush.msra.mxu0 %v2323
    %v2325 = vand.u32 %v272, 4294901760
    %2326 = vmatpush.msra.mxu0 %v2325
    %v2327 = vand.u32 %v270, 4294901760
    %2328 = vmatpush.msra.mxu0 %v2327
    %v2329 = vand.u32 %v268, 4294901760
    %2330 = vmatpush.msra.mxu0 %v2329
    %v2331 = vand.u32 %v266, 4294901760
    %2332 = vmatpush.msra.mxu0 %v2331
    %v2333 = vand.u32 %v264, 4294901760
    %2334 = vmatpush.msra.mxu0 %v2333
    %v2335 = vand.u32 %v262, 4294901760
    %2336 = vmatpush.msra.mxu0 %v2335
    %v2337 = vand.u32 %v260, 4294901760
    %2338 = vmatpush.msra.mxu0 %v2337
    %v2339 = vand.u32 %v258, 4294901760
    %2340 = vmatpush.msra.mxu0 %v2339
    %v2341 = vand.u32 %v256, 4294901760
    %2342 = vmatpush.msra.mxu0 %v2341
    %v2343 = vand.u32 %v94, 4294901760
    %2344 = vmatmul.f32.gmra.mxu0 %v2343
    %v2345 = vpop.f32.mrf.mxu0
    %v2346 = vadd.f32 %v2309, %v2345
    %2347 = vdwg.mxu0
    %2348 = vmatpush.msra.mxu0 0.0
    %2349 = vmatpush.msra.mxu0 0.0
    %2350 = vmatpush.msra.mxu0 0.0
    %2351 = vmatpush.msra.mxu0 0.0
    %2352 = vmatpush.msra.mxu0 0.0
    %2353 = vmatpush.msra.mxu0 0.0
    %2354 = vmatpush.msra.mxu0 0.0
    %2355 = vmatpush.msra.mxu0 0.0
    %2356 = vmatpush.msra.mxu0 0.0
    %2357 = vmatpush.msra.mxu0 0.0
    %2358 = vmatpush.msra.mxu0 0.0
    %2359 = vmatpush.msra.mxu0 0.0
    %2360 = vmatpush.msra.mxu0 0.0
    %2361 = vmatpush.msra.mxu0 0.0
    %v2362 = vand.u32 %v290, 4294901760
    %2363 = vmatpush.msra.mxu0 %v2362
    %v2364 = vand.u32 %v288, 4294901760
    %2365 = vmatpush.msra.mxu0 %v2364
    %v2366 = vand.u32 %v300, 4294901760
    %v2367 = vsub.f32 %v300, %v2366
    %v2368 = vand.u32 %v2367, 4294901760
    %v2369 = vsub.f32 %v2367, %v2368
    %v2370 = vand.u32 %v2369, 4294901760
    %2371 = vmatmul.f32.gmra.mxu0 %v2370
    %v2372 = vpop.f32.mrf.mxu0
    %v2373 = vadd.f32 %v2346, %v2372
    %2374 = vdwg.mxu0
    %2375 = vmatpush.msra.mxu0 0.0
    %2376 = vmatpush.msra.mxu0 0.0
    %2377 = vmatpush.msra.mxu0 0.0
    %2378 = vmatpush.msra.mxu0 0.0
    %2379 = vmatpush.msra.mxu0 0.0
    %2380 = vmatpush.msra.mxu0 0.0
    %2381 = vmatpush.msra.mxu0 0.0
    %2382 = vmatpush.msra.mxu0 0.0
    %2383 = vmatpush.msra.mxu0 0.0
    %2384 = vmatpush.msra.mxu0 0.0
    %2385 = vmatpush.msra.mxu0 0.0
    %2386 = vmatpush.msra.mxu0 0.0
    %2387 = vmatpush.msra.mxu0 0.0
    %2388 = vmatpush.msra.mxu0 0.0
    %v2389 = vand.u32 %v290, 4294901760
    %v2390 = vsub.f32 %v290, %v2389
    %v2391 = vand.u32 %v2390, 4294901760
    %v2392 = vsub.f32 %v2390, %v2391
    %v2393 = vand.u32 %v2392, 4294901760
    %2394 = vmatpush.msra.mxu0 %v2393
    %v2395 = vand.u32 %v288, 4294901760
    %v2396 = vsub.f32 %v288, %v2395
    %v2397 = vand.u32 %v2396, 4294901760
    %v2398 = vsub.f32 %v2396, %v2397
    %v2399 = vand.u32 %v2398, 4294901760
    %2400 = vmatpush.msra.mxu0 %v2399
    %v2401 = vand.u32 %v300, 4294901760
    %2402 = vmatmul.f32.gmra.mxu0 %v2401
    %v2403 = vpop.f32.mrf.mxu0
    %v2404 = vadd.f32 %v2373, %v2403
    %2405 = vdwg.mxu0
    %2406 = vmatpush.msra.mxu0 0.0
    %2407 = vmatpush.msra.mxu0 0.0
    %2408 = vmatpush.msra.mxu0 0.0
    %2409 = vmatpush.msra.mxu0 0.0
    %2410 = vmatpush.msra.mxu0 0.0
    %2411 = vmatpush.msra.mxu0 0.0
    %2412 = vmatpush.msra.mxu0 0.0
    %2413 = vmatpush.msra.mxu0 0.0
    %2414 = vmatpush.msra.mxu0 0.0
    %2415 = vmatpush.msra.mxu0 0.0
    %2416 = vmatpush.msra.mxu0 0.0
    %2417 = vmatpush.msra.mxu0 0.0
    %2418 = vmatpush.msra.mxu0 0.0
    %2419 = vmatpush.msra.mxu0 0.0
    %v2420 = vand.u32 %v290, 4294901760
    %v2421 = vsub.f32 %v290, %v2420
    %2422 = vmatpush.msra.mxu0 %v2421
    %v2423 = vand.u32 %v288, 4294901760
    %v2424 = vsub.f32 %v288, %v2423
    %2425 = vmatpush.msra.mxu0 %v2424
    %v2426 = vand.u32 %v300, 4294901760
    %v2427 = vsub.f32 %v300, %v2426
    %2428 = vmatmul.f32.gmra.mxu0 %v2427
    %v2429 = vpop.f32.mrf.mxu0
    %v2430 = vadd.f32 %v2404, %v2429
    %2431 = vdwg.mxu0
    %2432 = vmatpush.msra.mxu0 0.0
    %2433 = vmatpush.msra.mxu0 0.0
    %2434 = vmatpush.msra.mxu0 0.0
    %2435 = vmatpush.msra.mxu0 0.0
    %2436 = vmatpush.msra.mxu0 0.0
    %2437 = vmatpush.msra.mxu0 0.0
    %2438 = vmatpush.msra.mxu0 0.0
    %2439 = vmatpush.msra.mxu0 0.0
    %2440 = vmatpush.msra.mxu0 0.0
    %2441 = vmatpush.msra.mxu0 0.0
    %2442 = vmatpush.msra.mxu0 0.0
    %2443 = vmatpush.msra.mxu0 0.0
    %2444 = vmatpush.msra.mxu0 0.0
    %2445 = vmatpush.msra.mxu0 0.0
    %v2446 = vand.u32 %v290, 4294901760
    %2447 = vmatpush.msra.mxu0 %v2446
    %v2448 = vand.u32 %v288, 4294901760
    %2449 = vmatpush.msra.mxu0 %v2448
    %v2450 = vand.u32 %v300, 4294901760
    %v2451 = vsub.f32 %v300, %v2450
    %v2452 = vand.u32 %v2451, 4294901760
    %2453 = vmatmul.f32.gmra.mxu0 %v2452
    %v2454 = vpop.f32.mrf.mxu0
    %v2455 = vadd.f32 %v2430, %v2454
    %2456 = vdwg.mxu0
    %2457 = vmatpush.msra.mxu0 0.0
    %2458 = vmatpush.msra.mxu0 0.0
    %2459 = vmatpush.msra.mxu0 0.0
    %2460 = vmatpush.msra.mxu0 0.0
    %2461 = vmatpush.msra.mxu0 0.0
    %2462 = vmatpush.msra.mxu0 0.0
    %2463 = vmatpush.msra.mxu0 0.0
    %2464 = vmatpush.msra.mxu0 0.0
    %2465 = vmatpush.msra.mxu0 0.0
    %2466 = vmatpush.msra.mxu0 0.0
    %2467 = vmatpush.msra.mxu0 0.0
    %2468 = vmatpush.msra.mxu0 0.0
    %2469 = vmatpush.msra.mxu0 0.0
    %2470 = vmatpush.msra.mxu0 0.0
    %v2471 = vand.u32 %v290, 4294901760
    %v2472 = vsub.f32 %v290, %v2471
    %v2473 = vand.u32 %v2472, 4294901760
    %2474 = vmatpush.msra.mxu0 %v2473
    %v2475 = vand.u32 %v288, 4294901760
    %v2476 = vsub.f32 %v288, %v2475
    %v2477 = vand.u32 %v2476, 4294901760
    %2478 = vmatpush.msra.mxu0 %v2477
    %v2479 = vand.u32 %v300, 4294901760
    %2480 = vmatmul.f32.gmra.mxu0 %v2479
    %v2481 = vpop.f32.mrf.mxu0
    %v2482 = vadd.f32 %v2455, %v2481
    %2483 = vdwg.mxu0
    %2484 = vmatpush.msra.mxu0 0.0
    %2485 = vmatpush.msra.mxu0 0.0
    %2486 = vmatpush.msra.mxu0 0.0
    %2487 = vmatpush.msra.mxu0 0.0
    %2488 = vmatpush.msra.mxu0 0.0
    %2489 = vmatpush.msra.mxu0 0.0
    %2490 = vmatpush.msra.mxu0 0.0
    %2491 = vmatpush.msra.mxu0 0.0
    %2492 = vmatpush.msra.mxu0 0.0
    %2493 = vmatpush.msra.mxu0 0.0
    %2494 = vmatpush.msra.mxu0 0.0
    %2495 = vmatpush.msra.mxu0 0.0
    %2496 = vmatpush.msra.mxu0 0.0
    %2497 = vmatpush.msra.mxu0 0.0
    %v2498 = vand.u32 %v290, 4294901760
    %2499 = vmatpush.msra.mxu0 %v2498
    %v2500 = vand.u32 %v288, 4294901760
    %2501 = vmatpush.msra.mxu0 %v2500
    %v2502 = vand.u32 %v300, 4294901760
    %2503 = vmatmul.f32.gmra.mxu0 %v2502
    %v2504 = vpop.f32.mrf.mxu0
    %v2505 = vadd.f32 %v2482, %v2504
    %2506 = vdwg.mxu0
    %v2507 = vand.u32 %v127, 4294901760
    %2508 = vmatpush.msra.mxu0 %v2507
    %v2509 = vand.u32 %v125, 4294901760
    %2510 = vmatpush.msra.mxu0 %v2509
    %v2511 = vand.u32 %v123, 4294901760
    %2512 = vmatpush.msra.mxu0 %v2511
    %v2513 = vand.u32 %v121, 4294901760
    %2514 = vmatpush.msra.mxu0 %v2513
    %v2515 = vand.u32 %v119, 4294901760
    %2516 = vmatpush.msra.mxu0 %v2515
    %v2517 = vand.u32 %v117, 4294901760
    %2518 = vmatpush.msra.mxu0 %v2517
    %v2519 = vand.u32 %v115, 4294901760
    %2520 = vmatpush.msra.mxu0 %v2519
    %v2521 = vand.u32 %v113, 4294901760
    %2522 = vmatpush.msra.mxu0 %v2521
    %v2523 = vand.u32 %v111, 4294901760
    %2524 = vmatpush.msra.mxu0 %v2523
    %v2525 = vand.u32 %v109, 4294901760
    %2526 = vmatpush.msra.mxu0 %v2525
    %v2527 = vand.u32 %v107, 4294901760
    %2528 = vmatpush.msra.mxu0 %v2527
    %v2529 = vand.u32 %v105, 4294901760
    %2530 = vmatpush.msra.mxu0 %v2529
    %v2531 = vand.u32 %v103, 4294901760
    %2532 = vmatpush.msra.mxu0 %v2531
    %v2533 = vand.u32 %v101, 4294901760
    %2534 = vmatpush.msra.mxu0 %v2533
    %v2535 = vand.u32 %v99, 4294901760
    %2536 = vmatpush.msra.mxu0 %v2535
    %v2537 = vand.u32 %v97, 4294901760
    %2538 = vmatpush.msra.mxu0 %v2537
    %v2539 = vand.u32 %v89, 4294901760
    %v2540 = vsub.f32 %v89, %v2539
    %v2541 = vand.u32 %v2540, 4294901760
    %v2542 = vsub.f32 %v2540, %v2541
    %v2543 = vand.u32 %v2542, 4294901760
    %2544 = vmatmul.f32.gmra.mxu0 %v2543
    %v2545 = vpop.f32.mrf.mxu0
    %v2546 = vadd.f32 %v295, %v2545
    %2547 = vdwg.mxu0
    %v2548 = vand.u32 %v127, 4294901760
    %v2549 = vsub.f32 %v127, %v2548
    %v2550 = vand.u32 %v2549, 4294901760
    %v2551 = vsub.f32 %v2549, %v2550
    %v2552 = vand.u32 %v2551, 4294901760
    %2553 = vmatpush.msra.mxu0 %v2552
    %v2554 = vand.u32 %v125, 4294901760
    %v2555 = vsub.f32 %v125, %v2554
    %v2556 = vand.u32 %v2555, 4294901760
    %v2557 = vsub.f32 %v2555, %v2556
    %v2558 = vand.u32 %v2557, 4294901760
    %2559 = vmatpush.msra.mxu0 %v2558
    %v2560 = vand.u32 %v123, 4294901760
    %v2561 = vsub.f32 %v123, %v2560
    %v2562 = vand.u32 %v2561, 4294901760
    %v2563 = vsub.f32 %v2561, %v2562
    %v2564 = vand.u32 %v2563, 4294901760
    %2565 = vmatpush.msra.mxu0 %v2564
    %v2566 = vand.u32 %v121, 4294901760
    %v2567 = vsub.f32 %v121, %v2566
    %v2568 = vand.u32 %v2567, 4294901760
    %v2569 = vsub.f32 %v2567, %v2568
    %v2570 = vand.u32 %v2569, 4294901760
    %2571 = vmatpush.msra.mxu0 %v2570
    %v2572 = vand.u32 %v119, 4294901760
    %v2573 = vsub.f32 %v119, %v2572
    %v2574 = vand.u32 %v2573, 4294901760
    %v2575 = vsub.f32 %v2573, %v2574
    %v2576 = vand.u32 %v2575, 4294901760
    %2577 = vmatpush.msra.mxu0 %v2576
    %v2578 = vand.u32 %v117, 4294901760
    %v2579 = vsub.f32 %v117, %v2578
    %v2580 = vand.u32 %v2579, 4294901760
    %v2581 = vsub.f32 %v2579, %v2580
    %v2582 = vand.u32 %v2581, 4294901760
    %2583 = vmatpush.msra.mxu0 %v2582
    %v2584 = vand.u32 %v115, 4294901760
    %v2585 = vsub.f32 %v115, %v2584
    %v2586 = vand.u32 %v2585, 4294901760
    %v2587 = vsub.f32 %v2585, %v2586
    %v2588 = vand.u32 %v2587, 4294901760
    %2589 = vmatpush.msra.mxu0 %v2588
    %v2590 = vand.u32 %v113, 4294901760
    %v2591 = vsub.f32 %v113, %v2590
    %v2592 = vand.u32 %v2591, 4294901760
    %v2593 = vsub.f32 %v2591, %v2592
    %v2594 = vand.u32 %v2593, 4294901760
    %2595 = vmatpush.msra.mxu0 %v2594
    %v2596 = vand.u32 %v111, 4294901760
    %v2597 = vsub.f32 %v111, %v2596
    %v2598 = vand.u32 %v2597, 4294901760
    %v2599 = vsub.f32 %v2597, %v2598
    %v2600 = vand.u32 %v2599, 4294901760
    %2601 = vmatpush.msra.mxu0 %v2600
    %v2602 = vand.u32 %v109, 4294901760
    %v2603 = vsub.f32 %v109, %v2602
    %v2604 = vand.u32 %v2603, 4294901760
    %v2605 = vsub.f32 %v2603, %v2604
    %v2606 = vand.u32 %v2605, 4294901760
    %2607 = vmatpush.msra.mxu0 %v2606
    %v2608 = vand.u32 %v107, 4294901760
    %v2609 = vsub.f32 %v107, %v2608
    %v2610 = vand.u32 %v2609, 4294901760
    %v2611 = vsub.f32 %v2609, %v2610
    %v2612 = vand.u32 %v2611, 4294901760
    %2613 = vmatpush.msra.mxu0 %v2612
    %v2614 = vand.u32 %v105, 4294901760
    %v2615 = vsub.f32 %v105, %v2614
    %v2616 = vand.u32 %v2615, 4294901760
    %v2617 = vsub.f32 %v2615, %v2616
    %v2618 = vand.u32 %v2617, 4294901760
    %2619 = vmatpush.msra.mxu0 %v2618
    %v2620 = vand.u32 %v103, 4294901760
    %v2621 = vsub.f32 %v103, %v2620
    %v2622 = vand.u32 %v2621, 4294901760
    %v2623 = vsub.f32 %v2621, %v2622
    %v2624 = vand.u32 %v2623, 4294901760
    %2625 = vmatpush.msra.mxu0 %v2624
    %v2626 = vand.u32 %v101, 4294901760
    %v2627 = vsub.f32 %v101, %v2626
    %v2628 = vand.u32 %v2627, 4294901760
    %v2629 = vsub.f32 %v2627, %v2628
    %v2630 = vand.u32 %v2629, 4294901760
    %2631 = vmatpush.msra.mxu0 %v2630
    %v2632 = vand.u32 %v99, 4294901760
    %v2633 = vsub.f32 %v99, %v2632
    %v2634 = vand.u32 %v2633, 4294901760
    %v2635 = vsub.f32 %v2633, %v2634
    %v2636 = vand.u32 %v2635, 4294901760
    %2637 = vmatpush.msra.mxu0 %v2636
    %v2638 = vand.u32 %v97, 4294901760
    %v2639 = vsub.f32 %v97, %v2638
    %v2640 = vand.u32 %v2639, 4294901760
    %v2641 = vsub.f32 %v2639, %v2640
    %v2642 = vand.u32 %v2641, 4294901760
    %2643 = vmatpush.msra.mxu0 %v2642
    %v2644 = vand.u32 %v89, 4294901760
    %2645 = vmatmul.f32.gmra.mxu0 %v2644
    %v2646 = vpop.f32.mrf.mxu0
    %v2647 = vadd.f32 %v2546, %v2646
    %2648 = vdwg.mxu0
    %v2649 = vand.u32 %v127, 4294901760
    %v2650 = vsub.f32 %v127, %v2649
    %2651 = vmatpush.msra.mxu0 %v2650
    %v2652 = vand.u32 %v125, 4294901760
    %v2653 = vsub.f32 %v125, %v2652
    %2654 = vmatpush.msra.mxu0 %v2653
    %v2655 = vand.u32 %v123, 4294901760
    %v2656 = vsub.f32 %v123, %v2655
    %2657 = vmatpush.msra.mxu0 %v2656
    %v2658 = vand.u32 %v121, 4294901760
    %v2659 = vsub.f32 %v121, %v2658
    %2660 = vmatpush.msra.mxu0 %v2659
    %v2661 = vand.u32 %v119, 4294901760
    %v2662 = vsub.f32 %v119, %v2661
    %2663 = vmatpush.msra.mxu0 %v2662
    %v2664 = vand.u32 %v117, 4294901760
    %v2665 = vsub.f32 %v117, %v2664
    %2666 = vmatpush.msra.mxu0 %v2665
    %v2667 = vand.u32 %v115, 4294901760
    %v2668 = vsub.f32 %v115, %v2667
    %2669 = vmatpush.msra.mxu0 %v2668
    %v2670 = vand.u32 %v113, 4294901760
    %v2671 = vsub.f32 %v113, %v2670
    %2672 = vmatpush.msra.mxu0 %v2671
    %v2673 = vand.u32 %v111, 4294901760
    %v2674 = vsub.f32 %v111, %v2673
    %2675 = vmatpush.msra.mxu0 %v2674
    %v2676 = vand.u32 %v109, 4294901760
    %v2677 = vsub.f32 %v109, %v2676
    %2678 = vmatpush.msra.mxu0 %v2677
    %v2679 = vand.u32 %v107, 4294901760
    %v2680 = vsub.f32 %v107, %v2679
    %2681 = vmatpush.msra.mxu0 %v2680
    %v2682 = vand.u32 %v105, 4294901760
    %v2683 = vsub.f32 %v105, %v2682
    %2684 = vmatpush.msra.mxu0 %v2683
    %v2685 = vand.u32 %v103, 4294901760
    %v2686 = vsub.f32 %v103, %v2685
    %2687 = vmatpush.msra.mxu0 %v2686
    %v2688 = vand.u32 %v101, 4294901760
    %v2689 = vsub.f32 %v101, %v2688
    %2690 = vmatpush.msra.mxu0 %v2689
    %v2691 = vand.u32 %v99, 4294901760
    %v2692 = vsub.f32 %v99, %v2691
    %2693 = vmatpush.msra.mxu0 %v2692
    %v2694 = vand.u32 %v97, 4294901760
    %v2695 = vsub.f32 %v97, %v2694
    %2696 = vmatpush.msra.mxu0 %v2695
    %v2697 = vand.u32 %v89, 4294901760
    %v2698 = vsub.f32 %v89, %v2697
    %2699 = vmatmul.f32.gmra.mxu0 %v2698
    %v2700 = vpop.f32.mrf.mxu0
    %v2701 = vadd.f32 %v2647, %v2700
    %2702 = vdwg.mxu0
    %v2703 = vand.u32 %v127, 4294901760
    %2704 = vmatpush.msra.mxu0 %v2703
    %v2705 = vand.u32 %v125, 4294901760
    %2706 = vmatpush.msra.mxu0 %v2705
    %v2707 = vand.u32 %v123, 4294901760
    %2708 = vmatpush.msra.mxu0 %v2707
    %v2709 = vand.u32 %v121, 4294901760
    %2710 = vmatpush.msra.mxu0 %v2709
    %v2711 = vand.u32 %v119, 4294901760
    %2712 = vmatpush.msra.mxu0 %v2711
    %v2713 = vand.u32 %v117, 4294901760
    %2714 = vmatpush.msra.mxu0 %v2713
    %v2715 = vand.u32 %v115, 4294901760
    %2716 = vmatpush.msra.mxu0 %v2715
    %v2717 = vand.u32 %v113, 4294901760
    %2718 = vmatpush.msra.mxu0 %v2717
    %v2719 = vand.u32 %v111, 4294901760
    %2720 = vmatpush.msra.mxu0 %v2719
    %v2721 = vand.u32 %v109, 4294901760
    %2722 = vmatpush.msra.mxu0 %v2721
    %v2723 = vand.u32 %v107, 4294901760
    %2724 = vmatpush.msra.mxu0 %v2723
    %v2725 = vand.u32 %v105, 4294901760
    %2726 = vmatpush.msra.mxu0 %v2725
    %v2727 = vand.u32 %v103, 4294901760
    %2728 = vmatpush.msra.mxu0 %v2727
    %v2729 = vand.u32 %v101, 4294901760
    %2730 = vmatpush.msra.mxu0 %v2729
    %v2731 = vand.u32 %v99, 4294901760
    %2732 = vmatpush.msra.mxu0 %v2731
    %v2733 = vand.u32 %v97, 4294901760
    %2734 = vmatpush.msra.mxu0 %v2733
    %v2735 = vand.u32 %v89, 4294901760
    %v2736 = vsub.f32 %v89, %v2735
    %v2737 = vand.u32 %v2736, 4294901760
    %2738 = vmatmul.f32.gmra.mxu0 %v2737
    %v2739 = vpop.f32.mrf.mxu0
    %v2740 = vadd.f32 %v2701, %v2739
    %2741 = vdwg.mxu0
    %v2742 = vand.u32 %v127, 4294901760
    %v2743 = vsub.f32 %v127, %v2742
    %v2744 = vand.u32 %v2743, 4294901760
    %2745 = vmatpush.msra.mxu0 %v2744
    %v2746 = vand.u32 %v125, 4294901760
    %v2747 = vsub.f32 %v125, %v2746
    %v2748 = vand.u32 %v2747, 4294901760
    %2749 = vmatpush.msra.mxu0 %v2748
    %v2750 = vand.u32 %v123, 4294901760
    %v2751 = vsub.f32 %v123, %v2750
    %v2752 = vand.u32 %v2751, 4294901760
    %2753 = vmatpush.msra.mxu0 %v2752
    %v2754 = vand.u32 %v121, 4294901760
    %v2755 = vsub.f32 %v121, %v2754
    %v2756 = vand.u32 %v2755, 4294901760
    %2757 = vmatpush.msra.mxu0 %v2756
    %v2758 = vand.u32 %v119, 4294901760
    %v2759 = vsub.f32 %v119, %v2758
    %v2760 = vand.u32 %v2759, 4294901760
    %2761 = vmatpush.msra.mxu0 %v2760
    %v2762 = vand.u32 %v117, 4294901760
    %v2763 = vsub.f32 %v117, %v2762
    %v2764 = vand.u32 %v2763, 4294901760
    %2765 = vmatpush.msra.mxu0 %v2764
    %v2766 = vand.u32 %v115, 4294901760
    %v2767 = vsub.f32 %v115, %v2766
    %v2768 = vand.u32 %v2767, 4294901760
    %2769 = vmatpush.msra.mxu0 %v2768
    %v2770 = vand.u32 %v113, 4294901760
    %v2771 = vsub.f32 %v113, %v2770
    %v2772 = vand.u32 %v2771, 4294901760
    %2773 = vmatpush.msra.mxu0 %v2772
    %v2774 = vand.u32 %v111, 4294901760
    %v2775 = vsub.f32 %v111, %v2774
    %v2776 = vand.u32 %v2775, 4294901760
    %2777 = vmatpush.msra.mxu0 %v2776
    %v2778 = vand.u32 %v109, 4294901760
    %v2779 = vsub.f32 %v109, %v2778
    %v2780 = vand.u32 %v2779, 4294901760
    %2781 = vmatpush.msra.mxu0 %v2780
    %v2782 = vand.u32 %v107, 4294901760
    %v2783 = vsub.f32 %v107, %v2782
    %v2784 = vand.u32 %v2783, 4294901760
    %2785 = vmatpush.msra.mxu0 %v2784
    %v2786 = vand.u32 %v105, 4294901760
    %v2787 = vsub.f32 %v105, %v2786
    %v2788 = vand.u32 %v2787, 4294901760
    %2789 = vmatpush.msra.mxu0 %v2788
    %v2790 = vand.u32 %v103, 4294901760
    %v2791 = vsub.f32 %v103, %v2790
    %v2792 = vand.u32 %v2791, 4294901760
    %2793 = vmatpush.msra.mxu0 %v2792
    %v2794 = vand.u32 %v101, 4294901760
    %v2795 = vsub.f32 %v101, %v2794
    %v2796 = vand.u32 %v2795, 4294901760
    %2797 = vmatpush.msra.mxu0 %v2796
    %v2798 = vand.u32 %v99, 4294901760
    %v2799 = vsub.f32 %v99, %v2798
    %v2800 = vand.u32 %v2799, 4294901760
    %2801 = vmatpush.msra.mxu0 %v2800
    %v2802 = vand.u32 %v97, 4294901760
    %v2803 = vsub.f32 %v97, %v2802
    %v2804 = vand.u32 %v2803, 4294901760
    %2805 = vmatpush.msra.mxu0 %v2804
    %v2806 = vand.u32 %v89, 4294901760
    %2807 = vmatmul.f32.gmra.mxu0 %v2806
    %v2808 = vpop.f32.mrf.mxu0
    %v2809 = vadd.f32 %v2740, %v2808
    %2810 = vdwg.mxu0
    %v2811 = vand.u32 %v127, 4294901760
    %2812 = vmatpush.msra.mxu0 %v2811
    %v2813 = vand.u32 %v125, 4294901760
    %2814 = vmatpush.msra.mxu0 %v2813
    %v2815 = vand.u32 %v123, 4294901760
    %2816 = vmatpush.msra.mxu0 %v2815
    %v2817 = vand.u32 %v121, 4294901760
    %2818 = vmatpush.msra.mxu0 %v2817
    %v2819 = vand.u32 %v119, 4294901760
    %2820 = vmatpush.msra.mxu0 %v2819
    %v2821 = vand.u32 %v117, 4294901760
    %2822 = vmatpush.msra.mxu0 %v2821
    %v2823 = vand.u32 %v115, 4294901760
    %2824 = vmatpush.msra.mxu0 %v2823
    %v2825 = vand.u32 %v113, 4294901760
    %2826 = vmatpush.msra.mxu0 %v2825
    %v2827 = vand.u32 %v111, 4294901760
    %2828 = vmatpush.msra.mxu0 %v2827
    %v2829 = vand.u32 %v109, 4294901760
    %2830 = vmatpush.msra.mxu0 %v2829
    %v2831 = vand.u32 %v107, 4294901760
    %2832 = vmatpush.msra.mxu0 %v2831
    %v2833 = vand.u32 %v105, 4294901760
    %2834 = vmatpush.msra.mxu0 %v2833
    %v2835 = vand.u32 %v103, 4294901760
    %2836 = vmatpush.msra.mxu0 %v2835
    %v2837 = vand.u32 %v101, 4294901760
    %2838 = vmatpush.msra.mxu0 %v2837
    %v2839 = vand.u32 %v99, 4294901760
    %2840 = vmatpush.msra.mxu0 %v2839
    %v2841 = vand.u32 %v97, 4294901760
    %2842 = vmatpush.msra.mxu0 %v2841
    %v2843 = vand.u32 %v89, 4294901760
    %2844 = vmatmul.f32.gmra.mxu0 %v2843
    %v2845 = vpop.f32.mrf.mxu0
    %v2846 = vadd.f32 %v2809, %v2845
    %2847 = vdwg.mxu0
    %v2848 = vand.u32 %v159, 4294901760
    %2849 = vmatpush.msra.mxu0 %v2848
    %v2850 = vand.u32 %v157, 4294901760
    %2851 = vmatpush.msra.mxu0 %v2850
    %v2852 = vand.u32 %v155, 4294901760
    %2853 = vmatpush.msra.mxu0 %v2852
    %v2854 = vand.u32 %v153, 4294901760
    %2855 = vmatpush.msra.mxu0 %v2854
    %v2856 = vand.u32 %v151, 4294901760
    %2857 = vmatpush.msra.mxu0 %v2856
    %v2858 = vand.u32 %v149, 4294901760
    %2859 = vmatpush.msra.mxu0 %v2858
    %v2860 = vand.u32 %v147, 4294901760
    %2861 = vmatpush.msra.mxu0 %v2860
    %v2862 = vand.u32 %v145, 4294901760
    %2863 = vmatpush.msra.mxu0 %v2862
    %v2864 = vand.u32 %v143, 4294901760
    %2865 = vmatpush.msra.mxu0 %v2864
    %v2866 = vand.u32 %v141, 4294901760
    %2867 = vmatpush.msra.mxu0 %v2866
    %v2868 = vand.u32 %v139, 4294901760
    %2869 = vmatpush.msra.mxu0 %v2868
    %v2870 = vand.u32 %v137, 4294901760
    %2871 = vmatpush.msra.mxu0 %v2870
    %v2872 = vand.u32 %v135, 4294901760
    %2873 = vmatpush.msra.mxu0 %v2872
    %v2874 = vand.u32 %v133, 4294901760
    %2875 = vmatpush.msra.mxu0 %v2874
    %v2876 = vand.u32 %v131, 4294901760
    %2877 = vmatpush.msra.mxu0 %v2876
    %v2878 = vand.u32 %v129, 4294901760
    %2879 = vmatpush.msra.mxu0 %v2878
    %v2880 = vand.u32 %v90, 4294901760
    %v2881 = vsub.f32 %v90, %v2880
    %v2882 = vand.u32 %v2881, 4294901760
    %v2883 = vsub.f32 %v2881, %v2882
    %v2884 = vand.u32 %v2883, 4294901760
    %2885 = vmatmul.f32.gmra.mxu0 %v2884
    %v2886 = vpop.f32.mrf.mxu0
    %v2887 = vadd.f32 %v2846, %v2886
    %2888 = vdwg.mxu0
    %v2889 = vand.u32 %v159, 4294901760
    %v2890 = vsub.f32 %v159, %v2889
    %v2891 = vand.u32 %v2890, 4294901760
    %v2892 = vsub.f32 %v2890, %v2891
    %v2893 = vand.u32 %v2892, 4294901760
    %2894 = vmatpush.msra.mxu0 %v2893
    %v2895 = vand.u32 %v157, 4294901760
    %v2896 = vsub.f32 %v157, %v2895
    %v2897 = vand.u32 %v2896, 4294901760
    %v2898 = vsub.f32 %v2896, %v2897
    %v2899 = vand.u32 %v2898, 4294901760
    %2900 = vmatpush.msra.mxu0 %v2899
    %v2901 = vand.u32 %v155, 4294901760
    %v2902 = vsub.f32 %v155, %v2901
    %v2903 = vand.u32 %v2902, 4294901760
    %v2904 = vsub.f32 %v2902, %v2903
    %v2905 = vand.u32 %v2904, 4294901760
    %2906 = vmatpush.msra.mxu0 %v2905
    %v2907 = vand.u32 %v153, 4294901760
    %v2908 = vsub.f32 %v153, %v2907
    %v2909 = vand.u32 %v2908, 4294901760
    %v2910 = vsub.f32 %v2908, %v2909
    %v2911 = vand.u32 %v2910, 4294901760
    %2912 = vmatpush.msra.mxu0 %v2911
    %v2913 = vand.u32 %v151, 4294901760
    %v2914 = vsub.f32 %v151, %v2913
    %v2915 = vand.u32 %v2914, 4294901760
    %v2916 = vsub.f32 %v2914, %v2915
    %v2917 = vand.u32 %v2916, 4294901760
    %2918 = vmatpush.msra.mxu0 %v2917
    %v2919 = vand.u32 %v149, 4294901760
    %v2920 = vsub.f32 %v149, %v2919
    %v2921 = vand.u32 %v2920, 4294901760
    %v2922 = vsub.f32 %v2920, %v2921
    %v2923 = vand.u32 %v2922, 4294901760
    %2924 = vmatpush.msra.mxu0 %v2923
    %v2925 = vand.u32 %v147, 4294901760
    %v2926 = vsub.f32 %v147, %v2925
    %v2927 = vand.u32 %v2926, 4294901760
    %v2928 = vsub.f32 %v2926, %v2927
    %v2929 = vand.u32 %v2928, 4294901760
    %2930 = vmatpush.msra.mxu0 %v2929
    %v2931 = vand.u32 %v145, 4294901760
    %v2932 = vsub.f32 %v145, %v2931
    %v2933 = vand.u32 %v2932, 4294901760
    %v2934 = vsub.f32 %v2932, %v2933
    %v2935 = vand.u32 %v2934, 4294901760
    %2936 = vmatpush.msra.mxu0 %v2935
    %v2937 = vand.u32 %v143, 4294901760
    %v2938 = vsub.f32 %v143, %v2937
    %v2939 = vand.u32 %v2938, 4294901760
    %v2940 = vsub.f32 %v2938, %v2939
    %v2941 = vand.u32 %v2940, 4294901760
    %2942 = vmatpush.msra.mxu0 %v2941
    %v2943 = vand.u32 %v141, 4294901760
    %v2944 = vsub.f32 %v141, %v2943
    %v2945 = vand.u32 %v2944, 4294901760
    %v2946 = vsub.f32 %v2944, %v2945
    %v2947 = vand.u32 %v2946, 4294901760
    %2948 = vmatpush.msra.mxu0 %v2947
    %v2949 = vand.u32 %v139, 4294901760
    %v2950 = vsub.f32 %v139, %v2949
    %v2951 = vand.u32 %v2950, 4294901760
    %v2952 = vsub.f32 %v2950, %v2951
    %v2953 = vand.u32 %v2952, 4294901760
    %2954 = vmatpush.msra.mxu0 %v2953
    %v2955 = vand.u32 %v137, 4294901760
    %v2956 = vsub.f32 %v137, %v2955
    %v2957 = vand.u32 %v2956, 4294901760
    %v2958 = vsub.f32 %v2956, %v2957
    %v2959 = vand.u32 %v2958, 4294901760
    %2960 = vmatpush.msra.mxu0 %v2959
    %v2961 = vand.u32 %v135, 4294901760
    %v2962 = vsub.f32 %v135, %v2961
    %v2963 = vand.u32 %v2962, 4294901760
    %v2964 = vsub.f32 %v2962, %v2963
    %v2965 = vand.u32 %v2964, 4294901760
    %2966 = vmatpush.msra.mxu0 %v2965
    %v2967 = vand.u32 %v133, 4294901760
    %v2968 = vsub.f32 %v133, %v2967
    %v2969 = vand.u32 %v2968, 4294901760
    %v2970 = vsub.f32 %v2968, %v2969
    %v2971 = vand.u32 %v2970, 4294901760
    %2972 = vmatpush.msra.mxu0 %v2971
    %v2973 = vand.u32 %v131, 4294901760
    %v2974 = vsub.f32 %v131, %v2973
    %v2975 = vand.u32 %v2974, 4294901760
    %v2976 = vsub.f32 %v2974, %v2975
    %v2977 = vand.u32 %v2976, 4294901760
    %2978 = vmatpush.msra.mxu0 %v2977
    %v2979 = vand.u32 %v129, 4294901760
    %v2980 = vsub.f32 %v129, %v2979
    %v2981 = vand.u32 %v2980, 4294901760
    %v2982 = vsub.f32 %v2980, %v2981
    %v2983 = vand.u32 %v2982, 4294901760
    %2984 = vmatpush.msra.mxu0 %v2983
    %v2985 = vand.u32 %v90, 4294901760
    %2986 = vmatmul.f32.gmra.mxu0 %v2985
    %v2987 = vpop.f32.mrf.mxu0
    %v2988 = vadd.f32 %v2887, %v2987
    %2989 = vdwg.mxu0
    %v2990 = vand.u32 %v159, 4294901760
    %v2991 = vsub.f32 %v159, %v2990
    %2992 = vmatpush.msra.mxu0 %v2991
    %v2993 = vand.u32 %v157, 4294901760
    %v2994 = vsub.f32 %v157, %v2993
    %2995 = vmatpush.msra.mxu0 %v2994
    %v2996 = vand.u32 %v155, 4294901760
    %v2997 = vsub.f32 %v155, %v2996
    %2998 = vmatpush.msra.mxu0 %v2997
    %v2999 = vand.u32 %v153, 4294901760
    %v3000 = vsub.f32 %v153, %v2999
    %3001 = vmatpush.msra.mxu0 %v3000
    %v3002 = vand.u32 %v151, 4294901760
    %v3003 = vsub.f32 %v151, %v3002
    %3004 = vmatpush.msra.mxu0 %v3003
    %v3005 = vand.u32 %v149, 4294901760
    %v3006 = vsub.f32 %v149, %v3005
    %3007 = vmatpush.msra.mxu0 %v3006
    %v3008 = vand.u32 %v147, 4294901760
    %v3009 = vsub.f32 %v147, %v3008
    %3010 = vmatpush.msra.mxu0 %v3009
    %v3011 = vand.u32 %v145, 4294901760
    %v3012 = vsub.f32 %v145, %v3011
    %3013 = vmatpush.msra.mxu0 %v3012
    %v3014 = vand.u32 %v143, 4294901760
    %v3015 = vsub.f32 %v143, %v3014
    %3016 = vmatpush.msra.mxu0 %v3015
    %v3017 = vand.u32 %v141, 4294901760
    %v3018 = vsub.f32 %v141, %v3017
    %3019 = vmatpush.msra.mxu0 %v3018
    %v3020 = vand.u32 %v139, 4294901760
    %v3021 = vsub.f32 %v139, %v3020
    %3022 = vmatpush.msra.mxu0 %v3021
    %v3023 = vand.u32 %v137, 4294901760
    %v3024 = vsub.f32 %v137, %v3023
    %3025 = vmatpush.msra.mxu0 %v3024
    %v3026 = vand.u32 %v135, 4294901760
    %v3027 = vsub.f32 %v135, %v3026
    %3028 = vmatpush.msra.mxu0 %v3027
    %v3029 = vand.u32 %v133, 4294901760
    %v3030 = vsub.f32 %v133, %v3029
    %3031 = vmatpush.msra.mxu0 %v3030
    %v3032 = vand.u32 %v131, 4294901760
    %v3033 = vsub.f32 %v131, %v3032
    %3034 = vmatpush.msra.mxu0 %v3033
    %v3035 = vand.u32 %v129, 4294901760
    %v3036 = vsub.f32 %v129, %v3035
    %3037 = vmatpush.msra.mxu0 %v3036
    %v3038 = vand.u32 %v90, 4294901760
    %v3039 = vsub.f32 %v90, %v3038
    %3040 = vmatmul.f32.gmra.mxu0 %v3039
    %v3041 = vpop.f32.mrf.mxu0
    %v3042 = vadd.f32 %v2988, %v3041
    %3043 = vdwg.mxu0
    %v3044 = vand.u32 %v159, 4294901760
    %3045 = vmatpush.msra.mxu0 %v3044
    %v3046 = vand.u32 %v157, 4294901760
    %3047 = vmatpush.msra.mxu0 %v3046
    %v3048 = vand.u32 %v155, 4294901760
    %3049 = vmatpush.msra.mxu0 %v3048
    %v3050 = vand.u32 %v153, 4294901760
    %3051 = vmatpush.msra.mxu0 %v3050
    %v3052 = vand.u32 %v151, 4294901760
    %3053 = vmatpush.msra.mxu0 %v3052
    %v3054 = vand.u32 %v149, 4294901760
    %3055 = vmatpush.msra.mxu0 %v3054
    %v3056 = vand.u32 %v147, 4294901760
    %3057 = vmatpush.msra.mxu0 %v3056
    %v3058 = vand.u32 %v145, 4294901760
    %3059 = vmatpush.msra.mxu0 %v3058
    %v3060 = vand.u32 %v143, 4294901760
    %3061 = vmatpush.msra.mxu0 %v3060
    %v3062 = vand.u32 %v141, 4294901760
    %3063 = vmatpush.msra.mxu0 %v3062
    %v3064 = vand.u32 %v139, 4294901760
    %3065 = vmatpush.msra.mxu0 %v3064
    %v3066 = vand.u32 %v137, 4294901760
    %3067 = vmatpush.msra.mxu0 %v3066
    %v3068 = vand.u32 %v135, 4294901760
    %3069 = vmatpush.msra.mxu0 %v3068
    %v3070 = vand.u32 %v133, 4294901760
    %3071 = vmatpush.msra.mxu0 %v3070
    %v3072 = vand.u32 %v131, 4294901760
    %3073 = vmatpush.msra.mxu0 %v3072
    %v3074 = vand.u32 %v129, 4294901760
    %3075 = vmatpush.msra.mxu0 %v3074
    %v3076 = vand.u32 %v90, 4294901760
    %v3077 = vsub.f32 %v90, %v3076
    %v3078 = vand.u32 %v3077, 4294901760
    %3079 = vmatmul.f32.gmra.mxu0 %v3078
    %v3080 = vpop.f32.mrf.mxu0
    %v3081 = vadd.f32 %v3042, %v3080
    %3082 = vdwg.mxu0
    %v3083 = vand.u32 %v159, 4294901760
    %v3084 = vsub.f32 %v159, %v3083
    %v3085 = vand.u32 %v3084, 4294901760
    %3086 = vmatpush.msra.mxu0 %v3085
    %v3087 = vand.u32 %v157, 4294901760
    %v3088 = vsub.f32 %v157, %v3087
    %v3089 = vand.u32 %v3088, 4294901760
    %3090 = vmatpush.msra.mxu0 %v3089
    %v3091 = vand.u32 %v155, 4294901760
    %v3092 = vsub.f32 %v155, %v3091
    %v3093 = vand.u32 %v3092, 4294901760
    %3094 = vmatpush.msra.mxu0 %v3093
    %v3095 = vand.u32 %v153, 4294901760
    %v3096 = vsub.f32 %v153, %v3095
    %v3097 = vand.u32 %v3096, 4294901760
    %3098 = vmatpush.msra.mxu0 %v3097
    %v3099 = vand.u32 %v151, 4294901760
    %v3100 = vsub.f32 %v151, %v3099
    %v3101 = vand.u32 %v3100, 4294901760
    %3102 = vmatpush.msra.mxu0 %v3101
    %v3103 = vand.u32 %v149, 4294901760
    %v3104 = vsub.f32 %v149, %v3103
    %v3105 = vand.u32 %v3104, 4294901760
    %3106 = vmatpush.msra.mxu0 %v3105
    %v3107 = vand.u32 %v147, 4294901760
    %v3108 = vsub.f32 %v147, %v3107
    %v3109 = vand.u32 %v3108, 4294901760
    %3110 = vmatpush.msra.mxu0 %v3109
    %v3111 = vand.u32 %v145, 4294901760
    %v3112 = vsub.f32 %v145, %v3111
    %v3113 = vand.u32 %v3112, 4294901760
    %3114 = vmatpush.msra.mxu0 %v3113
    %v3115 = vand.u32 %v143, 4294901760
    %v3116 = vsub.f32 %v143, %v3115
    %v3117 = vand.u32 %v3116, 4294901760
    %3118 = vmatpush.msra.mxu0 %v3117
    %v3119 = vand.u32 %v141, 4294901760
    %v3120 = vsub.f32 %v141, %v3119
    %v3121 = vand.u32 %v3120, 4294901760
    %3122 = vmatpush.msra.mxu0 %v3121
    %v3123 = vand.u32 %v139, 4294901760
    %v3124 = vsub.f32 %v139, %v3123
    %v3125 = vand.u32 %v3124, 4294901760
    %3126 = vmatpush.msra.mxu0 %v3125
    %v3127 = vand.u32 %v137, 4294901760
    %v3128 = vsub.f32 %v137, %v3127
    %v3129 = vand.u32 %v3128, 4294901760
    %3130 = vmatpush.msra.mxu0 %v3129
    %v3131 = vand.u32 %v135, 4294901760
    %v3132 = vsub.f32 %v135, %v3131
    %v3133 = vand.u32 %v3132, 4294901760
    %3134 = vmatpush.msra.mxu0 %v3133
    %v3135 = vand.u32 %v133, 4294901760
    %v3136 = vsub.f32 %v133, %v3135
    %v3137 = vand.u32 %v3136, 4294901760
    %3138 = vmatpush.msra.mxu0 %v3137
    %v3139 = vand.u32 %v131, 4294901760
    %v3140 = vsub.f32 %v131, %v3139
    %v3141 = vand.u32 %v3140, 4294901760
    %3142 = vmatpush.msra.mxu0 %v3141
    %v3143 = vand.u32 %v129, 4294901760
    %v3144 = vsub.f32 %v129, %v3143
    %v3145 = vand.u32 %v3144, 4294901760
    %3146 = vmatpush.msra.mxu0 %v3145
    %v3147 = vand.u32 %v90, 4294901760
    %3148 = vmatmul.f32.gmra.mxu0 %v3147
    %v3149 = vpop.f32.mrf.mxu0
    %v3150 = vadd.f32 %v3081, %v3149
    %3151 = vdwg.mxu0
    %v3152 = vand.u32 %v159, 4294901760
    %3153 = vmatpush.msra.mxu0 %v3152
    %v3154 = vand.u32 %v157, 4294901760
    %3155 = vmatpush.msra.mxu0 %v3154
    %v3156 = vand.u32 %v155, 4294901760
    %3157 = vmatpush.msra.mxu0 %v3156
    %v3158 = vand.u32 %v153, 4294901760
    %3159 = vmatpush.msra.mxu0 %v3158
    %v3160 = vand.u32 %v151, 4294901760
    %3161 = vmatpush.msra.mxu0 %v3160
    %v3162 = vand.u32 %v149, 4294901760
    %3163 = vmatpush.msra.mxu0 %v3162
    %v3164 = vand.u32 %v147, 4294901760
    %3165 = vmatpush.msra.mxu0 %v3164
    %v3166 = vand.u32 %v145, 4294901760
    %3167 = vmatpush.msra.mxu0 %v3166
    %v3168 = vand.u32 %v143, 4294901760
    %3169 = vmatpush.msra.mxu0 %v3168
    %v3170 = vand.u32 %v141, 4294901760
    %3171 = vmatpush.msra.mxu0 %v3170
    %v3172 = vand.u32 %v139, 4294901760
    %3173 = vmatpush.msra.mxu0 %v3172
    %v3174 = vand.u32 %v137, 4294901760
    %3175 = vmatpush.msra.mxu0 %v3174
    %v3176 = vand.u32 %v135, 4294901760
    %3177 = vmatpush.msra.mxu0 %v3176
    %v3178 = vand.u32 %v133, 4294901760
    %3179 = vmatpush.msra.mxu0 %v3178
    %v3180 = vand.u32 %v131, 4294901760
    %3181 = vmatpush.msra.mxu0 %v3180
    %v3182 = vand.u32 %v129, 4294901760
    %3183 = vmatpush.msra.mxu0 %v3182
    %v3184 = vand.u32 %v90, 4294901760
    %3185 = vmatmul.f32.gmra.mxu0 %v3184
    %v3186 = vpop.f32.mrf.mxu0
    %v3187 = vadd.f32 %v3150, %v3186
    %3188 = vdwg.mxu0
    %v3189 = vand.u32 %v191, 4294901760
    %3190 = vmatpush.msra.mxu0 %v3189
    %v3191 = vand.u32 %v189, 4294901760
    %3192 = vmatpush.msra.mxu0 %v3191
    %v3193 = vand.u32 %v187, 4294901760
    %3194 = vmatpush.msra.mxu0 %v3193
    %v3195 = vand.u32 %v185, 4294901760
    %3196 = vmatpush.msra.mxu0 %v3195
    %v3197 = vand.u32 %v183, 4294901760
    %3198 = vmatpush.msra.mxu0 %v3197
    %v3199 = vand.u32 %v181, 4294901760
    %3200 = vmatpush.msra.mxu0 %v3199
    %v3201 = vand.u32 %v179, 4294901760
    %3202 = vmatpush.msra.mxu0 %v3201
    %v3203 = vand.u32 %v177, 4294901760
    %3204 = vmatpush.msra.mxu0 %v3203
    %v3205 = vand.u32 %v175, 4294901760
    %3206 = vmatpush.msra.mxu0 %v3205
    %v3207 = vand.u32 %v173, 4294901760
    %3208 = vmatpush.msra.mxu0 %v3207
    %v3209 = vand.u32 %v171, 4294901760
    %3210 = vmatpush.msra.mxu0 %v3209
    %v3211 = vand.u32 %v169, 4294901760
    %3212 = vmatpush.msra.mxu0 %v3211
    %v3213 = vand.u32 %v167, 4294901760
    %3214 = vmatpush.msra.mxu0 %v3213
    %v3215 = vand.u32 %v165, 4294901760
    %3216 = vmatpush.msra.mxu0 %v3215
    %v3217 = vand.u32 %v163, 4294901760
    %3218 = vmatpush.msra.mxu0 %v3217
    %v3219 = vand.u32 %v161, 4294901760
    %3220 = vmatpush.msra.mxu0 %v3219
    %v3221 = vand.u32 %v91, 4294901760
    %v3222 = vsub.f32 %v91, %v3221
    %v3223 = vand.u32 %v3222, 4294901760
    %v3224 = vsub.f32 %v3222, %v3223
    %v3225 = vand.u32 %v3224, 4294901760
    %3226 = vmatmul.f32.gmra.mxu0 %v3225
    %v3227 = vpop.f32.mrf.mxu0
    %v3228 = vadd.f32 %v3187, %v3227
    %3229 = vdwg.mxu0
    %v3230 = vand.u32 %v191, 4294901760
    %v3231 = vsub.f32 %v191, %v3230
    %v3232 = vand.u32 %v3231, 4294901760
    %v3233 = vsub.f32 %v3231, %v3232
    %v3234 = vand.u32 %v3233, 4294901760
    %3235 = vmatpush.msra.mxu0 %v3234
    %v3236 = vand.u32 %v189, 4294901760
    %v3237 = vsub.f32 %v189, %v3236
    %v3238 = vand.u32 %v3237, 4294901760
    %v3239 = vsub.f32 %v3237, %v3238
    %v3240 = vand.u32 %v3239, 4294901760
    %3241 = vmatpush.msra.mxu0 %v3240
    %v3242 = vand.u32 %v187, 4294901760
    %v3243 = vsub.f32 %v187, %v3242
    %v3244 = vand.u32 %v3243, 4294901760
    %v3245 = vsub.f32 %v3243, %v3244
    %v3246 = vand.u32 %v3245, 4294901760
    %3247 = vmatpush.msra.mxu0 %v3246
    %v3248 = vand.u32 %v185, 4294901760
    %v3249 = vsub.f32 %v185, %v3248
    %v3250 = vand.u32 %v3249, 4294901760
    %v3251 = vsub.f32 %v3249, %v3250
    %v3252 = vand.u32 %v3251, 4294901760
    %3253 = vmatpush.msra.mxu0 %v3252
    %v3254 = vand.u32 %v183, 4294901760
    %v3255 = vsub.f32 %v183, %v3254
    %v3256 = vand.u32 %v3255, 4294901760
    %v3257 = vsub.f32 %v3255, %v3256
    %v3258 = vand.u32 %v3257, 4294901760
    %3259 = vmatpush.msra.mxu0 %v3258
    %v3260 = vand.u32 %v181, 4294901760
    %v3261 = vsub.f32 %v181, %v3260
    %v3262 = vand.u32 %v3261, 4294901760
    %v3263 = vsub.f32 %v3261, %v3262
    %v3264 = vand.u32 %v3263, 4294901760
    %3265 = vmatpush.msra.mxu0 %v3264
    %v3266 = vand.u32 %v179, 4294901760
    %v3267 = vsub.f32 %v179, %v3266
    %v3268 = vand.u32 %v3267, 4294901760
    %v3269 = vsub.f32 %v3267, %v3268
    %v3270 = vand.u32 %v3269, 4294901760
    %3271 = vmatpush.msra.mxu0 %v3270
    %v3272 = vand.u32 %v177, 4294901760
    %v3273 = vsub.f32 %v177, %v3272
    %v3274 = vand.u32 %v3273, 4294901760
    %v3275 = vsub.f32 %v3273, %v3274
    %v3276 = vand.u32 %v3275, 4294901760
    %3277 = vmatpush.msra.mxu0 %v3276
    %v3278 = vand.u32 %v175, 4294901760
    %v3279 = vsub.f32 %v175, %v3278
    %v3280 = vand.u32 %v3279, 4294901760
    %v3281 = vsub.f32 %v3279, %v3280
    %v3282 = vand.u32 %v3281, 4294901760
    %3283 = vmatpush.msra.mxu0 %v3282
    %v3284 = vand.u32 %v173, 4294901760
    %v3285 = vsub.f32 %v173, %v3284
    %v3286 = vand.u32 %v3285, 4294901760
    %v3287 = vsub.f32 %v3285, %v3286
    %v3288 = vand.u32 %v3287, 4294901760
    %3289 = vmatpush.msra.mxu0 %v3288
    %v3290 = vand.u32 %v171, 4294901760
    %v3291 = vsub.f32 %v171, %v3290
    %v3292 = vand.u32 %v3291, 4294901760
    %v3293 = vsub.f32 %v3291, %v3292
    %v3294 = vand.u32 %v3293, 4294901760
    %3295 = vmatpush.msra.mxu0 %v3294
    %v3296 = vand.u32 %v169, 4294901760
    %v3297 = vsub.f32 %v169, %v3296
    %v3298 = vand.u32 %v3297, 4294901760
    %v3299 = vsub.f32 %v3297, %v3298
    %v3300 = vand.u32 %v3299, 4294901760
    %3301 = vmatpush.msra.mxu0 %v3300
    %v3302 = vand.u32 %v167, 4294901760
    %v3303 = vsub.f32 %v167, %v3302
    %v3304 = vand.u32 %v3303, 4294901760
    %v3305 = vsub.f32 %v3303, %v3304
    %v3306 = vand.u32 %v3305, 4294901760
    %3307 = vmatpush.msra.mxu0 %v3306
    %v3308 = vand.u32 %v165, 4294901760
    %v3309 = vsub.f32 %v165, %v3308
    %v3310 = vand.u32 %v3309, 4294901760
    %v3311 = vsub.f32 %v3309, %v3310
    %v3312 = vand.u32 %v3311, 4294901760
    %3313 = vmatpush.msra.mxu0 %v3312
    %v3314 = vand.u32 %v163, 4294901760
    %v3315 = vsub.f32 %v163, %v3314
    %v3316 = vand.u32 %v3315, 4294901760
    %v3317 = vsub.f32 %v3315, %v3316
    %v3318 = vand.u32 %v3317, 4294901760
    %3319 = vmatpush.msra.mxu0 %v3318
    %v3320 = vand.u32 %v161, 4294901760
    %v3321 = vsub.f32 %v161, %v3320
    %v3322 = vand.u32 %v3321, 4294901760
    %v3323 = vsub.f32 %v3321, %v3322
    %v3324 = vand.u32 %v3323, 4294901760
    %3325 = vmatpush.msra.mxu0 %v3324
    %v3326 = vand.u32 %v91, 4294901760
    %3327 = vmatmul.f32.gmra.mxu0 %v3326
    %v3328 = vpop.f32.mrf.mxu0
    %v3329 = vadd.f32 %v3228, %v3328
    %3330 = vdwg.mxu0
    %v3331 = vand.u32 %v191, 4294901760
    %v3332 = vsub.f32 %v191, %v3331
    %3333 = vmatpush.msra.mxu0 %v3332
    %v3334 = vand.u32 %v189, 4294901760
    %v3335 = vsub.f32 %v189, %v3334
    %3336 = vmatpush.msra.mxu0 %v3335
    %v3337 = vand.u32 %v187, 4294901760
    %v3338 = vsub.f32 %v187, %v3337
    %3339 = vmatpush.msra.mxu0 %v3338
    %v3340 = vand.u32 %v185, 4294901760
    %v3341 = vsub.f32 %v185, %v3340
    %3342 = vmatpush.msra.mxu0 %v3341
    %v3343 = vand.u32 %v183, 4294901760
    %v3344 = vsub.f32 %v183, %v3343
    %3345 = vmatpush.msra.mxu0 %v3344
    %v3346 = vand.u32 %v181, 4294901760
    %v3347 = vsub.f32 %v181, %v3346
    %3348 = vmatpush.msra.mxu0 %v3347
    %v3349 = vand.u32 %v179, 4294901760
    %v3350 = vsub.f32 %v179, %v3349
    %3351 = vmatpush.msra.mxu0 %v3350
    %v3352 = vand.u32 %v177, 4294901760
    %v3353 = vsub.f32 %v177, %v3352
    %3354 = vmatpush.msra.mxu0 %v3353
    %v3355 = vand.u32 %v175, 4294901760
    %v3356 = vsub.f32 %v175, %v3355
    %3357 = vmatpush.msra.mxu0 %v3356
    %v3358 = vand.u32 %v173, 4294901760
    %v3359 = vsub.f32 %v173, %v3358
    %3360 = vmatpush.msra.mxu0 %v3359
    %v3361 = vand.u32 %v171, 4294901760
    %v3362 = vsub.f32 %v171, %v3361
    %3363 = vmatpush.msra.mxu0 %v3362
    %v3364 = vand.u32 %v169, 4294901760
    %v3365 = vsub.f32 %v169, %v3364
    %3366 = vmatpush.msra.mxu0 %v3365
    %v3367 = vand.u32 %v167, 4294901760
    %v3368 = vsub.f32 %v167, %v3367
    %3369 = vmatpush.msra.mxu0 %v3368
    %v3370 = vand.u32 %v165, 4294901760
    %v3371 = vsub.f32 %v165, %v3370
    %3372 = vmatpush.msra.mxu0 %v3371
    %v3373 = vand.u32 %v163, 4294901760
    %v3374 = vsub.f32 %v163, %v3373
    %3375 = vmatpush.msra.mxu0 %v3374
    %v3376 = vand.u32 %v161, 4294901760
    %v3377 = vsub.f32 %v161, %v3376
    %3378 = vmatpush.msra.mxu0 %v3377
    %v3379 = vand.u32 %v91, 4294901760
    %v3380 = vsub.f32 %v91, %v3379
    %3381 = vmatmul.f32.gmra.mxu0 %v3380
    %v3382 = vpop.f32.mrf.mxu0
    %v3383 = vadd.f32 %v3329, %v3382
    %3384 = vdwg.mxu0
    %v3385 = vand.u32 %v191, 4294901760
    %3386 = vmatpush.msra.mxu0 %v3385
    %v3387 = vand.u32 %v189, 4294901760
    %3388 = vmatpush.msra.mxu0 %v3387
    %v3389 = vand.u32 %v187, 4294901760
    %3390 = vmatpush.msra.mxu0 %v3389
    %v3391 = vand.u32 %v185, 4294901760
    %3392 = vmatpush.msra.mxu0 %v3391
    %v3393 = vand.u32 %v183, 4294901760
    %3394 = vmatpush.msra.mxu0 %v3393
    %v3395 = vand.u32 %v181, 4294901760
    %3396 = vmatpush.msra.mxu0 %v3395
    %v3397 = vand.u32 %v179, 4294901760
    %3398 = vmatpush.msra.mxu0 %v3397
    %v3399 = vand.u32 %v177, 4294901760
    %3400 = vmatpush.msra.mxu0 %v3399
    %v3401 = vand.u32 %v175, 4294901760
    %3402 = vmatpush.msra.mxu0 %v3401
    %v3403 = vand.u32 %v173, 4294901760
    %3404 = vmatpush.msra.mxu0 %v3403
    %v3405 = vand.u32 %v171, 4294901760
    %3406 = vmatpush.msra.mxu0 %v3405
    %v3407 = vand.u32 %v169, 4294901760
    %3408 = vmatpush.msra.mxu0 %v3407
    %v3409 = vand.u32 %v167, 4294901760
    %3410 = vmatpush.msra.mxu0 %v3409
    %v3411 = vand.u32 %v165, 4294901760
    %3412 = vmatpush.msra.mxu0 %v3411
    %v3413 = vand.u32 %v163, 4294901760
    %3414 = vmatpush.msra.mxu0 %v3413
    %v3415 = vand.u32 %v161, 4294901760
    %3416 = vmatpush.msra.mxu0 %v3415
    %v3417 = vand.u32 %v91, 4294901760
    %v3418 = vsub.f32 %v91, %v3417
    %v3419 = vand.u32 %v3418, 4294901760
    %3420 = vmatmul.f32.gmra.mxu0 %v3419
    %v3421 = vpop.f32.mrf.mxu0
    %v3422 = vadd.f32 %v3383, %v3421
    %3423 = vdwg.mxu0
    %v3424 = vand.u32 %v191, 4294901760
    %v3425 = vsub.f32 %v191, %v3424
    %v3426 = vand.u32 %v3425, 4294901760
    %3427 = vmatpush.msra.mxu0 %v3426
    %v3428 = vand.u32 %v189, 4294901760
    %v3429 = vsub.f32 %v189, %v3428
    %v3430 = vand.u32 %v3429, 4294901760
    %3431 = vmatpush.msra.mxu0 %v3430
    %v3432 = vand.u32 %v187, 4294901760
    %v3433 = vsub.f32 %v187, %v3432
    %v3434 = vand.u32 %v3433, 4294901760
    %3435 = vmatpush.msra.mxu0 %v3434
    %v3436 = vand.u32 %v185, 4294901760
    %v3437 = vsub.f32 %v185, %v3436
    %v3438 = vand.u32 %v3437, 4294901760
    %3439 = vmatpush.msra.mxu0 %v3438
    %v3440 = vand.u32 %v183, 4294901760
    %v3441 = vsub.f32 %v183, %v3440
    %v3442 = vand.u32 %v3441, 4294901760
    %3443 = vmatpush.msra.mxu0 %v3442
    %v3444 = vand.u32 %v181, 4294901760
    %v3445 = vsub.f32 %v181, %v3444
    %v3446 = vand.u32 %v3445, 4294901760
    %3447 = vmatpush.msra.mxu0 %v3446
    %v3448 = vand.u32 %v179, 4294901760
    %v3449 = vsub.f32 %v179, %v3448
    %v3450 = vand.u32 %v3449, 4294901760
    %3451 = vmatpush.msra.mxu0 %v3450
    %v3452 = vand.u32 %v177, 4294901760
    %v3453 = vsub.f32 %v177, %v3452
    %v3454 = vand.u32 %v3453, 4294901760
    %3455 = vmatpush.msra.mxu0 %v3454
    %v3456 = vand.u32 %v175, 4294901760
    %v3457 = vsub.f32 %v175, %v3456
    %v3458 = vand.u32 %v3457, 4294901760
    %3459 = vmatpush.msra.mxu0 %v3458
    %v3460 = vand.u32 %v173, 4294901760
    %v3461 = vsub.f32 %v173, %v3460
    %v3462 = vand.u32 %v3461, 4294901760
    %3463 = vmatpush.msra.mxu0 %v3462
    %v3464 = vand.u32 %v171, 4294901760
    %v3465 = vsub.f32 %v171, %v3464
    %v3466 = vand.u32 %v3465, 4294901760
    %3467 = vmatpush.msra.mxu0 %v3466
    %v3468 = vand.u32 %v169, 4294901760
    %v3469 = vsub.f32 %v169, %v3468
    %v3470 = vand.u32 %v3469, 4294901760
    %3471 = vmatpush.msra.mxu0 %v3470
    %v3472 = vand.u32 %v167, 4294901760
    %v3473 = vsub.f32 %v167, %v3472
    %v3474 = vand.u32 %v3473, 4294901760
    %3475 = vmatpush.msra.mxu0 %v3474
    %v3476 = vand.u32 %v165, 4294901760
    %v3477 = vsub.f32 %v165, %v3476
    %v3478 = vand.u32 %v3477, 4294901760
    %3479 = vmatpush.msra.mxu0 %v3478
    %v3480 = vand.u32 %v163, 4294901760
    %v3481 = vsub.f32 %v163, %v3480
    %v3482 = vand.u32 %v3481, 4294901760
    %3483 = vmatpush.msra.mxu0 %v3482
    %v3484 = vand.u32 %v161, 4294901760
    %v3485 = vsub.f32 %v161, %v3484
    %v3486 = vand.u32 %v3485, 4294901760
    %3487 = vmatpush.msra.mxu0 %v3486
    %v3488 = vand.u32 %v91, 4294901760
    %3489 = vmatmul.f32.gmra.mxu0 %v3488
    %v3490 = vpop.f32.mrf.mxu0
    %v3491 = vadd.f32 %v3422, %v3490
    %3492 = vdwg.mxu0
    %v3493 = vand.u32 %v191, 4294901760
    %3494 = vmatpush.msra.mxu0 %v3493
    %v3495 = vand.u32 %v189, 4294901760
    %3496 = vmatpush.msra.mxu0 %v3495
    %v3497 = vand.u32 %v187, 4294901760
    %3498 = vmatpush.msra.mxu0 %v3497
    %v3499 = vand.u32 %v185, 4294901760
    %3500 = vmatpush.msra.mxu0 %v3499
    %v3501 = vand.u32 %v183, 4294901760
    %3502 = vmatpush.msra.mxu0 %v3501
    %v3503 = vand.u32 %v181, 4294901760
    %3504 = vmatpush.msra.mxu0 %v3503
    %v3505 = vand.u32 %v179, 4294901760
    %3506 = vmatpush.msra.mxu0 %v3505
    %v3507 = vand.u32 %v177, 4294901760
    %3508 = vmatpush.msra.mxu0 %v3507
    %v3509 = vand.u32 %v175, 4294901760
    %3510 = vmatpush.msra.mxu0 %v3509
    %v3511 = vand.u32 %v173, 4294901760
    %3512 = vmatpush.msra.mxu0 %v3511
    %v3513 = vand.u32 %v171, 4294901760
    %3514 = vmatpush.msra.mxu0 %v3513
    %v3515 = vand.u32 %v169, 4294901760
    %3516 = vmatpush.msra.mxu0 %v3515
    %v3517 = vand.u32 %v167, 4294901760
    %3518 = vmatpush.msra.mxu0 %v3517
    %v3519 = vand.u32 %v165, 4294901760
    %3520 = vmatpush.msra.mxu0 %v3519
    %v3521 = vand.u32 %v163, 4294901760
    %3522 = vmatpush.msra.mxu0 %v3521
    %v3523 = vand.u32 %v161, 4294901760
    %3524 = vmatpush.msra.mxu0 %v3523
    %v3525 = vand.u32 %v91, 4294901760
    %3526 = vmatmul.f32.gmra.mxu0 %v3525
    %v3527 = vpop.f32.mrf.mxu0
    %v3528 = vadd.f32 %v3491, %v3527
    %3529 = vdwg.mxu0
    %v3530 = vand.u32 %v223, 4294901760
    %3531 = vmatpush.msra.mxu0 %v3530
    %v3532 = vand.u32 %v221, 4294901760
    %3533 = vmatpush.msra.mxu0 %v3532
    %v3534 = vand.u32 %v219, 4294901760
    %3535 = vmatpush.msra.mxu0 %v3534
    %v3536 = vand.u32 %v217, 4294901760
    %3537 = vmatpush.msra.mxu0 %v3536
    %v3538 = vand.u32 %v215, 4294901760
    %3539 = vmatpush.msra.mxu0 %v3538
    %v3540 = vand.u32 %v213, 4294901760
    %3541 = vmatpush.msra.mxu0 %v3540
    %v3542 = vand.u32 %v211, 4294901760
    %3543 = vmatpush.msra.mxu0 %v3542
    %v3544 = vand.u32 %v209, 4294901760
    %3545 = vmatpush.msra.mxu0 %v3544
    %v3546 = vand.u32 %v207, 4294901760
    %3547 = vmatpush.msra.mxu0 %v3546
    %v3548 = vand.u32 %v205, 4294901760
    %3549 = vmatpush.msra.mxu0 %v3548
    %v3550 = vand.u32 %v203, 4294901760
    %3551 = vmatpush.msra.mxu0 %v3550
    %v3552 = vand.u32 %v201, 4294901760
    %3553 = vmatpush.msra.mxu0 %v3552
    %v3554 = vand.u32 %v199, 4294901760
    %3555 = vmatpush.msra.mxu0 %v3554
    %v3556 = vand.u32 %v197, 4294901760
    %3557 = vmatpush.msra.mxu0 %v3556
    %v3558 = vand.u32 %v195, 4294901760
    %3559 = vmatpush.msra.mxu0 %v3558
    %v3560 = vand.u32 %v193, 4294901760
    %3561 = vmatpush.msra.mxu0 %v3560
    %v3562 = vand.u32 %v92, 4294901760
    %v3563 = vsub.f32 %v92, %v3562
    %v3564 = vand.u32 %v3563, 4294901760
    %v3565 = vsub.f32 %v3563, %v3564
    %v3566 = vand.u32 %v3565, 4294901760
    %3567 = vmatmul.f32.gmra.mxu0 %v3566
    %v3568 = vpop.f32.mrf.mxu0
    %v3569 = vadd.f32 %v3528, %v3568
    %3570 = vdwg.mxu0
    %v3571 = vand.u32 %v223, 4294901760
    %v3572 = vsub.f32 %v223, %v3571
    %v3573 = vand.u32 %v3572, 4294901760
    %v3574 = vsub.f32 %v3572, %v3573
    %v3575 = vand.u32 %v3574, 4294901760
    %3576 = vmatpush.msra.mxu0 %v3575
    %v3577 = vand.u32 %v221, 4294901760
    %v3578 = vsub.f32 %v221, %v3577
    %v3579 = vand.u32 %v3578, 4294901760
    %v3580 = vsub.f32 %v3578, %v3579
    %v3581 = vand.u32 %v3580, 4294901760
    %3582 = vmatpush.msra.mxu0 %v3581
    %v3583 = vand.u32 %v219, 4294901760
    %v3584 = vsub.f32 %v219, %v3583
    %v3585 = vand.u32 %v3584, 4294901760
    %v3586 = vsub.f32 %v3584, %v3585
    %v3587 = vand.u32 %v3586, 4294901760
    %3588 = vmatpush.msra.mxu0 %v3587
    %v3589 = vand.u32 %v217, 4294901760
    %v3590 = vsub.f32 %v217, %v3589
    %v3591 = vand.u32 %v3590, 4294901760
    %v3592 = vsub.f32 %v3590, %v3591
    %v3593 = vand.u32 %v3592, 4294901760
    %3594 = vmatpush.msra.mxu0 %v3593
    %v3595 = vand.u32 %v215, 4294901760
    %v3596 = vsub.f32 %v215, %v3595
    %v3597 = vand.u32 %v3596, 4294901760
    %v3598 = vsub.f32 %v3596, %v3597
    %v3599 = vand.u32 %v3598, 4294901760
    %3600 = vmatpush.msra.mxu0 %v3599
    %v3601 = vand.u32 %v213, 4294901760
    %v3602 = vsub.f32 %v213, %v3601
    %v3603 = vand.u32 %v3602, 4294901760
    %v3604 = vsub.f32 %v3602, %v3603
    %v3605 = vand.u32 %v3604, 4294901760
    %3606 = vmatpush.msra.mxu0 %v3605
    %v3607 = vand.u32 %v211, 4294901760
    %v3608 = vsub.f32 %v211, %v3607
    %v3609 = vand.u32 %v3608, 4294901760
    %v3610 = vsub.f32 %v3608, %v3609
    %v3611 = vand.u32 %v3610, 4294901760
    %3612 = vmatpush.msra.mxu0 %v3611
    %v3613 = vand.u32 %v209, 4294901760
    %v3614 = vsub.f32 %v209, %v3613
    %v3615 = vand.u32 %v3614, 4294901760
    %v3616 = vsub.f32 %v3614, %v3615
    %v3617 = vand.u32 %v3616, 4294901760
    %3618 = vmatpush.msra.mxu0 %v3617
    %v3619 = vand.u32 %v207, 4294901760
    %v3620 = vsub.f32 %v207, %v3619
    %v3621 = vand.u32 %v3620, 4294901760
    %v3622 = vsub.f32 %v3620, %v3621
    %v3623 = vand.u32 %v3622, 4294901760
    %3624 = vmatpush.msra.mxu0 %v3623
    %v3625 = vand.u32 %v205, 4294901760
    %v3626 = vsub.f32 %v205, %v3625
    %v3627 = vand.u32 %v3626, 4294901760
    %v3628 = vsub.f32 %v3626, %v3627
    %v3629 = vand.u32 %v3628, 4294901760
    %3630 = vmatpush.msra.mxu0 %v3629
    %v3631 = vand.u32 %v203, 4294901760
    %v3632 = vsub.f32 %v203, %v3631
    %v3633 = vand.u32 %v3632, 4294901760
    %v3634 = vsub.f32 %v3632, %v3633
    %v3635 = vand.u32 %v3634, 4294901760
    %3636 = vmatpush.msra.mxu0 %v3635
    %v3637 = vand.u32 %v201, 4294901760
    %v3638 = vsub.f32 %v201, %v3637
    %v3639 = vand.u32 %v3638, 4294901760
    %v3640 = vsub.f32 %v3638, %v3639
    %v3641 = vand.u32 %v3640, 4294901760
    %3642 = vmatpush.msra.mxu0 %v3641
    %v3643 = vand.u32 %v199, 4294901760
    %v3644 = vsub.f32 %v199, %v3643
    %v3645 = vand.u32 %v3644, 4294901760
    %v3646 = vsub.f32 %v3644, %v3645
    %v3647 = vand.u32 %v3646, 4294901760
    %3648 = vmatpush.msra.mxu0 %v3647
    %v3649 = vand.u32 %v197, 4294901760
    %v3650 = vsub.f32 %v197, %v3649
    %v3651 = vand.u32 %v3650, 4294901760
    %v3652 = vsub.f32 %v3650, %v3651
    %v3653 = vand.u32 %v3652, 4294901760
    %3654 = vmatpush.msra.mxu0 %v3653
    %v3655 = vand.u32 %v195, 4294901760
    %v3656 = vsub.f32 %v195, %v3655
    %v3657 = vand.u32 %v3656, 4294901760
    %v3658 = vsub.f32 %v3656, %v3657
    %v3659 = vand.u32 %v3658, 4294901760
    %3660 = vmatpush.msra.mxu0 %v3659
    %v3661 = vand.u32 %v193, 4294901760
    %v3662 = vsub.f32 %v193, %v3661
    %v3663 = vand.u32 %v3662, 4294901760
    %v3664 = vsub.f32 %v3662, %v3663
    %v3665 = vand.u32 %v3664, 4294901760
    %3666 = vmatpush.msra.mxu0 %v3665
    %v3667 = vand.u32 %v92, 4294901760
    %3668 = vmatmul.f32.gmra.mxu0 %v3667
    %v3669 = vpop.f32.mrf.mxu0
    %v3670 = vadd.f32 %v3569, %v3669
    %3671 = vdwg.mxu0
    %v3672 = vand.u32 %v223, 4294901760
    %v3673 = vsub.f32 %v223, %v3672
    %3674 = vmatpush.msra.mxu0 %v3673
    %v3675 = vand.u32 %v221, 4294901760
    %v3676 = vsub.f32 %v221, %v3675
    %3677 = vmatpush.msra.mxu0 %v3676
    %v3678 = vand.u32 %v219, 4294901760
    %v3679 = vsub.f32 %v219, %v3678
    %3680 = vmatpush.msra.mxu0 %v3679
    %v3681 = vand.u32 %v217, 4294901760
    %v3682 = vsub.f32 %v217, %v3681
    %3683 = vmatpush.msra.mxu0 %v3682
    %v3684 = vand.u32 %v215, 4294901760
    %v3685 = vsub.f32 %v215, %v3684
    %3686 = vmatpush.msra.mxu0 %v3685
    %v3687 = vand.u32 %v213, 4294901760
    %v3688 = vsub.f32 %v213, %v3687
    %3689 = vmatpush.msra.mxu0 %v3688
    %v3690 = vand.u32 %v211, 4294901760
    %v3691 = vsub.f32 %v211, %v3690
    %3692 = vmatpush.msra.mxu0 %v3691
    %v3693 = vand.u32 %v209, 4294901760
    %v3694 = vsub.f32 %v209, %v3693
    %3695 = vmatpush.msra.mxu0 %v3694
    %v3696 = vand.u32 %v207, 4294901760
    %v3697 = vsub.f32 %v207, %v3696
    %3698 = vmatpush.msra.mxu0 %v3697
    %v3699 = vand.u32 %v205, 4294901760
    %v3700 = vsub.f32 %v205, %v3699
    %3701 = vmatpush.msra.mxu0 %v3700
    %v3702 = vand.u32 %v203, 4294901760
    %v3703 = vsub.f32 %v203, %v3702
    %3704 = vmatpush.msra.mxu0 %v3703
    %v3705 = vand.u32 %v201, 4294901760
    %v3706 = vsub.f32 %v201, %v3705
    %3707 = vmatpush.msra.mxu0 %v3706
    %v3708 = vand.u32 %v199, 4294901760
    %v3709 = vsub.f32 %v199, %v3708
    %3710 = vmatpush.msra.mxu0 %v3709
    %v3711 = vand.u32 %v197, 4294901760
    %v3712 = vsub.f32 %v197, %v3711
    %3713 = vmatpush.msra.mxu0 %v3712
    %v3714 = vand.u32 %v195, 4294901760
    %v3715 = vsub.f32 %v195, %v3714
    %3716 = vmatpush.msra.mxu0 %v3715
    %v3717 = vand.u32 %v193, 4294901760
    %v3718 = vsub.f32 %v193, %v3717
    %3719 = vmatpush.msra.mxu0 %v3718
    %v3720 = vand.u32 %v92, 4294901760
    %v3721 = vsub.f32 %v92, %v3720
    %3722 = vmatmul.f32.gmra.mxu0 %v3721
    %v3723 = vpop.f32.mrf.mxu0
    %v3724 = vadd.f32 %v3670, %v3723
    %3725 = vdwg.mxu0
    %v3726 = vand.u32 %v223, 4294901760
    %3727 = vmatpush.msra.mxu0 %v3726
    %v3728 = vand.u32 %v221, 4294901760
    %3729 = vmatpush.msra.mxu0 %v3728
    %v3730 = vand.u32 %v219, 4294901760
    %3731 = vmatpush.msra.mxu0 %v3730
    %v3732 = vand.u32 %v217, 4294901760
    %3733 = vmatpush.msra.mxu0 %v3732
    %v3734 = vand.u32 %v215, 4294901760
    %3735 = vmatpush.msra.mxu0 %v3734
    %v3736 = vand.u32 %v213, 4294901760
    %3737 = vmatpush.msra.mxu0 %v3736
    %v3738 = vand.u32 %v211, 4294901760
    %3739 = vmatpush.msra.mxu0 %v3738
    %v3740 = vand.u32 %v209, 4294901760
    %3741 = vmatpush.msra.mxu0 %v3740
    %v3742 = vand.u32 %v207, 4294901760
    %3743 = vmatpush.msra.mxu0 %v3742
    %v3744 = vand.u32 %v205, 4294901760
    %3745 = vmatpush.msra.mxu0 %v3744
    %v3746 = vand.u32 %v203, 4294901760
    %3747 = vmatpush.msra.mxu0 %v3746
    %v3748 = vand.u32 %v201, 4294901760
    %3749 = vmatpush.msra.mxu0 %v3748
    %v3750 = vand.u32 %v199, 4294901760
    %3751 = vmatpush.msra.mxu0 %v3750
    %v3752 = vand.u32 %v197, 4294901760
    %3753 = vmatpush.msra.mxu0 %v3752
    %v3754 = vand.u32 %v195, 4294901760
    %3755 = vmatpush.msra.mxu0 %v3754
    %v3756 = vand.u32 %v193, 4294901760
    %3757 = vmatpush.msra.mxu0 %v3756
    %v3758 = vand.u32 %v92, 4294901760
    %v3759 = vsub.f32 %v92, %v3758
    %v3760 = vand.u32 %v3759, 4294901760
    %3761 = vmatmul.f32.gmra.mxu0 %v3760
    %v3762 = vpop.f32.mrf.mxu0
    %v3763 = vadd.f32 %v3724, %v3762
    %3764 = vdwg.mxu0
    %v3765 = vand.u32 %v223, 4294901760
    %v3766 = vsub.f32 %v223, %v3765
    %v3767 = vand.u32 %v3766, 4294901760
    %3768 = vmatpush.msra.mxu0 %v3767
    %v3769 = vand.u32 %v221, 4294901760
    %v3770 = vsub.f32 %v221, %v3769
    %v3771 = vand.u32 %v3770, 4294901760
    %3772 = vmatpush.msra.mxu0 %v3771
    %v3773 = vand.u32 %v219, 4294901760
    %v3774 = vsub.f32 %v219, %v3773
    %v3775 = vand.u32 %v3774, 4294901760
    %3776 = vmatpush.msra.mxu0 %v3775
    %v3777 = vand.u32 %v217, 4294901760
    %v3778 = vsub.f32 %v217, %v3777
    %v3779 = vand.u32 %v3778, 4294901760
    %3780 = vmatpush.msra.mxu0 %v3779
    %v3781 = vand.u32 %v215, 4294901760
    %v3782 = vsub.f32 %v215, %v3781
    %v3783 = vand.u32 %v3782, 4294901760
    %3784 = vmatpush.msra.mxu0 %v3783
    %v3785 = vand.u32 %v213, 4294901760
    %v3786 = vsub.f32 %v213, %v3785
    %v3787 = vand.u32 %v3786, 4294901760
    %3788 = vmatpush.msra.mxu0 %v3787
    %v3789 = vand.u32 %v211, 4294901760
    %v3790 = vsub.f32 %v211, %v3789
    %v3791 = vand.u32 %v3790, 4294901760
    %3792 = vmatpush.msra.mxu0 %v3791
    %v3793 = vand.u32 %v209, 4294901760
    %v3794 = vsub.f32 %v209, %v3793
    %v3795 = vand.u32 %v3794, 4294901760
    %3796 = vmatpush.msra.mxu0 %v3795
    %v3797 = vand.u32 %v207, 4294901760
    %v3798 = vsub.f32 %v207, %v3797
    %v3799 = vand.u32 %v3798, 4294901760
    %3800 = vmatpush.msra.mxu0 %v3799
    %v3801 = vand.u32 %v205, 4294901760
    %v3802 = vsub.f32 %v205, %v3801
    %v3803 = vand.u32 %v3802, 4294901760
    %3804 = vmatpush.msra.mxu0 %v3803
    %v3805 = vand.u32 %v203, 4294901760
    %v3806 = vsub.f32 %v203, %v3805
    %v3807 = vand.u32 %v3806, 4294901760
    %3808 = vmatpush.msra.mxu0 %v3807
    %v3809 = vand.u32 %v201, 4294901760
    %v3810 = vsub.f32 %v201, %v3809
    %v3811 = vand.u32 %v3810, 4294901760
    %3812 = vmatpush.msra.mxu0 %v3811
    %v3813 = vand.u32 %v199, 4294901760
    %v3814 = vsub.f32 %v199, %v3813
    %v3815 = vand.u32 %v3814, 4294901760
    %3816 = vmatpush.msra.mxu0 %v3815
    %v3817 = vand.u32 %v197, 4294901760
    %v3818 = vsub.f32 %v197, %v3817
    %v3819 = vand.u32 %v3818, 4294901760
    %3820 = vmatpush.msra.mxu0 %v3819
    %v3821 = vand.u32 %v195, 4294901760
    %v3822 = vsub.f32 %v195, %v3821
    %v3823 = vand.u32 %v3822, 4294901760
    %3824 = vmatpush.msra.mxu0 %v3823
    %v3825 = vand.u32 %v193, 4294901760
    %v3826 = vsub.f32 %v193, %v3825
    %v3827 = vand.u32 %v3826, 4294901760
    %3828 = vmatpush.msra.mxu0 %v3827
    %v3829 = vand.u32 %v92, 4294901760
    %3830 = vmatmul.f32.gmra.mxu0 %v3829
    %v3831 = vpop.f32.mrf.mxu0
    %v3832 = vadd.f32 %v3763, %v3831
    %3833 = vdwg.mxu0
    %v3834 = vand.u32 %v223, 4294901760
    %3835 = vmatpush.msra.mxu0 %v3834
    %v3836 = vand.u32 %v221, 4294901760
    %3837 = vmatpush.msra.mxu0 %v3836
    %v3838 = vand.u32 %v219, 4294901760
    %3839 = vmatpush.msra.mxu0 %v3838
    %v3840 = vand.u32 %v217, 4294901760
    %3841 = vmatpush.msra.mxu0 %v3840
    %v3842 = vand.u32 %v215, 4294901760
    %3843 = vmatpush.msra.mxu0 %v3842
    %v3844 = vand.u32 %v213, 4294901760
    %3845 = vmatpush.msra.mxu0 %v3844
    %v3846 = vand.u32 %v211, 4294901760
    %3847 = vmatpush.msra.mxu0 %v3846
    %v3848 = vand.u32 %v209, 4294901760
    %3849 = vmatpush.msra.mxu0 %v3848
    %v3850 = vand.u32 %v207, 4294901760
    %3851 = vmatpush.msra.mxu0 %v3850
    %v3852 = vand.u32 %v205, 4294901760
    %3853 = vmatpush.msra.mxu0 %v3852
    %v3854 = vand.u32 %v203, 4294901760
    %3855 = vmatpush.msra.mxu0 %v3854
    %v3856 = vand.u32 %v201, 4294901760
    %3857 = vmatpush.msra.mxu0 %v3856
    %v3858 = vand.u32 %v199, 4294901760
    %3859 = vmatpush.msra.mxu0 %v3858
    %v3860 = vand.u32 %v197, 4294901760
    %3861 = vmatpush.msra.mxu0 %v3860
    %v3862 = vand.u32 %v195, 4294901760
    %3863 = vmatpush.msra.mxu0 %v3862
    %v3864 = vand.u32 %v193, 4294901760
    %3865 = vmatpush.msra.mxu0 %v3864
    %v3866 = vand.u32 %v92, 4294901760
    %3867 = vmatmul.f32.gmra.mxu0 %v3866
    %v3868 = vpop.f32.mrf.mxu0
    %v3869 = vadd.f32 %v3832, %v3868
    %3870 = vdwg.mxu0
    %v3871 = vand.u32 %v255, 4294901760
    %3872 = vmatpush.msra.mxu0 %v3871
    %v3873 = vand.u32 %v253, 4294901760
    %3874 = vmatpush.msra.mxu0 %v3873
    %v3875 = vand.u32 %v251, 4294901760
    %3876 = vmatpush.msra.mxu0 %v3875
    %v3877 = vand.u32 %v249, 4294901760
    %3878 = vmatpush.msra.mxu0 %v3877
    %v3879 = vand.u32 %v247, 4294901760
    %3880 = vmatpush.msra.mxu0 %v3879
    %v3881 = vand.u32 %v245, 4294901760
    %3882 = vmatpush.msra.mxu0 %v3881
    %v3883 = vand.u32 %v243, 4294901760
    %3884 = vmatpush.msra.mxu0 %v3883
    %v3885 = vand.u32 %v241, 4294901760
    %3886 = vmatpush.msra.mxu0 %v3885
    %v3887 = vand.u32 %v239, 4294901760
    %3888 = vmatpush.msra.mxu0 %v3887
    %v3889 = vand.u32 %v237, 4294901760
    %3890 = vmatpush.msra.mxu0 %v3889
    %v3891 = vand.u32 %v235, 4294901760
    %3892 = vmatpush.msra.mxu0 %v3891
    %v3893 = vand.u32 %v233, 4294901760
    %3894 = vmatpush.msra.mxu0 %v3893
    %v3895 = vand.u32 %v231, 4294901760
    %3896 = vmatpush.msra.mxu0 %v3895
    %v3897 = vand.u32 %v229, 4294901760
    %3898 = vmatpush.msra.mxu0 %v3897
    %v3899 = vand.u32 %v227, 4294901760
    %3900 = vmatpush.msra.mxu0 %v3899
    %v3901 = vand.u32 %v225, 4294901760
    %3902 = vmatpush.msra.mxu0 %v3901
    %v3903 = vand.u32 %v93, 4294901760
    %v3904 = vsub.f32 %v93, %v3903
    %v3905 = vand.u32 %v3904, 4294901760
    %v3906 = vsub.f32 %v3904, %v3905
    %v3907 = vand.u32 %v3906, 4294901760
    %3908 = vmatmul.f32.gmra.mxu0 %v3907
    %v3909 = vpop.f32.mrf.mxu0
    %v3910 = vadd.f32 %v3869, %v3909
    %3911 = vdwg.mxu0
    %v3912 = vand.u32 %v255, 4294901760
    %v3913 = vsub.f32 %v255, %v3912
    %v3914 = vand.u32 %v3913, 4294901760
    %v3915 = vsub.f32 %v3913, %v3914
    %v3916 = vand.u32 %v3915, 4294901760
    %3917 = vmatpush.msra.mxu0 %v3916
    %v3918 = vand.u32 %v253, 4294901760
    %v3919 = vsub.f32 %v253, %v3918
    %v3920 = vand.u32 %v3919, 4294901760
    %v3921 = vsub.f32 %v3919, %v3920
    %v3922 = vand.u32 %v3921, 4294901760
    %3923 = vmatpush.msra.mxu0 %v3922
    %v3924 = vand.u32 %v251, 4294901760
    %v3925 = vsub.f32 %v251, %v3924
    %v3926 = vand.u32 %v3925, 4294901760
    %v3927 = vsub.f32 %v3925, %v3926
    %v3928 = vand.u32 %v3927, 4294901760
    %3929 = vmatpush.msra.mxu0 %v3928
    %v3930 = vand.u32 %v249, 4294901760
    %v3931 = vsub.f32 %v249, %v3930
    %v3932 = vand.u32 %v3931, 4294901760
    %v3933 = vsub.f32 %v3931, %v3932
    %v3934 = vand.u32 %v3933, 4294901760
    %3935 = vmatpush.msra.mxu0 %v3934
    %v3936 = vand.u32 %v247, 4294901760
    %v3937 = vsub.f32 %v247, %v3936
    %v3938 = vand.u32 %v3937, 4294901760
    %v3939 = vsub.f32 %v3937, %v3938
    %v3940 = vand.u32 %v3939, 4294901760
    %3941 = vmatpush.msra.mxu0 %v3940
    %v3942 = vand.u32 %v245, 4294901760
    %v3943 = vsub.f32 %v245, %v3942
    %v3944 = vand.u32 %v3943, 4294901760
    %v3945 = vsub.f32 %v3943, %v3944
    %v3946 = vand.u32 %v3945, 4294901760
    %3947 = vmatpush.msra.mxu0 %v3946
    %v3948 = vand.u32 %v243, 4294901760
    %v3949 = vsub.f32 %v243, %v3948
    %v3950 = vand.u32 %v3949, 4294901760
    %v3951 = vsub.f32 %v3949, %v3950
    %v3952 = vand.u32 %v3951, 4294901760
    %3953 = vmatpush.msra.mxu0 %v3952
    %v3954 = vand.u32 %v241, 4294901760
    %v3955 = vsub.f32 %v241, %v3954
    %v3956 = vand.u32 %v3955, 4294901760
    %v3957 = vsub.f32 %v3955, %v3956
    %v3958 = vand.u32 %v3957, 4294901760
    %3959 = vmatpush.msra.mxu0 %v3958
    %v3960 = vand.u32 %v239, 4294901760
    %v3961 = vsub.f32 %v239, %v3960
    %v3962 = vand.u32 %v3961, 4294901760
    %v3963 = vsub.f32 %v3961, %v3962
    %v3964 = vand.u32 %v3963, 4294901760
    %3965 = vmatpush.msra.mxu0 %v3964
    %v3966 = vand.u32 %v237, 4294901760
    %v3967 = vsub.f32 %v237, %v3966
    %v3968 = vand.u32 %v3967, 4294901760
    %v3969 = vsub.f32 %v3967, %v3968
    %v3970 = vand.u32 %v3969, 4294901760
    %3971 = vmatpush.msra.mxu0 %v3970
    %v3972 = vand.u32 %v235, 4294901760
    %v3973 = vsub.f32 %v235, %v3972
    %v3974 = vand.u32 %v3973, 4294901760
    %v3975 = vsub.f32 %v3973, %v3974
    %v3976 = vand.u32 %v3975, 4294901760
    %3977 = vmatpush.msra.mxu0 %v3976
    %v3978 = vand.u32 %v233, 4294901760
    %v3979 = vsub.f32 %v233, %v3978
    %v3980 = vand.u32 %v3979, 4294901760
    %v3981 = vsub.f32 %v3979, %v3980
    %v3982 = vand.u32 %v3981, 4294901760
    %3983 = vmatpush.msra.mxu0 %v3982
    %v3984 = vand.u32 %v231, 4294901760
    %v3985 = vsub.f32 %v231, %v3984
    %v3986 = vand.u32 %v3985, 4294901760
    %v3987 = vsub.f32 %v3985, %v3986
    %v3988 = vand.u32 %v3987, 4294901760
    %3989 = vmatpush.msra.mxu0 %v3988
    %v3990 = vand.u32 %v229, 4294901760
    %v3991 = vsub.f32 %v229, %v3990
    %v3992 = vand.u32 %v3991, 4294901760
    %v3993 = vsub.f32 %v3991, %v3992
    %v3994 = vand.u32 %v3993, 4294901760
    %3995 = vmatpush.msra.mxu0 %v3994
    %v3996 = vand.u32 %v227, 4294901760
    %v3997 = vsub.f32 %v227, %v3996
    %v3998 = vand.u32 %v3997, 4294901760
    %v3999 = vsub.f32 %v3997, %v3998
    %v4000 = vand.u32 %v3999, 4294901760
    %4001 = vmatpush.msra.mxu0 %v4000
    %v4002 = vand.u32 %v225, 4294901760
    %v4003 = vsub.f32 %v225, %v4002
    %v4004 = vand.u32 %v4003, 4294901760
    %v4005 = vsub.f32 %v4003, %v4004
    %v4006 = vand.u32 %v4005, 4294901760
    %4007 = vmatpush.msra.mxu0 %v4006
    %v4008 = vand.u32 %v93, 4294901760
    %4009 = vmatmul.f32.gmra.mxu0 %v4008
    %v4010 = vpop.f32.mrf.mxu0
    %v4011 = vadd.f32 %v3910, %v4010
    %4012 = vdwg.mxu0
    %v4013 = vand.u32 %v255, 4294901760
    %v4014 = vsub.f32 %v255, %v4013
    %4015 = vmatpush.msra.mxu0 %v4014
    %v4016 = vand.u32 %v253, 4294901760
    %v4017 = vsub.f32 %v253, %v4016
    %4018 = vmatpush.msra.mxu0 %v4017
    %v4019 = vand.u32 %v251, 4294901760
    %v4020 = vsub.f32 %v251, %v4019
    %4021 = vmatpush.msra.mxu0 %v4020
    %v4022 = vand.u32 %v249, 4294901760
    %v4023 = vsub.f32 %v249, %v4022
    %4024 = vmatpush.msra.mxu0 %v4023
    %v4025 = vand.u32 %v247, 4294901760
    %v4026 = vsub.f32 %v247, %v4025
    %4027 = vmatpush.msra.mxu0 %v4026
    %v4028 = vand.u32 %v245, 4294901760
    %v4029 = vsub.f32 %v245, %v4028
    %4030 = vmatpush.msra.mxu0 %v4029
    %v4031 = vand.u32 %v243, 4294901760
    %v4032 = vsub.f32 %v243, %v4031
    %4033 = vmatpush.msra.mxu0 %v4032
    %v4034 = vand.u32 %v241, 4294901760
    %v4035 = vsub.f32 %v241, %v4034
    %4036 = vmatpush.msra.mxu0 %v4035
    %v4037 = vand.u32 %v239, 4294901760
    %v4038 = vsub.f32 %v239, %v4037
    %4039 = vmatpush.msra.mxu0 %v4038
    %v4040 = vand.u32 %v237, 4294901760
    %v4041 = vsub.f32 %v237, %v4040
    %4042 = vmatpush.msra.mxu0 %v4041
    %v4043 = vand.u32 %v235, 4294901760
    %v4044 = vsub.f32 %v235, %v4043
    %4045 = vmatpush.msra.mxu0 %v4044
    %v4046 = vand.u32 %v233, 4294901760
    %v4047 = vsub.f32 %v233, %v4046
    %4048 = vmatpush.msra.mxu0 %v4047
    %v4049 = vand.u32 %v231, 4294901760
    %v4050 = vsub.f32 %v231, %v4049
    %4051 = vmatpush.msra.mxu0 %v4050
    %v4052 = vand.u32 %v229, 4294901760
    %v4053 = vsub.f32 %v229, %v4052
    %4054 = vmatpush.msra.mxu0 %v4053
    %v4055 = vand.u32 %v227, 4294901760
    %v4056 = vsub.f32 %v227, %v4055
    %4057 = vmatpush.msra.mxu0 %v4056
    %v4058 = vand.u32 %v225, 4294901760
    %v4059 = vsub.f32 %v225, %v4058
    %4060 = vmatpush.msra.mxu0 %v4059
    %v4061 = vand.u32 %v93, 4294901760
    %v4062 = vsub.f32 %v93, %v4061
    %4063 = vmatmul.f32.gmra.mxu0 %v4062
    %v4064 = vpop.f32.mrf.mxu0
    %v4065 = vadd.f32 %v4011, %v4064
    %4066 = vdwg.mxu0
    %v4067 = vand.u32 %v255, 4294901760
    %4068 = vmatpush.msra.mxu0 %v4067
    %v4069 = vand.u32 %v253, 4294901760
    %4070 = vmatpush.msra.mxu0 %v4069
    %v4071 = vand.u32 %v251, 4294901760
    %4072 = vmatpush.msra.mxu0 %v4071
    %v4073 = vand.u32 %v249, 4294901760
    %4074 = vmatpush.msra.mxu0 %v4073
    %v4075 = vand.u32 %v247, 4294901760
    %4076 = vmatpush.msra.mxu0 %v4075
    %v4077 = vand.u32 %v245, 4294901760
    %4078 = vmatpush.msra.mxu0 %v4077
    %v4079 = vand.u32 %v243, 4294901760
    %4080 = vmatpush.msra.mxu0 %v4079
    %v4081 = vand.u32 %v241, 4294901760
    %4082 = vmatpush.msra.mxu0 %v4081
    %v4083 = vand.u32 %v239, 4294901760
    %4084 = vmatpush.msra.mxu0 %v4083
    %v4085 = vand.u32 %v237, 4294901760
    %4086 = vmatpush.msra.mxu0 %v4085
    %v4087 = vand.u32 %v235, 4294901760
    %4088 = vmatpush.msra.mxu0 %v4087
    %v4089 = vand.u32 %v233, 4294901760
    %4090 = vmatpush.msra.mxu0 %v4089
    %v4091 = vand.u32 %v231, 4294901760
    %4092 = vmatpush.msra.mxu0 %v4091
    %v4093 = vand.u32 %v229, 4294901760
    %4094 = vmatpush.msra.mxu0 %v4093
    %v4095 = vand.u32 %v227, 4294901760
    %4096 = vmatpush.msra.mxu0 %v4095
    %v4097 = vand.u32 %v225, 4294901760
    %4098 = vmatpush.msra.mxu0 %v4097
    %v4099 = vand.u32 %v93, 4294901760
    %v4100 = vsub.f32 %v93, %v4099
    %v4101 = vand.u32 %v4100, 4294901760
    %4102 = vmatmul.f32.gmra.mxu0 %v4101
    %v4103 = vpop.f32.mrf.mxu0
    %v4104 = vadd.f32 %v4065, %v4103
    %4105 = vdwg.mxu0
    %v4106 = vand.u32 %v255, 4294901760
    %v4107 = vsub.f32 %v255, %v4106
    %v4108 = vand.u32 %v4107, 4294901760
    %4109 = vmatpush.msra.mxu0 %v4108
    %v4110 = vand.u32 %v253, 4294901760
    %v4111 = vsub.f32 %v253, %v4110
    %v4112 = vand.u32 %v4111, 4294901760
    %4113 = vmatpush.msra.mxu0 %v4112
    %v4114 = vand.u32 %v251, 4294901760
    %v4115 = vsub.f32 %v251, %v4114
    %v4116 = vand.u32 %v4115, 4294901760
    %4117 = vmatpush.msra.mxu0 %v4116
    %v4118 = vand.u32 %v249, 4294901760
    %v4119 = vsub.f32 %v249, %v4118
    %v4120 = vand.u32 %v4119, 4294901760
    %4121 = vmatpush.msra.mxu0 %v4120
    %v4122 = vand.u32 %v247, 4294901760
    %v4123 = vsub.f32 %v247, %v4122
    %v4124 = vand.u32 %v4123, 4294901760
    %4125 = vmatpush.msra.mxu0 %v4124
    %v4126 = vand.u32 %v245, 4294901760
    %v4127 = vsub.f32 %v245, %v4126
    %v4128 = vand.u32 %v4127, 4294901760
    %4129 = vmatpush.msra.mxu0 %v4128
    %v4130 = vand.u32 %v243, 4294901760
    %v4131 = vsub.f32 %v243, %v4130
    %v4132 = vand.u32 %v4131, 4294901760
    %4133 = vmatpush.msra.mxu0 %v4132
    %v4134 = vand.u32 %v241, 4294901760
    %v4135 = vsub.f32 %v241, %v4134
    %v4136 = vand.u32 %v4135, 4294901760
    %4137 = vmatpush.msra.mxu0 %v4136
    %v4138 = vand.u32 %v239, 4294901760
    %v4139 = vsub.f32 %v239, %v4138
    %v4140 = vand.u32 %v4139, 4294901760
    %4141 = vmatpush.msra.mxu0 %v4140
    %v4142 = vand.u32 %v237, 4294901760
    %v4143 = vsub.f32 %v237, %v4142
    %v4144 = vand.u32 %v4143, 4294901760
    %4145 = vmatpush.msra.mxu0 %v4144
    %v4146 = vand.u32 %v235, 4294901760
    %v4147 = vsub.f32 %v235, %v4146
    %v4148 = vand.u32 %v4147, 4294901760
    %4149 = vmatpush.msra.mxu0 %v4148
    %v4150 = vand.u32 %v233, 4294901760
    %v4151 = vsub.f32 %v233, %v4150
    %v4152 = vand.u32 %v4151, 4294901760
    %4153 = vmatpush.msra.mxu0 %v4152
    %v4154 = vand.u32 %v231, 4294901760
    %v4155 = vsub.f32 %v231, %v4154
    %v4156 = vand.u32 %v4155, 4294901760
    %4157 = vmatpush.msra.mxu0 %v4156
    %v4158 = vand.u32 %v229, 4294901760
    %v4159 = vsub.f32 %v229, %v4158
    %v4160 = vand.u32 %v4159, 4294901760
    %4161 = vmatpush.msra.mxu0 %v4160
    %v4162 = vand.u32 %v227, 4294901760
    %v4163 = vsub.f32 %v227, %v4162
    %v4164 = vand.u32 %v4163, 4294901760
    %4165 = vmatpush.msra.mxu0 %v4164
    %v4166 = vand.u32 %v225, 4294901760
    %v4167 = vsub.f32 %v225, %v4166
    %v4168 = vand.u32 %v4167, 4294901760
    %4169 = vmatpush.msra.mxu0 %v4168
    %v4170 = vand.u32 %v93, 4294901760
    %4171 = vmatmul.f32.gmra.mxu0 %v4170
    %v4172 = vpop.f32.mrf.mxu0
    %v4173 = vadd.f32 %v4104, %v4172
    %4174 = vdwg.mxu0
    %v4175 = vand.u32 %v255, 4294901760
    %4176 = vmatpush.msra.mxu0 %v4175
    %v4177 = vand.u32 %v253, 4294901760
    %4178 = vmatpush.msra.mxu0 %v4177
    %v4179 = vand.u32 %v251, 4294901760
    %4180 = vmatpush.msra.mxu0 %v4179
    %v4181 = vand.u32 %v249, 4294901760
    %4182 = vmatpush.msra.mxu0 %v4181
    %v4183 = vand.u32 %v247, 4294901760
    %4184 = vmatpush.msra.mxu0 %v4183
    %v4185 = vand.u32 %v245, 4294901760
    %4186 = vmatpush.msra.mxu0 %v4185
    %v4187 = vand.u32 %v243, 4294901760
    %4188 = vmatpush.msra.mxu0 %v4187
    %v4189 = vand.u32 %v241, 4294901760
    %4190 = vmatpush.msra.mxu0 %v4189
    %v4191 = vand.u32 %v239, 4294901760
    %4192 = vmatpush.msra.mxu0 %v4191
    %v4193 = vand.u32 %v237, 4294901760
    %4194 = vmatpush.msra.mxu0 %v4193
    %v4195 = vand.u32 %v235, 4294901760
    %4196 = vmatpush.msra.mxu0 %v4195
    %v4197 = vand.u32 %v233, 4294901760
    %4198 = vmatpush.msra.mxu0 %v4197
    %v4199 = vand.u32 %v231, 4294901760
    %4200 = vmatpush.msra.mxu0 %v4199
    %v4201 = vand.u32 %v229, 4294901760
    %4202 = vmatpush.msra.mxu0 %v4201
    %v4203 = vand.u32 %v227, 4294901760
    %4204 = vmatpush.msra.mxu0 %v4203
    %v4205 = vand.u32 %v225, 4294901760
    %4206 = vmatpush.msra.mxu0 %v4205
    %v4207 = vand.u32 %v93, 4294901760
    %4208 = vmatmul.f32.gmra.mxu0 %v4207
    %v4209 = vpop.f32.mrf.mxu0
    %v4210 = vadd.f32 %v4173, %v4209
    %4211 = vdwg.mxu0
    %v4212 = vand.u32 %v287, 4294901760
    %4213 = vmatpush.msra.mxu0 %v4212
    %v4214 = vand.u32 %v285, 4294901760
    %4215 = vmatpush.msra.mxu0 %v4214
    %v4216 = vand.u32 %v283, 4294901760
    %4217 = vmatpush.msra.mxu0 %v4216
    %v4218 = vand.u32 %v281, 4294901760
    %4219 = vmatpush.msra.mxu0 %v4218
    %v4220 = vand.u32 %v279, 4294901760
    %4221 = vmatpush.msra.mxu0 %v4220
    %v4222 = vand.u32 %v277, 4294901760
    %4223 = vmatpush.msra.mxu0 %v4222
    %v4224 = vand.u32 %v275, 4294901760
    %4225 = vmatpush.msra.mxu0 %v4224
    %v4226 = vand.u32 %v273, 4294901760
    %4227 = vmatpush.msra.mxu0 %v4226
    %v4228 = vand.u32 %v271, 4294901760
    %4229 = vmatpush.msra.mxu0 %v4228
    %v4230 = vand.u32 %v269, 4294901760
    %4231 = vmatpush.msra.mxu0 %v4230
    %v4232 = vand.u32 %v267, 4294901760
    %4233 = vmatpush.msra.mxu0 %v4232
    %v4234 = vand.u32 %v265, 4294901760
    %4235 = vmatpush.msra.mxu0 %v4234
    %v4236 = vand.u32 %v263, 4294901760
    %4237 = vmatpush.msra.mxu0 %v4236
    %v4238 = vand.u32 %v261, 4294901760
    %4239 = vmatpush.msra.mxu0 %v4238
    %v4240 = vand.u32 %v259, 4294901760
    %4241 = vmatpush.msra.mxu0 %v4240
    %v4242 = vand.u32 %v257, 4294901760
    %4243 = vmatpush.msra.mxu0 %v4242
    %v4244 = vand.u32 %v94, 4294901760
    %v4245 = vsub.f32 %v94, %v4244
    %v4246 = vand.u32 %v4245, 4294901760
    %v4247 = vsub.f32 %v4245, %v4246
    %v4248 = vand.u32 %v4247, 4294901760
    %4249 = vmatmul.f32.gmra.mxu0 %v4248
    %v4250 = vpop.f32.mrf.mxu0
    %v4251 = vadd.f32 %v4210, %v4250
    %4252 = vdwg.mxu0
    %v4253 = vand.u32 %v287, 4294901760
    %v4254 = vsub.f32 %v287, %v4253
    %v4255 = vand.u32 %v4254, 4294901760
    %v4256 = vsub.f32 %v4254, %v4255
    %v4257 = vand.u32 %v4256, 4294901760
    %4258 = vmatpush.msra.mxu0 %v4257
    %v4259 = vand.u32 %v285, 4294901760
    %v4260 = vsub.f32 %v285, %v4259
    %v4261 = vand.u32 %v4260, 4294901760
    %v4262 = vsub.f32 %v4260, %v4261
    %v4263 = vand.u32 %v4262, 4294901760
    %4264 = vmatpush.msra.mxu0 %v4263
    %v4265 = vand.u32 %v283, 4294901760
    %v4266 = vsub.f32 %v283, %v4265
    %v4267 = vand.u32 %v4266, 4294901760
    %v4268 = vsub.f32 %v4266, %v4267
    %v4269 = vand.u32 %v4268, 4294901760
    %4270 = vmatpush.msra.mxu0 %v4269
    %v4271 = vand.u32 %v281, 4294901760
    %v4272 = vsub.f32 %v281, %v4271
    %v4273 = vand.u32 %v4272, 4294901760
    %v4274 = vsub.f32 %v4272, %v4273
    %v4275 = vand.u32 %v4274, 4294901760
    %4276 = vmatpush.msra.mxu0 %v4275
    %v4277 = vand.u32 %v279, 4294901760
    %v4278 = vsub.f32 %v279, %v4277
    %v4279 = vand.u32 %v4278, 4294901760
    %v4280 = vsub.f32 %v4278, %v4279
    %v4281 = vand.u32 %v4280, 4294901760
    %4282 = vmatpush.msra.mxu0 %v4281
    %v4283 = vand.u32 %v277, 4294901760
    %v4284 = vsub.f32 %v277, %v4283
    %v4285 = vand.u32 %v4284, 4294901760
    %v4286 = vsub.f32 %v4284, %v4285
    %v4287 = vand.u32 %v4286, 4294901760
    %4288 = vmatpush.msra.mxu0 %v4287
    %v4289 = vand.u32 %v275, 4294901760
    %v4290 = vsub.f32 %v275, %v4289
    %v4291 = vand.u32 %v4290, 4294901760
    %v4292 = vsub.f32 %v4290, %v4291
    %v4293 = vand.u32 %v4292, 4294901760
    %4294 = vmatpush.msra.mxu0 %v4293
    %v4295 = vand.u32 %v273, 4294901760
    %v4296 = vsub.f32 %v273, %v4295
    %v4297 = vand.u32 %v4296, 4294901760
    %v4298 = vsub.f32 %v4296, %v4297
    %v4299 = vand.u32 %v4298, 4294901760
    %4300 = vmatpush.msra.mxu0 %v4299
    %v4301 = vand.u32 %v271, 4294901760
    %v4302 = vsub.f32 %v271, %v4301
    %v4303 = vand.u32 %v4302, 4294901760
    %v4304 = vsub.f32 %v4302, %v4303
    %v4305 = vand.u32 %v4304, 4294901760
    %4306 = vmatpush.msra.mxu0 %v4305
    %v4307 = vand.u32 %v269, 4294901760
    %v4308 = vsub.f32 %v269, %v4307
    %v4309 = vand.u32 %v4308, 4294901760
    %v4310 = vsub.f32 %v4308, %v4309
    %v4311 = vand.u32 %v4310, 4294901760
    %4312 = vmatpush.msra.mxu0 %v4311
    %v4313 = vand.u32 %v267, 4294901760
    %v4314 = vsub.f32 %v267, %v4313
    %v4315 = vand.u32 %v4314, 4294901760
    %v4316 = vsub.f32 %v4314, %v4315
    %v4317 = vand.u32 %v4316, 4294901760
    %4318 = vmatpush.msra.mxu0 %v4317
    %v4319 = vand.u32 %v265, 4294901760
    %v4320 = vsub.f32 %v265, %v4319
    %v4321 = vand.u32 %v4320, 4294901760
    %v4322 = vsub.f32 %v4320, %v4321
    %v4323 = vand.u32 %v4322, 4294901760
    %4324 = vmatpush.msra.mxu0 %v4323
    %v4325 = vand.u32 %v263, 4294901760
    %v4326 = vsub.f32 %v263, %v4325
    %v4327 = vand.u32 %v4326, 4294901760
    %v4328 = vsub.f32 %v4326, %v4327
    %v4329 = vand.u32 %v4328, 4294901760
    %4330 = vmatpush.msra.mxu0 %v4329
    %v4331 = vand.u32 %v261, 4294901760
    %v4332 = vsub.f32 %v261, %v4331
    %v4333 = vand.u32 %v4332, 4294901760
    %v4334 = vsub.f32 %v4332, %v4333
    %v4335 = vand.u32 %v4334, 4294901760
    %4336 = vmatpush.msra.mxu0 %v4335
    %v4337 = vand.u32 %v259, 4294901760
    %v4338 = vsub.f32 %v259, %v4337
    %v4339 = vand.u32 %v4338, 4294901760
    %v4340 = vsub.f32 %v4338, %v4339
    %v4341 = vand.u32 %v4340, 4294901760
    %4342 = vmatpush.msra.mxu0 %v4341
    %v4343 = vand.u32 %v257, 4294901760
    %v4344 = vsub.f32 %v257, %v4343
    %v4345 = vand.u32 %v4344, 4294901760
    %v4346 = vsub.f32 %v4344, %v4345
    %v4347 = vand.u32 %v4346, 4294901760
    %4348 = vmatpush.msra.mxu0 %v4347
    %v4349 = vand.u32 %v94, 4294901760
    %4350 = vmatmul.f32.gmra.mxu0 %v4349
    %v4351 = vpop.f32.mrf.mxu0
    %v4352 = vadd.f32 %v4251, %v4351
    %4353 = vdwg.mxu0
    %v4354 = vand.u32 %v287, 4294901760
    %v4355 = vsub.f32 %v287, %v4354
    %4356 = vmatpush.msra.mxu0 %v4355
    %v4357 = vand.u32 %v285, 4294901760
    %v4358 = vsub.f32 %v285, %v4357
    %4359 = vmatpush.msra.mxu0 %v4358
    %v4360 = vand.u32 %v283, 4294901760
    %v4361 = vsub.f32 %v283, %v4360
    %4362 = vmatpush.msra.mxu0 %v4361
    %v4363 = vand.u32 %v281, 4294901760
    %v4364 = vsub.f32 %v281, %v4363
    %4365 = vmatpush.msra.mxu0 %v4364
    %v4366 = vand.u32 %v279, 4294901760
    %v4367 = vsub.f32 %v279, %v4366
    %4368 = vmatpush.msra.mxu0 %v4367
    %v4369 = vand.u32 %v277, 4294901760
    %v4370 = vsub.f32 %v277, %v4369
    %4371 = vmatpush.msra.mxu0 %v4370
    %v4372 = vand.u32 %v275, 4294901760
    %v4373 = vsub.f32 %v275, %v4372
    %4374 = vmatpush.msra.mxu0 %v4373
    %v4375 = vand.u32 %v273, 4294901760
    %v4376 = vsub.f32 %v273, %v4375
    %4377 = vmatpush.msra.mxu0 %v4376
    %v4378 = vand.u32 %v271, 4294901760
    %v4379 = vsub.f32 %v271, %v4378
    %4380 = vmatpush.msra.mxu0 %v4379
    %v4381 = vand.u32 %v269, 4294901760
    %v4382 = vsub.f32 %v269, %v4381
    %4383 = vmatpush.msra.mxu0 %v4382
    %v4384 = vand.u32 %v267, 4294901760
    %v4385 = vsub.f32 %v267, %v4384
    %4386 = vmatpush.msra.mxu0 %v4385
    %v4387 = vand.u32 %v265, 4294901760
    %v4388 = vsub.f32 %v265, %v4387
    %4389 = vmatpush.msra.mxu0 %v4388
    %v4390 = vand.u32 %v263, 4294901760
    %v4391 = vsub.f32 %v263, %v4390
    %4392 = vmatpush.msra.mxu0 %v4391
    %v4393 = vand.u32 %v261, 4294901760
    %v4394 = vsub.f32 %v261, %v4393
    %4395 = vmatpush.msra.mxu0 %v4394
    %v4396 = vand.u32 %v259, 4294901760
    %v4397 = vsub.f32 %v259, %v4396
    %4398 = vmatpush.msra.mxu0 %v4397
    %v4399 = vand.u32 %v257, 4294901760
    %v4400 = vsub.f32 %v257, %v4399
    %4401 = vmatpush.msra.mxu0 %v4400
    %v4402 = vand.u32 %v94, 4294901760
    %v4403 = vsub.f32 %v94, %v4402
    %4404 = vmatmul.f32.gmra.mxu0 %v4403
    %v4405 = vpop.f32.mrf.mxu0
    %v4406 = vadd.f32 %v4352, %v4405
    %4407 = vdwg.mxu0
    %v4408 = vand.u32 %v287, 4294901760
    %4409 = vmatpush.msra.mxu0 %v4408
    %v4410 = vand.u32 %v285, 4294901760
    %4411 = vmatpush.msra.mxu0 %v4410
    %v4412 = vand.u32 %v283, 4294901760
    %4413 = vmatpush.msra.mxu0 %v4412
    %v4414 = vand.u32 %v281, 4294901760
    %4415 = vmatpush.msra.mxu0 %v4414
    %v4416 = vand.u32 %v279, 4294901760
    %4417 = vmatpush.msra.mxu0 %v4416
    %v4418 = vand.u32 %v277, 4294901760
    %4419 = vmatpush.msra.mxu0 %v4418
    %v4420 = vand.u32 %v275, 4294901760
    %4421 = vmatpush.msra.mxu0 %v4420
    %v4422 = vand.u32 %v273, 4294901760
    %4423 = vmatpush.msra.mxu0 %v4422
    %v4424 = vand.u32 %v271, 4294901760
    %4425 = vmatpush.msra.mxu0 %v4424
    %v4426 = vand.u32 %v269, 4294901760
    %4427 = vmatpush.msra.mxu0 %v4426
    %v4428 = vand.u32 %v267, 4294901760
    %4429 = vmatpush.msra.mxu0 %v4428
    %v4430 = vand.u32 %v265, 4294901760
    %4431 = vmatpush.msra.mxu0 %v4430
    %v4432 = vand.u32 %v263, 4294901760
    %4433 = vmatpush.msra.mxu0 %v4432
    %v4434 = vand.u32 %v261, 4294901760
    %4435 = vmatpush.msra.mxu0 %v4434
    %v4436 = vand.u32 %v259, 4294901760
    %4437 = vmatpush.msra.mxu0 %v4436
    %v4438 = vand.u32 %v257, 4294901760
    %4439 = vmatpush.msra.mxu0 %v4438
    %v4440 = vand.u32 %v94, 4294901760
    %v4441 = vsub.f32 %v94, %v4440
    %v4442 = vand.u32 %v4441, 4294901760
    %4443 = vmatmul.f32.gmra.mxu0 %v4442
    %v4444 = vpop.f32.mrf.mxu0
    %v4445 = vadd.f32 %v4406, %v4444
    %4446 = vdwg.mxu0
    %v4447 = vand.u32 %v287, 4294901760
    %v4448 = vsub.f32 %v287, %v4447
    %v4449 = vand.u32 %v4448, 4294901760
    %4450 = vmatpush.msra.mxu0 %v4449
    %v4451 = vand.u32 %v285, 4294901760
    %v4452 = vsub.f32 %v285, %v4451
    %v4453 = vand.u32 %v4452, 4294901760
    %4454 = vmatpush.msra.mxu0 %v4453
    %v4455 = vand.u32 %v283, 4294901760
    %v4456 = vsub.f32 %v283, %v4455
    %v4457 = vand.u32 %v4456, 4294901760
    %4458 = vmatpush.msra.mxu0 %v4457
    %v4459 = vand.u32 %v281, 4294901760
    %v4460 = vsub.f32 %v281, %v4459
    %v4461 = vand.u32 %v4460, 4294901760
    %4462 = vmatpush.msra.mxu0 %v4461
    %v4463 = vand.u32 %v279, 4294901760
    %v4464 = vsub.f32 %v279, %v4463
    %v4465 = vand.u32 %v4464, 4294901760
    %4466 = vmatpush.msra.mxu0 %v4465
    %v4467 = vand.u32 %v277, 4294901760
    %v4468 = vsub.f32 %v277, %v4467
    %v4469 = vand.u32 %v4468, 4294901760
    %4470 = vmatpush.msra.mxu0 %v4469
    %v4471 = vand.u32 %v275, 4294901760
    %v4472 = vsub.f32 %v275, %v4471
    %v4473 = vand.u32 %v4472, 4294901760
    %4474 = vmatpush.msra.mxu0 %v4473
    %v4475 = vand.u32 %v273, 4294901760
    %v4476 = vsub.f32 %v273, %v4475
    %v4477 = vand.u32 %v4476, 4294901760
    %4478 = vmatpush.msra.mxu0 %v4477
    %v4479 = vand.u32 %v271, 4294901760
    %v4480 = vsub.f32 %v271, %v4479
    %v4481 = vand.u32 %v4480, 4294901760
    %4482 = vmatpush.msra.mxu0 %v4481
    %v4483 = vand.u32 %v269, 4294901760
    %v4484 = vsub.f32 %v269, %v4483
    %v4485 = vand.u32 %v4484, 4294901760
    %4486 = vmatpush.msra.mxu0 %v4485
    %v4487 = vand.u32 %v267, 4294901760
    %v4488 = vsub.f32 %v267, %v4487
    %v4489 = vand.u32 %v4488, 4294901760
    %4490 = vmatpush.msra.mxu0 %v4489
    %v4491 = vand.u32 %v265, 4294901760
    %v4492 = vsub.f32 %v265, %v4491
    %v4493 = vand.u32 %v4492, 4294901760
    %4494 = vmatpush.msra.mxu0 %v4493
    %v4495 = vand.u32 %v263, 4294901760
    %v4496 = vsub.f32 %v263, %v4495
    %v4497 = vand.u32 %v4496, 4294901760
    %4498 = vmatpush.msra.mxu0 %v4497
    %v4499 = vand.u32 %v261, 4294901760
    %v4500 = vsub.f32 %v261, %v4499
    %v4501 = vand.u32 %v4500, 4294901760
    %4502 = vmatpush.msra.mxu0 %v4501
    %v4503 = vand.u32 %v259, 4294901760
    %v4504 = vsub.f32 %v259, %v4503
    %v4505 = vand.u32 %v4504, 4294901760
    %4506 = vmatpush.msra.mxu0 %v4505
    %v4507 = vand.u32 %v257, 4294901760
    %v4508 = vsub.f32 %v257, %v4507
    %v4509 = vand.u32 %v4508, 4294901760
    %4510 = vmatpush.msra.mxu0 %v4509
    %v4511 = vand.u32 %v94, 4294901760
    %4512 = vmatmul.f32.gmra.mxu0 %v4511
    %v4513 = vpop.f32.mrf.mxu0
    %v4514 = vadd.f32 %v4445, %v4513
    %4515 = vdwg.mxu0
    %v4516 = vand.u32 %v287, 4294901760
    %4517 = vmatpush.msra.mxu0 %v4516
    %v4518 = vand.u32 %v285, 4294901760
    %4519 = vmatpush.msra.mxu0 %v4518
    %v4520 = vand.u32 %v283, 4294901760
    %4521 = vmatpush.msra.mxu0 %v4520
    %v4522 = vand.u32 %v281, 4294901760
    %4523 = vmatpush.msra.mxu0 %v4522
    %v4524 = vand.u32 %v279, 4294901760
    %4525 = vmatpush.msra.mxu0 %v4524
    %v4526 = vand.u32 %v277, 4294901760
    %4527 = vmatpush.msra.mxu0 %v4526
    %v4528 = vand.u32 %v275, 4294901760
    %4529 = vmatpush.msra.mxu0 %v4528
    %v4530 = vand.u32 %v273, 4294901760
    %4531 = vmatpush.msra.mxu0 %v4530
    %v4532 = vand.u32 %v271, 4294901760
    %4533 = vmatpush.msra.mxu0 %v4532
    %v4534 = vand.u32 %v269, 4294901760
    %4535 = vmatpush.msra.mxu0 %v4534
    %v4536 = vand.u32 %v267, 4294901760
    %4537 = vmatpush.msra.mxu0 %v4536
    %v4538 = vand.u32 %v265, 4294901760
    %4539 = vmatpush.msra.mxu0 %v4538
    %v4540 = vand.u32 %v263, 4294901760
    %4541 = vmatpush.msra.mxu0 %v4540
    %v4542 = vand.u32 %v261, 4294901760
    %4543 = vmatpush.msra.mxu0 %v4542
    %v4544 = vand.u32 %v259, 4294901760
    %4545 = vmatpush.msra.mxu0 %v4544
    %v4546 = vand.u32 %v257, 4294901760
    %4547 = vmatpush.msra.mxu0 %v4546
    %v4548 = vand.u32 %v94, 4294901760
    %4549 = vmatmul.f32.gmra.mxu0 %v4548
    %v4550 = vpop.f32.mrf.mxu0
    %v4551 = vadd.f32 %v4514, %v4550
    %4552 = vdwg.mxu0
    %4553 = vmatpush.msra.mxu0 0.0
    %4554 = vmatpush.msra.mxu0 0.0
    %4555 = vmatpush.msra.mxu0 0.0
    %4556 = vmatpush.msra.mxu0 0.0
    %4557 = vmatpush.msra.mxu0 0.0
    %4558 = vmatpush.msra.mxu0 0.0
    %4559 = vmatpush.msra.mxu0 0.0
    %4560 = vmatpush.msra.mxu0 0.0
    %4561 = vmatpush.msra.mxu0 0.0
    %4562 = vmatpush.msra.mxu0 0.0
    %4563 = vmatpush.msra.mxu0 0.0
    %4564 = vmatpush.msra.mxu0 0.0
    %4565 = vmatpush.msra.mxu0 0.0
    %4566 = vmatpush.msra.mxu0 0.0
    %v4567 = vand.u32 %v291, 4294901760
    %4568 = vmatpush.msra.mxu0 %v4567
    %v4569 = vand.u32 %v289, 4294901760
    %4570 = vmatpush.msra.mxu0 %v4569
    %v4571 = vand.u32 %v300, 4294901760
    %v4572 = vsub.f32 %v300, %v4571
    %v4573 = vand.u32 %v4572, 4294901760
    %v4574 = vsub.f32 %v4572, %v4573
    %v4575 = vand.u32 %v4574, 4294901760
    %4576 = vmatmul.f32.gmra.mxu0 %v4575
    %v4577 = vpop.f32.mrf.mxu0
    %v4578 = vadd.f32 %v4551, %v4577
    %4579 = vdwg.mxu0
    %4580 = vmatpush.msra.mxu0 0.0
    %4581 = vmatpush.msra.mxu0 0.0
    %4582 = vmatpush.msra.mxu0 0.0
    %4583 = vmatpush.msra.mxu0 0.0
    %4584 = vmatpush.msra.mxu0 0.0
    %4585 = vmatpush.msra.mxu0 0.0
    %4586 = vmatpush.msra.mxu0 0.0
    %4587 = vmatpush.msra.mxu0 0.0
    %4588 = vmatpush.msra.mxu0 0.0
    %4589 = vmatpush.msra.mxu0 0.0
    %4590 = vmatpush.msra.mxu0 0.0
    %4591 = vmatpush.msra.mxu0 0.0
    %4592 = vmatpush.msra.mxu0 0.0
    %4593 = vmatpush.msra.mxu0 0.0
    %v4594 = vand.u32 %v291, 4294901760
    %v4595 = vsub.f32 %v291, %v4594
    %v4596 = vand.u32 %v4595, 4294901760
    %v4597 = vsub.f32 %v4595, %v4596
    %v4598 = vand.u32 %v4597, 4294901760
    %4599 = vmatpush.msra.mxu0 %v4598
    %v4600 = vand.u32 %v289, 4294901760
    %v4601 = vsub.f32 %v289, %v4600
    %v4602 = vand.u32 %v4601, 4294901760
    %v4603 = vsub.f32 %v4601, %v4602
    %v4604 = vand.u32 %v4603, 4294901760
    %4605 = vmatpush.msra.mxu0 %v4604
    %v4606 = vand.u32 %v300, 4294901760
    %4607 = vmatmul.f32.gmra.mxu0 %v4606
    %v4608 = vpop.f32.mrf.mxu0
    %v4609 = vadd.f32 %v4578, %v4608
    %4610 = vdwg.mxu0
    %4611 = vmatpush.msra.mxu0 0.0
    %4612 = vmatpush.msra.mxu0 0.0
    %4613 = vmatpush.msra.mxu0 0.0
    %4614 = vmatpush.msra.mxu0 0.0
    %4615 = vmatpush.msra.mxu0 0.0
    %4616 = vmatpush.msra.mxu0 0.0
    %4617 = vmatpush.msra.mxu0 0.0
    %4618 = vmatpush.msra.mxu0 0.0
    %4619 = vmatpush.msra.mxu0 0.0
    %4620 = vmatpush.msra.mxu0 0.0
    %4621 = vmatpush.msra.mxu0 0.0
    %4622 = vmatpush.msra.mxu0 0.0
    %4623 = vmatpush.msra.mxu0 0.0
    %4624 = vmatpush.msra.mxu0 0.0
    %v4625 = vand.u32 %v291, 4294901760
    %v4626 = vsub.f32 %v291, %v4625
    %4627 = vmatpush.msra.mxu0 %v4626
    %v4628 = vand.u32 %v289, 4294901760
    %v4629 = vsub.f32 %v289, %v4628
    %4630 = vmatpush.msra.mxu0 %v4629
    %v4631 = vand.u32 %v300, 4294901760
    %v4632 = vsub.f32 %v300, %v4631
    %4633 = vmatmul.f32.gmra.mxu0 %v4632
    %v4634 = vpop.f32.mrf.mxu0
    %v4635 = vadd.f32 %v4609, %v4634
    %4636 = vdwg.mxu0
    %4637 = vmatpush.msra.mxu0 0.0
    %4638 = vmatpush.msra.mxu0 0.0
    %4639 = vmatpush.msra.mxu0 0.0
    %4640 = vmatpush.msra.mxu0 0.0
    %4641 = vmatpush.msra.mxu0 0.0
    %4642 = vmatpush.msra.mxu0 0.0
    %4643 = vmatpush.msra.mxu0 0.0
    %4644 = vmatpush.msra.mxu0 0.0
    %4645 = vmatpush.msra.mxu0 0.0
    %4646 = vmatpush.msra.mxu0 0.0
    %4647 = vmatpush.msra.mxu0 0.0
    %4648 = vmatpush.msra.mxu0 0.0
    %4649 = vmatpush.msra.mxu0 0.0
    %4650 = vmatpush.msra.mxu0 0.0
    %v4651 = vand.u32 %v291, 4294901760
    %4652 = vmatpush.msra.mxu0 %v4651
    %v4653 = vand.u32 %v289, 4294901760
    %4654 = vmatpush.msra.mxu0 %v4653
    %v4655 = vand.u32 %v300, 4294901760
    %v4656 = vsub.f32 %v300, %v4655
    %v4657 = vand.u32 %v4656, 4294901760
    %4658 = vmatmul.f32.gmra.mxu0 %v4657
    %v4659 = vpop.f32.mrf.mxu0
    %v4660 = vadd.f32 %v4635, %v4659
    %4661 = vdwg.mxu0
    %4662 = vmatpush.msra.mxu0 0.0
    %4663 = vmatpush.msra.mxu0 0.0
    %4664 = vmatpush.msra.mxu0 0.0
    %4665 = vmatpush.msra.mxu0 0.0
    %4666 = vmatpush.msra.mxu0 0.0
    %4667 = vmatpush.msra.mxu0 0.0
    %4668 = vmatpush.msra.mxu0 0.0
    %4669 = vmatpush.msra.mxu0 0.0
    %4670 = vmatpush.msra.mxu0 0.0
    %4671 = vmatpush.msra.mxu0 0.0
    %4672 = vmatpush.msra.mxu0 0.0
    %4673 = vmatpush.msra.mxu0 0.0
    %4674 = vmatpush.msra.mxu0 0.0
    %4675 = vmatpush.msra.mxu0 0.0
    %v4676 = vand.u32 %v291, 4294901760
    %v4677 = vsub.f32 %v291, %v4676
    %v4678 = vand.u32 %v4677, 4294901760
    %4679 = vmatpush.msra.mxu0 %v4678
    %v4680 = vand.u32 %v289, 4294901760
    %v4681 = vsub.f32 %v289, %v4680
    %v4682 = vand.u32 %v4681, 4294901760
    %4683 = vmatpush.msra.mxu0 %v4682
    %v4684 = vand.u32 %v300, 4294901760
    %4685 = vmatmul.f32.gmra.mxu0 %v4684
    %v4686 = vpop.f32.mrf.mxu0
    %v4687 = vadd.f32 %v4660, %v4686
    %4688 = vdwg.mxu0
    %4689 = vmatpush.msra.mxu0 0.0
    %4690 = vmatpush.msra.mxu0 0.0
    %4691 = vmatpush.msra.mxu0 0.0
    %4692 = vmatpush.msra.mxu0 0.0
    %4693 = vmatpush.msra.mxu0 0.0
    %4694 = vmatpush.msra.mxu0 0.0
    %4695 = vmatpush.msra.mxu0 0.0
    %4696 = vmatpush.msra.mxu0 0.0
    %4697 = vmatpush.msra.mxu0 0.0
    %4698 = vmatpush.msra.mxu0 0.0
    %4699 = vmatpush.msra.mxu0 0.0
    %4700 = vmatpush.msra.mxu0 0.0
    %4701 = vmatpush.msra.mxu0 0.0
    %4702 = vmatpush.msra.mxu0 0.0
    %v4703 = vand.u32 %v291, 4294901760
    %4704 = vmatpush.msra.mxu0 %v4703
    %v4705 = vand.u32 %v289, 4294901760
    %4706 = vmatpush.msra.mxu0 %v4705
    %v4707 = vand.u32 %v300, 4294901760
    %4708 = vmatmul.f32.gmra.mxu0 %v4707
    %v4709 = vpop.f32.mrf.mxu0
    %v4710 = vadd.f32 %v4687, %v4709
    %4711 = vdwg.mxu0
    %vm4712 = vcmp.gt.f32.partialorder %v2505, 0.0
    %vm4713 = vcmp.gt.f32.partialorder %v4710, 0.0
    %v4714 = vmul.f32 %v2505, 0.2
    %v4715 = vmul.f32 %v4710, 0.2
    %v4716 = vsel %vm4712, %v2505, %v4714
    %v4717 = vsel %vm4713, %v4710, %v4715
    %v4718 = vld [vmem:[#allocation7] sm:$0xff]
    %v4719 = vld [vmem:[#allocation7 + $0x8] sm:$0xff]
    %v4720 = vld [vmem:[#allocation7 + $0x10] sm:$0xff]
    %v4721 = vld [vmem:[#allocation7 + $0x18] sm:$0xff]
    %v4722 = vld [vmem:[#allocation7 + $0x20] sm:$0xff]
    %v4723 = vld [vmem:[#allocation7 + $0x28] sm:$0xff]
    %v4724 = vld [vmem:[#allocation7 + $0x30] sm:$0xff]
    %v4725 = vld [vmem:[#allocation7 + $0x38] sm:$0xff]
    %v4726 = vld [vmem:[#allocation7 + $0x40] sm:$0xff]
    %v4727 = vld [vmem:[#allocation7 + $0x48] sm:$0xff]
    %v4728 = vld [vmem:[#allocation7 + $0x50] sm:$0xff]
    %v4729 = vld [vmem:[#allocation7 + $0x58] sm:$0xff]
    %v4730 = vld [vmem:[#allocation7 + $0x60] sm:$0xff]
    %v4731 = vld [vmem:[#allocation7 + $0x68] sm:$0xff]
    %v4732 = vld [vmem:[#allocation7 + $0x70] sm:$0xff]
    %v4733 = vld [vmem:[#allocation7 + $0x78] sm:$0xff]
    %v4734 = vld [vmem:[#allocation7 + $0x80] sm:$0xff]
    %v4735 = vld [vmem:[#allocation7 + $0x88] sm:$0xff]
    %v4736 = vld [vmem:[#allocation7 + $0x90] sm:$0xff]
    %v4737 = vld [vmem:[#allocation7 + $0x98] sm:$0xff]
    %v4738 = vld [vmem:[#allocation7 + $0xa0] sm:$0xff]
    %v4739 = vld [vmem:[#allocation7 + $0xa8] sm:$0xff]
    %v4740 = vld [vmem:[#allocation7 + $0xb0] sm:$0xff]
    %v4741 = vld [vmem:[#allocation7 + $0xb8] sm:$0xff]
    %v4742 = vld [vmem:[#allocation7 + $0xc0] sm:$0xff]
    %v4743 = vld [vmem:[#allocation7 + $0xc8] sm:$0xff]
    %v4744 = vld [vmem:[#allocation7 + $0xd0] sm:$0xff]
    %v4745 = vld [vmem:[#allocation7 + $0xd8] sm:$0xff]
    %v4746 = vld [vmem:[#allocation7 + $0xe0] sm:$0xff]
    %v4747 = vld [vmem:[#allocation7 + $0xe8] sm:$0xff]
    %v4748 = vld [vmem:[#allocation7 + $0xf0] sm:$0xff]
    %v4749 = vld [vmem:[#allocation7 + $0xf8] sm:$0xff]
    %v4750 = vld [vmem:[#allocation7 + $0x100] sm:$0xff]
    %v4751 = vld [vmem:[#allocation7 + $0x108] sm:$0xff]
    %v4752 = vld [vmem:[#allocation7 + $0x110] sm:$0xff]
    %v4753 = vld [vmem:[#allocation7 + $0x118] sm:$0xff]
    %v4754 = vld [vmem:[#allocation7 + $0x120] sm:$0xff]
    %v4755 = vld [vmem:[#allocation7 + $0x128] sm:$0xff]
    %v4756 = vld [vmem:[#allocation7 + $0x130] sm:$0xff]
    %v4757 = vld [vmem:[#allocation7 + $0x138] sm:$0xff]
    %v4758 = vld [vmem:[#allocation7 + $0x140] sm:$0xff]
    %v4759 = vld [vmem:[#allocation7 + $0x148] sm:$0xff]
    %v4760 = vld [vmem:[#allocation7 + $0x150] sm:$0xff]
    %v4761 = vld [vmem:[#allocation7 + $0x158] sm:$0xff]
    %v4762 = vld [vmem:[#allocation7 + $0x160] sm:$0xff]
    %v4763 = vld [vmem:[#allocation7 + $0x168] sm:$0xff]
    %v4764 = vld [vmem:[#allocation7 + $0x170] sm:$0xff]
    %v4765 = vld [vmem:[#allocation7 + $0x178] sm:$0xff]
    %v4766 = vld [vmem:[#allocation7 + $0x180] sm:$0xff]
    %v4767 = vld [vmem:[#allocation7 + $0x188] sm:$0xff]
    %v4768 = vld [vmem:[#allocation7 + $0x190] sm:$0xff]
    %v4769 = vld [vmem:[#allocation7 + $0x198] sm:$0xff]
    %v4770 = vld [vmem:[#allocation7 + $0x1a0] sm:$0xff]
    %v4771 = vld [vmem:[#allocation7 + $0x1a8] sm:$0xff]
    %v4772 = vld [vmem:[#allocation7 + $0x1b0] sm:$0xff]
    %v4773 = vld [vmem:[#allocation7 + $0x1b8] sm:$0xff]
    %v4774 = vld [vmem:[#allocation7 + $0x1c0] sm:$0xff]
    %v4775 = vld [vmem:[#allocation7 + $0x1c8] sm:$0xff]
    %v4776 = vld [vmem:[#allocation7 + $0x1d0] sm:$0xff]
    %v4777 = vld [vmem:[#allocation7 + $0x1d8] sm:$0xff]
    %v4778 = vld [vmem:[#allocation7 + $0x1e0] sm:$0xff]
    %v4779 = vld [vmem:[#allocation7 + $0x1e8] sm:$0xff]
    %v4780 = vld [vmem:[#allocation7 + $0x1f0] sm:$0xff]
    %v4781 = vld [vmem:[#allocation7 + $0x1f8] sm:$0xff]
    %v4782 = vld [vmem:[%s4] sm:$0x3]
    %v4784 = vperm.slane %v4782, 0
    %v4785 = vperm.slane %v4782, 1
    %v4788 = vand.u32 %v4748, 4294901760
    %4789 = vmatpush.msra.mxu0 %v4788
    %v4790 = vand.u32 %v4746, 4294901760
    %4791 = vmatpush.msra.mxu0 %v4790
    %v4792 = vand.u32 %v4744, 4294901760
    %4793 = vmatpush.msra.mxu0 %v4792
    %v4794 = vand.u32 %v4742, 4294901760
    %4795 = vmatpush.msra.mxu0 %v4794
    %v4796 = vand.u32 %v4740, 4294901760
    %4797 = vmatpush.msra.mxu0 %v4796
    %v4798 = vand.u32 %v4738, 4294901760
    %4799 = vmatpush.msra.mxu0 %v4798
    %v4800 = vand.u32 %v4736, 4294901760
    %4801 = vmatpush.msra.mxu0 %v4800
    %v4802 = vand.u32 %v4734, 4294901760
    %4803 = vmatpush.msra.mxu0 %v4802
    %v4804 = vand.u32 %v4732, 4294901760
    %4805 = vmatpush.msra.mxu0 %v4804
    %v4806 = vand.u32 %v4730, 4294901760
    %4807 = vmatpush.msra.mxu0 %v4806
    %v4808 = vand.u32 %v4728, 4294901760
    %4809 = vmatpush.msra.mxu0 %v4808
    %v4810 = vand.u32 %v4726, 4294901760
    %4811 = vmatpush.msra.mxu0 %v4810
    %v4812 = vand.u32 %v4724, 4294901760
    %4813 = vmatpush.msra.mxu0 %v4812
    %v4814 = vand.u32 %v4722, 4294901760
    %4815 = vmatpush.msra.mxu0 %v4814
    %v4816 = vand.u32 %v4720, 4294901760
    %4817 = vmatpush.msra.mxu0 %v4816
    %v4818 = vand.u32 %v4718, 4294901760
    %4819 = vmatpush.msra.mxu0 %v4818
    %v4820 = vand.u32 %v4716, 4294901760
    %v4821 = vsub.f32 %v4716, %v4820
    %v4822 = vand.u32 %v4821, 4294901760
    %v4823 = vsub.f32 %v4821, %v4822
    %v4824 = vand.u32 %v4823, 4294901760
    %4825 = vmatmul.f32.gmra.mxu0 %v4824
    %v4826 = vpop.f32.mrf.mxu0
    %v4827 = vadd.f32 %v4784, %v4826
    %4828 = vdwg.mxu0
    %v4829 = vand.u32 %v4748, 4294901760
    %v4830 = vsub.f32 %v4748, %v4829
    %v4831 = vand.u32 %v4830, 4294901760
    %v4832 = vsub.f32 %v4830, %v4831
    %v4833 = vand.u32 %v4832, 4294901760
    %4834 = vmatpush.msra.mxu0 %v4833
    %v4835 = vand.u32 %v4746, 4294901760
    %v4836 = vsub.f32 %v4746, %v4835
    %v4837 = vand.u32 %v4836, 4294901760
    %v4838 = vsub.f32 %v4836, %v4837
    %v4839 = vand.u32 %v4838, 4294901760
    %4840 = vmatpush.msra.mxu0 %v4839
    %v4841 = vand.u32 %v4744, 4294901760
    %v4842 = vsub.f32 %v4744, %v4841
    %v4843 = vand.u32 %v4842, 4294901760
    %v4844 = vsub.f32 %v4842, %v4843
    %v4845 = vand.u32 %v4844, 4294901760
    %4846 = vmatpush.msra.mxu0 %v4845
    %v4847 = vand.u32 %v4742, 4294901760
    %v4848 = vsub.f32 %v4742, %v4847
    %v4849 = vand.u32 %v4848, 4294901760
    %v4850 = vsub.f32 %v4848, %v4849
    %v4851 = vand.u32 %v4850, 4294901760
    %4852 = vmatpush.msra.mxu0 %v4851
    %v4853 = vand.u32 %v4740, 4294901760
    %v4854 = vsub.f32 %v4740, %v4853
    %v4855 = vand.u32 %v4854, 4294901760
    %v4856 = vsub.f32 %v4854, %v4855
    %v4857 = vand.u32 %v4856, 4294901760
    %4858 = vmatpush.msra.mxu0 %v4857
    %v4859 = vand.u32 %v4738, 4294901760
    %v4860 = vsub.f32 %v4738, %v4859
    %v4861 = vand.u32 %v4860, 4294901760
    %v4862 = vsub.f32 %v4860, %v4861
    %v4863 = vand.u32 %v4862, 4294901760
    %4864 = vmatpush.msra.mxu0 %v4863
    %v4865 = vand.u32 %v4736, 4294901760
    %v4866 = vsub.f32 %v4736, %v4865
    %v4867 = vand.u32 %v4866, 4294901760
    %v4868 = vsub.f32 %v4866, %v4867
    %v4869 = vand.u32 %v4868, 4294901760
    %4870 = vmatpush.msra.mxu0 %v4869
    %v4871 = vand.u32 %v4734, 4294901760
    %v4872 = vsub.f32 %v4734, %v4871
    %v4873 = vand.u32 %v4872, 4294901760
    %v4874 = vsub.f32 %v4872, %v4873
    %v4875 = vand.u32 %v4874, 4294901760
    %4876 = vmatpush.msra.mxu0 %v4875
    %v4877 = vand.u32 %v4732, 4294901760
    %v4878 = vsub.f32 %v4732, %v4877
    %v4879 = vand.u32 %v4878, 4294901760
    %v4880 = vsub.f32 %v4878, %v4879
    %v4881 = vand.u32 %v4880, 4294901760
    %4882 = vmatpush.msra.mxu0 %v4881
    %v4883 = vand.u32 %v4730, 4294901760
    %v4884 = vsub.f32 %v4730, %v4883
    %v4885 = vand.u32 %v4884, 4294901760
    %v4886 = vsub.f32 %v4884, %v4885
    %v4887 = vand.u32 %v4886, 4294901760
    %4888 = vmatpush.msra.mxu0 %v4887
    %v4889 = vand.u32 %v4728, 4294901760
    %v4890 = vsub.f32 %v4728, %v4889
    %v4891 = vand.u32 %v4890, 4294901760
    %v4892 = vsub.f32 %v4890, %v4891
    %v4893 = vand.u32 %v4892, 4294901760
    %4894 = vmatpush.msra.mxu0 %v4893
    %v4895 = vand.u32 %v4726, 4294901760
    %v4896 = vsub.f32 %v4726, %v4895
    %v4897 = vand.u32 %v4896, 4294901760
    %v4898 = vsub.f32 %v4896, %v4897
    %v4899 = vand.u32 %v4898, 4294901760
    %4900 = vmatpush.msra.mxu0 %v4899
    %v4901 = vand.u32 %v4724, 4294901760
    %v4902 = vsub.f32 %v4724, %v4901
    %v4903 = vand.u32 %v4902, 4294901760
    %v4904 = vsub.f32 %v4902, %v4903
    %v4905 = vand.u32 %v4904, 4294901760
    %4906 = vmatpush.msra.mxu0 %v4905
    %v4907 = vand.u32 %v4722, 4294901760
    %v4908 = vsub.f32 %v4722, %v4907
    %v4909 = vand.u32 %v4908, 4294901760
    %v4910 = vsub.f32 %v4908, %v4909
    %v4911 = vand.u32 %v4910, 4294901760
    %4912 = vmatpush.msra.mxu0 %v4911
    %v4913 = vand.u32 %v4720, 4294901760
    %v4914 = vsub.f32 %v4720, %v4913
    %v4915 = vand.u32 %v4914, 4294901760
    %v4916 = vsub.f32 %v4914, %v4915
    %v4917 = vand.u32 %v4916, 4294901760
    %4918 = vmatpush.msra.mxu0 %v4917
    %v4919 = vand.u32 %v4718, 4294901760
    %v4920 = vsub.f32 %v4718, %v4919
    %v4921 = vand.u32 %v4920, 4294901760
    %v4922 = vsub.f32 %v4920, %v4921
    %v4923 = vand.u32 %v4922, 4294901760
    %4924 = vmatpush.msra.mxu0 %v4923
    %v4925 = vand.u32 %v4716, 4294901760
    %4926 = vmatmul.f32.gmra.mxu0 %v4925
    %v4927 = vpop.f32.mrf.mxu0
    %v4928 = vadd.f32 %v4827, %v4927
    %4929 = vdwg.mxu0
    %v4930 = vand.u32 %v4748, 4294901760
    %v4931 = vsub.f32 %v4748, %v4930
    %4932 = vmatpush.msra.mxu0 %v4931
    %v4933 = vand.u32 %v4746, 4294901760
    %v4934 = vsub.f32 %v4746, %v4933
    %4935 = vmatpush.msra.mxu0 %v4934
    %v4936 = vand.u32 %v4744, 4294901760
    %v4937 = vsub.f32 %v4744, %v4936
    %4938 = vmatpush.msra.mxu0 %v4937
    %v4939 = vand.u32 %v4742, 4294901760
    %v4940 = vsub.f32 %v4742, %v4939
    %4941 = vmatpush.msra.mxu0 %v4940
    %v4942 = vand.u32 %v4740, 4294901760
    %v4943 = vsub.f32 %v4740, %v4942
    %4944 = vmatpush.msra.mxu0 %v4943
    %v4945 = vand.u32 %v4738, 4294901760
    %v4946 = vsub.f32 %v4738, %v4945
    %4947 = vmatpush.msra.mxu0 %v4946
    %v4948 = vand.u32 %v4736, 4294901760
    %v4949 = vsub.f32 %v4736, %v4948
    %4950 = vmatpush.msra.mxu0 %v4949
    %v4951 = vand.u32 %v4734, 4294901760
    %v4952 = vsub.f32 %v4734, %v4951
    %4953 = vmatpush.msra.mxu0 %v4952
    %v4954 = vand.u32 %v4732, 4294901760
    %v4955 = vsub.f32 %v4732, %v4954
    %4956 = vmatpush.msra.mxu0 %v4955
    %v4957 = vand.u32 %v4730, 4294901760
    %v4958 = vsub.f32 %v4730, %v4957
    %4959 = vmatpush.msra.mxu0 %v4958
    %v4960 = vand.u32 %v4728, 4294901760
    %v4961 = vsub.f32 %v4728, %v4960
    %4962 = vmatpush.msra.mxu0 %v4961
    %v4963 = vand.u32 %v4726, 4294901760
    %v4964 = vsub.f32 %v4726, %v4963
    %4965 = vmatpush.msra.mxu0 %v4964
    %v4966 = vand.u32 %v4724, 4294901760
    %v4967 = vsub.f32 %v4724, %v4966
    %4968 = vmatpush.msra.mxu0 %v4967
    %v4969 = vand.u32 %v4722, 4294901760
    %v4970 = vsub.f32 %v4722, %v4969
    %4971 = vmatpush.msra.mxu0 %v4970
    %v4972 = vand.u32 %v4720, 4294901760
    %v4973 = vsub.f32 %v4720, %v4972
    %4974 = vmatpush.msra.mxu0 %v4973
    %v4975 = vand.u32 %v4718, 4294901760
    %v4976 = vsub.f32 %v4718, %v4975
    %4977 = vmatpush.msra.mxu0 %v4976
    %v4978 = vand.u32 %v4716, 4294901760
    %v4979 = vsub.f32 %v4716, %v4978
    %4980 = vmatmul.f32.gmra.mxu0 %v4979
    %v4981 = vpop.f32.mrf.mxu0
    %v4982 = vadd.f32 %v4928, %v4981
    %4983 = vdwg.mxu0
    %v4984 = vand.u32 %v4748, 4294901760
    %4985 = vmatpush.msra.mxu0 %v4984
    %v4986 = vand.u32 %v4746, 4294901760
    %4987 = vmatpush.msra.mxu0 %v4986
    %v4988 = vand.u32 %v4744, 4294901760
    %4989 = vmatpush.msra.mxu0 %v4988
    %v4990 = vand.u32 %v4742, 4294901760
    %4991 = vmatpush.msra.mxu0 %v4990
    %v4992 = vand.u32 %v4740, 4294901760
    %4993 = vmatpush.msra.mxu0 %v4992
    %v4994 = vand.u32 %v4738, 4294901760
    %4995 = vmatpush.msra.mxu0 %v4994
    %v4996 = vand.u32 %v4736, 4294901760
    %4997 = vmatpush.msra.mxu0 %v4996
    %v4998 = vand.u32 %v4734, 4294901760
    %4999 = vmatpush.msra.mxu0 %v4998
    %v5000 = vand.u32 %v4732, 4294901760
    %5001 = vmatpush.msra.mxu0 %v5000
    %v5002 = vand.u32 %v4730, 4294901760
    %5003 = vmatpush.msra.mxu0 %v5002
    %v5004 = vand.u32 %v4728, 4294901760
    %5005 = vmatpush.msra.mxu0 %v5004
    %v5006 = vand.u32 %v4726, 4294901760
    %5007 = vmatpush.msra.mxu0 %v5006
    %v5008 = vand.u32 %v4724, 4294901760
    %5009 = vmatpush.msra.mxu0 %v5008
    %v5010 = vand.u32 %v4722, 4294901760
    %5011 = vmatpush.msra.mxu0 %v5010
    %v5012 = vand.u32 %v4720, 4294901760
    %5013 = vmatpush.msra.mxu0 %v5012
    %v5014 = vand.u32 %v4718, 4294901760
    %5015 = vmatpush.msra.mxu0 %v5014
    %v5016 = vand.u32 %v4716, 4294901760
    %v5017 = vsub.f32 %v4716, %v5016
    %v5018 = vand.u32 %v5017, 4294901760
    %5019 = vmatmul.f32.gmra.mxu0 %v5018
    %v5020 = vpop.f32.mrf.mxu0
    %v5021 = vadd.f32 %v4982, %v5020
    %5022 = vdwg.mxu0
    %v5023 = vand.u32 %v4748, 4294901760
    %v5024 = vsub.f32 %v4748, %v5023
    %v5025 = vand.u32 %v5024, 4294901760
    %5026 = vmatpush.msra.mxu0 %v5025
    %v5027 = vand.u32 %v4746, 4294901760
    %v5028 = vsub.f32 %v4746, %v5027
    %v5029 = vand.u32 %v5028, 4294901760
    %5030 = vmatpush.msra.mxu0 %v5029
    %v5031 = vand.u32 %v4744, 4294901760
    %v5032 = vsub.f32 %v4744, %v5031
    %v5033 = vand.u32 %v5032, 4294901760
    %5034 = vmatpush.msra.mxu0 %v5033
    %v5035 = vand.u32 %v4742, 4294901760
    %v5036 = vsub.f32 %v4742, %v5035
    %v5037 = vand.u32 %v5036, 4294901760
    %5038 = vmatpush.msra.mxu0 %v5037
    %v5039 = vand.u32 %v4740, 4294901760
    %v5040 = vsub.f32 %v4740, %v5039
    %v5041 = vand.u32 %v5040, 4294901760
    %5042 = vmatpush.msra.mxu0 %v5041
    %v5043 = vand.u32 %v4738, 4294901760
    %v5044 = vsub.f32 %v4738, %v5043
    %v5045 = vand.u32 %v5044, 4294901760
    %5046 = vmatpush.msra.mxu0 %v5045
    %v5047 = vand.u32 %v4736, 4294901760
    %v5048 = vsub.f32 %v4736, %v5047
    %v5049 = vand.u32 %v5048, 4294901760
    %5050 = vmatpush.msra.mxu0 %v5049
    %v5051 = vand.u32 %v4734, 4294901760
    %v5052 = vsub.f32 %v4734, %v5051
    %v5053 = vand.u32 %v5052, 4294901760
    %5054 = vmatpush.msra.mxu0 %v5053
    %v5055 = vand.u32 %v4732, 4294901760
    %v5056 = vsub.f32 %v4732, %v5055
    %v5057 = vand.u32 %v5056, 4294901760
    %5058 = vmatpush.msra.mxu0 %v5057
    %v5059 = vand.u32 %v4730, 4294901760
    %v5060 = vsub.f32 %v4730, %v5059
    %v5061 = vand.u32 %v5060, 4294901760
    %5062 = vmatpush.msra.mxu0 %v5061
    %v5063 = vand.u32 %v4728, 4294901760
    %v5064 = vsub.f32 %v4728, %v5063
    %v5065 = vand.u32 %v5064, 4294901760
    %5066 = vmatpush.msra.mxu0 %v5065
    %v5067 = vand.u32 %v4726, 4294901760
    %v5068 = vsub.f32 %v4726, %v5067
    %v5069 = vand.u32 %v5068, 4294901760
    %5070 = vmatpush.msra.mxu0 %v5069
    %v5071 = vand.u32 %v4724, 4294901760
    %v5072 = vsub.f32 %v4724, %v5071
    %v5073 = vand.u32 %v5072, 4294901760
    %5074 = vmatpush.msra.mxu0 %v5073
    %v5075 = vand.u32 %v4722, 4294901760
    %v5076 = vsub.f32 %v4722, %v5075
    %v5077 = vand.u32 %v5076, 4294901760
    %5078 = vmatpush.msra.mxu0 %v5077
    %v5079 = vand.u32 %v4720, 4294901760
    %v5080 = vsub.f32 %v4720, %v5079
    %v5081 = vand.u32 %v5080, 4294901760
    %5082 = vmatpush.msra.mxu0 %v5081
    %v5083 = vand.u32 %v4718, 4294901760
    %v5084 = vsub.f32 %v4718, %v5083
    %v5085 = vand.u32 %v5084, 4294901760
    %5086 = vmatpush.msra.mxu0 %v5085
    %v5087 = vand.u32 %v4716, 4294901760
    %5088 = vmatmul.f32.gmra.mxu0 %v5087
    %v5089 = vpop.f32.mrf.mxu0
    %v5090 = vadd.f32 %v5021, %v5089
    %5091 = vdwg.mxu0
    %v5092 = vand.u32 %v4748, 4294901760
    %5093 = vmatpush.msra.mxu0 %v5092
    %v5094 = vand.u32 %v4746, 4294901760
    %5095 = vmatpush.msra.mxu0 %v5094
    %v5096 = vand.u32 %v4744, 4294901760
    %5097 = vmatpush.msra.mxu0 %v5096
    %v5098 = vand.u32 %v4742, 4294901760
    %5099 = vmatpush.msra.mxu0 %v5098
    %v5100 = vand.u32 %v4740, 4294901760
    %5101 = vmatpush.msra.mxu0 %v5100
    %v5102 = vand.u32 %v4738, 4294901760
    %5103 = vmatpush.msra.mxu0 %v5102
    %v5104 = vand.u32 %v4736, 4294901760
    %5105 = vmatpush.msra.mxu0 %v5104
    %v5106 = vand.u32 %v4734, 4294901760
    %5107 = vmatpush.msra.mxu0 %v5106
    %v5108 = vand.u32 %v4732, 4294901760
    %5109 = vmatpush.msra.mxu0 %v5108
    %v5110 = vand.u32 %v4730, 4294901760
    %5111 = vmatpush.msra.mxu0 %v5110
    %v5112 = vand.u32 %v4728, 4294901760
    %5113 = vmatpush.msra.mxu0 %v5112
    %v5114 = vand.u32 %v4726, 4294901760
    %5115 = vmatpush.msra.mxu0 %v5114
    %v5116 = vand.u32 %v4724, 4294901760
    %5117 = vmatpush.msra.mxu0 %v5116
    %v5118 = vand.u32 %v4722, 4294901760
    %5119 = vmatpush.msra.mxu0 %v5118
    %v5120 = vand.u32 %v4720, 4294901760
    %5121 = vmatpush.msra.mxu0 %v5120
    %v5122 = vand.u32 %v4718, 4294901760
    %5123 = vmatpush.msra.mxu0 %v5122
    %v5124 = vand.u32 %v4716, 4294901760
    %5125 = vmatmul.f32.gmra.mxu0 %v5124
    %v5126 = vpop.f32.mrf.mxu0
    %v5127 = vadd.f32 %v5090, %v5126
    %5128 = vdwg.mxu0
    %v5129 = vand.u32 %v4780, 4294901760
    %5130 = vmatpush.msra.mxu0 %v5129
    %v5131 = vand.u32 %v4778, 4294901760
    %5132 = vmatpush.msra.mxu0 %v5131
    %v5133 = vand.u32 %v4776, 4294901760
    %5134 = vmatpush.msra.mxu0 %v5133
    %v5135 = vand.u32 %v4774, 4294901760
    %5136 = vmatpush.msra.mxu0 %v5135
    %v5137 = vand.u32 %v4772, 4294901760
    %5138 = vmatpush.msra.mxu0 %v5137
    %v5139 = vand.u32 %v4770, 4294901760
    %5140 = vmatpush.msra.mxu0 %v5139
    %v5141 = vand.u32 %v4768, 4294901760
    %5142 = vmatpush.msra.mxu0 %v5141
    %v5143 = vand.u32 %v4766, 4294901760
    %5144 = vmatpush.msra.mxu0 %v5143
    %v5145 = vand.u32 %v4764, 4294901760
    %5146 = vmatpush.msra.mxu0 %v5145
    %v5147 = vand.u32 %v4762, 4294901760
    %5148 = vmatpush.msra.mxu0 %v5147
    %v5149 = vand.u32 %v4760, 4294901760
    %5150 = vmatpush.msra.mxu0 %v5149
    %v5151 = vand.u32 %v4758, 4294901760
    %5152 = vmatpush.msra.mxu0 %v5151
    %v5153 = vand.u32 %v4756, 4294901760
    %5154 = vmatpush.msra.mxu0 %v5153
    %v5155 = vand.u32 %v4754, 4294901760
    %5156 = vmatpush.msra.mxu0 %v5155
    %v5157 = vand.u32 %v4752, 4294901760
    %5158 = vmatpush.msra.mxu0 %v5157
    %v5159 = vand.u32 %v4750, 4294901760
    %5160 = vmatpush.msra.mxu0 %v5159
    %v5161 = vand.u32 %v4717, 4294901760
    %v5162 = vsub.f32 %v4717, %v5161
    %v5163 = vand.u32 %v5162, 4294901760
    %v5164 = vsub.f32 %v5162, %v5163
    %v5165 = vand.u32 %v5164, 4294901760
    %5166 = vmatmul.f32.gmra.mxu0 %v5165
    %v5167 = vpop.f32.mrf.mxu0
    %v5168 = vadd.f32 %v5127, %v5167
    %5169 = vdwg.mxu0
    %v5170 = vand.u32 %v4780, 4294901760
    %v5171 = vsub.f32 %v4780, %v5170
    %v5172 = vand.u32 %v5171, 4294901760
    %v5173 = vsub.f32 %v5171, %v5172
    %v5174 = vand.u32 %v5173, 4294901760
    %5175 = vmatpush.msra.mxu0 %v5174
    %v5176 = vand.u32 %v4778, 4294901760
    %v5177 = vsub.f32 %v4778, %v5176
    %v5178 = vand.u32 %v5177, 4294901760
    %v5179 = vsub.f32 %v5177, %v5178
    %v5180 = vand.u32 %v5179, 4294901760
    %5181 = vmatpush.msra.mxu0 %v5180
    %v5182 = vand.u32 %v4776, 4294901760
    %v5183 = vsub.f32 %v4776, %v5182
    %v5184 = vand.u32 %v5183, 4294901760
    %v5185 = vsub.f32 %v5183, %v5184
    %v5186 = vand.u32 %v5185, 4294901760
    %5187 = vmatpush.msra.mxu0 %v5186
    %v5188 = vand.u32 %v4774, 4294901760
    %v5189 = vsub.f32 %v4774, %v5188
    %v5190 = vand.u32 %v5189, 4294901760
    %v5191 = vsub.f32 %v5189, %v5190
    %v5192 = vand.u32 %v5191, 4294901760
    %5193 = vmatpush.msra.mxu0 %v5192
    %v5194 = vand.u32 %v4772, 4294901760
    %v5195 = vsub.f32 %v4772, %v5194
    %v5196 = vand.u32 %v5195, 4294901760
    %v5197 = vsub.f32 %v5195, %v5196
    %v5198 = vand.u32 %v5197, 4294901760
    %5199 = vmatpush.msra.mxu0 %v5198
    %v5200 = vand.u32 %v4770, 4294901760
    %v5201 = vsub.f32 %v4770, %v5200
    %v5202 = vand.u32 %v5201, 4294901760
    %v5203 = vsub.f32 %v5201, %v5202
    %v5204 = vand.u32 %v5203, 4294901760
    %5205 = vmatpush.msra.mxu0 %v5204
    %v5206 = vand.u32 %v4768, 4294901760
    %v5207 = vsub.f32 %v4768, %v5206
    %v5208 = vand.u32 %v5207, 4294901760
    %v5209 = vsub.f32 %v5207, %v5208
    %v5210 = vand.u32 %v5209, 4294901760
    %5211 = vmatpush.msra.mxu0 %v5210
    %v5212 = vand.u32 %v4766, 4294901760
    %v5213 = vsub.f32 %v4766, %v5212
    %v5214 = vand.u32 %v5213, 4294901760
    %v5215 = vsub.f32 %v5213, %v5214
    %v5216 = vand.u32 %v5215, 4294901760
    %5217 = vmatpush.msra.mxu0 %v5216
    %v5218 = vand.u32 %v4764, 4294901760
    %v5219 = vsub.f32 %v4764, %v5218
    %v5220 = vand.u32 %v5219, 4294901760
    %v5221 = vsub.f32 %v5219, %v5220
    %v5222 = vand.u32 %v5221, 4294901760
    %5223 = vmatpush.msra.mxu0 %v5222
    %v5224 = vand.u32 %v4762, 4294901760
    %v5225 = vsub.f32 %v4762, %v5224
    %v5226 = vand.u32 %v5225, 4294901760
    %v5227 = vsub.f32 %v5225, %v5226
    %v5228 = vand.u32 %v5227, 4294901760
    %5229 = vmatpush.msra.mxu0 %v5228
    %v5230 = vand.u32 %v4760, 4294901760
    %v5231 = vsub.f32 %v4760, %v5230
    %v5232 = vand.u32 %v5231, 4294901760
    %v5233 = vsub.f32 %v5231, %v5232
    %v5234 = vand.u32 %v5233, 4294901760
    %5235 = vmatpush.msra.mxu0 %v5234
    %v5236 = vand.u32 %v4758, 4294901760
    %v5237 = vsub.f32 %v4758, %v5236
    %v5238 = vand.u32 %v5237, 4294901760
    %v5239 = vsub.f32 %v5237, %v5238
    %v5240 = vand.u32 %v5239, 4294901760
    %5241 = vmatpush.msra.mxu0 %v5240
    %v5242 = vand.u32 %v4756, 4294901760
    %v5243 = vsub.f32 %v4756, %v5242
    %v5244 = vand.u32 %v5243, 4294901760
    %v5245 = vsub.f32 %v5243, %v5244
    %v5246 = vand.u32 %v5245, 4294901760
    %5247 = vmatpush.msra.mxu0 %v5246
    %v5248 = vand.u32 %v4754, 4294901760
    %v5249 = vsub.f32 %v4754, %v5248
    %v5250 = vand.u32 %v5249, 4294901760
    %v5251 = vsub.f32 %v5249, %v5250
    %v5252 = vand.u32 %v5251, 4294901760
    %5253 = vmatpush.msra.mxu0 %v5252
    %v5254 = vand.u32 %v4752, 4294901760
    %v5255 = vsub.f32 %v4752, %v5254
    %v5256 = vand.u32 %v5255, 4294901760
    %v5257 = vsub.f32 %v5255, %v5256
    %v5258 = vand.u32 %v5257, 4294901760
    %5259 = vmatpush.msra.mxu0 %v5258
    %v5260 = vand.u32 %v4750, 4294901760
    %v5261 = vsub.f32 %v4750, %v5260
    %v5262 = vand.u32 %v5261, 4294901760
    %v5263 = vsub.f32 %v5261, %v5262
    %v5264 = vand.u32 %v5263, 4294901760
    %5265 = vmatpush.msra.mxu0 %v5264
    %v5266 = vand.u32 %v4717, 4294901760
    %5267 = vmatmul.f32.gmra.mxu0 %v5266
    %v5268 = vpop.f32.mrf.mxu0
    %v5269 = vadd.f32 %v5168, %v5268
    %5270 = vdwg.mxu0
    %v5271 = vand.u32 %v4780, 4294901760
    %v5272 = vsub.f32 %v4780, %v5271
    %5273 = vmatpush.msra.mxu0 %v5272
    %v5274 = vand.u32 %v4778, 4294901760
    %v5275 = vsub.f32 %v4778, %v5274
    %5276 = vmatpush.msra.mxu0 %v5275
    %v5277 = vand.u32 %v4776, 4294901760
    %v5278 = vsub.f32 %v4776, %v5277
    %5279 = vmatpush.msra.mxu0 %v5278
    %v5280 = vand.u32 %v4774, 4294901760
    %v5281 = vsub.f32 %v4774, %v5280
    %5282 = vmatpush.msra.mxu0 %v5281
    %v5283 = vand.u32 %v4772, 4294901760
    %v5284 = vsub.f32 %v4772, %v5283
    %5285 = vmatpush.msra.mxu0 %v5284
    %v5286 = vand.u32 %v4770, 4294901760
    %v5287 = vsub.f32 %v4770, %v5286
    %5288 = vmatpush.msra.mxu0 %v5287
    %v5289 = vand.u32 %v4768, 4294901760
    %v5290 = vsub.f32 %v4768, %v5289
    %5291 = vmatpush.msra.mxu0 %v5290
    %v5292 = vand.u32 %v4766, 4294901760
    %v5293 = vsub.f32 %v4766, %v5292
    %5294 = vmatpush.msra.mxu0 %v5293
    %v5295 = vand.u32 %v4764, 4294901760
    %v5296 = vsub.f32 %v4764, %v5295
    %5297 = vmatpush.msra.mxu0 %v5296
    %v5298 = vand.u32 %v4762, 4294901760
    %v5299 = vsub.f32 %v4762, %v5298
    %5300 = vmatpush.msra.mxu0 %v5299
    %v5301 = vand.u32 %v4760, 4294901760
    %v5302 = vsub.f32 %v4760, %v5301
    %5303 = vmatpush.msra.mxu0 %v5302
    %v5304 = vand.u32 %v4758, 4294901760
    %v5305 = vsub.f32 %v4758, %v5304
    %5306 = vmatpush.msra.mxu0 %v5305
    %v5307 = vand.u32 %v4756, 4294901760
    %v5308 = vsub.f32 %v4756, %v5307
    %5309 = vmatpush.msra.mxu0 %v5308
    %v5310 = vand.u32 %v4754, 4294901760
    %v5311 = vsub.f32 %v4754, %v5310
    %5312 = vmatpush.msra.mxu0 %v5311
    %v5313 = vand.u32 %v4752, 4294901760
    %v5314 = vsub.f32 %v4752, %v5313
    %5315 = vmatpush.msra.mxu0 %v5314
    %v5316 = vand.u32 %v4750, 4294901760
    %v5317 = vsub.f32 %v4750, %v5316
    %5318 = vmatpush.msra.mxu0 %v5317
    %v5319 = vand.u32 %v4717, 4294901760
    %v5320 = vsub.f32 %v4717, %v5319
    %5321 = vmatmul.f32.gmra.mxu0 %v5320
    %v5322 = vpop.f32.mrf.mxu0
    %v5323 = vadd.f32 %v5269, %v5322
    %5324 = vdwg.mxu0
    %v5325 = vand.u32 %v4780, 4294901760
    %5326 = vmatpush.msra.mxu0 %v5325
    %v5327 = vand.u32 %v4778, 4294901760
    %5328 = vmatpush.msra.mxu0 %v5327
    %v5329 = vand.u32 %v4776, 4294901760
    %5330 = vmatpush.msra.mxu0 %v5329
    %v5331 = vand.u32 %v4774, 4294901760
    %5332 = vmatpush.msra.mxu0 %v5331
    %v5333 = vand.u32 %v4772, 4294901760
    %5334 = vmatpush.msra.mxu0 %v5333
    %v5335 = vand.u32 %v4770, 4294901760
    %5336 = vmatpush.msra.mxu0 %v5335
    %v5337 = vand.u32 %v4768, 4294901760
    %5338 = vmatpush.msra.mxu0 %v5337
    %v5339 = vand.u32 %v4766, 4294901760
    %5340 = vmatpush.msra.mxu0 %v5339
    %v5341 = vand.u32 %v4764, 4294901760
    %5342 = vmatpush.msra.mxu0 %v5341
    %v5343 = vand.u32 %v4762, 4294901760
    %5344 = vmatpush.msra.mxu0 %v5343
    %v5345 = vand.u32 %v4760, 4294901760
    %5346 = vmatpush.msra.mxu0 %v5345
    %v5347 = vand.u32 %v4758, 4294901760
    %5348 = vmatpush.msra.mxu0 %v5347
    %v5349 = vand.u32 %v4756, 4294901760
    %5350 = vmatpush.msra.mxu0 %v5349
    %v5351 = vand.u32 %v4754, 4294901760
    %5352 = vmatpush.msra.mxu0 %v5351
    %v5353 = vand.u32 %v4752, 4294901760
    %5354 = vmatpush.msra.mxu0 %v5353
    %v5355 = vand.u32 %v4750, 4294901760
    %5356 = vmatpush.msra.mxu0 %v5355
    %v5357 = vand.u32 %v4717, 4294901760
    %v5358 = vsub.f32 %v4717, %v5357
    %v5359 = vand.u32 %v5358, 4294901760
    %5360 = vmatmul.f32.gmra.mxu0 %v5359
    %v5361 = vpop.f32.mrf.mxu0
    %v5362 = vadd.f32 %v5323, %v5361
    %5363 = vdwg.mxu0
    %v5364 = vand.u32 %v4780, 4294901760
    %v5365 = vsub.f32 %v4780, %v5364
    %v5366 = vand.u32 %v5365, 4294901760
    %5367 = vmatpush.msra.mxu0 %v5366
    %v5368 = vand.u32 %v4778, 4294901760
    %v5369 = vsub.f32 %v4778, %v5368
    %v5370 = vand.u32 %v5369, 4294901760
    %5371 = vmatpush.msra.mxu0 %v5370
    %v5372 = vand.u32 %v4776, 4294901760
    %v5373 = vsub.f32 %v4776, %v5372
    %v5374 = vand.u32 %v5373, 4294901760
    %5375 = vmatpush.msra.mxu0 %v5374
    %v5376 = vand.u32 %v4774, 4294901760
    %v5377 = vsub.f32 %v4774, %v5376
    %v5378 = vand.u32 %v5377, 4294901760
    %5379 = vmatpush.msra.mxu0 %v5378
    %v5380 = vand.u32 %v4772, 4294901760
    %v5381 = vsub.f32 %v4772, %v5380
    %v5382 = vand.u32 %v5381, 4294901760
    %5383 = vmatpush.msra.mxu0 %v5382
    %v5384 = vand.u32 %v4770, 4294901760
    %v5385 = vsub.f32 %v4770, %v5384
    %v5386 = vand.u32 %v5385, 4294901760
    %5387 = vmatpush.msra.mxu0 %v5386
    %v5388 = vand.u32 %v4768, 4294901760
    %v5389 = vsub.f32 %v4768, %v5388
    %v5390 = vand.u32 %v5389, 4294901760
    %5391 = vmatpush.msra.mxu0 %v5390
    %v5392 = vand.u32 %v4766, 4294901760
    %v5393 = vsub.f32 %v4766, %v5392
    %v5394 = vand.u32 %v5393, 4294901760
    %5395 = vmatpush.msra.mxu0 %v5394
    %v5396 = vand.u32 %v4764, 4294901760
    %v5397 = vsub.f32 %v4764, %v5396
    %v5398 = vand.u32 %v5397, 4294901760
    %5399 = vmatpush.msra.mxu0 %v5398
    %v5400 = vand.u32 %v4762, 4294901760
    %v5401 = vsub.f32 %v4762, %v5400
    %v5402 = vand.u32 %v5401, 4294901760
    %5403 = vmatpush.msra.mxu0 %v5402
    %v5404 = vand.u32 %v4760, 4294901760
    %v5405 = vsub.f32 %v4760, %v5404
    %v5406 = vand.u32 %v5405, 4294901760
    %5407 = vmatpush.msra.mxu0 %v5406
    %v5408 = vand.u32 %v4758, 4294901760
    %v5409 = vsub.f32 %v4758, %v5408
    %v5410 = vand.u32 %v5409, 4294901760
    %5411 = vmatpush.msra.mxu0 %v5410
    %v5412 = vand.u32 %v4756, 4294901760
    %v5413 = vsub.f32 %v4756, %v5412
    %v5414 = vand.u32 %v5413, 4294901760
    %5415 = vmatpush.msra.mxu0 %v5414
    %v5416 = vand.u32 %v4754, 4294901760
    %v5417 = vsub.f32 %v4754, %v5416
    %v5418 = vand.u32 %v5417, 4294901760
    %5419 = vmatpush.msra.mxu0 %v5418
    %v5420 = vand.u32 %v4752, 4294901760
    %v5421 = vsub.f32 %v4752, %v5420
    %v5422 = vand.u32 %v5421, 4294901760
    %5423 = vmatpush.msra.mxu0 %v5422
    %v5424 = vand.u32 %v4750, 4294901760
    %v5425 = vsub.f32 %v4750, %v5424
    %v5426 = vand.u32 %v5425, 4294901760
    %5427 = vmatpush.msra.mxu0 %v5426
    %v5428 = vand.u32 %v4717, 4294901760
    %5429 = vmatmul.f32.gmra.mxu0 %v5428
    %v5430 = vpop.f32.mrf.mxu0
    %v5431 = vadd.f32 %v5362, %v5430
    %5432 = vdwg.mxu0
    %v5433 = vand.u32 %v4780, 4294901760
    %5434 = vmatpush.msra.mxu0 %v5433
    %v5435 = vand.u32 %v4778, 4294901760
    %5436 = vmatpush.msra.mxu0 %v5435
    %v5437 = vand.u32 %v4776, 4294901760
    %5438 = vmatpush.msra.mxu0 %v5437
    %v5439 = vand.u32 %v4774, 4294901760
    %5440 = vmatpush.msra.mxu0 %v5439
    %v5441 = vand.u32 %v4772, 4294901760
    %5442 = vmatpush.msra.mxu0 %v5441
    %v5443 = vand.u32 %v4770, 4294901760
    %5444 = vmatpush.msra.mxu0 %v5443
    %v5445 = vand.u32 %v4768, 4294901760
    %5446 = vmatpush.msra.mxu0 %v5445
    %v5447 = vand.u32 %v4766, 4294901760
    %5448 = vmatpush.msra.mxu0 %v5447
    %v5449 = vand.u32 %v4764, 4294901760
    %5450 = vmatpush.msra.mxu0 %v5449
    %v5451 = vand.u32 %v4762, 4294901760
    %5452 = vmatpush.msra.mxu0 %v5451
    %v5453 = vand.u32 %v4760, 4294901760
    %5454 = vmatpush.msra.mxu0 %v5453
    %v5455 = vand.u32 %v4758, 4294901760
    %5456 = vmatpush.msra.mxu0 %v5455
    %v5457 = vand.u32 %v4756, 4294901760
    %5458 = vmatpush.msra.mxu0 %v5457
    %v5459 = vand.u32 %v4754, 4294901760
    %5460 = vmatpush.msra.mxu0 %v5459
    %v5461 = vand.u32 %v4752, 4294901760
    %5462 = vmatpush.msra.mxu0 %v5461
    %v5463 = vand.u32 %v4750, 4294901760
    %5464 = vmatpush.msra.mxu0 %v5463
    %v5465 = vand.u32 %v4717, 4294901760
    %5466 = vmatmul.f32.gmra.mxu0 %v5465
    %v5467 = vpop.f32.mrf.mxu0
    %v5468 = vadd.f32 %v5431, %v5467
    %5469 = vdwg.mxu0
    %v5470 = vand.u32 %v4749, 4294901760
    %5471 = vmatpush.msra.mxu0 %v5470
    %v5472 = vand.u32 %v4747, 4294901760
    %5473 = vmatpush.msra.mxu0 %v5472
    %v5474 = vand.u32 %v4745, 4294901760
    %5475 = vmatpush.msra.mxu0 %v5474
    %v5476 = vand.u32 %v4743, 4294901760
    %5477 = vmatpush.msra.mxu0 %v5476
    %v5478 = vand.u32 %v4741, 4294901760
    %5479 = vmatpush.msra.mxu0 %v5478
    %v5480 = vand.u32 %v4739, 4294901760
    %5481 = vmatpush.msra.mxu0 %v5480
    %v5482 = vand.u32 %v4737, 4294901760
    %5483 = vmatpush.msra.mxu0 %v5482
    %v5484 = vand.u32 %v4735, 4294901760
    %5485 = vmatpush.msra.mxu0 %v5484
    %v5486 = vand.u32 %v4733, 4294901760
    %5487 = vmatpush.msra.mxu0 %v5486
    %v5488 = vand.u32 %v4731, 4294901760
    %5489 = vmatpush.msra.mxu0 %v5488
    %v5490 = vand.u32 %v4729, 4294901760
    %5491 = vmatpush.msra.mxu0 %v5490
    %v5492 = vand.u32 %v4727, 4294901760
    %5493 = vmatpush.msra.mxu0 %v5492
    %v5494 = vand.u32 %v4725, 4294901760
    %5495 = vmatpush.msra.mxu0 %v5494
    %v5496 = vand.u32 %v4723, 4294901760
    %5497 = vmatpush.msra.mxu0 %v5496
    %v5498 = vand.u32 %v4721, 4294901760
    %5499 = vmatpush.msra.mxu0 %v5498
    %v5500 = vand.u32 %v4719, 4294901760
    %5501 = vmatpush.msra.mxu0 %v5500
    %v5502 = vand.u32 %v4716, 4294901760
    %v5503 = vsub.f32 %v4716, %v5502
    %v5504 = vand.u32 %v5503, 4294901760
    %v5505 = vsub.f32 %v5503, %v5504
    %v5506 = vand.u32 %v5505, 4294901760
    %5507 = vmatmul.f32.gmra.mxu0 %v5506
    %v5508 = vpop.f32.mrf.mxu0
    %v5509 = vadd.f32 %v4785, %v5508
    %5510 = vdwg.mxu0
    %v5511 = vand.u32 %v4749, 4294901760
    %v5512 = vsub.f32 %v4749, %v5511
    %v5513 = vand.u32 %v5512, 4294901760
    %v5514 = vsub.f32 %v5512, %v5513
    %v5515 = vand.u32 %v5514, 4294901760
    %5516 = vmatpush.msra.mxu0 %v5515
    %v5517 = vand.u32 %v4747, 4294901760
    %v5518 = vsub.f32 %v4747, %v5517
    %v5519 = vand.u32 %v5518, 4294901760
    %v5520 = vsub.f32 %v5518, %v5519
    %v5521 = vand.u32 %v5520, 4294901760
    %5522 = vmatpush.msra.mxu0 %v5521
    %v5523 = vand.u32 %v4745, 4294901760
    %v5524 = vsub.f32 %v4745, %v5523
    %v5525 = vand.u32 %v5524, 4294901760
    %v5526 = vsub.f32 %v5524, %v5525
    %v5527 = vand.u32 %v5526, 4294901760
    %5528 = vmatpush.msra.mxu0 %v5527
    %v5529 = vand.u32 %v4743, 4294901760
    %v5530 = vsub.f32 %v4743, %v5529
    %v5531 = vand.u32 %v5530, 4294901760
    %v5532 = vsub.f32 %v5530, %v5531
    %v5533 = vand.u32 %v5532, 4294901760
    %5534 = vmatpush.msra.mxu0 %v5533
    %v5535 = vand.u32 %v4741, 4294901760
    %v5536 = vsub.f32 %v4741, %v5535
    %v5537 = vand.u32 %v5536, 4294901760
    %v5538 = vsub.f32 %v5536, %v5537
    %v5539 = vand.u32 %v5538, 4294901760
    %5540 = vmatpush.msra.mxu0 %v5539
    %v5541 = vand.u32 %v4739, 4294901760
    %v5542 = vsub.f32 %v4739, %v5541
    %v5543 = vand.u32 %v5542, 4294901760
    %v5544 = vsub.f32 %v5542, %v5543
    %v5545 = vand.u32 %v5544, 4294901760
    %5546 = vmatpush.msra.mxu0 %v5545
    %v5547 = vand.u32 %v4737, 4294901760
    %v5548 = vsub.f32 %v4737, %v5547
    %v5549 = vand.u32 %v5548, 4294901760
    %v5550 = vsub.f32 %v5548, %v5549
    %v5551 = vand.u32 %v5550, 4294901760
    %5552 = vmatpush.msra.mxu0 %v5551
    %v5553 = vand.u32 %v4735, 4294901760
    %v5554 = vsub.f32 %v4735, %v5553
    %v5555 = vand.u32 %v5554, 4294901760
    %v5556 = vsub.f32 %v5554, %v5555
    %v5557 = vand.u32 %v5556, 4294901760
    %5558 = vmatpush.msra.mxu0 %v5557
    %v5559 = vand.u32 %v4733, 4294901760
    %v5560 = vsub.f32 %v4733, %v5559
    %v5561 = vand.u32 %v5560, 4294901760
    %v5562 = vsub.f32 %v5560, %v5561
    %v5563 = vand.u32 %v5562, 4294901760
    %5564 = vmatpush.msra.mxu0 %v5563
    %v5565 = vand.u32 %v4731, 4294901760
    %v5566 = vsub.f32 %v4731, %v5565
    %v5567 = vand.u32 %v5566, 4294901760
    %v5568 = vsub.f32 %v5566, %v5567
    %v5569 = vand.u32 %v5568, 4294901760
    %5570 = vmatpush.msra.mxu0 %v5569
    %v5571 = vand.u32 %v4729, 4294901760
    %v5572 = vsub.f32 %v4729, %v5571
    %v5573 = vand.u32 %v5572, 4294901760
    %v5574 = vsub.f32 %v5572, %v5573
    %v5575 = vand.u32 %v5574, 4294901760
    %5576 = vmatpush.msra.mxu0 %v5575
    %v5577 = vand.u32 %v4727, 4294901760
    %v5578 = vsub.f32 %v4727, %v5577
    %v5579 = vand.u32 %v5578, 4294901760
    %v5580 = vsub.f32 %v5578, %v5579
    %v5581 = vand.u32 %v5580, 4294901760
    %5582 = vmatpush.msra.mxu0 %v5581
    %v5583 = vand.u32 %v4725, 4294901760
    %v5584 = vsub.f32 %v4725, %v5583
    %v5585 = vand.u32 %v5584, 4294901760
    %v5586 = vsub.f32 %v5584, %v5585
    %v5587 = vand.u32 %v5586, 4294901760
    %5588 = vmatpush.msra.mxu0 %v5587
    %v5589 = vand.u32 %v4723, 4294901760
    %v5590 = vsub.f32 %v4723, %v5589
    %v5591 = vand.u32 %v5590, 4294901760
    %v5592 = vsub.f32 %v5590, %v5591
    %v5593 = vand.u32 %v5592, 4294901760
    %5594 = vmatpush.msra.mxu0 %v5593
    %v5595 = vand.u32 %v4721, 4294901760
    %v5596 = vsub.f32 %v4721, %v5595
    %v5597 = vand.u32 %v5596, 4294901760
    %v5598 = vsub.f32 %v5596, %v5597
    %v5599 = vand.u32 %v5598, 4294901760
    %5600 = vmatpush.msra.mxu0 %v5599
    %v5601 = vand.u32 %v4719, 4294901760
    %v5602 = vsub.f32 %v4719, %v5601
    %v5603 = vand.u32 %v5602, 4294901760
    %v5604 = vsub.f32 %v5602, %v5603
    %v5605 = vand.u32 %v5604, 4294901760
    %5606 = vmatpush.msra.mxu0 %v5605
    %v5607 = vand.u32 %v4716, 4294901760
    %5608 = vmatmul.f32.gmra.mxu0 %v5607
    %v5609 = vpop.f32.mrf.mxu0
    %v5610 = vadd.f32 %v5509, %v5609
    %5611 = vdwg.mxu0
    %v5612 = vand.u32 %v4749, 4294901760
    %v5613 = vsub.f32 %v4749, %v5612
    %5614 = vmatpush.msra.mxu0 %v5613
    %v5615 = vand.u32 %v4747, 4294901760
    %v5616 = vsub.f32 %v4747, %v5615
    %5617 = vmatpush.msra.mxu0 %v5616
    %v5618 = vand.u32 %v4745, 4294901760
    %v5619 = vsub.f32 %v4745, %v5618
    %5620 = vmatpush.msra.mxu0 %v5619
    %v5621 = vand.u32 %v4743, 4294901760
    %v5622 = vsub.f32 %v4743, %v5621
    %5623 = vmatpush.msra.mxu0 %v5622
    %v5624 = vand.u32 %v4741, 4294901760
    %v5625 = vsub.f32 %v4741, %v5624
    %5626 = vmatpush.msra.mxu0 %v5625
    %v5627 = vand.u32 %v4739, 4294901760
    %v5628 = vsub.f32 %v4739, %v5627
    %5629 = vmatpush.msra.mxu0 %v5628
    %v5630 = vand.u32 %v4737, 4294901760
    %v5631 = vsub.f32 %v4737, %v5630
    %5632 = vmatpush.msra.mxu0 %v5631
    %v5633 = vand.u32 %v4735, 4294901760
    %v5634 = vsub.f32 %v4735, %v5633
    %5635 = vmatpush.msra.mxu0 %v5634
    %v5636 = vand.u32 %v4733, 4294901760
    %v5637 = vsub.f32 %v4733, %v5636
    %5638 = vmatpush.msra.mxu0 %v5637
    %v5639 = vand.u32 %v4731, 4294901760
    %v5640 = vsub.f32 %v4731, %v5639
    %5641 = vmatpush.msra.mxu0 %v5640
    %v5642 = vand.u32 %v4729, 4294901760
    %v5643 = vsub.f32 %v4729, %v5642
    %5644 = vmatpush.msra.mxu0 %v5643
    %v5645 = vand.u32 %v4727, 4294901760
    %v5646 = vsub.f32 %v4727, %v5645
    %5647 = vmatpush.msra.mxu0 %v5646
    %v5648 = vand.u32 %v4725, 4294901760
    %v5649 = vsub.f32 %v4725, %v5648
    %5650 = vmatpush.msra.mxu0 %v5649
    %v5651 = vand.u32 %v4723, 4294901760
    %v5652 = vsub.f32 %v4723, %v5651
    %5653 = vmatpush.msra.mxu0 %v5652
    %v5654 = vand.u32 %v4721, 4294901760
    %v5655 = vsub.f32 %v4721, %v5654
    %5656 = vmatpush.msra.mxu0 %v5655
    %v5657 = vand.u32 %v4719, 4294901760
    %v5658 = vsub.f32 %v4719, %v5657
    %5659 = vmatpush.msra.mxu0 %v5658
    %v5660 = vand.u32 %v4716, 4294901760
    %v5661 = vsub.f32 %v4716, %v5660
    %5662 = vmatmul.f32.gmra.mxu0 %v5661
    %v5663 = vpop.f32.mrf.mxu0
    %v5664 = vadd.f32 %v5610, %v5663
    %5665 = vdwg.mxu0
    %v5666 = vand.u32 %v4749, 4294901760
    %5667 = vmatpush.msra.mxu0 %v5666
    %v5668 = vand.u32 %v4747, 4294901760
    %5669 = vmatpush.msra.mxu0 %v5668
    %v5670 = vand.u32 %v4745, 4294901760
    %5671 = vmatpush.msra.mxu0 %v5670
    %v5672 = vand.u32 %v4743, 4294901760
    %5673 = vmatpush.msra.mxu0 %v5672
    %v5674 = vand.u32 %v4741, 4294901760
    %5675 = vmatpush.msra.mxu0 %v5674
    %v5676 = vand.u32 %v4739, 4294901760
    %5677 = vmatpush.msra.mxu0 %v5676
    %v5678 = vand.u32 %v4737, 4294901760
    %5679 = vmatpush.msra.mxu0 %v5678
    %v5680 = vand.u32 %v4735, 4294901760
    %5681 = vmatpush.msra.mxu0 %v5680
    %v5682 = vand.u32 %v4733, 4294901760
    %5683 = vmatpush.msra.mxu0 %v5682
    %v5684 = vand.u32 %v4731, 4294901760
    %5685 = vmatpush.msra.mxu0 %v5684
    %v5686 = vand.u32 %v4729, 4294901760
    %5687 = vmatpush.msra.mxu0 %v5686
    %v5688 = vand.u32 %v4727, 4294901760
    %5689 = vmatpush.msra.mxu0 %v5688
    %v5690 = vand.u32 %v4725, 4294901760
    %5691 = vmatpush.msra.mxu0 %v5690
    %v5692 = vand.u32 %v4723, 4294901760
    %5693 = vmatpush.msra.mxu0 %v5692
    %v5694 = vand.u32 %v4721, 4294901760
    %5695 = vmatpush.msra.mxu0 %v5694
    %v5696 = vand.u32 %v4719, 4294901760
    %5697 = vmatpush.msra.mxu0 %v5696
    %v5698 = vand.u32 %v4716, 4294901760
    %v5699 = vsub.f32 %v4716, %v5698
    %v5700 = vand.u32 %v5699, 4294901760
    %5701 = vmatmul.f32.gmra.mxu0 %v5700
    %v5702 = vpop.f32.mrf.mxu0
    %v5703 = vadd.f32 %v5664, %v5702
    %5704 = vdwg.mxu0
    %v5705 = vand.u32 %v4749, 4294901760
    %v5706 = vsub.f32 %v4749, %v5705
    %v5707 = vand.u32 %v5706, 4294901760
    %5708 = vmatpush.msra.mxu0 %v5707
    %v5709 = vand.u32 %v4747, 4294901760
    %v5710 = vsub.f32 %v4747, %v5709
    %v5711 = vand.u32 %v5710, 4294901760
    %5712 = vmatpush.msra.mxu0 %v5711
    %v5713 = vand.u32 %v4745, 4294901760
    %v5714 = vsub.f32 %v4745, %v5713
    %v5715 = vand.u32 %v5714, 4294901760
    %5716 = vmatpush.msra.mxu0 %v5715
    %v5717 = vand.u32 %v4743, 4294901760
    %v5718 = vsub.f32 %v4743, %v5717
    %v5719 = vand.u32 %v5718, 4294901760
    %5720 = vmatpush.msra.mxu0 %v5719
    %v5721 = vand.u32 %v4741, 4294901760
    %v5722 = vsub.f32 %v4741, %v5721
    %v5723 = vand.u32 %v5722, 4294901760
    %5724 = vmatpush.msra.mxu0 %v5723
    %v5725 = vand.u32 %v4739, 4294901760
    %v5726 = vsub.f32 %v4739, %v5725
    %v5727 = vand.u32 %v5726, 4294901760
    %5728 = vmatpush.msra.mxu0 %v5727
    %v5729 = vand.u32 %v4737, 4294901760
    %v5730 = vsub.f32 %v4737, %v5729
    %v5731 = vand.u32 %v5730, 4294901760
    %5732 = vmatpush.msra.mxu0 %v5731
    %v5733 = vand.u32 %v4735, 4294901760
    %v5734 = vsub.f32 %v4735, %v5733
    %v5735 = vand.u32 %v5734, 4294901760
    %5736 = vmatpush.msra.mxu0 %v5735
    %v5737 = vand.u32 %v4733, 4294901760
    %v5738 = vsub.f32 %v4733, %v5737
    %v5739 = vand.u32 %v5738, 4294901760
    %5740 = vmatpush.msra.mxu0 %v5739
    %v5741 = vand.u32 %v4731, 4294901760
    %v5742 = vsub.f32 %v4731, %v5741
    %v5743 = vand.u32 %v5742, 4294901760
    %5744 = vmatpush.msra.mxu0 %v5743
    %v5745 = vand.u32 %v4729, 4294901760
    %v5746 = vsub.f32 %v4729, %v5745
    %v5747 = vand.u32 %v5746, 4294901760
    %5748 = vmatpush.msra.mxu0 %v5747
    %v5749 = vand.u32 %v4727, 4294901760
    %v5750 = vsub.f32 %v4727, %v5749
    %v5751 = vand.u32 %v5750, 4294901760
    %5752 = vmatpush.msra.mxu0 %v5751
    %v5753 = vand.u32 %v4725, 4294901760
    %v5754 = vsub.f32 %v4725, %v5753
    %v5755 = vand.u32 %v5754, 4294901760
    %5756 = vmatpush.msra.mxu0 %v5755
    %v5757 = vand.u32 %v4723, 4294901760
    %v5758 = vsub.f32 %v4723, %v5757
    %v5759 = vand.u32 %v5758, 4294901760
    %5760 = vmatpush.msra.mxu0 %v5759
    %v5761 = vand.u32 %v4721, 4294901760
    %v5762 = vsub.f32 %v4721, %v5761
    %v5763 = vand.u32 %v5762, 4294901760
    %5764 = vmatpush.msra.mxu0 %v5763
    %v5765 = vand.u32 %v4719, 4294901760
    %v5766 = vsub.f32 %v4719, %v5765
    %v5767 = vand.u32 %v5766, 4294901760
    %5768 = vmatpush.msra.mxu0 %v5767
    %v5769 = vand.u32 %v4716, 4294901760
    %5770 = vmatmul.f32.gmra.mxu0 %v5769
    %v5771 = vpop.f32.mrf.mxu0
    %v5772 = vadd.f32 %v5703, %v5771
    %5773 = vdwg.mxu0
    %v5774 = vand.u32 %v4749, 4294901760
    %5775 = vmatpush.msra.mxu0 %v5774
    %v5776 = vand.u32 %v4747, 4294901760
    %5777 = vmatpush.msra.mxu0 %v5776
    %v5778 = vand.u32 %v4745, 4294901760
    %5779 = vmatpush.msra.mxu0 %v5778
    %v5780 = vand.u32 %v4743, 4294901760
    %5781 = vmatpush.msra.mxu0 %v5780
    %v5782 = vand.u32 %v4741, 4294901760
    %5783 = vmatpush.msra.mxu0 %v5782
    %v5784 = vand.u32 %v4739, 4294901760
    %5785 = vmatpush.msra.mxu0 %v5784
    %v5786 = vand.u32 %v4737, 4294901760
    %5787 = vmatpush.msra.mxu0 %v5786
    %v5788 = vand.u32 %v4735, 4294901760
    %5789 = vmatpush.msra.mxu0 %v5788
    %v5790 = vand.u32 %v4733, 4294901760
    %5791 = vmatpush.msra.mxu0 %v5790
    %v5792 = vand.u32 %v4731, 4294901760
    %5793 = vmatpush.msra.mxu0 %v5792
    %v5794 = vand.u32 %v4729, 4294901760
    %5795 = vmatpush.msra.mxu0 %v5794
    %v5796 = vand.u32 %v4727, 4294901760
    %5797 = vmatpush.msra.mxu0 %v5796
    %v5798 = vand.u32 %v4725, 4294901760
    %5799 = vmatpush.msra.mxu0 %v5798
    %v5800 = vand.u32 %v4723, 4294901760
    %5801 = vmatpush.msra.mxu0 %v5800
    %v5802 = vand.u32 %v4721, 4294901760
    %5803 = vmatpush.msra.mxu0 %v5802
    %v5804 = vand.u32 %v4719, 4294901760
    %5805 = vmatpush.msra.mxu0 %v5804
    %v5806 = vand.u32 %v4716, 4294901760
    %5807 = vmatmul.f32.gmra.mxu0 %v5806
    %v5808 = vpop.f32.mrf.mxu0
    %v5809 = vadd.f32 %v5772, %v5808
    %5810 = vdwg.mxu0
    %v5811 = vand.u32 %v4781, 4294901760
    %5812 = vmatpush.msra.mxu0 %v5811
    %v5813 = vand.u32 %v4779, 4294901760
    %5814 = vmatpush.msra.mxu0 %v5813
    %v5815 = vand.u32 %v4777, 4294901760
    %5816 = vmatpush.msra.mxu0 %v5815
    %v5817 = vand.u32 %v4775, 4294901760
    %5818 = vmatpush.msra.mxu0 %v5817
    %v5819 = vand.u32 %v4773, 4294901760
    %5820 = vmatpush.msra.mxu0 %v5819
    %v5821 = vand.u32 %v4771, 4294901760
    %5822 = vmatpush.msra.mxu0 %v5821
    %v5823 = vand.u32 %v4769, 4294901760
    %5824 = vmatpush.msra.mxu0 %v5823
    %v5825 = vand.u32 %v4767, 4294901760
    %5826 = vmatpush.msra.mxu0 %v5825
    %v5827 = vand.u32 %v4765, 4294901760
    %5828 = vmatpush.msra.mxu0 %v5827
    %v5829 = vand.u32 %v4763, 4294901760
    %5830 = vmatpush.msra.mxu0 %v5829
    %v5831 = vand.u32 %v4761, 4294901760
    %5832 = vmatpush.msra.mxu0 %v5831
    %v5833 = vand.u32 %v4759, 4294901760
    %5834 = vmatpush.msra.mxu0 %v5833
    %v5835 = vand.u32 %v4757, 4294901760
    %5836 = vmatpush.msra.mxu0 %v5835
    %v5837 = vand.u32 %v4755, 4294901760
    %5838 = vmatpush.msra.mxu0 %v5837
    %v5839 = vand.u32 %v4753, 4294901760
    %5840 = vmatpush.msra.mxu0 %v5839
    %v5841 = vand.u32 %v4751, 4294901760
    %5842 = vmatpush.msra.mxu0 %v5841
    %v5843 = vand.u32 %v4717, 4294901760
    %v5844 = vsub.f32 %v4717, %v5843
    %v5845 = vand.u32 %v5844, 4294901760
    %v5846 = vsub.f32 %v5844, %v5845
    %v5847 = vand.u32 %v5846, 4294901760
    %5848 = vmatmul.f32.gmra.mxu0 %v5847
    %v5849 = vpop.f32.mrf.mxu0
    %v5850 = vadd.f32 %v5809, %v5849
    %5851 = vdwg.mxu0
    %v5852 = vand.u32 %v4781, 4294901760
    %v5853 = vsub.f32 %v4781, %v5852
    %v5854 = vand.u32 %v5853, 4294901760
    %v5855 = vsub.f32 %v5853, %v5854
    %v5856 = vand.u32 %v5855, 4294901760
    %5857 = vmatpush.msra.mxu0 %v5856
    %v5858 = vand.u32 %v4779, 4294901760
    %v5859 = vsub.f32 %v4779, %v5858
    %v5860 = vand.u32 %v5859, 4294901760
    %v5861 = vsub.f32 %v5859, %v5860
    %v5862 = vand.u32 %v5861, 4294901760
    %5863 = vmatpush.msra.mxu0 %v5862
    %v5864 = vand.u32 %v4777, 4294901760
    %v5865 = vsub.f32 %v4777, %v5864
    %v5866 = vand.u32 %v5865, 4294901760
    %v5867 = vsub.f32 %v5865, %v5866
    %v5868 = vand.u32 %v5867, 4294901760
    %5869 = vmatpush.msra.mxu0 %v5868
    %v5870 = vand.u32 %v4775, 4294901760
    %v5871 = vsub.f32 %v4775, %v5870
    %v5872 = vand.u32 %v5871, 4294901760
    %v5873 = vsub.f32 %v5871, %v5872
    %v5874 = vand.u32 %v5873, 4294901760
    %5875 = vmatpush.msra.mxu0 %v5874
    %v5876 = vand.u32 %v4773, 4294901760
    %v5877 = vsub.f32 %v4773, %v5876
    %v5878 = vand.u32 %v5877, 4294901760
    %v5879 = vsub.f32 %v5877, %v5878
    %v5880 = vand.u32 %v5879, 4294901760
    %5881 = vmatpush.msra.mxu0 %v5880
    %v5882 = vand.u32 %v4771, 4294901760
    %v5883 = vsub.f32 %v4771, %v5882
    %v5884 = vand.u32 %v5883, 4294901760
    %v5885 = vsub.f32 %v5883, %v5884
    %v5886 = vand.u32 %v5885, 4294901760
    %5887 = vmatpush.msra.mxu0 %v5886
    %v5888 = vand.u32 %v4769, 4294901760
    %v5889 = vsub.f32 %v4769, %v5888
    %v5890 = vand.u32 %v5889, 4294901760
    %v5891 = vsub.f32 %v5889, %v5890
    %v5892 = vand.u32 %v5891, 4294901760
    %5893 = vmatpush.msra.mxu0 %v5892
    %v5894 = vand.u32 %v4767, 4294901760
    %v5895 = vsub.f32 %v4767, %v5894
    %v5896 = vand.u32 %v5895, 4294901760
    %v5897 = vsub.f32 %v5895, %v5896
    %v5898 = vand.u32 %v5897, 4294901760
    %5899 = vmatpush.msra.mxu0 %v5898
    %v5900 = vand.u32 %v4765, 4294901760
    %v5901 = vsub.f32 %v4765, %v5900
    %v5902 = vand.u32 %v5901, 4294901760
    %v5903 = vsub.f32 %v5901, %v5902
    %v5904 = vand.u32 %v5903, 4294901760
    %5905 = vmatpush.msra.mxu0 %v5904
    %v5906 = vand.u32 %v4763, 4294901760
    %v5907 = vsub.f32 %v4763, %v5906
    %v5908 = vand.u32 %v5907, 4294901760
    %v5909 = vsub.f32 %v5907, %v5908
    %v5910 = vand.u32 %v5909, 4294901760
    %5911 = vmatpush.msra.mxu0 %v5910
    %v5912 = vand.u32 %v4761, 4294901760
    %v5913 = vsub.f32 %v4761, %v5912
    %v5914 = vand.u32 %v5913, 4294901760
    %v5915 = vsub.f32 %v5913, %v5914
    %v5916 = vand.u32 %v5915, 4294901760
    %5917 = vmatpush.msra.mxu0 %v5916
    %v5918 = vand.u32 %v4759, 4294901760
    %v5919 = vsub.f32 %v4759, %v5918
    %v5920 = vand.u32 %v5919, 4294901760
    %v5921 = vsub.f32 %v5919, %v5920
    %v5922 = vand.u32 %v5921, 4294901760
    %5923 = vmatpush.msra.mxu0 %v5922
    %v5924 = vand.u32 %v4757, 4294901760
    %v5925 = vsub.f32 %v4757, %v5924
    %v5926 = vand.u32 %v5925, 4294901760
    %v5927 = vsub.f32 %v5925, %v5926
    %v5928 = vand.u32 %v5927, 4294901760
    %5929 = vmatpush.msra.mxu0 %v5928
    %v5930 = vand.u32 %v4755, 4294901760
    %v5931 = vsub.f32 %v4755, %v5930
    %v5932 = vand.u32 %v5931, 4294901760
    %v5933 = vsub.f32 %v5931, %v5932
    %v5934 = vand.u32 %v5933, 4294901760
    %5935 = vmatpush.msra.mxu0 %v5934
    %v5936 = vand.u32 %v4753, 4294901760
    %v5937 = vsub.f32 %v4753, %v5936
    %v5938 = vand.u32 %v5937, 4294901760
    %v5939 = vsub.f32 %v5937, %v5938
    %v5940 = vand.u32 %v5939, 4294901760
    %5941 = vmatpush.msra.mxu0 %v5940
    %v5942 = vand.u32 %v4751, 4294901760
    %v5943 = vsub.f32 %v4751, %v5942
    %v5944 = vand.u32 %v5943, 4294901760
    %v5945 = vsub.f32 %v5943, %v5944
    %v5946 = vand.u32 %v5945, 4294901760
    %5947 = vmatpush.msra.mxu0 %v5946
    %v5948 = vand.u32 %v4717, 4294901760
    %5949 = vmatmul.f32.gmra.mxu0 %v5948
    %v5950 = vpop.f32.mrf.mxu0
    %v5951 = vadd.f32 %v5850, %v5950
    %5952 = vdwg.mxu0
    %v5953 = vand.u32 %v4781, 4294901760
    %v5954 = vsub.f32 %v4781, %v5953
    %5955 = vmatpush.msra.mxu0 %v5954
    %v5956 = vand.u32 %v4779, 4294901760
    %v5957 = vsub.f32 %v4779, %v5956
    %5958 = vmatpush.msra.mxu0 %v5957
    %v5959 = vand.u32 %v4777, 4294901760
    %v5960 = vsub.f32 %v4777, %v5959
    %5961 = vmatpush.msra.mxu0 %v5960
    %v5962 = vand.u32 %v4775, 4294901760
    %v5963 = vsub.f32 %v4775, %v5962
    %5964 = vmatpush.msra.mxu0 %v5963
    %v5965 = vand.u32 %v4773, 4294901760
    %v5966 = vsub.f32 %v4773, %v5965
    %5967 = vmatpush.msra.mxu0 %v5966
    %v5968 = vand.u32 %v4771, 4294901760
    %v5969 = vsub.f32 %v4771, %v5968
    %5970 = vmatpush.msra.mxu0 %v5969
    %v5971 = vand.u32 %v4769, 4294901760
    %v5972 = vsub.f32 %v4769, %v5971
    %5973 = vmatpush.msra.mxu0 %v5972
    %v5974 = vand.u32 %v4767, 4294901760
    %v5975 = vsub.f32 %v4767, %v5974
    %5976 = vmatpush.msra.mxu0 %v5975
    %v5977 = vand.u32 %v4765, 4294901760
    %v5978 = vsub.f32 %v4765, %v5977
    %5979 = vmatpush.msra.mxu0 %v5978
    %v5980 = vand.u32 %v4763, 4294901760
    %v5981 = vsub.f32 %v4763, %v5980
    %5982 = vmatpush.msra.mxu0 %v5981
    %v5983 = vand.u32 %v4761, 4294901760
    %v5984 = vsub.f32 %v4761, %v5983
    %5985 = vmatpush.msra.mxu0 %v5984
    %v5986 = vand.u32 %v4759, 4294901760
    %v5987 = vsub.f32 %v4759, %v5986
    %5988 = vmatpush.msra.mxu0 %v5987
    %v5989 = vand.u32 %v4757, 4294901760
    %v5990 = vsub.f32 %v4757, %v5989
    %5991 = vmatpush.msra.mxu0 %v5990
    %v5992 = vand.u32 %v4755, 4294901760
    %v5993 = vsub.f32 %v4755, %v5992
    %5994 = vmatpush.msra.mxu0 %v5993
    %v5995 = vand.u32 %v4753, 4294901760
    %v5996 = vsub.f32 %v4753, %v5995
    %5997 = vmatpush.msra.mxu0 %v5996
    %v5998 = vand.u32 %v4751, 4294901760
    %v5999 = vsub.f32 %v4751, %v5998
    %6000 = vmatpush.msra.mxu0 %v5999
    %v6001 = vand.u32 %v4717, 4294901760
    %v6002 = vsub.f32 %v4717, %v6001
    %6003 = vmatmul.f32.gmra.mxu0 %v6002
    %v6004 = vpop.f32.mrf.mxu0
    %v6005 = vadd.f32 %v5951, %v6004
    %6006 = vdwg.mxu0
    %v6007 = vand.u32 %v4781, 4294901760
    %6008 = vmatpush.msra.mxu0 %v6007
    %v6009 = vand.u32 %v4779, 4294901760
    %6010 = vmatpush.msra.mxu0 %v6009
    %v6011 = vand.u32 %v4777, 4294901760
    %6012 = vmatpush.msra.mxu0 %v6011
    %v6013 = vand.u32 %v4775, 4294901760
    %6014 = vmatpush.msra.mxu0 %v6013
    %v6015 = vand.u32 %v4773, 4294901760
    %6016 = vmatpush.msra.mxu0 %v6015
    %v6017 = vand.u32 %v4771, 4294901760
    %6018 = vmatpush.msra.mxu0 %v6017
    %v6019 = vand.u32 %v4769, 4294901760
    %6020 = vmatpush.msra.mxu0 %v6019
    %v6021 = vand.u32 %v4767, 4294901760
    %6022 = vmatpush.msra.mxu0 %v6021
    %v6023 = vand.u32 %v4765, 4294901760
    %6024 = vmatpush.msra.mxu0 %v6023
    %v6025 = vand.u32 %v4763, 4294901760
    %6026 = vmatpush.msra.mxu0 %v6025
    %v6027 = vand.u32 %v4761, 4294901760
    %6028 = vmatpush.msra.mxu0 %v6027
    %v6029 = vand.u32 %v4759, 4294901760
    %6030 = vmatpush.msra.mxu0 %v6029
    %v6031 = vand.u32 %v4757, 4294901760
    %6032 = vmatpush.msra.mxu0 %v6031
    %v6033 = vand.u32 %v4755, 4294901760
    %6034 = vmatpush.msra.mxu0 %v6033
    %v6035 = vand.u32 %v4753, 4294901760
    %6036 = vmatpush.msra.mxu0 %v6035
    %v6037 = vand.u32 %v4751, 4294901760
    %6038 = vmatpush.msra.mxu0 %v6037
    %v6039 = vand.u32 %v4717, 4294901760
    %v6040 = vsub.f32 %v4717, %v6039
    %v6041 = vand.u32 %v6040, 4294901760
    %6042 = vmatmul.f32.gmra.mxu0 %v6041
    %v6043 = vpop.f32.mrf.mxu0
    %v6044 = vadd.f32 %v6005, %v6043
    %6045 = vdwg.mxu0
    %v6046 = vand.u32 %v4781, 4294901760
    %v6047 = vsub.f32 %v4781, %v6046
    %v6048 = vand.u32 %v6047, 4294901760
    %6049 = vmatpush.msra.mxu0 %v6048
    %v6050 = vand.u32 %v4779, 4294901760
    %v6051 = vsub.f32 %v4779, %v6050
    %v6052 = vand.u32 %v6051, 4294901760
    %6053 = vmatpush.msra.mxu0 %v6052
    %v6054 = vand.u32 %v4777, 4294901760
    %v6055 = vsub.f32 %v4777, %v6054
    %v6056 = vand.u32 %v6055, 4294901760
    %6057 = vmatpush.msra.mxu0 %v6056
    %v6058 = vand.u32 %v4775, 4294901760
    %v6059 = vsub.f32 %v4775, %v6058
    %v6060 = vand.u32 %v6059, 4294901760
    %6061 = vmatpush.msra.mxu0 %v6060
    %v6062 = vand.u32 %v4773, 4294901760
    %v6063 = vsub.f32 %v4773, %v6062
    %v6064 = vand.u32 %v6063, 4294901760
    %6065 = vmatpush.msra.mxu0 %v6064
    %v6066 = vand.u32 %v4771, 4294901760
    %v6067 = vsub.f32 %v4771, %v6066
    %v6068 = vand.u32 %v6067, 4294901760
    %6069 = vmatpush.msra.mxu0 %v6068
    %v6070 = vand.u32 %v4769, 4294901760
    %v6071 = vsub.f32 %v4769, %v6070
    %v6072 = vand.u32 %v6071, 4294901760
    %6073 = vmatpush.msra.mxu0 %v6072
    %v6074 = vand.u32 %v4767, 4294901760
    %v6075 = vsub.f32 %v4767, %v6074
    %v6076 = vand.u32 %v6075, 4294901760
    %6077 = vmatpush.msra.mxu0 %v6076
    %v6078 = vand.u32 %v4765, 4294901760
    %v6079 = vsub.f32 %v4765, %v6078
    %v6080 = vand.u32 %v6079, 4294901760
    %6081 = vmatpush.msra.mxu0 %v6080
    %v6082 = vand.u32 %v4763, 4294901760
    %v6083 = vsub.f32 %v4763, %v6082
    %v6084 = vand.u32 %v6083, 4294901760
    %6085 = vmatpush.msra.mxu0 %v6084
    %v6086 = vand.u32 %v4761, 4294901760
    %v6087 = vsub.f32 %v4761, %v6086
    %v6088 = vand.u32 %v6087, 4294901760
    %6089 = vmatpush.msra.mxu0 %v6088
    %v6090 = vand.u32 %v4759, 4294901760
    %v6091 = vsub.f32 %v4759, %v6090
    %v6092 = vand.u32 %v6091, 4294901760
    %6093 = vmatpush.msra.mxu0 %v6092
    %v6094 = vand.u32 %v4757, 4294901760
    %v6095 = vsub.f32 %v4757, %v6094
    %v6096 = vand.u32 %v6095, 4294901760
    %6097 = vmatpush.msra.mxu0 %v6096
    %v6098 = vand.u32 %v4755, 4294901760
    %v6099 = vsub.f32 %v4755, %v6098
    %v6100 = vand.u32 %v6099, 4294901760
    %6101 = vmatpush.msra.mxu0 %v6100
    %v6102 = vand.u32 %v4753, 4294901760
    %v6103 = vsub.f32 %v4753, %v6102
    %v6104 = vand.u32 %v6103, 4294901760
    %6105 = vmatpush.msra.mxu0 %v6104
    %v6106 = vand.u32 %v4751, 4294901760
    %v6107 = vsub.f32 %v4751, %v6106
    %v6108 = vand.u32 %v6107, 4294901760
    %6109 = vmatpush.msra.mxu0 %v6108
    %v6110 = vand.u32 %v4717, 4294901760
    %6111 = vmatmul.f32.gmra.mxu0 %v6110
    %v6112 = vpop.f32.mrf.mxu0
    %v6113 = vadd.f32 %v6044, %v6112
    %6114 = vdwg.mxu0
    %v6115 = vand.u32 %v4781, 4294901760
    %6116 = vmatpush.msra.mxu0 %v6115
    %v6117 = vand.u32 %v4779, 4294901760
    %6118 = vmatpush.msra.mxu0 %v6117
    %v6119 = vand.u32 %v4777, 4294901760
    %6120 = vmatpush.msra.mxu0 %v6119
    %v6121 = vand.u32 %v4775, 4294901760
    %6122 = vmatpush.msra.mxu0 %v6121
    %v6123 = vand.u32 %v4773, 4294901760
    %6124 = vmatpush.msra.mxu0 %v6123
    %v6125 = vand.u32 %v4771, 4294901760
    %6126 = vmatpush.msra.mxu0 %v6125
    %v6127 = vand.u32 %v4769, 4294901760
    %6128 = vmatpush.msra.mxu0 %v6127
    %v6129 = vand.u32 %v4767, 4294901760
    %6130 = vmatpush.msra.mxu0 %v6129
    %v6131 = vand.u32 %v4765, 4294901760
    %6132 = vmatpush.msra.mxu0 %v6131
    %v6133 = vand.u32 %v4763, 4294901760
    %6134 = vmatpush.msra.mxu0 %v6133
    %v6135 = vand.u32 %v4761, 4294901760
    %6136 = vmatpush.msra.mxu0 %v6135
    %v6137 = vand.u32 %v4759, 4294901760
    %6138 = vmatpush.msra.mxu0 %v6137
    %v6139 = vand.u32 %v4757, 4294901760
    %6140 = vmatpush.msra.mxu0 %v6139
    %v6141 = vand.u32 %v4755, 4294901760
    %6142 = vmatpush.msra.mxu0 %v6141
    %v6143 = vand.u32 %v4753, 4294901760
    %6144 = vmatpush.msra.mxu0 %v6143
    %v6145 = vand.u32 %v4751, 4294901760
    %6146 = vmatpush.msra.mxu0 %v6145
    %v6147 = vand.u32 %v4717, 4294901760
    %6148 = vmatmul.f32.gmra.mxu0 %v6147
    %v6149 = vpop.f32.mrf.mxu0
    %v6150 = vadd.f32 %v6113, %v6149
    %6151 = vdwg.mxu0
    %vm6152 = vcmp.gt.f32.partialorder %v5468, 0.0
    %vm6153 = vcmp.gt.f32.partialorder %v6150, 0.0
    %v6154 = vmul.f32 %v5468, 0.2
    %v6155 = vmul.f32 %v6150, 0.2
    %v6156 = vsel %vm6152, %v5468, %v6154
    %v6157 = vsel %vm6153, %v6150, %v6155
    %v6158 = vld [vmem:[#allocation8] sm:$0xff]
    %v6159 = vld [vmem:[#allocation8 + $0x8] sm:$0xff]
    %v6160 = vld [vmem:[#allocation8 + $0x10] sm:$0xff]
    %v6161 = vld [vmem:[#allocation8 + $0x18] sm:$0xff]
    %v6162 = vld [vmem:[#allocation8 + $0x20] sm:$0xff]
    %v6163 = vld [vmem:[#allocation8 + $0x28] sm:$0xff]
    %v6164 = vld [vmem:[#allocation8 + $0x30] sm:$0xff]
    %v6165 = vld [vmem:[#allocation8 + $0x38] sm:$0xff]
    %v6166 = vld [vmem:[#allocation8 + $0x40] sm:$0xff]
    %v6167 = vld [vmem:[#allocation8 + $0x48] sm:$0xff]
    %v6168 = vld [vmem:[#allocation8 + $0x50] sm:$0xff]
    %v6169 = vld [vmem:[#allocation8 + $0x58] sm:$0xff]
    %v6170 = vld [vmem:[#allocation8 + $0x60] sm:$0xff]
    %v6171 = vld [vmem:[#allocation8 + $0x68] sm:$0xff]
    %v6172 = vld [vmem:[#allocation8 + $0x70] sm:$0xff]
    %v6173 = vld [vmem:[#allocation8 + $0x78] sm:$0xff]
    %v6174 = vld [vmem:[#allocation8 + $0x80] sm:$0xff]
    %v6175 = vld [vmem:[#allocation8 + $0x88] sm:$0xff]
    %v6176 = vld [vmem:[#allocation8 + $0x90] sm:$0xff]
    %v6177 = vld [vmem:[#allocation8 + $0x98] sm:$0xff]
    %v6178 = vld [vmem:[#allocation8 + $0xa0] sm:$0xff]
    %v6179 = vld [vmem:[#allocation8 + $0xa8] sm:$0xff]
    %v6180 = vld [vmem:[#allocation8 + $0xb0] sm:$0xff]
    %v6181 = vld [vmem:[#allocation8 + $0xb8] sm:$0xff]
    %v6182 = vld [vmem:[#allocation8 + $0xc0] sm:$0xff]
    %v6183 = vld [vmem:[#allocation8 + $0xc8] sm:$0xff]
    %v6184 = vld [vmem:[#allocation8 + $0xd0] sm:$0xff]
    %v6185 = vld [vmem:[#allocation8 + $0xd8] sm:$0xff]
    %v6186 = vld [vmem:[#allocation8 + $0xe0] sm:$0xff]
    %v6187 = vld [vmem:[#allocation8 + $0xe8] sm:$0xff]
    %v6188 = vld [vmem:[#allocation8 + $0xf0] sm:$0xff]
    %v6189 = vld [vmem:[#allocation8 + $0xf8] sm:$0xff]
    %v6190 = vand.u32 %v6173, 4294901760
    %6191 = vmatpush.msra.mxu0 %v6190
    %v6192 = vand.u32 %v6172, 4294901760
    %6193 = vmatpush.msra.mxu0 %v6192
    %v6194 = vand.u32 %v6171, 4294901760
    %6195 = vmatpush.msra.mxu0 %v6194
    %v6196 = vand.u32 %v6170, 4294901760
    %6197 = vmatpush.msra.mxu0 %v6196
    %v6198 = vand.u32 %v6169, 4294901760
    %6199 = vmatpush.msra.mxu0 %v6198
    %v6200 = vand.u32 %v6168, 4294901760
    %6201 = vmatpush.msra.mxu0 %v6200
    %v6202 = vand.u32 %v6167, 4294901760
    %6203 = vmatpush.msra.mxu0 %v6202
    %v6204 = vand.u32 %v6166, 4294901760
    %6205 = vmatpush.msra.mxu0 %v6204
    %v6206 = vand.u32 %v6165, 4294901760
    %6207 = vmatpush.msra.mxu0 %v6206
    %v6208 = vand.u32 %v6164, 4294901760
    %6209 = vmatpush.msra.mxu0 %v6208
    %v6210 = vand.u32 %v6163, 4294901760
    %6211 = vmatpush.msra.mxu0 %v6210
    %v6212 = vand.u32 %v6162, 4294901760
    %6213 = vmatpush.msra.mxu0 %v6212
    %v6214 = vand.u32 %v6161, 4294901760
    %6215 = vmatpush.msra.mxu0 %v6214
    %v6216 = vand.u32 %v6160, 4294901760
    %6217 = vmatpush.msra.mxu0 %v6216
    %v6218 = vand.u32 %v6159, 4294901760
    %6219 = vmatpush.msra.mxu0 %v6218
    %v6220 = vand.u32 %v6158, 4294901760
    %6221 = vmatpush.msra.mxu0 %v6220
    %v6222 = vand.u32 %v6156, 4294901760
    %v6223 = vsub.f32 %v6156, %v6222
    %v6224 = vand.u32 %v6223, 4294901760
    %v6225 = vsub.f32 %v6223, %v6224
    %v6226 = vand.u32 %v6225, 4294901760
    %6227 = vmatmul.f32.gmra.mxu0 %v6226
    %v6228 = vpop.f32.mrf.mxu0
    %v6229 = vadd.f32 0.0, %v6228
    %6230 = vdwg.mxu0
    %v6231 = vand.u32 %v6173, 4294901760
    %v6232 = vsub.f32 %v6173, %v6231
    %v6233 = vand.u32 %v6232, 4294901760
    %v6234 = vsub.f32 %v6232, %v6233
    %v6235 = vand.u32 %v6234, 4294901760
    %6236 = vmatpush.msra.mxu0 %v6235
    %v6237 = vand.u32 %v6172, 4294901760
    %v6238 = vsub.f32 %v6172, %v6237
    %v6239 = vand.u32 %v6238, 4294901760
    %v6240 = vsub.f32 %v6238, %v6239
    %v6241 = vand.u32 %v6240, 4294901760
    %6242 = vmatpush.msra.mxu0 %v6241
    %v6243 = vand.u32 %v6171, 4294901760
    %v6244 = vsub.f32 %v6171, %v6243
    %v6245 = vand.u32 %v6244, 4294901760
    %v6246 = vsub.f32 %v6244, %v6245
    %v6247 = vand.u32 %v6246, 4294901760
    %6248 = vmatpush.msra.mxu0 %v6247
    %v6249 = vand.u32 %v6170, 4294901760
    %v6250 = vsub.f32 %v6170, %v6249
    %v6251 = vand.u32 %v6250, 4294901760
    %v6252 = vsub.f32 %v6250, %v6251
    %v6253 = vand.u32 %v6252, 4294901760
    %6254 = vmatpush.msra.mxu0 %v6253
    %v6255 = vand.u32 %v6169, 4294901760
    %v6256 = vsub.f32 %v6169, %v6255
    %v6257 = vand.u32 %v6256, 4294901760
    %v6258 = vsub.f32 %v6256, %v6257
    %v6259 = vand.u32 %v6258, 4294901760
    %6260 = vmatpush.msra.mxu0 %v6259
    %v6261 = vand.u32 %v6168, 4294901760
    %v6262 = vsub.f32 %v6168, %v6261
    %v6263 = vand.u32 %v6262, 4294901760
    %v6264 = vsub.f32 %v6262, %v6263
    %v6265 = vand.u32 %v6264, 4294901760
    %6266 = vmatpush.msra.mxu0 %v6265
    %v6267 = vand.u32 %v6167, 4294901760
    %v6268 = vsub.f32 %v6167, %v6267
    %v6269 = vand.u32 %v6268, 4294901760
    %v6270 = vsub.f32 %v6268, %v6269
    %v6271 = vand.u32 %v6270, 4294901760
    %6272 = vmatpush.msra.mxu0 %v6271
    %v6273 = vand.u32 %v6166, 4294901760
    %v6274 = vsub.f32 %v6166, %v6273
    %v6275 = vand.u32 %v6274, 4294901760
    %v6276 = vsub.f32 %v6274, %v6275
    %v6277 = vand.u32 %v6276, 4294901760
    %6278 = vmatpush.msra.mxu0 %v6277
    %v6279 = vand.u32 %v6165, 4294901760
    %v6280 = vsub.f32 %v6165, %v6279
    %v6281 = vand.u32 %v6280, 4294901760
    %v6282 = vsub.f32 %v6280, %v6281
    %v6283 = vand.u32 %v6282, 4294901760
    %6284 = vmatpush.msra.mxu0 %v6283
    %v6285 = vand.u32 %v6164, 4294901760
    %v6286 = vsub.f32 %v6164, %v6285
    %v6287 = vand.u32 %v6286, 4294901760
    %v6288 = vsub.f32 %v6286, %v6287
    %v6289 = vand.u32 %v6288, 4294901760
    %6290 = vmatpush.msra.mxu0 %v6289
    %v6291 = vand.u32 %v6163, 4294901760
    %v6292 = vsub.f32 %v6163, %v6291
    %v6293 = vand.u32 %v6292, 4294901760
    %v6294 = vsub.f32 %v6292, %v6293
    %v6295 = vand.u32 %v6294, 4294901760
    %6296 = vmatpush.msra.mxu0 %v6295
    %v6297 = vand.u32 %v6162, 4294901760
    %v6298 = vsub.f32 %v6162, %v6297
    %v6299 = vand.u32 %v6298, 4294901760
    %v6300 = vsub.f32 %v6298, %v6299
    %v6301 = vand.u32 %v6300, 4294901760
    %6302 = vmatpush.msra.mxu0 %v6301
    %v6303 = vand.u32 %v6161, 4294901760
    %v6304 = vsub.f32 %v6161, %v6303
    %v6305 = vand.u32 %v6304, 4294901760
    %v6306 = vsub.f32 %v6304, %v6305
    %v6307 = vand.u32 %v6306, 4294901760
    %6308 = vmatpush.msra.mxu0 %v6307
    %v6309 = vand.u32 %v6160, 4294901760
    %v6310 = vsub.f32 %v6160, %v6309
    %v6311 = vand.u32 %v6310, 4294901760
    %v6312 = vsub.f32 %v6310, %v6311
    %v6313 = vand.u32 %v6312, 4294901760
    %6314 = vmatpush.msra.mxu0 %v6313
    %v6315 = vand.u32 %v6159, 4294901760
    %v6316 = vsub.f32 %v6159, %v6315
    %v6317 = vand.u32 %v6316, 4294901760
    %v6318 = vsub.f32 %v6316, %v6317
    %v6319 = vand.u32 %v6318, 4294901760
    %6320 = vmatpush.msra.mxu0 %v6319
    %v6321 = vand.u32 %v6158, 4294901760
    %v6322 = vsub.f32 %v6158, %v6321
    %v6323 = vand.u32 %v6322, 4294901760
    %v6324 = vsub.f32 %v6322, %v6323
    %v6325 = vand.u32 %v6324, 4294901760
    %6326 = vmatpush.msra.mxu0 %v6325
    %v6327 = vand.u32 %v6156, 4294901760
    %6328 = vmatmul.f32.gmra.mxu0 %v6327
    %v6329 = vpop.f32.mrf.mxu0
    %v6330 = vadd.f32 %v6229, %v6329
    %6331 = vdwg.mxu0
    %v6332 = vand.u32 %v6173, 4294901760
    %v6333 = vsub.f32 %v6173, %v6332
    %6334 = vmatpush.msra.mxu0 %v6333
    %v6335 = vand.u32 %v6172, 4294901760
    %v6336 = vsub.f32 %v6172, %v6335
    %6337 = vmatpush.msra.mxu0 %v6336
    %v6338 = vand.u32 %v6171, 4294901760
    %v6339 = vsub.f32 %v6171, %v6338
    %6340 = vmatpush.msra.mxu0 %v6339
    %v6341 = vand.u32 %v6170, 4294901760
    %v6342 = vsub.f32 %v6170, %v6341
    %6343 = vmatpush.msra.mxu0 %v6342
    %v6344 = vand.u32 %v6169, 4294901760
    %v6345 = vsub.f32 %v6169, %v6344
    %6346 = vmatpush.msra.mxu0 %v6345
    %v6347 = vand.u32 %v6168, 4294901760
    %v6348 = vsub.f32 %v6168, %v6347
    %6349 = vmatpush.msra.mxu0 %v6348
    %v6350 = vand.u32 %v6167, 4294901760
    %v6351 = vsub.f32 %v6167, %v6350
    %6352 = vmatpush.msra.mxu0 %v6351
    %v6353 = vand.u32 %v6166, 4294901760
    %v6354 = vsub.f32 %v6166, %v6353
    %6355 = vmatpush.msra.mxu0 %v6354
    %v6356 = vand.u32 %v6165, 4294901760
    %v6357 = vsub.f32 %v6165, %v6356
    %6358 = vmatpush.msra.mxu0 %v6357
    %v6359 = vand.u32 %v6164, 4294901760
    %v6360 = vsub.f32 %v6164, %v6359
    %6361 = vmatpush.msra.mxu0 %v6360
    %v6362 = vand.u32 %v6163, 4294901760
    %v6363 = vsub.f32 %v6163, %v6362
    %6364 = vmatpush.msra.mxu0 %v6363
    %v6365 = vand.u32 %v6162, 4294901760
    %v6366 = vsub.f32 %v6162, %v6365
    %6367 = vmatpush.msra.mxu0 %v6366
    %v6368 = vand.u32 %v6161, 4294901760
    %v6369 = vsub.f32 %v6161, %v6368
    %6370 = vmatpush.msra.mxu0 %v6369
    %v6371 = vand.u32 %v6160, 4294901760
    %v6372 = vsub.f32 %v6160, %v6371
    %6373 = vmatpush.msra.mxu0 %v6372
    %v6374 = vand.u32 %v6159, 4294901760
    %v6375 = vsub.f32 %v6159, %v6374
    %6376 = vmatpush.msra.mxu0 %v6375
    %v6377 = vand.u32 %v6158, 4294901760
    %v6378 = vsub.f32 %v6158, %v6377
    %6379 = vmatpush.msra.mxu0 %v6378
    %v6380 = vand.u32 %v6156, 4294901760
    %v6381 = vsub.f32 %v6156, %v6380
    %6382 = vmatmul.f32.gmra.mxu0 %v6381
    %v6383 = vpop.f32.mrf.mxu0
    %v6384 = vadd.f32 %v6330, %v6383
    %6385 = vdwg.mxu0
    %v6386 = vand.u32 %v6173, 4294901760
    %6387 = vmatpush.msra.mxu0 %v6386
    %v6388 = vand.u32 %v6172, 4294901760
    %6389 = vmatpush.msra.mxu0 %v6388
    %v6390 = vand.u32 %v6171, 4294901760
    %6391 = vmatpush.msra.mxu0 %v6390
    %v6392 = vand.u32 %v6170, 4294901760
    %6393 = vmatpush.msra.mxu0 %v6392
    %v6394 = vand.u32 %v6169, 4294901760
    %6395 = vmatpush.msra.mxu0 %v6394
    %v6396 = vand.u32 %v6168, 4294901760
    %6397 = vmatpush.msra.mxu0 %v6396
    %v6398 = vand.u32 %v6167, 4294901760
    %6399 = vmatpush.msra.mxu0 %v6398
    %v6400 = vand.u32 %v6166, 4294901760
    %6401 = vmatpush.msra.mxu0 %v6400
    %v6402 = vand.u32 %v6165, 4294901760
    %6403 = vmatpush.msra.mxu0 %v6402
    %v6404 = vand.u32 %v6164, 4294901760
    %6405 = vmatpush.msra.mxu0 %v6404
    %v6406 = vand.u32 %v6163, 4294901760
    %6407 = vmatpush.msra.mxu0 %v6406
    %v6408 = vand.u32 %v6162, 4294901760
    %6409 = vmatpush.msra.mxu0 %v6408
    %v6410 = vand.u32 %v6161, 4294901760
    %6411 = vmatpush.msra.mxu0 %v6410
    %v6412 = vand.u32 %v6160, 4294901760
    %6413 = vmatpush.msra.mxu0 %v6412
    %v6414 = vand.u32 %v6159, 4294901760
    %6415 = vmatpush.msra.mxu0 %v6414
    %v6416 = vand.u32 %v6158, 4294901760
    %6417 = vmatpush.msra.mxu0 %v6416
    %v6418 = vand.u32 %v6156, 4294901760
    %v6419 = vsub.f32 %v6156, %v6418
    %v6420 = vand.u32 %v6419, 4294901760
    %6421 = vmatmul.f32.gmra.mxu0 %v6420
    %v6422 = vpop.f32.mrf.mxu0
    %v6423 = vadd.f32 %v6384, %v6422
    %6424 = vdwg.mxu0
    %v6425 = vand.u32 %v6173, 4294901760
    %v6426 = vsub.f32 %v6173, %v6425
    %v6427 = vand.u32 %v6426, 4294901760
    %6428 = vmatpush.msra.mxu0 %v6427
    %v6429 = vand.u32 %v6172, 4294901760
    %v6430 = vsub.f32 %v6172, %v6429
    %v6431 = vand.u32 %v6430, 4294901760
    %6432 = vmatpush.msra.mxu0 %v6431
    %v6433 = vand.u32 %v6171, 4294901760
    %v6434 = vsub.f32 %v6171, %v6433
    %v6435 = vand.u32 %v6434, 4294901760
    %6436 = vmatpush.msra.mxu0 %v6435
    %v6437 = vand.u32 %v6170, 4294901760
    %v6438 = vsub.f32 %v6170, %v6437
    %v6439 = vand.u32 %v6438, 4294901760
    %6440 = vmatpush.msra.mxu0 %v6439
    %v6441 = vand.u32 %v6169, 4294901760
    %v6442 = vsub.f32 %v6169, %v6441
    %v6443 = vand.u32 %v6442, 4294901760
    %6444 = vmatpush.msra.mxu0 %v6443
    %v6445 = vand.u32 %v6168, 4294901760
    %v6446 = vsub.f32 %v6168, %v6445
    %v6447 = vand.u32 %v6446, 4294901760
    %6448 = vmatpush.msra.mxu0 %v6447
    %v6449 = vand.u32 %v6167, 4294901760
    %v6450 = vsub.f32 %v6167, %v6449
    %v6451 = vand.u32 %v6450, 4294901760
    %6452 = vmatpush.msra.mxu0 %v6451
    %v6453 = vand.u32 %v6166, 4294901760
    %v6454 = vsub.f32 %v6166, %v6453
    %v6455 = vand.u32 %v6454, 4294901760
    %6456 = vmatpush.msra.mxu0 %v6455
    %v6457 = vand.u32 %v6165, 4294901760
    %v6458 = vsub.f32 %v6165, %v6457
    %v6459 = vand.u32 %v6458, 4294901760
    %6460 = vmatpush.msra.mxu0 %v6459
    %v6461 = vand.u32 %v6164, 4294901760
    %v6462 = vsub.f32 %v6164, %v6461
    %v6463 = vand.u32 %v6462, 4294901760
    %6464 = vmatpush.msra.mxu0 %v6463
    %v6465 = vand.u32 %v6163, 4294901760
    %v6466 = vsub.f32 %v6163, %v6465
    %v6467 = vand.u32 %v6466, 4294901760
    %6468 = vmatpush.msra.mxu0 %v6467
    %v6469 = vand.u32 %v6162, 4294901760
    %v6470 = vsub.f32 %v6162, %v6469
    %v6471 = vand.u32 %v6470, 4294901760
    %6472 = vmatpush.msra.mxu0 %v6471
    %v6473 = vand.u32 %v6161, 4294901760
    %v6474 = vsub.f32 %v6161, %v6473
    %v6475 = vand.u32 %v6474, 4294901760
    %6476 = vmatpush.msra.mxu0 %v6475
    %v6477 = vand.u32 %v6160, 4294901760
    %v6478 = vsub.f32 %v6160, %v6477
    %v6479 = vand.u32 %v6478, 4294901760
    %6480 = vmatpush.msra.mxu0 %v6479
    %v6481 = vand.u32 %v6159, 4294901760
    %v6482 = vsub.f32 %v6159, %v6481
    %v6483 = vand.u32 %v6482, 4294901760
    %6484 = vmatpush.msra.mxu0 %v6483
    %v6485 = vand.u32 %v6158, 4294901760
    %v6486 = vsub.f32 %v6158, %v6485
    %v6487 = vand.u32 %v6486, 4294901760
    %6488 = vmatpush.msra.mxu0 %v6487
    %v6489 = vand.u32 %v6156, 4294901760
    %6490 = vmatmul.f32.gmra.mxu0 %v6489
    %v6491 = vpop.f32.mrf.mxu0
    %v6492 = vadd.f32 %v6423, %v6491
    %6493 = vdwg.mxu0
    %v6494 = vand.u32 %v6173, 4294901760
    %6495 = vmatpush.msra.mxu0 %v6494
    %v6496 = vand.u32 %v6172, 4294901760
    %6497 = vmatpush.msra.mxu0 %v6496
    %v6498 = vand.u32 %v6171, 4294901760
    %6499 = vmatpush.msra.mxu0 %v6498
    %v6500 = vand.u32 %v6170, 4294901760
    %6501 = vmatpush.msra.mxu0 %v6500
    %v6502 = vand.u32 %v6169, 4294901760
    %6503 = vmatpush.msra.mxu0 %v6502
    %v6504 = vand.u32 %v6168, 4294901760
    %6505 = vmatpush.msra.mxu0 %v6504
    %v6506 = vand.u32 %v6167, 4294901760
    %6507 = vmatpush.msra.mxu0 %v6506
    %v6508 = vand.u32 %v6166, 4294901760
    %6509 = vmatpush.msra.mxu0 %v6508
    %v6510 = vand.u32 %v6165, 4294901760
    %6511 = vmatpush.msra.mxu0 %v6510
    %v6512 = vand.u32 %v6164, 4294901760
    %6513 = vmatpush.msra.mxu0 %v6512
    %v6514 = vand.u32 %v6163, 4294901760
    %6515 = vmatpush.msra.mxu0 %v6514
    %v6516 = vand.u32 %v6162, 4294901760
    %6517 = vmatpush.msra.mxu0 %v6516
    %v6518 = vand.u32 %v6161, 4294901760
    %6519 = vmatpush.msra.mxu0 %v6518
    %v6520 = vand.u32 %v6160, 4294901760
    %6521 = vmatpush.msra.mxu0 %v6520
    %v6522 = vand.u32 %v6159, 4294901760
    %6523 = vmatpush.msra.mxu0 %v6522
    %v6524 = vand.u32 %v6158, 4294901760
    %6525 = vmatpush.msra.mxu0 %v6524
    %v6526 = vand.u32 %v6156, 4294901760
    %6527 = vmatmul.f32.gmra.mxu0 %v6526
    %v6528 = vpop.f32.mrf.mxu0
    %v6529 = vadd.f32 %v6492, %v6528
    %6530 = vdwg.mxu0
    %v6531 = vand.u32 %v6189, 4294901760
    %6532 = vmatpush.msra.mxu0 %v6531
    %v6533 = vand.u32 %v6188, 4294901760
    %6534 = vmatpush.msra.mxu0 %v6533
    %v6535 = vand.u32 %v6187, 4294901760
    %6536 = vmatpush.msra.mxu0 %v6535
    %v6537 = vand.u32 %v6186, 4294901760
    %6538 = vmatpush.msra.mxu0 %v6537
    %v6539 = vand.u32 %v6185, 4294901760
    %6540 = vmatpush.msra.mxu0 %v6539
    %v6541 = vand.u32 %v6184, 4294901760
    %6542 = vmatpush.msra.mxu0 %v6541
    %v6543 = vand.u32 %v6183, 4294901760
    %6544 = vmatpush.msra.mxu0 %v6543
    %v6545 = vand.u32 %v6182, 4294901760
    %6546 = vmatpush.msra.mxu0 %v6545
    %v6547 = vand.u32 %v6181, 4294901760
    %6548 = vmatpush.msra.mxu0 %v6547
    %v6549 = vand.u32 %v6180, 4294901760
    %6550 = vmatpush.msra.mxu0 %v6549
    %v6551 = vand.u32 %v6179, 4294901760
    %6552 = vmatpush.msra.mxu0 %v6551
    %v6553 = vand.u32 %v6178, 4294901760
    %6554 = vmatpush.msra.mxu0 %v6553
    %v6555 = vand.u32 %v6177, 4294901760
    %6556 = vmatpush.msra.mxu0 %v6555
    %v6557 = vand.u32 %v6176, 4294901760
    %6558 = vmatpush.msra.mxu0 %v6557
    %v6559 = vand.u32 %v6175, 4294901760
    %6560 = vmatpush.msra.mxu0 %v6559
    %v6561 = vand.u32 %v6174, 4294901760
    %6562 = vmatpush.msra.mxu0 %v6561
    %v6563 = vand.u32 %v6157, 4294901760
    %v6564 = vsub.f32 %v6157, %v6563
    %v6565 = vand.u32 %v6564, 4294901760
    %v6566 = vsub.f32 %v6564, %v6565
    %v6567 = vand.u32 %v6566, 4294901760
    %6568 = vmatmul.f32.gmra.mxu0 %v6567
    %v6569 = vpop.f32.mrf.mxu0
    %v6570 = vadd.f32 %v6529, %v6569
    %6571 = vdwg.mxu0
    %v6572 = vand.u32 %v6189, 4294901760
    %v6573 = vsub.f32 %v6189, %v6572
    %v6574 = vand.u32 %v6573, 4294901760
    %v6575 = vsub.f32 %v6573, %v6574
    %v6576 = vand.u32 %v6575, 4294901760
    %6577 = vmatpush.msra.mxu0 %v6576
    %v6578 = vand.u32 %v6188, 4294901760
    %v6579 = vsub.f32 %v6188, %v6578
    %v6580 = vand.u32 %v6579, 4294901760
    %v6581 = vsub.f32 %v6579, %v6580
    %v6582 = vand.u32 %v6581, 4294901760
    %6583 = vmatpush.msra.mxu0 %v6582
    %v6584 = vand.u32 %v6187, 4294901760
    %v6585 = vsub.f32 %v6187, %v6584
    %v6586 = vand.u32 %v6585, 4294901760
    %v6587 = vsub.f32 %v6585, %v6586
    %v6588 = vand.u32 %v6587, 4294901760
    %6589 = vmatpush.msra.mxu0 %v6588
    %v6590 = vand.u32 %v6186, 4294901760
    %v6591 = vsub.f32 %v6186, %v6590
    %v6592 = vand.u32 %v6591, 4294901760
    %v6593 = vsub.f32 %v6591, %v6592
    %v6594 = vand.u32 %v6593, 4294901760
    %6595 = vmatpush.msra.mxu0 %v6594
    %v6596 = vand.u32 %v6185, 4294901760
    %v6597 = vsub.f32 %v6185, %v6596
    %v6598 = vand.u32 %v6597, 4294901760
    %v6599 = vsub.f32 %v6597, %v6598
    %v6600 = vand.u32 %v6599, 4294901760
    %6601 = vmatpush.msra.mxu0 %v6600
    %v6602 = vand.u32 %v6184, 4294901760
    %v6603 = vsub.f32 %v6184, %v6602
    %v6604 = vand.u32 %v6603, 4294901760
    %v6605 = vsub.f32 %v6603, %v6604
    %v6606 = vand.u32 %v6605, 4294901760
    %6607 = vmatpush.msra.mxu0 %v6606
    %v6608 = vand.u32 %v6183, 4294901760
    %v6609 = vsub.f32 %v6183, %v6608
    %v6610 = vand.u32 %v6609, 4294901760
    %v6611 = vsub.f32 %v6609, %v6610
    %v6612 = vand.u32 %v6611, 4294901760
    %6613 = vmatpush.msra.mxu0 %v6612
    %v6614 = vand.u32 %v6182, 4294901760
    %v6615 = vsub.f32 %v6182, %v6614
    %v6616 = vand.u32 %v6615, 4294901760
    %v6617 = vsub.f32 %v6615, %v6616
    %v6618 = vand.u32 %v6617, 4294901760
    %6619 = vmatpush.msra.mxu0 %v6618
    %v6620 = vand.u32 %v6181, 4294901760
    %v6621 = vsub.f32 %v6181, %v6620
    %v6622 = vand.u32 %v6621, 4294901760
    %v6623 = vsub.f32 %v6621, %v6622
    %v6624 = vand.u32 %v6623, 4294901760
    %6625 = vmatpush.msra.mxu0 %v6624
    %v6626 = vand.u32 %v6180, 4294901760
    %v6627 = vsub.f32 %v6180, %v6626
    %v6628 = vand.u32 %v6627, 4294901760
    %v6629 = vsub.f32 %v6627, %v6628
    %v6630 = vand.u32 %v6629, 4294901760
    %6631 = vmatpush.msra.mxu0 %v6630
    %v6632 = vand.u32 %v6179, 4294901760
    %v6633 = vsub.f32 %v6179, %v6632
    %v6634 = vand.u32 %v6633, 4294901760
    %v6635 = vsub.f32 %v6633, %v6634
    %v6636 = vand.u32 %v6635, 4294901760
    %6637 = vmatpush.msra.mxu0 %v6636
    %v6638 = vand.u32 %v6178, 4294901760
    %v6639 = vsub.f32 %v6178, %v6638
    %v6640 = vand.u32 %v6639, 4294901760
    %v6641 = vsub.f32 %v6639, %v6640
    %v6642 = vand.u32 %v6641, 4294901760
    %6643 = vmatpush.msra.mxu0 %v6642
    %v6644 = vand.u32 %v6177, 4294901760
    %v6645 = vsub.f32 %v6177, %v6644
    %v6646 = vand.u32 %v6645, 4294901760
    %v6647 = vsub.f32 %v6645, %v6646
    %v6648 = vand.u32 %v6647, 4294901760
    %6649 = vmatpush.msra.mxu0 %v6648
    %v6650 = vand.u32 %v6176, 4294901760
    %v6651 = vsub.f32 %v6176, %v6650
    %v6652 = vand.u32 %v6651, 4294901760
    %v6653 = vsub.f32 %v6651, %v6652
    %v6654 = vand.u32 %v6653, 4294901760
    %6655 = vmatpush.msra.mxu0 %v6654
    %v6656 = vand.u32 %v6175, 4294901760
    %v6657 = vsub.f32 %v6175, %v6656
    %v6658 = vand.u32 %v6657, 4294901760
    %v6659 = vsub.f32 %v6657, %v6658
    %v6660 = vand.u32 %v6659, 4294901760
    %6661 = vmatpush.msra.mxu0 %v6660
    %v6662 = vand.u32 %v6174, 4294901760
    %v6663 = vsub.f32 %v6174, %v6662
    %v6664 = vand.u32 %v6663, 4294901760
    %v6665 = vsub.f32 %v6663, %v6664
    %v6666 = vand.u32 %v6665, 4294901760
    %6667 = vmatpush.msra.mxu0 %v6666
    %v6668 = vand.u32 %v6157, 4294901760
    %6669 = vmatmul.f32.gmra.mxu0 %v6668
    %v6670 = vpop.f32.mrf.mxu0
    %v6671 = vadd.f32 %v6570, %v6670
    %6672 = vdwg.mxu0
    %v6673 = vand.u32 %v6189, 4294901760
    %v6674 = vsub.f32 %v6189, %v6673
    %6675 = vmatpush.msra.mxu0 %v6674
    %v6676 = vand.u32 %v6188, 4294901760
    %v6677 = vsub.f32 %v6188, %v6676
    %6678 = vmatpush.msra.mxu0 %v6677
    %v6679 = vand.u32 %v6187, 4294901760
    %v6680 = vsub.f32 %v6187, %v6679
    %6681 = vmatpush.msra.mxu0 %v6680
    %v6682 = vand.u32 %v6186, 4294901760
    %v6683 = vsub.f32 %v6186, %v6682
    %6684 = vmatpush.msra.mxu0 %v6683
    %v6685 = vand.u32 %v6185, 4294901760
    %v6686 = vsub.f32 %v6185, %v6685
    %6687 = vmatpush.msra.mxu0 %v6686
    %v6688 = vand.u32 %v6184, 4294901760
    %v6689 = vsub.f32 %v6184, %v6688
    %6690 = vmatpush.msra.mxu0 %v6689
    %v6691 = vand.u32 %v6183, 4294901760
    %v6692 = vsub.f32 %v6183, %v6691
    %6693 = vmatpush.msra.mxu0 %v6692
    %v6694 = vand.u32 %v6182, 4294901760
    %v6695 = vsub.f32 %v6182, %v6694
    %6696 = vmatpush.msra.mxu0 %v6695
    %v6697 = vand.u32 %v6181, 4294901760
    %v6698 = vsub.f32 %v6181, %v6697
    %6699 = vmatpush.msra.mxu0 %v6698
    %v6700 = vand.u32 %v6180, 4294901760
    %v6701 = vsub.f32 %v6180, %v6700
    %6702 = vmatpush.msra.mxu0 %v6701
    %v6703 = vand.u32 %v6179, 4294901760
    %v6704 = vsub.f32 %v6179, %v6703
    %6705 = vmatpush.msra.mxu0 %v6704
    %v6706 = vand.u32 %v6178, 4294901760
    %v6707 = vsub.f32 %v6178, %v6706
    %6708 = vmatpush.msra.mxu0 %v6707
    %v6709 = vand.u32 %v6177, 4294901760
    %v6710 = vsub.f32 %v6177, %v6709
    %6711 = vmatpush.msra.mxu0 %v6710
    %v6712 = vand.u32 %v6176, 4294901760
    %v6713 = vsub.f32 %v6176, %v6712
    %6714 = vmatpush.msra.mxu0 %v6713
    %v6715 = vand.u32 %v6175, 4294901760
    %v6716 = vsub.f32 %v6175, %v6715
    %6717 = vmatpush.msra.mxu0 %v6716
    %v6718 = vand.u32 %v6174, 4294901760
    %v6719 = vsub.f32 %v6174, %v6718
    %6720 = vmatpush.msra.mxu0 %v6719
    %v6721 = vand.u32 %v6157, 4294901760
    %v6722 = vsub.f32 %v6157, %v6721
    %6723 = vmatmul.f32.gmra.mxu0 %v6722
    %v6724 = vpop.f32.mrf.mxu0
    %v6725 = vadd.f32 %v6671, %v6724
    %6726 = vdwg.mxu0
    %v6727 = vand.u32 %v6189, 4294901760
    %6728 = vmatpush.msra.mxu0 %v6727
    %v6729 = vand.u32 %v6188, 4294901760
    %6730 = vmatpush.msra.mxu0 %v6729
    %v6731 = vand.u32 %v6187, 4294901760
    %6732 = vmatpush.msra.mxu0 %v6731
    %v6733 = vand.u32 %v6186, 4294901760
    %6734 = vmatpush.msra.mxu0 %v6733
    %v6735 = vand.u32 %v6185, 4294901760
    %6736 = vmatpush.msra.mxu0 %v6735
    %v6737 = vand.u32 %v6184, 4294901760
    %6738 = vmatpush.msra.mxu0 %v6737
    %v6739 = vand.u32 %v6183, 4294901760
    %6740 = vmatpush.msra.mxu0 %v6739
    %v6741 = vand.u32 %v6182, 4294901760
    %6742 = vmatpush.msra.mxu0 %v6741
    %v6743 = vand.u32 %v6181, 4294901760
    %6744 = vmatpush.msra.mxu0 %v6743
    %v6745 = vand.u32 %v6180, 4294901760
    %6746 = vmatpush.msra.mxu0 %v6745
    %v6747 = vand.u32 %v6179, 4294901760
    %6748 = vmatpush.msra.mxu0 %v6747
    %v6749 = vand.u32 %v6178, 4294901760
    %6750 = vmatpush.msra.mxu0 %v6749
    %v6751 = vand.u32 %v6177, 4294901760
    %6752 = vmatpush.msra.mxu0 %v6751
    %v6753 = vand.u32 %v6176, 4294901760
    %6754 = vmatpush.msra.mxu0 %v6753
    %v6755 = vand.u32 %v6175, 4294901760
    %6756 = vmatpush.msra.mxu0 %v6755
    %v6757 = vand.u32 %v6174, 4294901760
    %6758 = vmatpush.msra.mxu0 %v6757
    %v6759 = vand.u32 %v6157, 4294901760
    %v6760 = vsub.f32 %v6157, %v6759
    %v6761 = vand.u32 %v6760, 4294901760
    %6762 = vmatmul.f32.gmra.mxu0 %v6761
    %v6763 = vpop.f32.mrf.mxu0
    %v6764 = vadd.f32 %v6725, %v6763
    %6765 = vdwg.mxu0
    %v6766 = vand.u32 %v6189, 4294901760
    %v6767 = vsub.f32 %v6189, %v6766
    %v6768 = vand.u32 %v6767, 4294901760
    %6769 = vmatpush.msra.mxu0 %v6768
    %v6770 = vand.u32 %v6188, 4294901760
    %v6771 = vsub.f32 %v6188, %v6770
    %v6772 = vand.u32 %v6771, 4294901760
    %6773 = vmatpush.msra.mxu0 %v6772
    %v6774 = vand.u32 %v6187, 4294901760
    %v6775 = vsub.f32 %v6187, %v6774
    %v6776 = vand.u32 %v6775, 4294901760
    %6777 = vmatpush.msra.mxu0 %v6776
    %v6778 = vand.u32 %v6186, 4294901760
    %v6779 = vsub.f32 %v6186, %v6778
    %v6780 = vand.u32 %v6779, 4294901760
    %6781 = vmatpush.msra.mxu0 %v6780
    %v6782 = vand.u32 %v6185, 4294901760
    %v6783 = vsub.f32 %v6185, %v6782
    %v6784 = vand.u32 %v6783, 4294901760
    %6785 = vmatpush.msra.mxu0 %v6784
    %v6786 = vand.u32 %v6184, 4294901760
    %v6787 = vsub.f32 %v6184, %v6786
    %v6788 = vand.u32 %v6787, 4294901760
    %6789 = vmatpush.msra.mxu0 %v6788
    %v6790 = vand.u32 %v6183, 4294901760
    %v6791 = vsub.f32 %v6183, %v6790
    %v6792 = vand.u32 %v6791, 4294901760
    %6793 = vmatpush.msra.mxu0 %v6792
    %v6794 = vand.u32 %v6182, 4294901760
    %v6795 = vsub.f32 %v6182, %v6794
    %v6796 = vand.u32 %v6795, 4294901760
    %6797 = vmatpush.msra.mxu0 %v6796
    %v6798 = vand.u32 %v6181, 4294901760
    %v6799 = vsub.f32 %v6181, %v6798
    %v6800 = vand.u32 %v6799, 4294901760
    %6801 = vmatpush.msra.mxu0 %v6800
    %v6802 = vand.u32 %v6180, 4294901760
    %v6803 = vsub.f32 %v6180, %v6802
    %v6804 = vand.u32 %v6803, 4294901760
    %6805 = vmatpush.msra.mxu0 %v6804
    %v6806 = vand.u32 %v6179, 4294901760
    %v6807 = vsub.f32 %v6179, %v6806
    %v6808 = vand.u32 %v6807, 4294901760
    %6809 = vmatpush.msra.mxu0 %v6808
    %v6810 = vand.u32 %v6178, 4294901760
    %v6811 = vsub.f32 %v6178, %v6810
    %v6812 = vand.u32 %v6811, 4294901760
    %6813 = vmatpush.msra.mxu0 %v6812
    %v6814 = vand.u32 %v6177, 4294901760
    %v6815 = vsub.f32 %v6177, %v6814
    %v6816 = vand.u32 %v6815, 4294901760
    %6817 = vmatpush.msra.mxu0 %v6816
    %v6818 = vand.u32 %v6176, 4294901760
    %v6819 = vsub.f32 %v6176, %v6818
    %v6820 = vand.u32 %v6819, 4294901760
    %6821 = vmatpush.msra.mxu0 %v6820
    %v6822 = vand.u32 %v6175, 4294901760
    %v6823 = vsub.f32 %v6175, %v6822
    %v6824 = vand.u32 %v6823, 4294901760
    %6825 = vmatpush.msra.mxu0 %v6824
    %v6826 = vand.u32 %v6174, 4294901760
    %v6827 = vsub.f32 %v6174, %v6826
    %v6828 = vand.u32 %v6827, 4294901760
    %6829 = vmatpush.msra.mxu0 %v6828
    %v6830 = vand.u32 %v6157, 4294901760
    %6831 = vmatmul.f32.gmra.mxu0 %v6830
    %v6832 = vpop.f32.mrf.mxu0
    %v6833 = vadd.f32 %v6764, %v6832
    %6834 = vdwg.mxu0
    %v6835 = vand.u32 %v6189, 4294901760
    %6836 = vmatpush.msra.mxu0 %v6835
    %v6837 = vand.u32 %v6188, 4294901760
    %6838 = vmatpush.msra.mxu0 %v6837
    %v6839 = vand.u32 %v6187, 4294901760
    %6840 = vmatpush.msra.mxu0 %v6839
    %v6841 = vand.u32 %v6186, 4294901760
    %6842 = vmatpush.msra.mxu0 %v6841
    %v6843 = vand.u32 %v6185, 4294901760
    %6844 = vmatpush.msra.mxu0 %v6843
    %v6845 = vand.u32 %v6184, 4294901760
    %6846 = vmatpush.msra.mxu0 %v6845
    %v6847 = vand.u32 %v6183, 4294901760
    %6848 = vmatpush.msra.mxu0 %v6847
    %v6849 = vand.u32 %v6182, 4294901760
    %6850 = vmatpush.msra.mxu0 %v6849
    %v6851 = vand.u32 %v6181, 4294901760
    %6852 = vmatpush.msra.mxu0 %v6851
    %v6853 = vand.u32 %v6180, 4294901760
    %6854 = vmatpush.msra.mxu0 %v6853
    %v6855 = vand.u32 %v6179, 4294901760
    %6856 = vmatpush.msra.mxu0 %v6855
    %v6857 = vand.u32 %v6178, 4294901760
    %6858 = vmatpush.msra.mxu0 %v6857
    %v6859 = vand.u32 %v6177, 4294901760
    %6860 = vmatpush.msra.mxu0 %v6859
    %v6861 = vand.u32 %v6176, 4294901760
    %6862 = vmatpush.msra.mxu0 %v6861
    %v6863 = vand.u32 %v6175, 4294901760
    %6864 = vmatpush.msra.mxu0 %v6863
    %v6865 = vand.u32 %v6174, 4294901760
    %6866 = vmatpush.msra.mxu0 %v6865
    %v6867 = vand.u32 %v6157, 4294901760
    %6868 = vmatmul.f32.gmra.mxu0 %v6867
    %v6869 = vpop.f32.mrf.mxu0
    %v6870 = vadd.f32 %v6833, %v6869
    %6871 = vdwg.mxu0
    %v6872 = vld [vmem:[#allocation2] sm:$0x1]
    %v6874 = vperm.slane %v6872, 0
    %v6876 = vadd.f32 %v6870, %v6874
    %v6877 = vxor.u32 %v6876, 2147483648
    %v6878 = vmul.f32 %v6877, 1.442695
    %v6879 = vpow.pop %v6878
    %v6880 = vadd.f32 %v6879, 1.0
    %v6881 = vrcp.pop %v6880
    %v6882 = vmul.f32 %v6880, %v6881
    %v6883 = vsub.f32 1.0, %v6882
    %v6884 = vmul.f32 %v6881, %v6883
    %v6885 = vadd.f32 %v6881, %v6884
    %vm6886 = vweird.f32 %v6880
    %vm6887 = vweird.f32 %v6881
    %vm6888 = vmor %vm6886, %vm6887
    %v6889 = vsel %vm6888, %v6881, %v6885
    %v6890 = vand.u32 2147483647, %v6880
    %vm6891 = vcmp.eq.f32.partialorder %v6890, 8.507059e+37
    %v6892 = vand.u32 %v6880, 2147483648
    %v6893 = vor.u32 1.1754944e-38, %v6892
    %v6894 = vsel %vm6891, %v6893, %v6889
    %v6895 = vmul.f32 1.0, %v6894
    %vm6896 = vcmask 7168
    %6897 = vst.msk [vmem:[%s7] sm:$0xff] %vm6896, %v6895
    // Predicated region
    $region46: #{tpu_custom_call.1} parent=1 // pred_check
      _
    $region47: #{tpu_custom_call.1} parent=1 // pred_check_branch
      %6899 = sbr.rel (0) target = $region49
    $region48: #{tpu_custom_call.1} parent=1 // pred_region
      _
    $region49: #{tpu_custom_call.1} parent=1 // pred_fallthru
      _
    // Predicated region
    $region50: #{tpu_custom_call.1} parent=1 // pred_check
      _
    $region51: #{tpu_custom_call.1} parent=1 // pred_check_branch
      %6901 = sbr.rel (0) target = $region53
    $region52: #{tpu_custom_call.1} parent=1 // pred_region
      _
    $region53: #{tpu_custom_call.1} parent=1 // pred_fallthru
      _
    %6902 = vsyncpa [#allocation4], 1
    %6903 = vsyncpa [#allocation6], 1
    %6904 = vsyncpa [#allocation9], 1

</llo_original>
